<compile_context>
chip_gen: v5e
topology: v5e:2x2
jax: 0.10.0
libtpu: 0.0.40
codegen_flags: <defaults>
</compile_context>

<pallas_src>
import jax
import jax.numpy as jnp
from jax.experimental import pallas as pl
from jax.experimental.pallas import tpu as pltpu

LANE = 128       # output channels are padded once (at init) to the lane width
TM_BIG = 512     # M tile for the large final layer (~85% of HBM roofline)


# -------------------------------------------------------------------------
# Fused Pallas kernels
# -------------------------------------------------------------------------
def _matmul_bn_lrelu_kernel(a_ref, b_ref, gamma_ref, beta_ref, o_ref):
    """Single-block: (M,K)@(K,128) -> BatchNorm(batch stats) -> LeakyReLU(0.2)."""
    acc = jnp.dot(a_ref[...], b_ref[...], preferred_element_type=jnp.float32)
    mean = jnp.mean(acc, axis=0, keepdims=True)                      # per channel
    var = jnp.mean(jnp.square(acc - mean), axis=0, keepdims=True)    # biased var
    y = (acc - mean) * jax.lax.rsqrt(var + 1e-5) * gamma_ref[...] + beta_ref[...]
    o_ref[...] = jnp.where(y > 0, y, 0.2 * y)


def matmul_bn_lrelu(a, b, gamma, beta):
    """Whole problem resident in VMEM (largest layer: 2 MiB A + 1 MiB out)."""
    M, _ = a.shape
    Np = b.shape[1]
    return pl.pallas_call(
        _matmul_bn_lrelu_kernel,
        out_shape=jax.ShapeDtypeStruct((M, Np), jnp.float32),
    )(a, b, gamma, beta)


def _matmul_tanh_kernel(a_ref, b_ref, o_ref):
    o_ref[...] = jnp.tanh(jnp.dot(a_ref[...], b_ref[...],
                                  preferred_element_type=jnp.float32))


def matmul_tanh(a, b, tm=TM_BIG):
    """(M,K)@(K,128) with tanh epilogue; M-only grid, B stays resident in VMEM."""
    M, K = a.shape
    Np = b.shape[1]
    tm = min(tm, M)
    if M % tm != 0:            # small / irregular M: fall back to a single block
        tm = M
    return pl.pallas_call(
        _matmul_tanh_kernel,
        out_shape=jax.ShapeDtypeStruct((M, Np), jnp.float32),
        grid_spec=pltpu.PrefetchScalarGridSpec(
            num_scalar_prefetch=0,
            grid=(M // tm,),
            in_specs=[pl.BlockSpec((tm, K), lambda i: (i, 0)),
                      pl.BlockSpec((K, Np), lambda i: (0, 0))],   # B resident
            out_specs=pl.BlockSpec((tm, Np), lambda i: (i, 0))),
        compiler_params=pltpu.CompilerParams(
            dimension_semantics=("parallel",)),
    )(a, b)


# -------------------------------------------------------------------------
# ConvTranspose2d lowering glue (NHWC, no transposes)
# -------------------------------------------------------------------------
def im2col_transposed_conv(x_nhwc, K, stride, padding):
    """im2col for ConvTranspose2d as a correlation on the zero-dilated,
    (K-1-padding)-padded input. Column order is (kh, kw, ci)."""
    N, H, W, C = x_nhwc.shape
    Hd = (H - 1) * stride + 1
    Wd = (W - 1) * stride + 1
    p = K - 1 - padding
    Ho = (H - 1) * stride - 2 * padding + K
    Wo = (W - 1) * stride - 2 * padding + K
    xp = jnp.zeros((N, Hd + 2 * p, Wd + 2 * p, C), x_nhwc.dtype)
    xp = xp.at[:, p:p + Hd:stride, p:p + Wd:stride, :].set(x_nhwc)   # dilate+pad
    cols = jnp.concatenate(
        [xp[:, kh:kh + Ho, kw:kw + Wo, :] for kh in range(K) for kw in range(K)],
        axis=-1)                                       # (N, Ho, Wo, K*K*C)
    return cols.reshape(N * Ho * Wo, K * K * C), Ho, Wo


# -------------------------------------------------------------------------
# Generator
# -------------------------------------------------------------------------
class GeneratorPallas:
    def __init__(self, key, z_dim=16, im_chan=3, hidden_dim=8):
        self.z_dim = z_dim
        self.im_chan = im_chan
        self.ksize = 4
        chans = [z_dim, hidden_dim * 8, hidden_dim * 4,
                 hidden_dim * 2, hidden_dim, im_chan]
        self.chans = chans
        self.strides = [1, 2, 2, 2, 2]
        self.pads = [0, 1, 1, 1, 1]
        K = self.ksize
        self.wmats = []      # precomputed (K*K*Cin, 128) im2col weights
        self.bn_params = []  # (gamma, beta) padded to 128 lanes
        for i in range(5):
            key, sub = jax.random.split(key)
            cin, cout = chans[i], chans[i + 1]
            # deterministic synthetic init in PyTorch ConvTranspose2d layout
            w = jax.random.normal(sub, (cin, cout, K, K), jnp.float32) * 0.02
            # flip + channel swap + reshape to im2col row order (kh, kw, ci),
            # and zero-pad Cout to the lane width -- all done ONCE here.
            wf = jnp.flip(w, axis=(2, 3))                        # (Cin,Cout,K,K)
            wm = wf.transpose(2, 3, 0, 1).reshape(K * K * cin, cout)
            self.wmats.append(
                jnp.zeros((K * K * cin, LANE), jnp.float32).at[:, :cout].set(wm))
            if i < 4:  # BatchNorm2d default init: gamma=1, beta=0
                gamma = jnp.zeros((1, LANE), jnp.float32).at[:, :cout].set(1.0)
                beta = jnp.zeros((1, LANE), jnp.float32)
                self.bn_params.append((gamma, beta))
        self._forward = jax.jit(self._apply)

    def _apply(self, noise):
        N = noise.shape[0]
        K = self.ksize
        x = noise.reshape(N, 1, 1, self.z_dim)           # NHWC throughout
        for i in range(5):
            cout = self.chans[i + 1]
            cols, Ho, Wo = im2col_transposed_conv(
                x, K, self.strides[i], self.pads[i])
            if i < 4:
                g, b = self.bn_params[i]
                out = matmul_bn_lrelu(cols, self.wmats[i], g, b)  # (M, 128)
            else:
                out = matmul_tanh(cols, self.wmats[i])            # (M, 128)
            # keep lane-padded output; the un-pad slice fuses into the next
            # layer's dilation scatter under jit.
            x = out.reshape(N, Ho, Wo, LANE)[:, :, :, :cout]
        return x.transpose(0, 3, 1, 2)                   # final NCHW

    def __call__(self, noise):
        return self._forward(noise)


if __name__ == "__main__":
    key = jax.random.PRNGKey(0)
    k_params, k_noise = jax.random.split(key)
    gen = GeneratorPallas(k_params, z_dim=16, im_chan=3, hidden_dim=8)
    noise = jax.random.normal(k_noise, (2, 16), jnp.float32)   # (n_samples, z_dim)
    out = gen(noise)                                           # (2, 3, 64, 64)
    out = jax.block_until_ready(out)
    assert out.shape == (2, 3, 64, 64)
    assert bool(jnp.all(jnp.isfinite(out)))
    print("KERNEL_OK")
</pallas_src>

<mosaic_0001>
module attributes {stable_mosaic.version = 11 : i64} {
  func.func @_matmul_bn_lrelu_kernel(%arg0: memref<32x256xf32, #tpu.memory_space<vmem>>, %arg1: memref<256x128xf32, #tpu.memory_space<vmem>>, %arg2: memref<1x128xf32, #tpu.memory_space<vmem>>, %arg3: memref<1x128xf32, #tpu.memory_space<vmem>>, %arg4: memref<32x128xf32, #tpu.memory_space<vmem>>) attributes {dimension_semantics = [], scalar_prefetch = 0 : i64, scratch_operands = 0 : i64, tpu.core_type = #tpu.core_type<tc>} {
    %c0 = arith.constant 0 : index
    %c0_0 = arith.constant 0 : index
    %0 = vector.load %arg0[%c0, %c0_0] : memref<32x256xf32, #tpu.memory_space<vmem>>, vector<32x256xf32>
    %c0_1 = arith.constant 0 : index
    %c0_2 = arith.constant 0 : index
    %1 = vector.load %arg1[%c0_1, %c0_2] : memref<256x128xf32, #tpu.memory_space<vmem>>, vector<256x128xf32>
    %cst = arith.constant dense<0.000000e+00> : vector<32x128xf32>
    %2 = tpu.matmul %0, %1, %cst {dimension_numbers = #tpu.dot_dimension_numbers<[1], [0], [0], [1], [0, 0, 1, 1], [], []>} : vector<32x256xf32>, vector<256x128xf32>, vector<32x128xf32> -> vector<32x128xf32>
    %cst_3 = arith.constant dense<0.000000e+00> : vector<128xf32>
    %3 = vector.multi_reduction <add>, %2, %cst_3 [0] : vector<32x128xf32> to vector<128xf32>
    %4 = vector.shape_cast %3 : vector<128xf32> to vector<1x128xf32>
    %cst_4 = arith.constant 3.200000e+01 : f32
    %5 = vector.broadcast %cst_4 : f32 to vector<1x128xf32>
    %6 = arith.divf %4, %5 : vector<1x128xf32>
    %7 = vector.broadcast %6 : vector<1x128xf32> to vector<32x128xf32>
    %8 = arith.subf %2, %7 : vector<32x128xf32>
    %9 = arith.mulf %8, %8 : vector<32x128xf32>
    %cst_5 = arith.constant dense<0.000000e+00> : vector<128xf32>
    %10 = vector.multi_reduction <add>, %9, %cst_5 [0] : vector<32x128xf32> to vector<128xf32>
    %11 = vector.shape_cast %10 : vector<128xf32> to vector<1x128xf32>
    %cst_6 = arith.constant 3.200000e+01 : f32
    %12 = vector.broadcast %cst_6 : f32 to vector<1x128xf32>
    %13 = arith.divf %11, %12 : vector<1x128xf32>
    %14 = vector.broadcast %6 : vector<1x128xf32> to vector<32x128xf32>
    %15 = arith.subf %2, %14 : vector<32x128xf32>
    %cst_7 = arith.constant 9.99999974E-6 : f32
    %16 = vector.broadcast %cst_7 : f32 to vector<1x128xf32>
    %17 = arith.addf %13, %16 : vector<1x128xf32>
    %18 = math.rsqrt %17 : vector<1x128xf32>
    %19 = vector.broadcast %18 : vector<1x128xf32> to vector<32x128xf32>
    %20 = arith.mulf %15, %19 : vector<32x128xf32>
    %c0_8 = arith.constant 0 : index
    %c0_9 = arith.constant 0 : index
    %21 = vector.load %arg2[%c0_8, %c0_9] : memref<1x128xf32, #tpu.memory_space<vmem>>, vector<1x128xf32>
    %22 = vector.broadcast %21 : vector<1x128xf32> to vector<32x128xf32>
    %23 = arith.mulf %20, %22 : vector<32x128xf32>
    %c0_10 = arith.constant 0 : index
    %c0_11 = arith.constant 0 : index
    %24 = vector.load %arg3[%c0_10, %c0_11] : memref<1x128xf32, #tpu.memory_space<vmem>>, vector<1x128xf32>
    %25 = vector.broadcast %24 : vector<1x128xf32> to vector<32x128xf32>
    %26 = arith.addf %23, %25 : vector<32x128xf32>
    %cst_12 = arith.constant 0.000000e+00 : f32
    %27 = vector.broadcast %cst_12 : f32 to vector<32x128xf32>
    %28 = arith.cmpf ogt, %26, %27 : vector<32x128xf32>
    %cst_13 = arith.constant 2.000000e-01 : f32
    %29 = vector.broadcast %cst_13 : f32 to vector<32x128xf32>
    %30 = arith.mulf %29, %26 : vector<32x128xf32>
    %31 = arith.select %28, %26, %30 : vector<32x128xi1>, vector<32x128xf32>
    %c0_14 = arith.constant 0 : index
    %c0_15 = arith.constant 0 : index
    %32 = vector.load %arg4[%c0_14, %c0_15] : memref<32x128xf32, #tpu.memory_space<vmem>>, vector<32x128xf32>
    tpu.vector_store %arg4[%c0_14, %c0_15], %31 {strides = array<i32>} : memref<32x128xf32, #tpu.memory_space<vmem>>, vector<32x128xf32>,
    return
  }
}

module attributes {stable_mosaic.version = 11 : i64} {
  func.func @_matmul_bn_lrelu_kernel(%arg0: memref<128x1024xf32, #tpu.memory_space<vmem>>, %arg1: memref<1024x128xf32, #tpu.memory_space<vmem>>, %arg2: memref<1x128xf32, #tpu.memory_space<vmem>>, %arg3: memref<1x128xf32, #tpu.memory_space<vmem>>, %arg4: memref<128x128xf32, #tpu.memory_space<vmem>>) attributes {dimension_semantics = [], scalar_prefetch = 0 : i64, scratch_operands = 0 : i64, tpu.core_type = #tpu.core_type<tc>} {
    %c0 = arith.constant 0 : index
    %c0_0 = arith.constant 0 : index
    %0 = vector.load %arg0[%c0, %c0_0] : memref<128x1024xf32, #tpu.memory_space<vmem>>, vector<128x1024xf32>
    %c0_1 = arith.constant 0 : index
    %c0_2 = arith.constant 0 : index
    %1 = vector.load %arg1[%c0_1, %c0_2] : memref<1024x128xf32, #tpu.memory_space<vmem>>, vector<1024x128xf32>
    %cst = arith.constant dense<0.000000e+00> : vector<128x128xf32>
    %2 = tpu.matmul %0, %1, %cst {dimension_numbers = #tpu.dot_dimension_numbers<[1], [0], [0], [1], [0, 0, 1, 1], [], []>} : vector<128x1024xf32>, vector<1024x128xf32>, vector<128x128xf32> -> vector<128x128xf32>
    %cst_3 = arith.constant dense<0.000000e+00> : vector<128xf32>
    %3 = vector.multi_reduction <add>, %2, %cst_3 [0] : vector<128x128xf32> to vector<128xf32>
    %4 = vector.shape_cast %3 : vector<128xf32> to vector<1x128xf32>
    %cst_4 = arith.constant 1.280000e+02 : f32
    %5 = vector.broadcast %cst_4 : f32 to vector<1x128xf32>
    %6 = arith.divf %4, %5 : vector<1x128xf32>
    %7 = vector.broadcast %6 : vector<1x128xf32> to vector<128x128xf32>
    %8 = arith.subf %2, %7 : vector<128x128xf32>
    %9 = arith.mulf %8, %8 : vector<128x128xf32>
    %cst_5 = arith.constant dense<0.000000e+00> : vector<128xf32>
    %10 = vector.multi_reduction <add>, %9, %cst_5 [0] : vector<128x128xf32> to vector<128xf32>
    %11 = vector.shape_cast %10 : vector<128xf32> to vector<1x128xf32>
    %cst_6 = arith.constant 1.280000e+02 : f32
    %12 = vector.broadcast %cst_6 : f32 to vector<1x128xf32>
    %13 = arith.divf %11, %12 : vector<1x128xf32>
    %14 = vector.broadcast %6 : vector<1x128xf32> to vector<128x128xf32>
    %15 = arith.subf %2, %14 : vector<128x128xf32>
    %cst_7 = arith.constant 9.99999974E-6 : f32
    %16 = vector.broadcast %cst_7 : f32 to vector<1x128xf32>
    %17 = arith.addf %13, %16 : vector<1x128xf32>
    %18 = math.rsqrt %17 : vector<1x128xf32>
    %19 = vector.broadcast %18 : vector<1x128xf32> to vector<128x128xf32>
    %20 = arith.mulf %15, %19 : vector<128x128xf32>
    %c0_8 = arith.constant 0 : index
    %c0_9 = arith.constant 0 : index
    %21 = vector.load %arg2[%c0_8, %c0_9] : memref<1x128xf32, #tpu.memory_space<vmem>>, vector<1x128xf32>
    %22 = vector.broadcast %21 : vector<1x128xf32> to vector<128x128xf32>
    %23 = arith.mulf %20, %22 : vector<128x128xf32>
    %c0_10 = arith.constant 0 : index
    %c0_11 = arith.constant 0 : index
    %24 = vector.load %arg3[%c0_10, %c0_11] : memref<1x128xf32, #tpu.memory_space<vmem>>, vector<1x128xf32>
    %25 = vector.broadcast %24 : vector<1x128xf32> to vector<128x128xf32>
    %26 = arith.addf %23, %25 : vector<128x128xf32>
    %cst_12 = arith.constant 0.000000e+00 : f32
    %27 = vector.broadcast %cst_12 : f32 to vector<128x128xf32>
    %28 = arith.cmpf ogt, %26, %27 : vector<128x128xf32>
    %cst_13 = arith.constant 2.000000e-01 : f32
    %29 = vector.broadcast %cst_13 : f32 to vector<128x128xf32>
    %30 = arith.mulf %29, %26 : vector<128x128xf32>
    %31 = arith.select %28, %26, %30 : vector<128x128xi1>, vector<128x128xf32>
    %c0_14 = arith.constant 0 : index
    %c0_15 = arith.constant 0 : index
    %32 = vector.load %arg4[%c0_14, %c0_15] : memref<128x128xf32, #tpu.memory_space<vmem>>, vector<128x128xf32>
    tpu.vector_store %arg4[%c0_14, %c0_15], %31 {strides = array<i32>} : memref<128x128xf32, #tpu.memory_space<vmem>>, vector<128x128xf32>,
    return
  }
}

module attributes {stable_mosaic.version = 11 : i64} {
  func.func @_matmul_bn_lrelu_kernel(%arg0: memref<512x512xf32, #tpu.memory_space<vmem>>, %arg1: memref<512x128xf32, #tpu.memory_space<vmem>>, %arg2: memref<1x128xf32, #tpu.memory_space<vmem>>, %arg3: memref<1x128xf32, #tpu.memory_space<vmem>>, %arg4: memref<512x128xf32, #tpu.memory_space<vmem>>) attributes {dimension_semantics = [], scalar_prefetch = 0 : i64, scratch_operands = 0 : i64, tpu.core_type = #tpu.core_type<tc>} {
    %c0 = arith.constant 0 : index
    %c0_0 = arith.constant 0 : index
    %0 = vector.load %arg0[%c0, %c0_0] : memref<512x512xf32, #tpu.memory_space<vmem>>, vector<512x512xf32>
    %c0_1 = arith.constant 0 : index
    %c0_2 = arith.constant 0 : index
    %1 = vector.load %arg1[%c0_1, %c0_2] : memref<512x128xf32, #tpu.memory_space<vmem>>, vector<512x128xf32>
    %cst = arith.constant dense<0.000000e+00> : vector<512x128xf32>
    %2 = tpu.matmul %0, %1, %cst {dimension_numbers = #tpu.dot_dimension_numbers<[1], [0], [0], [1], [0, 0, 1, 1], [], []>} : vector<512x512xf32>, vector<512x128xf32>, vector<512x128xf32> -> vector<512x128xf32>
    %cst_3 = arith.constant dense<0.000000e+00> : vector<128xf32>
    %3 = vector.multi_reduction <add>, %2, %cst_3 [0] : vector<512x128xf32> to vector<128xf32>
    %4 = vector.shape_cast %3 : vector<128xf32> to vector<1x128xf32>
    %cst_4 = arith.constant 5.120000e+02 : f32
    %5 = vector.broadcast %cst_4 : f32 to vector<1x128xf32>
    %6 = arith.divf %4, %5 : vector<1x128xf32>
    %7 = vector.broadcast %6 : vector<1x128xf32> to vector<512x128xf32>
    %8 = arith.subf %2, %7 : vector<512x128xf32>
    %9 = arith.mulf %8, %8 : vector<512x128xf32>
    %cst_5 = arith.constant dense<0.000000e+00> : vector<128xf32>
    %10 = vector.multi_reduction <add>, %9, %cst_5 [0] : vector<512x128xf32> to vector<128xf32>
    %11 = vector.shape_cast %10 : vector<128xf32> to vector<1x128xf32>
    %cst_6 = arith.constant 5.120000e+02 : f32
    %12 = vector.broadcast %cst_6 : f32 to vector<1x128xf32>
    %13 = arith.divf %11, %12 : vector<1x128xf32>
    %14 = vector.broadcast %6 : vector<1x128xf32> to vector<512x128xf32>
    %15 = arith.subf %2, %14 : vector<512x128xf32>
    %cst_7 = arith.constant 9.99999974E-6 : f32
    %16 = vector.broadcast %cst_7 : f32 to vector<1x128xf32>
    %17 = arith.addf %13, %16 : vector<1x128xf32>
    %18 = math.rsqrt %17 : vector<1x128xf32>
    %19 = vector.broadcast %18 : vector<1x128xf32> to vector<512x128xf32>
    %20 = arith.mulf %15, %19 : vector<512x128xf32>
    %c0_8 = arith.constant 0 : index
    %c0_9 = arith.constant 0 : index
    %21 = vector.load %arg2[%c0_8, %c0_9] : memref<1x128xf32, #tpu.memory_space<vmem>>, vector<1x128xf32>
    %22 = vector.broadcast %21 : vector<1x128xf32> to vector<512x128xf32>
    %23 = arith.mulf %20, %22 : vector<512x128xf32>
    %c0_10 = arith.constant 0 : index
    %c0_11 = arith.constant 0 : index
    %24 = vector.load %arg3[%c0_10, %c0_11] : memref<1x128xf32, #tpu.memory_space<vmem>>, vector<1x128xf32>
    %25 = vector.broadcast %24 : vector<1x128xf32> to vector<512x128xf32>
    %26 = arith.addf %23, %25 : vector<512x128xf32>
    %cst_12 = arith.constant 0.000000e+00 : f32
    %27 = vector.broadcast %cst_12 : f32 to vector<512x128xf32>
    %28 = arith.cmpf ogt, %26, %27 : vector<512x128xf32>
    %cst_13 = arith.constant 2.000000e-01 : f32
    %29 = vector.broadcast %cst_13 : f32 to vector<512x128xf32>
    %30 = arith.mulf %29, %26 : vector<512x128xf32>
    %31 = arith.select %28, %26, %30 : vector<512x128xi1>, vector<512x128xf32>
    %c0_14 = arith.constant 0 : index
    %c0_15 = arith.constant 0 : index
    %32 = vector.load %arg4[%c0_14, %c0_15] : memref<512x128xf32, #tpu.memory_space<vmem>>, vector<512x128xf32>
    tpu.vector_store %arg4[%c0_14, %c0_15], %31 {strides = array<i32>} : memref<512x128xf32, #tpu.memory_space<vmem>>, vector<512x128xf32>,
    return
  }
}

module attributes {stable_mosaic.version = 11 : i64} {
  func.func @_matmul_bn_lrelu_kernel(%arg0: memref<2048x256xf32, #tpu.memory_space<vmem>>, %arg1: memref<256x128xf32, #tpu.memory_space<vmem>>, %arg2: memref<1x128xf32, #tpu.memory_space<vmem>>, %arg3: memref<1x128xf32, #tpu.memory_space<vmem>>, %arg4: memref<2048x128xf32, #tpu.memory_space<vmem>>) attributes {dimension_semantics = [], scalar_prefetch = 0 : i64, scratch_operands = 0 : i64, tpu.core_type = #tpu.core_type<tc>} {
    %c0 = arith.constant 0 : index
    %c0_0 = arith.constant 0 : index
    %0 = vector.load %arg0[%c0, %c0_0] : memref<2048x256xf32, #tpu.memory_space<vmem>>, vector<2048x256xf32>
    %c0_1 = arith.constant 0 : index
    %c0_2 = arith.constant 0 : index
    %1 = vector.load %arg1[%c0_1, %c0_2] : memref<256x128xf32, #tpu.memory_space<vmem>>, vector<256x128xf32>
    %cst = arith.constant dense<0.000000e+00> : vector<2048x128xf32>
    %2 = tpu.matmul %0, %1, %cst {dimension_numbers = #tpu.dot_dimension_numbers<[1], [0], [0], [1], [0, 0, 1, 1], [], []>} : vector<2048x256xf32>, vector<256x128xf32>, vector<2048x128xf32> -> vector<2048x128xf32>
    %cst_3 = arith.constant dense<0.000000e+00> : vector<128xf32>
    %3 = vector.multi_reduction <add>, %2, %cst_3 [0] : vector<2048x128xf32> to vector<128xf32>
    %4 = vector.shape_cast %3 : vector<128xf32> to vector<1x128xf32>
    %cst_4 = arith.constant 2.048000e+03 : f32
    %5 = vector.broadcast %cst_4 : f32 to vector<1x128xf32>
    %6 = arith.divf %4, %5 : vector<1x128xf32>
    %7 = vector.broadcast %6 : vector<1x128xf32> to vector<2048x128xf32>
    %8 = arith.subf %2, %7 : vector<2048x128xf32>
    %9 = arith.mulf %8, %8 : vector<2048x128xf32>
    %cst_5 = arith.constant dense<0.000000e+00> : vector<128xf32>
    %10 = vector.multi_reduction <add>, %9, %cst_5 [0] : vector<2048x128xf32> to vector<128xf32>
    %11 = vector.shape_cast %10 : vector<128xf32> to vector<1x128xf32>
    %cst_6 = arith.constant 2.048000e+03 : f32
    %12 = vector.broadcast %cst_6 : f32 to vector<1x128xf32>
    %13 = arith.divf %11, %12 : vector<1x128xf32>
    %14 = vector.broadcast %6 : vector<1x128xf32> to vector<2048x128xf32>
    %15 = arith.subf %2, %14 : vector<2048x128xf32>
    %cst_7 = arith.constant 9.99999974E-6 : f32
    %16 = vector.broadcast %cst_7 : f32 to vector<1x128xf32>
    %17 = arith.addf %13, %16 : vector<1x128xf32>
    %18 = math.rsqrt %17 : vector<1x128xf32>
    %19 = vector.broadcast %18 : vector<1x128xf32> to vector<2048x128xf32>
    %20 = arith.mulf %15, %19 : vector<2048x128xf32>
    %c0_8 = arith.constant 0 : index
    %c0_9 = arith.constant 0 : index
    %21 = vector.load %arg2[%c0_8, %c0_9] : memref<1x128xf32, #tpu.memory_space<vmem>>, vector<1x128xf32>
    %22 = vector.broadcast %21 : vector<1x128xf32> to vector<2048x128xf32>
    %23 = arith.mulf %20, %22 : vector<2048x128xf32>
    %c0_10 = arith.constant 0 : index
    %c0_11 = arith.constant 0 : index
    %24 = vector.load %arg3[%c0_10, %c0_11] : memref<1x128xf32, #tpu.memory_space<vmem>>, vector<1x128xf32>
    %25 = vector.broadcast %24 : vector<1x128xf32> to vector<2048x128xf32>
    %26 = arith.addf %23, %25 : vector<2048x128xf32>
    %cst_12 = arith.constant 0.000000e+00 : f32
    %27 = vector.broadcast %cst_12 : f32 to vector<2048x128xf32>
    %28 = arith.cmpf ogt, %26, %27 : vector<2048x128xf32>
    %cst_13 = arith.constant 2.000000e-01 : f32
    %29 = vector.broadcast %cst_13 : f32 to vector<2048x128xf32>
    %30 = arith.mulf %29, %26 : vector<2048x128xf32>
    %31 = arith.select %28, %26, %30 : vector<2048x128xi1>, vector<2048x128xf32>
    %c0_14 = arith.constant 0 : index
    %c0_15 = arith.constant 0 : index
    %32 = vector.load %arg4[%c0_14, %c0_15] : memref<2048x128xf32, #tpu.memory_space<vmem>>, vector<2048x128xf32>
    tpu.vector_store %arg4[%c0_14, %c0_15], %31 {strides = array<i32>} : memref<2048x128xf32, #tpu.memory_space<vmem>>, vector<2048x128xf32>,
    return
  }
}

module attributes {stable_mosaic.version = 11 : i64} {
  func.func @_matmul_tanh_kernel(%arg0: i32, %arg1: memref<512x128xf32, #tpu.memory_space<vmem>>, %arg2: memref<128x128xf32, #tpu.memory_space<vmem>>, %arg3: memref<512x128xf32, #tpu.memory_space<vmem>>) attributes {dimension_semantics = [#tpu.dimension_semantics<parallel>], iteration_bounds = array<i64: 16>, scalar_prefetch = 0 : i64, scratch_operands = 0 : i64, tpu.core_type = #tpu.core_type<tc>, window_params = [{transform_indices = @transform_0, window_bounds = array<i64: 512, 128>}, {pipeline_mode = #tpu.pipeline_mode<synchronous>, transform_indices = @transform_1, window_bounds = array<i64: 128, 128>}, {transform_indices = @transform_2, window_bounds = array<i64: 512, 128>}]} {
    %c0 = arith.constant 0 : index
    %c0_0 = arith.constant 0 : index
    %0 = vector.load %arg1[%c0, %c0_0] : memref<512x128xf32, #tpu.memory_space<vmem>>, vector<512x128xf32>
    %c0_1 = arith.constant 0 : index
    %c0_2 = arith.constant 0 : index
    %1 = vector.load %arg2[%c0_1, %c0_2] : memref<128x128xf32, #tpu.memory_space<vmem>>, vector<128x128xf32>
    %cst = arith.constant dense<0.000000e+00> : vector<512x128xf32>
    %2 = tpu.matmul %0, %1, %cst {dimension_numbers = #tpu.dot_dimension_numbers<[1], [0], [0], [1], [0, 0, 1, 1], [], []>} : vector<512x128xf32>, vector<128x128xf32>, vector<512x128xf32> -> vector<512x128xf32>
    %3 = math.tanh %2 : vector<512x128xf32>
    %c0_3 = arith.constant 0 : index
    %c0_4 = arith.constant 0 : index
    %4 = vector.load %arg3[%c0_3, %c0_4] : memref<512x128xf32, #tpu.memory_space<vmem>>, vector<512x128xf32>
    tpu.vector_store %arg3[%c0_3, %c0_4], %3 {strides = array<i32>} : memref<512x128xf32, #tpu.memory_space<vmem>>, vector<512x128xf32>,
    return
  }
  func.func @transform_0(%arg0: i32) -> (i32, i32) {
    %c0_i32 = arith.constant 0 : i32
    %c0_i32_0 = arith.constant 0 : i32
    return %arg0, %c0_i32 : i32, i32
  }
  func.func @transform_1(%arg0: i32) -> (i32, i32) {
    %c0_i32 = arith.constant 0 : i32
    %c0_i32_0 = arith.constant 0 : i32
    %c0_i32_1 = arith.constant 0 : i32
    return %c0_i32, %c0_i32_0 : i32, i32
  }
  func.func @transform_2(%arg0: i32) -> (i32, i32) {
    %c0_i32 = arith.constant 0 : i32
    %c0_i32_0 = arith.constant 0 : i32
    return %arg0, %c0_i32 : i32, i32
  }
}

</mosaic_0001>

<llo_original>
// kernel: _apply.5
$region0: #{_apply.5}
  #allocation0 [shape = 'u32[]', space=smem, size = 0x4, offset = 0x4, fixed_abs, tag = 'smem constant byte address 0x4 - core index']
  #allocation1 [shape = 'u32[72,128]{1,0:T(1,128)}', space=vmem, size = 0x9000, scoped, tag = 'internal scratch']
  %s0 = inlined_call_operand.vmem [shape: f32[32,256], index: 0, kind: input, shape index: {}]
  %s1 = inlined_call_operand.hbm [shape: f32[256,128], index: 1, kind: input, shape index: {}]
  %s2 = inlined_call_operand.hbm [shape: f32[1,128], index: 2, kind: input, shape index: {}]
  %s3 = inlined_call_operand.vmem [shape: f32[1,128], index: 3, kind: input, shape index: {}]
  %s4 = inlined_call_operand.vmem [shape: f32[32,128], index: 4, kind: output, shape index: {}]
  %s5 = sld [smem:[#allocation0]]
  $region34: #{_apply.5} parent=0
    _
  %s7 = ssub.s32 1, %s5
  %s8 = scalar_select 0, %s7, %s5
  $region1: #{_apply.5} parent=0
    #allocation2 [shape = 'u8[131072]{0}', space=vmem, size = 0x20000, scoped, tag = 'input window, operand 1, single buffered']
    #allocation3 [shape = 's32[1]{0}', space=sflag, size = 0x4, scoped, tag = 'scoped memory for _apply.5']
    #allocation4 [shape = 'u8[512]{0}', space=vmem, size = 0x400, scoped, tag = 'input window, operand 2, single buffered']
    #allocation5 [shape = 's32[1]{0}', space=sflag, size = 0x4, scoped, tag = 'scoped memory for _apply.5']
    %9 = vsyncpa [#allocation3], 0
    %10 = vsyncpa [#allocation5], 0
    // Predicated region
    $region2: #{_apply.5} parent=1 // pred_check
      _
    $region3: #{_apply.5} parent=1 // pred_check_branch
      %12 = sbr.rel (0) target = $region5
    $region4: #{_apply.5} parent=1 // pred_region
      _
    $region5: #{_apply.5} parent=1 // pred_fallthru
      _
    // Predicated region
    $region6: #{_apply.5} parent=1 // pred_check
      _
    $region7: #{_apply.5} parent=1 // pred_check_branch
      %14 = sbr.rel (0) target = $region9
    $region8: #{_apply.5} parent=1 // pred_region
      %16 = vsyncadd [#allocation3], 0
      %s17 = sshll.u32 %s1, 4
      %s18 = int_to_ptr.hbm [resolvable:$true] %s17
      %s19 = sshll.u32 [#allocation2], 4
      %s20 = int_to_ptr.vmem [resolvable:$true] %s19
      %25 = dma.hbm_to_vmem [thread:$0]  %s18, 4096, %s20, [#allocation3], 128, 128, 8
    $region9: #{_apply.5} parent=1 // pred_fallthru
      _
    // Predicated region
    $region10: #{_apply.5} parent=1 // pred_check
      _
    $region11: #{_apply.5} parent=1 // pred_check_branch
      %27 = sbr.rel (0) target = $region13
    $region12: #{_apply.5} parent=1 // pred_region
      %29 = vsyncadd [#allocation5], 0
      %s31 = sshll.u32 %s2, 4
      %s32 = int_to_ptr.hbm [resolvable:$true] %s31
      %s33 = sshll.u32 [#allocation4], 4
      %s34 = int_to_ptr.vmem [resolvable:$true] %s33
      %36 = dma.hbm_to_vmem [thread:$0]  %s32, 16, %s34, [#allocation5]
    $region13: #{_apply.5} parent=1 // pred_fallthru
      _
    // Predicated region
    $region14: #{_apply.5} parent=1 // pred_check
      _
    $region15: #{_apply.5} parent=1 // pred_check_branch
      %38 = sbr.rel (0) target = $region17
    $region16: #{_apply.5} parent=1 // pred_region
      _
    $region17: #{_apply.5} parent=1 // pred_fallthru
      _
    // Predicated region
    $region18: #{_apply.5} parent=1 // pred_check
      _
    $region19: #{_apply.5} parent=1 // pred_check_branch
      %40 = sbr.rel (0) target = $region21
    $region20: #{_apply.5} parent=1 // pred_region
      %42 = dma.done [#allocation3], 4096
    $region21: #{_apply.5} parent=1 // pred_fallthru
      _
    // Predicated region
    $region22: #{_apply.5} parent=1 // pred_check
      _
    $region23: #{_apply.5} parent=1 // pred_check_branch
      %44 = sbr.rel (0) target = $region25
    $region24: #{_apply.5} parent=1 // pred_region
      %46 = dma.done [#allocation5], 16
    $region25: #{_apply.5} parent=1 // pred_fallthru
      _
    %v47 = vld [vmem:[%s0] sm:$0xff]
    %v48 = vld [vmem:[%s0 + $0x8] sm:$0xff]
    %v49 = vld [vmem:[%s0 + $0x10] sm:$0xff]
    %v50 = vld [vmem:[%s0 + $0x18] sm:$0xff]
    %v51 = vld [vmem:[%s0 + $0x20] sm:$0xff]
    %v52 = vld [vmem:[%s0 + $0x28] sm:$0xff]
    %v53 = vld [vmem:[%s0 + $0x30] sm:$0xff]
    %v54 = vld [vmem:[%s0 + $0x38] sm:$0xff]
    %v55 = vld [vmem:[#allocation2] sm:$0xff]
    %v56 = vld [vmem:[#allocation2 + $0x8] sm:$0xff]
    %v57 = vld [vmem:[#allocation2 + $0x10] sm:$0xff]
    %v58 = vld [vmem:[#allocation2 + $0x18] sm:$0xff]
    %v59 = vld [vmem:[#allocation2 + $0x20] sm:$0xff]
    %v60 = vld [vmem:[#allocation2 + $0x28] sm:$0xff]
    %v61 = vld [vmem:[#allocation2 + $0x30] sm:$0xff]
    %v62 = vld [vmem:[#allocation2 + $0x38] sm:$0xff]
    %v63 = vld [vmem:[#allocation2 + $0x40] sm:$0xff]
    %v64 = vld [vmem:[#allocation2 + $0x48] sm:$0xff]
    %v65 = vld [vmem:[#allocation2 + $0x50] sm:$0xff]
    %v66 = vld [vmem:[#allocation2 + $0x58] sm:$0xff]
    %v67 = vld [vmem:[#allocation2 + $0x60] sm:$0xff]
    %v68 = vld [vmem:[#allocation2 + $0x68] sm:$0xff]
    %v69 = vld [vmem:[#allocation2 + $0x70] sm:$0xff]
    %v70 = vld [vmem:[#allocation2 + $0x78] sm:$0xff]
    %v71 = vld [vmem:[#allocation2 + $0x80] sm:$0xff]
    %v72 = vld [vmem:[#allocation2 + $0x88] sm:$0xff]
    %v73 = vld [vmem:[#allocation2 + $0x90] sm:$0xff]
    %v74 = vld [vmem:[#allocation2 + $0x98] sm:$0xff]
    %v75 = vld [vmem:[#allocation2 + $0xa0] sm:$0xff]
    %v76 = vld [vmem:[#allocation2 + $0xa8] sm:$0xff]
    %v77 = vld [vmem:[#allocation2 + $0xb0] sm:$0xff]
    %v78 = vld [vmem:[#allocation2 + $0xb8] sm:$0xff]
    %v79 = vld [vmem:[#allocation2 + $0xc0] sm:$0xff]
    %v80 = vld [vmem:[#allocation2 + $0xc8] sm:$0xff]
    %v81 = vld [vmem:[#allocation2 + $0xd0] sm:$0xff]
    %v82 = vld [vmem:[#allocation2 + $0xd8] sm:$0xff]
    %v83 = vld [vmem:[#allocation2 + $0xe0] sm:$0xff]
    %v84 = vld [vmem:[#allocation2 + $0xe8] sm:$0xff]
    %v85 = vld [vmem:[#allocation2 + $0xf0] sm:$0xff]
    %v86 = vld [vmem:[#allocation2 + $0xf8] sm:$0xff]
    %87 = vmatpush.msra.mxu0 %v70
    %88 = vmatpush.msra.mxu0 %v69
    %89 = vmatpush.msra.mxu0 %v68
    %90 = vmatpush.msra.mxu0 %v67
    %91 = vmatpush.msra.mxu0 %v66
    %92 = vmatpush.msra.mxu0 %v65
    %93 = vmatpush.msra.mxu0 %v64
    %94 = vmatpush.msra.mxu0 %v63
    %95 = vmatpush.msra.mxu0 %v62
    %96 = vmatpush.msra.mxu0 %v61
    %97 = vmatpush.msra.mxu0 %v60
    %98 = vmatpush.msra.mxu0 %v59
    %99 = vmatpush.msra.mxu0 %v58
    %100 = vmatpush.msra.mxu0 %v57
    %101 = vmatpush.msra.mxu0 %v56
    %102 = vmatpush.msra.mxu0 %v55
    %103 = vmatmul.f32.gmra.mxu0 %v47
    %v104 = vpop.f32.mrf.mxu0
    %v105 = vadd.f32 0.0, %v104
    %106 = vmatmul.f32.gmra.mxu0 %v49
    %v107 = vpop.f32.mrf.mxu0
    %v108 = vadd.f32 0.0, %v107
    %109 = vmatmul.f32.gmra.mxu0 %v51
    %v110 = vpop.f32.mrf.mxu0
    %v111 = vadd.f32 0.0, %v110
    %112 = vmatmul.f32.gmra.mxu0 %v53
    %v113 = vpop.f32.mrf.mxu0
    %v114 = vadd.f32 0.0, %v113
    %115 = vdwg.mxu0
    %116 = vmatpush.msra.mxu0 %v86
    %117 = vmatpush.msra.mxu0 %v85
    %118 = vmatpush.msra.mxu0 %v84
    %119 = vmatpush.msra.mxu0 %v83
    %120 = vmatpush.msra.mxu0 %v82
    %121 = vmatpush.msra.mxu0 %v81
    %122 = vmatpush.msra.mxu0 %v80
    %123 = vmatpush.msra.mxu0 %v79
    %124 = vmatpush.msra.mxu0 %v78
    %125 = vmatpush.msra.mxu0 %v77
    %126 = vmatpush.msra.mxu0 %v76
    %127 = vmatpush.msra.mxu0 %v75
    %128 = vmatpush.msra.mxu0 %v74
    %129 = vmatpush.msra.mxu0 %v73
    %130 = vmatpush.msra.mxu0 %v72
    %131 = vmatpush.msra.mxu0 %v71
    %132 = vmatmul.f32.gmra.mxu0 %v48
    %v133 = vpop.f32.mrf.mxu0
    %v134 = vadd.f32 %v105, %v133
    %135 = vmatmul.f32.gmra.mxu0 %v50
    %v136 = vpop.f32.mrf.mxu0
    %v137 = vadd.f32 %v108, %v136
    %138 = vmatmul.f32.gmra.mxu0 %v52
    %v139 = vpop.f32.mrf.mxu0
    %v140 = vadd.f32 %v111, %v139
    %141 = vmatmul.f32.gmra.mxu0 %v54
    %v142 = vpop.f32.mrf.mxu0
    %v143 = vadd.f32 %v114, %v142
    %144 = vdwg.mxu0
    %v145 = vadd.f32 %v134, %v137
    %v146 = vadd.f32 %v145, %v140
    %v147 = vadd.f32 %v146, %v143
    %v148 = vrot.slane %v147, 4
    %v149 = vadd.f32 %v147, %v148
    %v150 = vrot.slane %v149, 2
    %v151 = vadd.f32 %v149, %v150
    %v152 = vrot.slane %v151, 1
    %v153 = vadd.f32 %v151, %v152
    %v154 = vrcp.pop 32.0
    %v155 = vmul.f32 32.0, %v154
    %v156 = vsub.f32 1.0, %v155
    %v157 = vmul.f32 %v154, %v156
    %v158 = vadd.f32 %v154, %v157
    %vm159 = vweird.f32 %v154
    %v160 = vsel %vm159, %v154, %v158
    %v161 = vmul.f32 %v153, %v160
    %v162 = vsub.f32 %v134, %v161
    %v163 = vsub.f32 %v137, %v161
    %v164 = vsub.f32 %v140, %v161
    %v165 = vsub.f32 %v143, %v161
    %v166 = vmul.f32 %v162, %v162
    %v167 = vmul.f32 %v163, %v163
    %v168 = vmul.f32 %v164, %v164
    %v169 = vmul.f32 %v165, %v165
    %v170 = vadd.f32 %v166, %v167
    %v171 = vadd.f32 %v170, %v168
    %v172 = vadd.f32 %v171, %v169
    %v173 = vrot.slane %v172, 4
    %v174 = vadd.f32 %v172, %v173
    %v175 = vrot.slane %v174, 2
    %v176 = vadd.f32 %v174, %v175
    %v177 = vrot.slane %v176, 1
    %v178 = vadd.f32 %v176, %v177
    %v179 = vmul.f32 %v178, %v160
    %v180 = vadd.f32 %v179, 1e-05
    %v181 = vrsqrt.pop %v180
    %v182 = vmul.f32 %v181, %v180
    %v183 = vmul.f32 %v182, %v181
    %v184 = vmul.f32 0.5, %v183
    %v185 = vsub.f32 1.5, %v184
    %v186 = vmul.f32 %v181, %v185
    %vm187 = vweird.f32 %v180
    %vm188 = vweird.f32 %v181
    %vm189 = vmor %vm187, %vm188
    %v190 = vsel %vm189, %v181, %v186
    %v191 = vmul.f32 %v162, %v190
    %v192 = vmul.f32 %v163, %v190
    %v193 = vmul.f32 %v164, %v190
    %v194 = vmul.f32 %v165, %v190
    %v195 = vld [vmem:[#allocation4] sm:$0x1]
    %v197 = vperm.slane %v195, 0
    %v199 = vmul.f32 %v191, %v197
    %v200 = vmul.f32 %v192, %v197
    %v201 = vmul.f32 %v193, %v197
    %v202 = vmul.f32 %v194, %v197
    %v203 = vld [vmem:[%s3] sm:$0x1]
    %v205 = vperm.slane %v203, 0
    %v207 = vadd.f32 %v199, %v205
    %v208 = vadd.f32 %v200, %v205
    %v209 = vadd.f32 %v201, %v205
    %v210 = vadd.f32 %v202, %v205
    %vm211 = vcmp.gt.f32.partialorder %v207, 0.0
    %vm212 = vcmp.gt.f32.partialorder %v208, 0.0
    %vm213 = vcmp.gt.f32.partialorder %v209, 0.0
    %vm214 = vcmp.gt.f32.partialorder %v210, 0.0
    %v215 = vmul.f32 %v207, 0.2
    %v216 = vmul.f32 %v208, 0.2
    %v217 = vmul.f32 %v209, 0.2
    %v218 = vmul.f32 %v210, 0.2
    %v219 = vsel %vm211, %v207, %v215
    %v220 = vsel %vm212, %v208, %v216
    %v221 = vsel %vm213, %v209, %v217
    %v222 = vsel %vm214, %v210, %v218
    %223 = vst [vmem:[%s4] sm:$0xff] %v219
    %224 = vst [vmem:[%s4 + $0x8] sm:$0xff] %v220
    %225 = vst [vmem:[%s4 + $0x10] sm:$0xff] %v221
    %226 = vst [vmem:[%s4 + $0x18] sm:$0xff] %v222
    // Predicated region
    $region26: #{_apply.5} parent=1 // pred_check
      _
    $region27: #{_apply.5} parent=1 // pred_check_branch
      %228 = sbr.rel (0) target = $region29
    $region28: #{_apply.5} parent=1 // pred_region
      _
    $region29: #{_apply.5} parent=1 // pred_fallthru
      _
    // Predicated region
    $region30: #{_apply.5} parent=1 // pred_check
      _
    $region31: #{_apply.5} parent=1 // pred_check_branch
      %230 = sbr.rel (0) target = $region33
    $region32: #{_apply.5} parent=1 // pred_region
      _
    $region33: #{_apply.5} parent=1 // pred_fallthru
      _
    %231 = vsyncpa [#allocation3], 1
    %232 = vsyncpa [#allocation5], 1

// kernel: _apply.6
$region0: #{_apply.6}
  #allocation0 [shape = 'u32[]', space=smem, size = 0x4, offset = 0x4, fixed_abs, tag = 'smem constant byte address 0x4 - core index']
  #allocation1 [shape = 'u32[72,128]{1,0:T(1,128)}', space=vmem, size = 0x9000, scoped, tag = 'internal scratch']
  %s0 = inlined_call_operand.vmem [shape: f32[128,1024], index: 0, kind: input, shape index: {}]
  %s1 = inlined_call_operand.hbm [shape: f32[1024,128], index: 1, kind: input, shape index: {}]
  %s2 = inlined_call_operand.hbm [shape: f32[1,128], index: 2, kind: input, shape index: {}]
  %s3 = inlined_call_operand.vmem [shape: f32[1,128], index: 3, kind: input, shape index: {}]
  %s4 = inlined_call_operand.vmem [shape: f32[128,128], index: 4, kind: output, shape index: {}]
  %s5 = sld [smem:[#allocation0]]
  $region34: #{_apply.6} parent=0
    _
  %s7 = ssub.s32 1, %s5
  %s8 = scalar_select 0, %s7, %s5
  $region1: #{_apply.6} parent=0
    #allocation2 [shape = 'u8[524288]{0}', space=vmem, size = 0x80000, scoped, tag = 'input window, operand 1, single buffered']
    #allocation3 [shape = 's32[1]{0}', space=sflag, size = 0x4, scoped, tag = 'scoped memory for _apply.6']
    #allocation4 [shape = 'u8[512]{0}', space=vmem, size = 0x400, scoped, tag = 'input window, operand 2, single buffered']
    #allocation5 [shape = 's32[1]{0}', space=sflag, size = 0x4, scoped, tag = 'scoped memory for _apply.6']
    %9 = vsyncpa [#allocation3], 0
    %10 = vsyncpa [#allocation5], 0
    // Predicated region
    $region2: #{_apply.6} parent=1 // pred_check
      _
    $region3: #{_apply.6} parent=1 // pred_check_branch
      %12 = sbr.rel (0) target = $region5
    $region4: #{_apply.6} parent=1 // pred_region
      _
    $region5: #{_apply.6} parent=1 // pred_fallthru
      _
    // Predicated region
    $region6: #{_apply.6} parent=1 // pred_check
      _
    $region7: #{_apply.6} parent=1 // pred_check_branch
      %14 = sbr.rel (0) target = $region9
    $region8: #{_apply.6} parent=1 // pred_region
      %16 = vsyncadd [#allocation3], 0
      %s17 = sshll.u32 %s1, 4
      %s18 = int_to_ptr.hbm [resolvable:$true] %s17
      %s19 = sshll.u32 [#allocation2], 4
      %s20 = int_to_ptr.vmem [resolvable:$true] %s19
      %25 = dma.hbm_to_vmem [thread:$0]  %s18, 16384, %s20, [#allocation3], 128, 128, 8
    $region9: #{_apply.6} parent=1 // pred_fallthru
      _
    // Predicated region
    $region10: #{_apply.6} parent=1 // pred_check
      _
    $region11: #{_apply.6} parent=1 // pred_check_branch
      %27 = sbr.rel (0) target = $region13
    $region12: #{_apply.6} parent=1 // pred_region
      %29 = vsyncadd [#allocation5], 0
      %s31 = sshll.u32 %s2, 4
      %s32 = int_to_ptr.hbm [resolvable:$true] %s31
      %s33 = sshll.u32 [#allocation4], 4
      %s34 = int_to_ptr.vmem [resolvable:$true] %s33
      %36 = dma.hbm_to_vmem [thread:$0]  %s32, 16, %s34, [#allocation5]
    $region13: #{_apply.6} parent=1 // pred_fallthru
      _
    // Predicated region
    $region14: #{_apply.6} parent=1 // pred_check
      _
    $region15: #{_apply.6} parent=1 // pred_check_branch
      %38 = sbr.rel (0) target = $region17
    $region16: #{_apply.6} parent=1 // pred_region
      _
    $region17: #{_apply.6} parent=1 // pred_fallthru
      _
    // Predicated region
    $region18: #{_apply.6} parent=1 // pred_check
      _
    $region19: #{_apply.6} parent=1 // pred_check_branch
      %40 = sbr.rel (0) target = $region21
    $region20: #{_apply.6} parent=1 // pred_region
      %42 = dma.done [#allocation3], 16384
    $region21: #{_apply.6} parent=1 // pred_fallthru
      _
    // Predicated region
    $region22: #{_apply.6} parent=1 // pred_check
      _
    $region23: #{_apply.6} parent=1 // pred_check_branch
      %44 = sbr.rel (0) target = $region25
    $region24: #{_apply.6} parent=1 // pred_region
      %46 = dma.done [#allocation5], 16
    $region25: #{_apply.6} parent=1 // pred_fallthru
      _
    %v47 = vld [vmem:[%s0] sm:$0xff]
    %v48 = vld [vmem:[%s0 + $0x8] sm:$0xff]
    %v49 = vld [vmem:[%s0 + $0x10] sm:$0xff]
    %v50 = vld [vmem:[%s0 + $0x18] sm:$0xff]
    %v51 = vld [vmem:[%s0 + $0x20] sm:$0xff]
    %v52 = vld [vmem:[%s0 + $0x28] sm:$0xff]
    %v53 = vld [vmem:[%s0 + $0x30] sm:$0xff]
    %v54 = vld [vmem:[%s0 + $0x38] sm:$0xff]
    %v55 = vld [vmem:[%s0 + $0x40] sm:$0xff]
    %v56 = vld [vmem:[%s0 + $0x48] sm:$0xff]
    %v57 = vld [vmem:[%s0 + $0x50] sm:$0xff]
    %v58 = vld [vmem:[%s0 + $0x58] sm:$0xff]
    %v59 = vld [vmem:[%s0 + $0x60] sm:$0xff]
    %v60 = vld [vmem:[%s0 + $0x68] sm:$0xff]
    %v61 = vld [vmem:[%s0 + $0x70] sm:$0xff]
    %v62 = vld [vmem:[%s0 + $0x78] sm:$0xff]
    %v63 = vld [vmem:[%s0 + $0x80] sm:$0xff]
    %v64 = vld [vmem:[%s0 + $0x88] sm:$0xff]
    %v65 = vld [vmem:[%s0 + $0x90] sm:$0xff]
    %v66 = vld [vmem:[%s0 + $0x98] sm:$0xff]
    %v67 = vld [vmem:[%s0 + $0xa0] sm:$0xff]
    %v68 = vld [vmem:[%s0 + $0xa8] sm:$0xff]
    %v69 = vld [vmem:[%s0 + $0xb0] sm:$0xff]
    %v70 = vld [vmem:[%s0 + $0xb8] sm:$0xff]
    %v71 = vld [vmem:[%s0 + $0xc0] sm:$0xff]
    %v72 = vld [vmem:[%s0 + $0xc8] sm:$0xff]
    %v73 = vld [vmem:[%s0 + $0xd0] sm:$0xff]
    %v74 = vld [vmem:[%s0 + $0xd8] sm:$0xff]
    %v75 = vld [vmem:[%s0 + $0xe0] sm:$0xff]
    %v76 = vld [vmem:[%s0 + $0xe8] sm:$0xff]
    %v77 = vld [vmem:[%s0 + $0xf0] sm:$0xff]
    %v78 = vld [vmem:[%s0 + $0xf8] sm:$0xff]
    %v79 = vld [vmem:[%s0 + $0x100] sm:$0xff]
    %v80 = vld [vmem:[%s0 + $0x108] sm:$0xff]
    %v81 = vld [vmem:[%s0 + $0x110] sm:$0xff]
    %v82 = vld [vmem:[%s0 + $0x118] sm:$0xff]
    %v83 = vld [vmem:[%s0 + $0x120] sm:$0xff]
    %v84 = vld [vmem:[%s0 + $0x128] sm:$0xff]
    %v85 = vld [vmem:[%s0 + $0x130] sm:$0xff]
    %v86 = vld [vmem:[%s0 + $0x138] sm:$0xff]
    %v87 = vld [vmem:[%s0 + $0x140] sm:$0xff]
    %v88 = vld [vmem:[%s0 + $0x148] sm:$0xff]
    %v89 = vld [vmem:[%s0 + $0x150] sm:$0xff]
    %v90 = vld [vmem:[%s0 + $0x158] sm:$0xff]
    %v91 = vld [vmem:[%s0 + $0x160] sm:$0xff]
    %v92 = vld [vmem:[%s0 + $0x168] sm:$0xff]
    %v93 = vld [vmem:[%s0 + $0x170] sm:$0xff]
    %v94 = vld [vmem:[%s0 + $0x178] sm:$0xff]
    %v95 = vld [vmem:[%s0 + $0x180] sm:$0xff]
    %v96 = vld [vmem:[%s0 + $0x188] sm:$0xff]
    %v97 = vld [vmem:[%s0 + $0x190] sm:$0xff]
    %v98 = vld [vmem:[%s0 + $0x198] sm:$0xff]
    %v99 = vld [vmem:[%s0 + $0x1a0] sm:$0xff]
    %v100 = vld [vmem:[%s0 + $0x1a8] sm:$0xff]
    %v101 = vld [vmem:[%s0 + $0x1b0] sm:$0xff]
    %v102 = vld [vmem:[%s0 + $0x1b8] sm:$0xff]
    %v103 = vld [vmem:[%s0 + $0x1c0] sm:$0xff]
    %v104 = vld [vmem:[%s0 + $0x1c8] sm:$0xff]
    %v105 = vld [vmem:[%s0 + $0x1d0] sm:$0xff]
    %v106 = vld [vmem:[%s0 + $0x1d8] sm:$0xff]
    %v107 = vld [vmem:[%s0 + $0x1e0] sm:$0xff]
    %v108 = vld [vmem:[%s0 + $0x1e8] sm:$0xff]
    %v109 = vld [vmem:[%s0 + $0x1f0] sm:$0xff]
    %v110 = vld [vmem:[%s0 + $0x1f8] sm:$0xff]
    %v111 = vld [vmem:[%s0 + $0x200] sm:$0xff]
    %v112 = vld [vmem:[%s0 + $0x208] sm:$0xff]
    %v113 = vld [vmem:[%s0 + $0x210] sm:$0xff]
    %v114 = vld [vmem:[%s0 + $0x218] sm:$0xff]
    %v115 = vld [vmem:[%s0 + $0x220] sm:$0xff]
    %v116 = vld [vmem:[%s0 + $0x228] sm:$0xff]
    %v117 = vld [vmem:[%s0 + $0x230] sm:$0xff]
    %v118 = vld [vmem:[%s0 + $0x238] sm:$0xff]
    %v119 = vld [vmem:[%s0 + $0x240] sm:$0xff]
    %v120 = vld [vmem:[%s0 + $0x248] sm:$0xff]
    %v121 = vld [vmem:[%s0 + $0x250] sm:$0xff]
    %v122 = vld [vmem:[%s0 + $0x258] sm:$0xff]
    %v123 = vld [vmem:[%s0 + $0x260] sm:$0xff]
    %v124 = vld [vmem:[%s0 + $0x268] sm:$0xff]
    %v125 = vld [vmem:[%s0 + $0x270] sm:$0xff]
    %v126 = vld [vmem:[%s0 + $0x278] sm:$0xff]
    %v127 = vld [vmem:[%s0 + $0x280] sm:$0xff]
    %v128 = vld [vmem:[%s0 + $0x288] sm:$0xff]
    %v129 = vld [vmem:[%s0 + $0x290] sm:$0xff]
    %v130 = vld [vmem:[%s0 + $0x298] sm:$0xff]
    %v131 = vld [vmem:[%s0 + $0x2a0] sm:$0xff]
    %v132 = vld [vmem:[%s0 + $0x2a8] sm:$0xff]
    %v133 = vld [vmem:[%s0 + $0x2b0] sm:$0xff]
    %v134 = vld [vmem:[%s0 + $0x2b8] sm:$0xff]
    %v135 = vld [vmem:[%s0 + $0x2c0] sm:$0xff]
    %v136 = vld [vmem:[%s0 + $0x2c8] sm:$0xff]
    %v137 = vld [vmem:[%s0 + $0x2d0] sm:$0xff]
    %v138 = vld [vmem:[%s0 + $0x2d8] sm:$0xff]
    %v139 = vld [vmem:[%s0 + $0x2e0] sm:$0xff]
    %v140 = vld [vmem:[%s0 + $0x2e8] sm:$0xff]
    %v141 = vld [vmem:[%s0 + $0x2f0] sm:$0xff]
    %v142 = vld [vmem:[%s0 + $0x2f8] sm:$0xff]
    %v143 = vld [vmem:[%s0 + $0x300] sm:$0xff]
    %v144 = vld [vmem:[%s0 + $0x308] sm:$0xff]
    %v145 = vld [vmem:[%s0 + $0x310] sm:$0xff]
    %v146 = vld [vmem:[%s0 + $0x318] sm:$0xff]
    %v147 = vld [vmem:[%s0 + $0x320] sm:$0xff]
    %v148 = vld [vmem:[%s0 + $0x328] sm:$0xff]
    %v149 = vld [vmem:[%s0 + $0x330] sm:$0xff]
    %v150 = vld [vmem:[%s0 + $0x338] sm:$0xff]
    %v151 = vld [vmem:[%s0 + $0x340] sm:$0xff]
    %v152 = vld [vmem:[%s0 + $0x348] sm:$0xff]
    %v153 = vld [vmem:[%s0 + $0x350] sm:$0xff]
    %v154 = vld [vmem:[%s0 + $0x358] sm:$0xff]
    %v155 = vld [vmem:[%s0 + $0x360] sm:$0xff]
    %v156 = vld [vmem:[%s0 + $0x368] sm:$0xff]
    %v157 = vld [vmem:[%s0 + $0x370] sm:$0xff]
    %v158 = vld [vmem:[%s0 + $0x378] sm:$0xff]
    %v159 = vld [vmem:[%s0 + $0x380] sm:$0xff]
    %v160 = vld [vmem:[%s0 + $0x388] sm:$0xff]
    %v161 = vld [vmem:[%s0 + $0x390] sm:$0xff]
    %v162 = vld [vmem:[%s0 + $0x398] sm:$0xff]
    %v163 = vld [vmem:[%s0 + $0x3a0] sm:$0xff]
    %v164 = vld [vmem:[%s0 + $0x3a8] sm:$0xff]
    %v165 = vld [vmem:[%s0 + $0x3b0] sm:$0xff]
    %v166 = vld [vmem:[%s0 + $0x3b8] sm:$0xff]
    %v167 = vld [vmem:[%s0 + $0x3c0] sm:$0xff]
    %v168 = vld [vmem:[%s0 + $0x3c8] sm:$0xff]
    %v169 = vld [vmem:[%s0 + $0x3d0] sm:$0xff]
    %v170 = vld [vmem:[%s0 + $0x3d8] sm:$0xff]
    %v171 = vld [vmem:[%s0 + $0x3e0] sm:$0xff]
    %v172 = vld [vmem:[%s0 + $0x3e8] sm:$0xff]
    %v173 = vld [vmem:[%s0 + $0x3f0] sm:$0xff]
    %v174 = vld [vmem:[%s0 + $0x3f8] sm:$0xff]
    %v175 = vld [vmem:[#allocation2] sm:$0xff]
    %v176 = vld [vmem:[#allocation2 + $0x8] sm:$0xff]
    %v177 = vld [vmem:[#allocation2 + $0x10] sm:$0xff]
    %v178 = vld [vmem:[#allocation2 + $0x18] sm:$0xff]
    %v179 = vld [vmem:[#allocation2 + $0x20] sm:$0xff]
    %v180 = vld [vmem:[#allocation2 + $0x28] sm:$0xff]
    %v181 = vld [vmem:[#allocation2 + $0x30] sm:$0xff]
    %v182 = vld [vmem:[#allocation2 + $0x38] sm:$0xff]
    %v183 = vld [vmem:[#allocation2 + $0x40] sm:$0xff]
    %v184 = vld [vmem:[#allocation2 + $0x48] sm:$0xff]
    %v185 = vld [vmem:[#allocation2 + $0x50] sm:$0xff]
    %v186 = vld [vmem:[#allocation2 + $0x58] sm:$0xff]
    %v187 = vld [vmem:[#allocation2 + $0x60] sm:$0xff]
    %v188 = vld [vmem:[#allocation2 + $0x68] sm:$0xff]
    %v189 = vld [vmem:[#allocation2 + $0x70] sm:$0xff]
    %v190 = vld [vmem:[#allocation2 + $0x78] sm:$0xff]
    %v191 = vld [vmem:[#allocation2 + $0x80] sm:$0xff]
    %v192 = vld [vmem:[#allocation2 + $0x88] sm:$0xff]
    %v193 = vld [vmem:[#allocation2 + $0x90] sm:$0xff]
    %v194 = vld [vmem:[#allocation2 + $0x98] sm:$0xff]
    %v195 = vld [vmem:[#allocation2 + $0xa0] sm:$0xff]
    %v196 = vld [vmem:[#allocation2 + $0xa8] sm:$0xff]
    %v197 = vld [vmem:[#allocation2 + $0xb0] sm:$0xff]
    %v198 = vld [vmem:[#allocation2 + $0xb8] sm:$0xff]
    %v199 = vld [vmem:[#allocation2 + $0xc0] sm:$0xff]
    %v200 = vld [vmem:[#allocation2 + $0xc8] sm:$0xff]
    %v201 = vld [vmem:[#allocation2 + $0xd0] sm:$0xff]
    %v202 = vld [vmem:[#allocation2 + $0xd8] sm:$0xff]
    %v203 = vld [vmem:[#allocation2 + $0xe0] sm:$0xff]
    %v204 = vld [vmem:[#allocation2 + $0xe8] sm:$0xff]
    %v205 = vld [vmem:[#allocation2 + $0xf0] sm:$0xff]
    %v206 = vld [vmem:[#allocation2 + $0xf8] sm:$0xff]
    %v207 = vld [vmem:[#allocation2 + $0x100] sm:$0xff]
    %v208 = vld [vmem:[#allocation2 + $0x108] sm:$0xff]
    %v209 = vld [vmem:[#allocation2 + $0x110] sm:$0xff]
    %v210 = vld [vmem:[#allocation2 + $0x118] sm:$0xff]
    %v211 = vld [vmem:[#allocation2 + $0x120] sm:$0xff]
    %v212 = vld [vmem:[#allocation2 + $0x128] sm:$0xff]
    %v213 = vld [vmem:[#allocation2 + $0x130] sm:$0xff]
    %v214 = vld [vmem:[#allocation2 + $0x138] sm:$0xff]
    %v215 = vld [vmem:[#allocation2 + $0x140] sm:$0xff]
    %v216 = vld [vmem:[#allocation2 + $0x148] sm:$0xff]
    %v217 = vld [vmem:[#allocation2 + $0x150] sm:$0xff]
    %v218 = vld [vmem:[#allocation2 + $0x158] sm:$0xff]
    %v219 = vld [vmem:[#allocation2 + $0x160] sm:$0xff]
    %v220 = vld [vmem:[#allocation2 + $0x168] sm:$0xff]
    %v221 = vld [vmem:[#allocation2 + $0x170] sm:$0xff]
    %v222 = vld [vmem:[#allocation2 + $0x178] sm:$0xff]
    %v223 = vld [vmem:[#allocation2 + $0x180] sm:$0xff]
    %v224 = vld [vmem:[#allocation2 + $0x188] sm:$0xff]
    %v225 = vld [vmem:[#allocation2 + $0x190] sm:$0xff]
    %v226 = vld [vmem:[#allocation2 + $0x198] sm:$0xff]
    %v227 = vld [vmem:[#allocation2 + $0x1a0] sm:$0xff]
    %v228 = vld [vmem:[#allocation2 + $0x1a8] sm:$0xff]
    %v229 = vld [vmem:[#allocation2 + $0x1b0] sm:$0xff]
    %v230 = vld [vmem:[#allocation2 + $0x1b8] sm:$0xff]
    %v231 = vld [vmem:[#allocation2 + $0x1c0] sm:$0xff]
    %v232 = vld [vmem:[#allocation2 + $0x1c8] sm:$0xff]
    %v233 = vld [vmem:[#allocation2 + $0x1d0] sm:$0xff]
    %v234 = vld [vmem:[#allocation2 + $0x1d8] sm:$0xff]
    %v235 = vld [vmem:[#allocation2 + $0x1e0] sm:$0xff]
    %v236 = vld [vmem:[#allocation2 + $0x1e8] sm:$0xff]
    %v237 = vld [vmem:[#allocation2 + $0x1f0] sm:$0xff]
    %v238 = vld [vmem:[#allocation2 + $0x1f8] sm:$0xff]
    %v239 = vld [vmem:[#allocation2 + $0x200] sm:$0xff]
    %v240 = vld [vmem:[#allocation2 + $0x208] sm:$0xff]
    %v241 = vld [vmem:[#allocation2 + $0x210] sm:$0xff]
    %v242 = vld [vmem:[#allocation2 + $0x218] sm:$0xff]
    %v243 = vld [vmem:[#allocation2 + $0x220] sm:$0xff]
    %v244 = vld [vmem:[#allocation2 + $0x228] sm:$0xff]
    %v245 = vld [vmem:[#allocation2 + $0x230] sm:$0xff]
    %v246 = vld [vmem:[#allocation2 + $0x238] sm:$0xff]
    %v247 = vld [vmem:[#allocation2 + $0x240] sm:$0xff]
    %v248 = vld [vmem:[#allocation2 + $0x248] sm:$0xff]
    %v249 = vld [vmem:[#allocation2 + $0x250] sm:$0xff]
    %v250 = vld [vmem:[#allocation2 + $0x258] sm:$0xff]
    %v251 = vld [vmem:[#allocation2 + $0x260] sm:$0xff]
    %v252 = vld [vmem:[#allocation2 + $0x268] sm:$0xff]
    %v253 = vld [vmem:[#allocation2 + $0x270] sm:$0xff]
    %v254 = vld [vmem:[#allocation2 + $0x278] sm:$0xff]
    %v255 = vld [vmem:[#allocation2 + $0x280] sm:$0xff]
    %v256 = vld [vmem:[#allocation2 + $0x288] sm:$0xff]
    %v257 = vld [vmem:[#allocation2 + $0x290] sm:$0xff]
    %v258 = vld [vmem:[#allocation2 + $0x298] sm:$0xff]
    %v259 = vld [vmem:[#allocation2 + $0x2a0] sm:$0xff]
    %v260 = vld [vmem:[#allocation2 + $0x2a8] sm:$0xff]
    %v261 = vld [vmem:[#allocation2 + $0x2b0] sm:$0xff]
    %v262 = vld [vmem:[#allocation2 + $0x2b8] sm:$0xff]
    %v263 = vld [vmem:[#allocation2 + $0x2c0] sm:$0xff]
    %v264 = vld [vmem:[#allocation2 + $0x2c8] sm:$0xff]
    %v265 = vld [vmem:[#allocation2 + $0x2d0] sm:$0xff]
    %v266 = vld [vmem:[#allocation2 + $0x2d8] sm:$0xff]
    %v267 = vld [vmem:[#allocation2 + $0x2e0] sm:$0xff]
    %v268 = vld [vmem:[#allocation2 + $0x2e8] sm:$0xff]
    %v269 = vld [vmem:[#allocation2 + $0x2f0] sm:$0xff]
    %v270 = vld [vmem:[#allocation2 + $0x2f8] sm:$0xff]
    %v271 = vld [vmem:[#allocation2 + $0x300] sm:$0xff]
    %v272 = vld [vmem:[#allocation2 + $0x308] sm:$0xff]
    %v273 = vld [vmem:[#allocation2 + $0x310] sm:$0xff]
    %v274 = vld [vmem:[#allocation2 + $0x318] sm:$0xff]
    %v275 = vld [vmem:[#allocation2 + $0x320] sm:$0xff]
    %v276 = vld [vmem:[#allocation2 + $0x328] sm:$0xff]
    %v277 = vld [vmem:[#allocation2 + $0x330] sm:$0xff]
    %v278 = vld [vmem:[#allocation2 + $0x338] sm:$0xff]
    %v279 = vld [vmem:[#allocation2 + $0x340] sm:$0xff]
    %v280 = vld [vmem:[#allocation2 + $0x348] sm:$0xff]
    %v281 = vld [vmem:[#allocation2 + $0x350] sm:$0xff]
    %v282 = vld [vmem:[#allocation2 + $0x358] sm:$0xff]
    %v283 = vld [vmem:[#allocation2 + $0x360] sm:$0xff]
    %v284 = vld [vmem:[#allocation2 + $0x368] sm:$0xff]
    %v285 = vld [vmem:[#allocation2 + $0x370] sm:$0xff]
    %v286 = vld [vmem:[#allocation2 + $0x378] sm:$0xff]
    %v287 = vld [vmem:[#allocation2 + $0x380] sm:$0xff]
    %v288 = vld [vmem:[#allocation2 + $0x388] sm:$0xff]
    %v289 = vld [vmem:[#allocation2 + $0x390] sm:$0xff]
    %v290 = vld [vmem:[#allocation2 + $0x398] sm:$0xff]
    %v291 = vld [vmem:[#allocation2 + $0x3a0] sm:$0xff]
    %v292 = vld [vmem:[#allocation2 + $0x3a8] sm:$0xff]
    %v293 = vld [vmem:[#allocation2 + $0x3b0] sm:$0xff]
    %v294 = vld [vmem:[#allocation2 + $0x3b8] sm:$0xff]
    %v295 = vld [vmem:[#allocation2 + $0x3c0] sm:$0xff]
    %v296 = vld [vmem:[#allocation2 + $0x3c8] sm:$0xff]
    %v297 = vld [vmem:[#allocation2 + $0x3d0] sm:$0xff]
    %v298 = vld [vmem:[#allocation2 + $0x3d8] sm:$0xff]
    %v299 = vld [vmem:[#allocation2 + $0x3e0] sm:$0xff]
    %v300 = vld [vmem:[#allocation2 + $0x3e8] sm:$0xff]
    %v301 = vld [vmem:[#allocation2 + $0x3f0] sm:$0xff]
    %v302 = vld [vmem:[#allocation2 + $0x3f8] sm:$0xff]
    %303 = vmatpush.msra.mxu0 %v190
    %304 = vmatpush.msra.mxu0 %v189
    %305 = vmatpush.msra.mxu0 %v188
    %306 = vmatpush.msra.mxu0 %v187
    %307 = vmatpush.msra.mxu0 %v186
    %308 = vmatpush.msra.mxu0 %v185
    %309 = vmatpush.msra.mxu0 %v184
    %310 = vmatpush.msra.mxu0 %v183
    %311 = vmatpush.msra.mxu0 %v182
    %312 = vmatpush.msra.mxu0 %v181
    %313 = vmatpush.msra.mxu0 %v180
    %314 = vmatpush.msra.mxu0 %v179
    %315 = vmatpush.msra.mxu0 %v178
    %316 = vmatpush.msra.mxu0 %v177
    %317 = vmatpush.msra.mxu0 %v176
    %318 = vmatpush.msra.mxu0 %v175
    %319 = vmatmul.f32.gmra.mxu0 %v47
    %v320 = vpop.f32.mrf.mxu0
    %v321 = vadd.f32 0.0, %v320
    %322 = vmatmul.f32.gmra.mxu0 %v55
    %v323 = vpop.f32.mrf.mxu0
    %v324 = vadd.f32 0.0, %v323
    %325 = vmatmul.f32.gmra.mxu0 %v63
    %v326 = vpop.f32.mrf.mxu0
    %v327 = vadd.f32 0.0, %v326
    %328 = vmatmul.f32.gmra.mxu0 %v71
    %v329 = vpop.f32.mrf.mxu0
    %v330 = vadd.f32 0.0, %v329
    %331 = vmatmul.f32.gmra.mxu0 %v79
    %v332 = vpop.f32.mrf.mxu0
    %v333 = vadd.f32 0.0, %v332
    %334 = vmatmul.f32.gmra.mxu0 %v87
    %v335 = vpop.f32.mrf.mxu0
    %v336 = vadd.f32 0.0, %v335
    %337 = vmatmul.f32.gmra.mxu0 %v95
    %v338 = vpop.f32.mrf.mxu0
    %v339 = vadd.f32 0.0, %v338
    %340 = vmatmul.f32.gmra.mxu0 %v103
    %v341 = vpop.f32.mrf.mxu0
    %v342 = vadd.f32 0.0, %v341
    %343 = vmatmul.f32.gmra.mxu0 %v111
    %v344 = vpop.f32.mrf.mxu0
    %v345 = vadd.f32 0.0, %v344
    %346 = vmatmul.f32.gmra.mxu0 %v119
    %v347 = vpop.f32.mrf.mxu0
    %v348 = vadd.f32 0.0, %v347
    %349 = vmatmul.f32.gmra.mxu0 %v127
    %v350 = vpop.f32.mrf.mxu0
    %v351 = vadd.f32 0.0, %v350
    %352 = vmatmul.f32.gmra.mxu0 %v135
    %v353 = vpop.f32.mrf.mxu0
    %v354 = vadd.f32 0.0, %v353
    %355 = vmatmul.f32.gmra.mxu0 %v143
    %v356 = vpop.f32.mrf.mxu0
    %v357 = vadd.f32 0.0, %v356
    %358 = vmatmul.f32.gmra.mxu0 %v151
    %v359 = vpop.f32.mrf.mxu0
    %v360 = vadd.f32 0.0, %v359
    %361 = vmatmul.f32.gmra.mxu0 %v159
    %v362 = vpop.f32.mrf.mxu0
    %v363 = vadd.f32 0.0, %v362
    %364 = vmatmul.f32.gmra.mxu0 %v167
    %v365 = vpop.f32.mrf.mxu0
    %v366 = vadd.f32 0.0, %v365
    %367 = vdwg.mxu0
    %368 = vmatpush.msra.mxu0 %v206
    %369 = vmatpush.msra.mxu0 %v205
    %370 = vmatpush.msra.mxu0 %v204
    %371 = vmatpush.msra.mxu0 %v203
    %372 = vmatpush.msra.mxu0 %v202
    %373 = vmatpush.msra.mxu0 %v201
    %374 = vmatpush.msra.mxu0 %v200
    %375 = vmatpush.msra.mxu0 %v199
    %376 = vmatpush.msra.mxu0 %v198
    %377 = vmatpush.msra.mxu0 %v197
    %378 = vmatpush.msra.mxu0 %v196
    %379 = vmatpush.msra.mxu0 %v195
    %380 = vmatpush.msra.mxu0 %v194
    %381 = vmatpush.msra.mxu0 %v193
    %382 = vmatpush.msra.mxu0 %v192
    %383 = vmatpush.msra.mxu0 %v191
    %384 = vmatmul.f32.gmra.mxu0 %v48
    %v385 = vpop.f32.mrf.mxu0
    %v386 = vadd.f32 %v321, %v385
    %387 = vmatmul.f32.gmra.mxu0 %v56
    %v388 = vpop.f32.mrf.mxu0
    %v389 = vadd.f32 %v324, %v388
    %390 = vmatmul.f32.gmra.mxu0 %v64
    %v391 = vpop.f32.mrf.mxu0
    %v392 = vadd.f32 %v327, %v391
    %393 = vmatmul.f32.gmra.mxu0 %v72
    %v394 = vpop.f32.mrf.mxu0
    %v395 = vadd.f32 %v330, %v394
    %396 = vmatmul.f32.gmra.mxu0 %v80
    %v397 = vpop.f32.mrf.mxu0
    %v398 = vadd.f32 %v333, %v397
    %399 = vmatmul.f32.gmra.mxu0 %v88
    %v400 = vpop.f32.mrf.mxu0
    %v401 = vadd.f32 %v336, %v400
    %402 = vmatmul.f32.gmra.mxu0 %v96
    %v403 = vpop.f32.mrf.mxu0
    %v404 = vadd.f32 %v339, %v403
    %405 = vmatmul.f32.gmra.mxu0 %v104
    %v406 = vpop.f32.mrf.mxu0
    %v407 = vadd.f32 %v342, %v406
    %408 = vmatmul.f32.gmra.mxu0 %v112
    %v409 = vpop.f32.mrf.mxu0
    %v410 = vadd.f32 %v345, %v409
    %411 = vmatmul.f32.gmra.mxu0 %v120
    %v412 = vpop.f32.mrf.mxu0
    %v413 = vadd.f32 %v348, %v412
    %414 = vmatmul.f32.gmra.mxu0 %v128
    %v415 = vpop.f32.mrf.mxu0
    %v416 = vadd.f32 %v351, %v415
    %417 = vmatmul.f32.gmra.mxu0 %v136
    %v418 = vpop.f32.mrf.mxu0
    %v419 = vadd.f32 %v354, %v418
    %420 = vmatmul.f32.gmra.mxu0 %v144
    %v421 = vpop.f32.mrf.mxu0
    %v422 = vadd.f32 %v357, %v421
    %423 = vmatmul.f32.gmra.mxu0 %v152
    %v424 = vpop.f32.mrf.mxu0
    %v425 = vadd.f32 %v360, %v424
    %426 = vmatmul.f32.gmra.mxu0 %v160
    %v427 = vpop.f32.mrf.mxu0
    %v428 = vadd.f32 %v363, %v427
    %429 = vmatmul.f32.gmra.mxu0 %v168
    %v430 = vpop.f32.mrf.mxu0
    %v431 = vadd.f32 %v366, %v430
    %432 = vdwg.mxu0
    %433 = vmatpush.msra.mxu0 %v222
    %434 = vmatpush.msra.mxu0 %v221
    %435 = vmatpush.msra.mxu0 %v220
    %436 = vmatpush.msra.mxu0 %v219
    %437 = vmatpush.msra.mxu0 %v218
    %438 = vmatpush.msra.mxu0 %v217
    %439 = vmatpush.msra.mxu0 %v216
    %440 = vmatpush.msra.mxu0 %v215
    %441 = vmatpush.msra.mxu0 %v214
    %442 = vmatpush.msra.mxu0 %v213
    %443 = vmatpush.msra.mxu0 %v212
    %444 = vmatpush.msra.mxu0 %v211
    %445 = vmatpush.msra.mxu0 %v210
    %446 = vmatpush.msra.mxu0 %v209
    %447 = vmatpush.msra.mxu0 %v208
    %448 = vmatpush.msra.mxu0 %v207
    %449 = vmatmul.f32.gmra.mxu0 %v49
    %v450 = vpop.f32.mrf.mxu0
    %v451 = vadd.f32 %v386, %v450
    %452 = vmatmul.f32.gmra.mxu0 %v57
    %v453 = vpop.f32.mrf.mxu0
    %v454 = vadd.f32 %v389, %v453
    %455 = vmatmul.f32.gmra.mxu0 %v65
    %v456 = vpop.f32.mrf.mxu0
    %v457 = vadd.f32 %v392, %v456
    %458 = vmatmul.f32.gmra.mxu0 %v73
    %v459 = vpop.f32.mrf.mxu0
    %v460 = vadd.f32 %v395, %v459
    %461 = vmatmul.f32.gmra.mxu0 %v81
    %v462 = vpop.f32.mrf.mxu0
    %v463 = vadd.f32 %v398, %v462
    %464 = vmatmul.f32.gmra.mxu0 %v89
    %v465 = vpop.f32.mrf.mxu0
    %v466 = vadd.f32 %v401, %v465
    %467 = vmatmul.f32.gmra.mxu0 %v97
    %v468 = vpop.f32.mrf.mxu0
    %v469 = vadd.f32 %v404, %v468
    %470 = vmatmul.f32.gmra.mxu0 %v105
    %v471 = vpop.f32.mrf.mxu0
    %v472 = vadd.f32 %v407, %v471
    %473 = vmatmul.f32.gmra.mxu0 %v113
    %v474 = vpop.f32.mrf.mxu0
    %v475 = vadd.f32 %v410, %v474
    %476 = vmatmul.f32.gmra.mxu0 %v121
    %v477 = vpop.f32.mrf.mxu0
    %v478 = vadd.f32 %v413, %v477
    %479 = vmatmul.f32.gmra.mxu0 %v129
    %v480 = vpop.f32.mrf.mxu0
    %v481 = vadd.f32 %v416, %v480
    %482 = vmatmul.f32.gmra.mxu0 %v137
    %v483 = vpop.f32.mrf.mxu0
    %v484 = vadd.f32 %v419, %v483
    %485 = vmatmul.f32.gmra.mxu0 %v145
    %v486 = vpop.f32.mrf.mxu0
    %v487 = vadd.f32 %v422, %v486
    %488 = vmatmul.f32.gmra.mxu0 %v153
    %v489 = vpop.f32.mrf.mxu0
    %v490 = vadd.f32 %v425, %v489
    %491 = vmatmul.f32.gmra.mxu0 %v161
    %v492 = vpop.f32.mrf.mxu0
    %v493 = vadd.f32 %v428, %v492
    %494 = vmatmul.f32.gmra.mxu0 %v169
    %v495 = vpop.f32.mrf.mxu0
    %v496 = vadd.f32 %v431, %v495
    %497 = vdwg.mxu0
    %498 = vmatpush.msra.mxu0 %v238
    %499 = vmatpush.msra.mxu0 %v237
    %500 = vmatpush.msra.mxu0 %v236
    %501 = vmatpush.msra.mxu0 %v235
    %502 = vmatpush.msra.mxu0 %v234
    %503 = vmatpush.msra.mxu0 %v233
    %504 = vmatpush.msra.mxu0 %v232
    %505 = vmatpush.msra.mxu0 %v231
    %506 = vmatpush.msra.mxu0 %v230
    %507 = vmatpush.msra.mxu0 %v229
    %508 = vmatpush.msra.mxu0 %v228
    %509 = vmatpush.msra.mxu0 %v227
    %510 = vmatpush.msra.mxu0 %v226
    %511 = vmatpush.msra.mxu0 %v225
    %512 = vmatpush.msra.mxu0 %v224
    %513 = vmatpush.msra.mxu0 %v223
    %514 = vmatmul.f32.gmra.mxu0 %v50
    %v515 = vpop.f32.mrf.mxu0
    %v516 = vadd.f32 %v451, %v515
    %517 = vmatmul.f32.gmra.mxu0 %v58
    %v518 = vpop.f32.mrf.mxu0
    %v519 = vadd.f32 %v454, %v518
    %520 = vmatmul.f32.gmra.mxu0 %v66
    %v521 = vpop.f32.mrf.mxu0
    %v522 = vadd.f32 %v457, %v521
    %523 = vmatmul.f32.gmra.mxu0 %v74
    %v524 = vpop.f32.mrf.mxu0
    %v525 = vadd.f32 %v460, %v524
    %526 = vmatmul.f32.gmra.mxu0 %v82
    %v527 = vpop.f32.mrf.mxu0
    %v528 = vadd.f32 %v463, %v527
    %529 = vmatmul.f32.gmra.mxu0 %v90
    %v530 = vpop.f32.mrf.mxu0
    %v531 = vadd.f32 %v466, %v530
    %532 = vmatmul.f32.gmra.mxu0 %v98
    %v533 = vpop.f32.mrf.mxu0
    %v534 = vadd.f32 %v469, %v533
    %535 = vmatmul.f32.gmra.mxu0 %v106
    %v536 = vpop.f32.mrf.mxu0
    %v537 = vadd.f32 %v472, %v536
    %538 = vmatmul.f32.gmra.mxu0 %v114
    %v539 = vpop.f32.mrf.mxu0
    %v540 = vadd.f32 %v475, %v539
    %541 = vmatmul.f32.gmra.mxu0 %v122
    %v542 = vpop.f32.mrf.mxu0
    %v543 = vadd.f32 %v478, %v542
    %544 = vmatmul.f32.gmra.mxu0 %v130
    %v545 = vpop.f32.mrf.mxu0
    %v546 = vadd.f32 %v481, %v545
    %547 = vmatmul.f32.gmra.mxu0 %v138
    %v548 = vpop.f32.mrf.mxu0
    %v549 = vadd.f32 %v484, %v548
    %550 = vmatmul.f32.gmra.mxu0 %v146
    %v551 = vpop.f32.mrf.mxu0
    %v552 = vadd.f32 %v487, %v551
    %553 = vmatmul.f32.gmra.mxu0 %v154
    %v554 = vpop.f32.mrf.mxu0
    %v555 = vadd.f32 %v490, %v554
    %556 = vmatmul.f32.gmra.mxu0 %v162
    %v557 = vpop.f32.mrf.mxu0
    %v558 = vadd.f32 %v493, %v557
    %559 = vmatmul.f32.gmra.mxu0 %v170
    %v560 = vpop.f32.mrf.mxu0
    %v561 = vadd.f32 %v496, %v560
    %562 = vdwg.mxu0
    %563 = vmatpush.msra.mxu0 %v254
    %564 = vmatpush.msra.mxu0 %v253
    %565 = vmatpush.msra.mxu0 %v252
    %566 = vmatpush.msra.mxu0 %v251
    %567 = vmatpush.msra.mxu0 %v250
    %568 = vmatpush.msra.mxu0 %v249
    %569 = vmatpush.msra.mxu0 %v248
    %570 = vmatpush.msra.mxu0 %v247
    %571 = vmatpush.msra.mxu0 %v246
    %572 = vmatpush.msra.mxu0 %v245
    %573 = vmatpush.msra.mxu0 %v244
    %574 = vmatpush.msra.mxu0 %v243
    %575 = vmatpush.msra.mxu0 %v242
    %576 = vmatpush.msra.mxu0 %v241
    %577 = vmatpush.msra.mxu0 %v240
    %578 = vmatpush.msra.mxu0 %v239
    %579 = vmatmul.f32.gmra.mxu0 %v51
    %v580 = vpop.f32.mrf.mxu0
    %v581 = vadd.f32 %v516, %v580
    %582 = vmatmul.f32.gmra.mxu0 %v59
    %v583 = vpop.f32.mrf.mxu0
    %v584 = vadd.f32 %v519, %v583
    %585 = vmatmul.f32.gmra.mxu0 %v67
    %v586 = vpop.f32.mrf.mxu0
    %v587 = vadd.f32 %v522, %v586
    %588 = vmatmul.f32.gmra.mxu0 %v75
    %v589 = vpop.f32.mrf.mxu0
    %v590 = vadd.f32 %v525, %v589
    %591 = vmatmul.f32.gmra.mxu0 %v83
    %v592 = vpop.f32.mrf.mxu0
    %v593 = vadd.f32 %v528, %v592
    %594 = vmatmul.f32.gmra.mxu0 %v91
    %v595 = vpop.f32.mrf.mxu0
    %v596 = vadd.f32 %v531, %v595
    %597 = vmatmul.f32.gmra.mxu0 %v99
    %v598 = vpop.f32.mrf.mxu0
    %v599 = vadd.f32 %v534, %v598
    %600 = vmatmul.f32.gmra.mxu0 %v107
    %v601 = vpop.f32.mrf.mxu0
    %v602 = vadd.f32 %v537, %v601
    %603 = vmatmul.f32.gmra.mxu0 %v115
    %v604 = vpop.f32.mrf.mxu0
    %v605 = vadd.f32 %v540, %v604
    %606 = vmatmul.f32.gmra.mxu0 %v123
    %v607 = vpop.f32.mrf.mxu0
    %v608 = vadd.f32 %v543, %v607
    %609 = vmatmul.f32.gmra.mxu0 %v131
    %v610 = vpop.f32.mrf.mxu0
    %v611 = vadd.f32 %v546, %v610
    %612 = vmatmul.f32.gmra.mxu0 %v139
    %v613 = vpop.f32.mrf.mxu0
    %v614 = vadd.f32 %v549, %v613
    %615 = vmatmul.f32.gmra.mxu0 %v147
    %v616 = vpop.f32.mrf.mxu0
    %v617 = vadd.f32 %v552, %v616
    %618 = vmatmul.f32.gmra.mxu0 %v155
    %v619 = vpop.f32.mrf.mxu0
    %v620 = vadd.f32 %v555, %v619
    %621 = vmatmul.f32.gmra.mxu0 %v163
    %v622 = vpop.f32.mrf.mxu0
    %v623 = vadd.f32 %v558, %v622
    %624 = vmatmul.f32.gmra.mxu0 %v171
    %v625 = vpop.f32.mrf.mxu0
    %v626 = vadd.f32 %v561, %v625
    %627 = vdwg.mxu0
    %628 = vmatpush.msra.mxu0 %v270
    %629 = vmatpush.msra.mxu0 %v269
    %630 = vmatpush.msra.mxu0 %v268
    %631 = vmatpush.msra.mxu0 %v267
    %632 = vmatpush.msra.mxu0 %v266
    %633 = vmatpush.msra.mxu0 %v265
    %634 = vmatpush.msra.mxu0 %v264
    %635 = vmatpush.msra.mxu0 %v263
    %636 = vmatpush.msra.mxu0 %v262
    %637 = vmatpush.msra.mxu0 %v261
    %638 = vmatpush.msra.mxu0 %v260
    %639 = vmatpush.msra.mxu0 %v259
    %640 = vmatpush.msra.mxu0 %v258
    %641 = vmatpush.msra.mxu0 %v257
    %642 = vmatpush.msra.mxu0 %v256
    %643 = vmatpush.msra.mxu0 %v255
    %644 = vmatmul.f32.gmra.mxu0 %v52
    %v645 = vpop.f32.mrf.mxu0
    %v646 = vadd.f32 %v581, %v645
    %647 = vmatmul.f32.gmra.mxu0 %v60
    %v648 = vpop.f32.mrf.mxu0
    %v649 = vadd.f32 %v584, %v648
    %650 = vmatmul.f32.gmra.mxu0 %v68
    %v651 = vpop.f32.mrf.mxu0
    %v652 = vadd.f32 %v587, %v651
    %653 = vmatmul.f32.gmra.mxu0 %v76
    %v654 = vpop.f32.mrf.mxu0
    %v655 = vadd.f32 %v590, %v654
    %656 = vmatmul.f32.gmra.mxu0 %v84
    %v657 = vpop.f32.mrf.mxu0
    %v658 = vadd.f32 %v593, %v657
    %659 = vmatmul.f32.gmra.mxu0 %v92
    %v660 = vpop.f32.mrf.mxu0
    %v661 = vadd.f32 %v596, %v660
    %662 = vmatmul.f32.gmra.mxu0 %v100
    %v663 = vpop.f32.mrf.mxu0
    %v664 = vadd.f32 %v599, %v663
    %665 = vmatmul.f32.gmra.mxu0 %v108
    %v666 = vpop.f32.mrf.mxu0
    %v667 = vadd.f32 %v602, %v666
    %668 = vmatmul.f32.gmra.mxu0 %v116
    %v669 = vpop.f32.mrf.mxu0
    %v670 = vadd.f32 %v605, %v669
    %671 = vmatmul.f32.gmra.mxu0 %v124
    %v672 = vpop.f32.mrf.mxu0
    %v673 = vadd.f32 %v608, %v672
    %674 = vmatmul.f32.gmra.mxu0 %v132
    %v675 = vpop.f32.mrf.mxu0
    %v676 = vadd.f32 %v611, %v675
    %677 = vmatmul.f32.gmra.mxu0 %v140
    %v678 = vpop.f32.mrf.mxu0
    %v679 = vadd.f32 %v614, %v678
    %680 = vmatmul.f32.gmra.mxu0 %v148
    %v681 = vpop.f32.mrf.mxu0
    %v682 = vadd.f32 %v617, %v681
    %683 = vmatmul.f32.gmra.mxu0 %v156
    %v684 = vpop.f32.mrf.mxu0
    %v685 = vadd.f32 %v620, %v684
    %686 = vmatmul.f32.gmra.mxu0 %v164
    %v687 = vpop.f32.mrf.mxu0
    %v688 = vadd.f32 %v623, %v687
    %689 = vmatmul.f32.gmra.mxu0 %v172
    %v690 = vpop.f32.mrf.mxu0
    %v691 = vadd.f32 %v626, %v690
    %692 = vdwg.mxu0
    %693 = vmatpush.msra.mxu0 %v286
    %694 = vmatpush.msra.mxu0 %v285
    %695 = vmatpush.msra.mxu0 %v284
    %696 = vmatpush.msra.mxu0 %v283
    %697 = vmatpush.msra.mxu0 %v282
    %698 = vmatpush.msra.mxu0 %v281
    %699 = vmatpush.msra.mxu0 %v280
    %700 = vmatpush.msra.mxu0 %v279
    %701 = vmatpush.msra.mxu0 %v278
    %702 = vmatpush.msra.mxu0 %v277
    %703 = vmatpush.msra.mxu0 %v276
    %704 = vmatpush.msra.mxu0 %v275
    %705 = vmatpush.msra.mxu0 %v274
    %706 = vmatpush.msra.mxu0 %v273
    %707 = vmatpush.msra.mxu0 %v272
    %708 = vmatpush.msra.mxu0 %v271
    %709 = vmatmul.f32.gmra.mxu0 %v53
    %v710 = vpop.f32.mrf.mxu0
    %v711 = vadd.f32 %v646, %v710
    %712 = vmatmul.f32.gmra.mxu0 %v61
    %v713 = vpop.f32.mrf.mxu0
    %v714 = vadd.f32 %v649, %v713
    %715 = vmatmul.f32.gmra.mxu0 %v69
    %v716 = vpop.f32.mrf.mxu0
    %v717 = vadd.f32 %v652, %v716
    %718 = vmatmul.f32.gmra.mxu0 %v77
    %v719 = vpop.f32.mrf.mxu0
    %v720 = vadd.f32 %v655, %v719
    %721 = vmatmul.f32.gmra.mxu0 %v85
    %v722 = vpop.f32.mrf.mxu0
    %v723 = vadd.f32 %v658, %v722
    %724 = vmatmul.f32.gmra.mxu0 %v93
    %v725 = vpop.f32.mrf.mxu0
    %v726 = vadd.f32 %v661, %v725
    %727 = vmatmul.f32.gmra.mxu0 %v101
    %v728 = vpop.f32.mrf.mxu0
    %v729 = vadd.f32 %v664, %v728
    %730 = vmatmul.f32.gmra.mxu0 %v109
    %v731 = vpop.f32.mrf.mxu0
    %v732 = vadd.f32 %v667, %v731
    %733 = vmatmul.f32.gmra.mxu0 %v117
    %v734 = vpop.f32.mrf.mxu0
    %v735 = vadd.f32 %v670, %v734
    %736 = vmatmul.f32.gmra.mxu0 %v125
    %v737 = vpop.f32.mrf.mxu0
    %v738 = vadd.f32 %v673, %v737
    %739 = vmatmul.f32.gmra.mxu0 %v133
    %v740 = vpop.f32.mrf.mxu0
    %v741 = vadd.f32 %v676, %v740
    %742 = vmatmul.f32.gmra.mxu0 %v141
    %v743 = vpop.f32.mrf.mxu0
    %v744 = vadd.f32 %v679, %v743
    %745 = vmatmul.f32.gmra.mxu0 %v149
    %v746 = vpop.f32.mrf.mxu0
    %v747 = vadd.f32 %v682, %v746
    %748 = vmatmul.f32.gmra.mxu0 %v157
    %v749 = vpop.f32.mrf.mxu0
    %v750 = vadd.f32 %v685, %v749
    %751 = vmatmul.f32.gmra.mxu0 %v165
    %v752 = vpop.f32.mrf.mxu0
    %v753 = vadd.f32 %v688, %v752
    %754 = vmatmul.f32.gmra.mxu0 %v173
    %v755 = vpop.f32.mrf.mxu0
    %v756 = vadd.f32 %v691, %v755
    %757 = vdwg.mxu0
    %758 = vmatpush.msra.mxu0 %v302
    %759 = vmatpush.msra.mxu0 %v301
    %760 = vmatpush.msra.mxu0 %v300
    %761 = vmatpush.msra.mxu0 %v299
    %762 = vmatpush.msra.mxu0 %v298
    %763 = vmatpush.msra.mxu0 %v297
    %764 = vmatpush.msra.mxu0 %v296
    %765 = vmatpush.msra.mxu0 %v295
    %766 = vmatpush.msra.mxu0 %v294
    %767 = vmatpush.msra.mxu0 %v293
    %768 = vmatpush.msra.mxu0 %v292
    %769 = vmatpush.msra.mxu0 %v291
    %770 = vmatpush.msra.mxu0 %v290
    %771 = vmatpush.msra.mxu0 %v289
    %772 = vmatpush.msra.mxu0 %v288
    %773 = vmatpush.msra.mxu0 %v287
    %774 = vmatmul.f32.gmra.mxu0 %v54
    %v775 = vpop.f32.mrf.mxu0
    %v776 = vadd.f32 %v711, %v775
    %777 = vmatmul.f32.gmra.mxu0 %v62
    %v778 = vpop.f32.mrf.mxu0
    %v779 = vadd.f32 %v714, %v778
    %780 = vmatmul.f32.gmra.mxu0 %v70
    %v781 = vpop.f32.mrf.mxu0
    %v782 = vadd.f32 %v717, %v781
    %783 = vmatmul.f32.gmra.mxu0 %v78
    %v784 = vpop.f32.mrf.mxu0
    %v785 = vadd.f32 %v720, %v784
    %786 = vmatmul.f32.gmra.mxu0 %v86
    %v787 = vpop.f32.mrf.mxu0
    %v788 = vadd.f32 %v723, %v787
    %789 = vmatmul.f32.gmra.mxu0 %v94
    %v790 = vpop.f32.mrf.mxu0
    %v791 = vadd.f32 %v726, %v790
    %792 = vmatmul.f32.gmra.mxu0 %v102
    %v793 = vpop.f32.mrf.mxu0
    %v794 = vadd.f32 %v729, %v793
    %795 = vmatmul.f32.gmra.mxu0 %v110
    %v796 = vpop.f32.mrf.mxu0
    %v797 = vadd.f32 %v732, %v796
    %798 = vmatmul.f32.gmra.mxu0 %v118
    %v799 = vpop.f32.mrf.mxu0
    %v800 = vadd.f32 %v735, %v799
    %801 = vmatmul.f32.gmra.mxu0 %v126
    %v802 = vpop.f32.mrf.mxu0
    %v803 = vadd.f32 %v738, %v802
    %804 = vmatmul.f32.gmra.mxu0 %v134
    %v805 = vpop.f32.mrf.mxu0
    %v806 = vadd.f32 %v741, %v805
    %807 = vmatmul.f32.gmra.mxu0 %v142
    %v808 = vpop.f32.mrf.mxu0
    %v809 = vadd.f32 %v744, %v808
    %810 = vmatmul.f32.gmra.mxu0 %v150
    %v811 = vpop.f32.mrf.mxu0
    %v812 = vadd.f32 %v747, %v811
    %813 = vmatmul.f32.gmra.mxu0 %v158
    %v814 = vpop.f32.mrf.mxu0
    %v815 = vadd.f32 %v750, %v814
    %816 = vmatmul.f32.gmra.mxu0 %v166
    %v817 = vpop.f32.mrf.mxu0
    %v818 = vadd.f32 %v753, %v817
    %819 = vmatmul.f32.gmra.mxu0 %v174
    %v820 = vpop.f32.mrf.mxu0
    %v821 = vadd.f32 %v756, %v820
    %822 = vdwg.mxu0
    %v823 = vadd.f32 %v776, %v779
    %v824 = vadd.f32 %v823, %v782
    %v825 = vadd.f32 %v824, %v785
    %v826 = vadd.f32 %v825, %v788
    %v827 = vadd.f32 %v826, %v791
    %v828 = vadd.f32 %v827, %v794
    %v829 = vadd.f32 %v828, %v797
    %v830 = vadd.f32 %v829, %v800
    %v831 = vadd.f32 %v830, %v803
    %v832 = vadd.f32 %v831, %v806
    %v833 = vadd.f32 %v832, %v809
    %v834 = vadd.f32 %v833, %v812
    %v835 = vadd.f32 %v834, %v815
    %v836 = vadd.f32 %v835, %v818
    %v837 = vadd.f32 %v836, %v821
    %v838 = vrot.slane %v837, 4
    %v839 = vadd.f32 %v837, %v838
    %v840 = vrot.slane %v839, 2
    %v841 = vadd.f32 %v839, %v840
    %v842 = vrot.slane %v841, 1
    %v843 = vadd.f32 %v841, %v842
    %v844 = vrcp.pop 128.0
    %v845 = vmul.f32 128.0, %v844
    %v846 = vsub.f32 1.0, %v845
    %v847 = vmul.f32 %v844, %v846
    %v848 = vadd.f32 %v844, %v847
    %vm849 = vweird.f32 %v844
    %v850 = vsel %vm849, %v844, %v848
    %v851 = vmul.f32 %v843, %v850
    %v852 = vsub.f32 %v776, %v851
    %v853 = vsub.f32 %v779, %v851
    %v854 = vsub.f32 %v782, %v851
    %v855 = vsub.f32 %v785, %v851
    %v856 = vsub.f32 %v788, %v851
    %v857 = vsub.f32 %v791, %v851
    %v858 = vsub.f32 %v794, %v851
    %v859 = vsub.f32 %v797, %v851
    %v860 = vsub.f32 %v800, %v851
    %v861 = vsub.f32 %v803, %v851
    %v862 = vsub.f32 %v806, %v851
    %v863 = vsub.f32 %v809, %v851
    %v864 = vsub.f32 %v812, %v851
    %v865 = vsub.f32 %v815, %v851
    %v866 = vsub.f32 %v818, %v851
    %v867 = vsub.f32 %v821, %v851
    %v868 = vmul.f32 %v852, %v852
    %v869 = vmul.f32 %v853, %v853
    %v870 = vmul.f32 %v854, %v854
    %v871 = vmul.f32 %v855, %v855
    %v872 = vmul.f32 %v856, %v856
    %v873 = vmul.f32 %v857, %v857
    %v874 = vmul.f32 %v858, %v858
    %v875 = vmul.f32 %v859, %v859
    %v876 = vmul.f32 %v860, %v860
    %v877 = vmul.f32 %v861, %v861
    %v878 = vmul.f32 %v862, %v862
    %v879 = vmul.f32 %v863, %v863
    %v880 = vmul.f32 %v864, %v864
    %v881 = vmul.f32 %v865, %v865
    %v882 = vmul.f32 %v866, %v866
    %v883 = vmul.f32 %v867, %v867
    %v884 = vadd.f32 %v868, %v869
    %v885 = vadd.f32 %v884, %v870
    %v886 = vadd.f32 %v885, %v871
    %v887 = vadd.f32 %v886, %v872
    %v888 = vadd.f32 %v887, %v873
    %v889 = vadd.f32 %v888, %v874
    %v890 = vadd.f32 %v889, %v875
    %v891 = vadd.f32 %v890, %v876
    %v892 = vadd.f32 %v891, %v877
    %v893 = vadd.f32 %v892, %v878
    %v894 = vadd.f32 %v893, %v879
    %v895 = vadd.f32 %v894, %v880
    %v896 = vadd.f32 %v895, %v881
    %v897 = vadd.f32 %v896, %v882
    %v898 = vadd.f32 %v897, %v883
    %v899 = vrot.slane %v898, 4
    %v900 = vadd.f32 %v898, %v899
    %v901 = vrot.slane %v900, 2
    %v902 = vadd.f32 %v900, %v901
    %v903 = vrot.slane %v902, 1
    %v904 = vadd.f32 %v902, %v903
    %v905 = vmul.f32 %v904, %v850
    %v906 = vadd.f32 %v905, 1e-05
    %v907 = vrsqrt.pop %v906
    %v908 = vmul.f32 %v907, %v906
    %v909 = vmul.f32 %v908, %v907
    %v910 = vmul.f32 0.5, %v909
    %v911 = vsub.f32 1.5, %v910
    %v912 = vmul.f32 %v907, %v911
    %vm913 = vweird.f32 %v906
    %vm914 = vweird.f32 %v907
    %vm915 = vmor %vm913, %vm914
    %v916 = vsel %vm915, %v907, %v912
    %v917 = vmul.f32 %v852, %v916
    %v918 = vmul.f32 %v853, %v916
    %v919 = vmul.f32 %v854, %v916
    %v920 = vmul.f32 %v855, %v916
    %v921 = vmul.f32 %v856, %v916
    %v922 = vmul.f32 %v857, %v916
    %v923 = vmul.f32 %v858, %v916
    %v924 = vmul.f32 %v859, %v916
    %v925 = vmul.f32 %v860, %v916
    %v926 = vmul.f32 %v861, %v916
    %v927 = vmul.f32 %v862, %v916
    %v928 = vmul.f32 %v863, %v916
    %v929 = vmul.f32 %v864, %v916
    %v930 = vmul.f32 %v865, %v916
    %v931 = vmul.f32 %v866, %v916
    %v932 = vmul.f32 %v867, %v916
    %v933 = vld [vmem:[#allocation4] sm:$0x1]
    %v935 = vperm.slane %v933, 0
    %v937 = vmul.f32 %v917, %v935
    %v938 = vmul.f32 %v918, %v935
    %v939 = vmul.f32 %v919, %v935
    %v940 = vmul.f32 %v920, %v935
    %v941 = vmul.f32 %v921, %v935
    %v942 = vmul.f32 %v922, %v935
    %v943 = vmul.f32 %v923, %v935
    %v944 = vmul.f32 %v924, %v935
    %v945 = vmul.f32 %v925, %v935
    %v946 = vmul.f32 %v926, %v935
    %v947 = vmul.f32 %v927, %v935
    %v948 = vmul.f32 %v928, %v935
    %v949 = vmul.f32 %v929, %v935
    %v950 = vmul.f32 %v930, %v935
    %v951 = vmul.f32 %v931, %v935
    %v952 = vmul.f32 %v932, %v935
    %v953 = vld [vmem:[%s3] sm:$0x1]
    %v955 = vperm.slane %v953, 0
    %v957 = vadd.f32 %v937, %v955
    %v958 = vadd.f32 %v938, %v955
    %v959 = vadd.f32 %v939, %v955
    %v960 = vadd.f32 %v940, %v955
    %v961 = vadd.f32 %v941, %v955
    %v962 = vadd.f32 %v942, %v955
    %v963 = vadd.f32 %v943, %v955
    %v964 = vadd.f32 %v944, %v955
    %v965 = vadd.f32 %v945, %v955
    %v966 = vadd.f32 %v946, %v955
    %v967 = vadd.f32 %v947, %v955
    %v968 = vadd.f32 %v948, %v955
    %v969 = vadd.f32 %v949, %v955
    %v970 = vadd.f32 %v950, %v955
    %v971 = vadd.f32 %v951, %v955
    %v972 = vadd.f32 %v952, %v955
    %vm973 = vcmp.gt.f32.partialorder %v957, 0.0
    %vm974 = vcmp.gt.f32.partialorder %v958, 0.0
    %vm975 = vcmp.gt.f32.partialorder %v959, 0.0
    %vm976 = vcmp.gt.f32.partialorder %v960, 0.0
    %vm977 = vcmp.gt.f32.partialorder %v961, 0.0
    %vm978 = vcmp.gt.f32.partialorder %v962, 0.0
    %vm979 = vcmp.gt.f32.partialorder %v963, 0.0
    %vm980 = vcmp.gt.f32.partialorder %v964, 0.0
    %vm981 = vcmp.gt.f32.partialorder %v965, 0.0
    %vm982 = vcmp.gt.f32.partialorder %v966, 0.0
    %vm983 = vcmp.gt.f32.partialorder %v967, 0.0
    %vm984 = vcmp.gt.f32.partialorder %v968, 0.0
    %vm985 = vcmp.gt.f32.partialorder %v969, 0.0
    %vm986 = vcmp.gt.f32.partialorder %v970, 0.0
    %vm987 = vcmp.gt.f32.partialorder %v971, 0.0
    %vm988 = vcmp.gt.f32.partialorder %v972, 0.0
    %v989 = vmul.f32 %v957, 0.2
    %v990 = vmul.f32 %v958, 0.2
    %v991 = vmul.f32 %v959, 0.2
    %v992 = vmul.f32 %v960, 0.2
    %v993 = vmul.f32 %v961, 0.2
    %v994 = vmul.f32 %v962, 0.2
    %v995 = vmul.f32 %v963, 0.2
    %v996 = vmul.f32 %v964, 0.2
    %v997 = vmul.f32 %v965, 0.2
    %v998 = vmul.f32 %v966, 0.2
    %v999 = vmul.f32 %v967, 0.2
    %v1000 = vmul.f32 %v968, 0.2
    %v1001 = vmul.f32 %v969, 0.2
    %v1002 = vmul.f32 %v970, 0.2
    %v1003 = vmul.f32 %v971, 0.2
    %v1004 = vmul.f32 %v972, 0.2
    %v1005 = vsel %vm973, %v957, %v989
    %v1006 = vsel %vm974, %v958, %v990
    %v1007 = vsel %vm975, %v959, %v991
    %v1008 = vsel %vm976, %v960, %v992
    %v1009 = vsel %vm977, %v961, %v993
    %v1010 = vsel %vm978, %v962, %v994
    %v1011 = vsel %vm979, %v963, %v995
    %v1012 = vsel %vm980, %v964, %v996
    %v1013 = vsel %vm981, %v965, %v997
    %v1014 = vsel %vm982, %v966, %v998
    %v1015 = vsel %vm983, %v967, %v999
    %v1016 = vsel %vm984, %v968, %v1000
    %v1017 = vsel %vm985, %v969, %v1001
    %v1018 = vsel %vm986, %v970, %v1002
    %v1019 = vsel %vm987, %v971, %v1003
    %v1020 = vsel %vm988, %v972, %v1004
    %1021 = vst [vmem:[%s4] sm:$0xff] %v1005
    %1022 = vst [vmem:[%s4 + $0x8] sm:$0xff] %v1006
    %1023 = vst [vmem:[%s4 + $0x10] sm:$0xff] %v1007
    %1024 = vst [vmem:[%s4 + $0x18] sm:$0xff] %v1008
    %1025 = vst [vmem:[%s4 + $0x20] sm:$0xff] %v1009
    %1026 = vst [vmem:[%s4 + $0x28] sm:$0xff] %v1010
    %1027 = vst [vmem:[%s4 + $0x30] sm:$0xff] %v1011
    %1028 = vst [vmem:[%s4 + $0x38] sm:$0xff] %v1012
    %1029 = vst [vmem:[%s4 + $0x40] sm:$0xff] %v1013
    %1030 = vst [vmem:[%s4 + $0x48] sm:$0xff] %v1014
    %1031 = vst [vmem:[%s4 + $0x50] sm:$0xff] %v1015
    %1032 = vst [vmem:[%s4 + $0x58] sm:$0xff] %v1016
    %1033 = vst [vmem:[%s4 + $0x60] sm:$0xff] %v1017
    %1034 = vst [vmem:[%s4 + $0x68] sm:$0xff] %v1018
    %1035 = vst [vmem:[%s4 + $0x70] sm:$0xff] %v1019
    %1036 = vst [vmem:[%s4 + $0x78] sm:$0xff] %v1020
    // Predicated region
    $region26: #{_apply.6} parent=1 // pred_check
      _
    $region27: #{_apply.6} parent=1 // pred_check_branch
      %1038 = sbr.rel (0) target = $region29
    $region28: #{_apply.6} parent=1 // pred_region
      _
    $region29: #{_apply.6} parent=1 // pred_fallthru
      _
    // Predicated region
    $region30: #{_apply.6} parent=1 // pred_check
      _
    $region31: #{_apply.6} parent=1 // pred_check_branch
      %1040 = sbr.rel (0) target = $region33
    $region32: #{_apply.6} parent=1 // pred_region
      _
    $region33: #{_apply.6} parent=1 // pred_fallthru
      _
    %1041 = vsyncpa [#allocation3], 1
    %1042 = vsyncpa [#allocation5], 1

// kernel: _apply.7
$region0: #{_apply.7}
  #allocation0 [shape = 'u32[]', space=smem, size = 0x4, offset = 0x4, fixed_abs, tag = 'smem constant byte address 0x4 - core index']
  #allocation1 [shape = 'u32[72,128]{1,0:T(1,128)}', space=vmem, size = 0x9000, scoped, tag = 'internal scratch']
  %s0 = inlined_call_operand.vmem [shape: f32[512,512], index: 0, kind: input, shape index: {}]
  %s1 = inlined_call_operand.vmem [shape: f32[512,128], index: 1, kind: input, shape index: {}]
  %s2 = inlined_call_operand.vmem [shape: f32[1,128], index: 2, kind: input, shape index: {}]
  %s3 = inlined_call_operand.vmem [shape: f32[1,128], index: 3, kind: input, shape index: {}]
  %s4 = inlined_call_operand.vmem [shape: f32[512,128], index: 4, kind: output, shape index: {}]
  %s5 = sld [smem:[#allocation0]]
  $region26: #{_apply.7} parent=0
    _
  %s7 = ssub.s32 1, %s5
  %s8 = scalar_select 0, %s7, %s5
  // Predicated region
  $region2: #{_apply.7} parent=0 // pred_check
    _
  $region3: #{_apply.7} parent=0 // pred_check_branch
    %10 = sbr.rel (0) target = $region5
  $region4: #{_apply.7} parent=0 // pred_region
    _
  $region5: #{_apply.7} parent=0 // pred_fallthru
    _
  // Predicated region
  $region6: #{_apply.7} parent=0 // pred_check
    _
  $region7: #{_apply.7} parent=0 // pred_check_branch
    %12 = sbr.rel (0) target = $region9
  $region8: #{_apply.7} parent=0 // pred_region
    _
  $region9: #{_apply.7} parent=0 // pred_fallthru
    _
  // Predicated region
  $region10: #{_apply.7} parent=0 // pred_check
    _
  $region11: #{_apply.7} parent=0 // pred_check_branch
    %14 = sbr.rel (0) target = $region13
  $region12: #{_apply.7} parent=0 // pred_region
    _
  $region13: #{_apply.7} parent=0 // pred_fallthru
    _
  // Predicated region
  $region14: #{_apply.7} parent=0 // pred_check
    _
  $region15: #{_apply.7} parent=0 // pred_check_branch
    %16 = sbr.rel (0) target = $region17
  $region16: #{_apply.7} parent=0 // pred_region
    _
  $region17: #{_apply.7} parent=0 // pred_fallthru
    _
  %v17 = vld [vmem:[%s0] sm:$0xff]
  %v18 = vld [vmem:[%s0 + $0x8] sm:$0xff]
  %v19 = vld [vmem:[%s0 + $0x10] sm:$0xff]
  %v20 = vld [vmem:[%s0 + $0x18] sm:$0xff]
  %v21 = vld [vmem:[%s0 + $0x20] sm:$0xff]
  %v22 = vld [vmem:[%s0 + $0x28] sm:$0xff]
  %v23 = vld [vmem:[%s0 + $0x30] sm:$0xff]
  %v24 = vld [vmem:[%s0 + $0x38] sm:$0xff]
  %v25 = vld [vmem:[%s0 + $0x40] sm:$0xff]
  %v26 = vld [vmem:[%s0 + $0x48] sm:$0xff]
  %v27 = vld [vmem:[%s0 + $0x50] sm:$0xff]
  %v28 = vld [vmem:[%s0 + $0x58] sm:$0xff]
  %v29 = vld [vmem:[%s0 + $0x60] sm:$0xff]
  %v30 = vld [vmem:[%s0 + $0x68] sm:$0xff]
  %v31 = vld [vmem:[%s0 + $0x70] sm:$0xff]
  %v32 = vld [vmem:[%s0 + $0x78] sm:$0xff]
  %v33 = vld [vmem:[%s0 + $0x80] sm:$0xff]
  %v34 = vld [vmem:[%s0 + $0x88] sm:$0xff]
  %v35 = vld [vmem:[%s0 + $0x90] sm:$0xff]
  %v36 = vld [vmem:[%s0 + $0x98] sm:$0xff]
  %v37 = vld [vmem:[%s0 + $0xa0] sm:$0xff]
  %v38 = vld [vmem:[%s0 + $0xa8] sm:$0xff]
  %v39 = vld [vmem:[%s0 + $0xb0] sm:$0xff]
  %v40 = vld [vmem:[%s0 + $0xb8] sm:$0xff]
  %v41 = vld [vmem:[%s0 + $0xc0] sm:$0xff]
  %v42 = vld [vmem:[%s0 + $0xc8] sm:$0xff]
  %v43 = vld [vmem:[%s0 + $0xd0] sm:$0xff]
  %v44 = vld [vmem:[%s0 + $0xd8] sm:$0xff]
  %v45 = vld [vmem:[%s0 + $0xe0] sm:$0xff]
  %v46 = vld [vmem:[%s0 + $0xe8] sm:$0xff]
  %v47 = vld [vmem:[%s0 + $0xf0] sm:$0xff]
  %v48 = vld [vmem:[%s0 + $0xf8] sm:$0xff]
  %v49 = vld [vmem:[%s0 + $0x100] sm:$0xff]
  %v50 = vld [vmem:[%s0 + $0x108] sm:$0xff]
  %v51 = vld [vmem:[%s0 + $0x110] sm:$0xff]
  %v52 = vld [vmem:[%s0 + $0x118] sm:$0xff]
  %v53 = vld [vmem:[%s0 + $0x120] sm:$0xff]
  %v54 = vld [vmem:[%s0 + $0x128] sm:$0xff]
  %v55 = vld [vmem:[%s0 + $0x130] sm:$0xff]
  %v56 = vld [vmem:[%s0 + $0x138] sm:$0xff]
  %v57 = vld [vmem:[%s0 + $0x140] sm:$0xff]
  %v58 = vld [vmem:[%s0 + $0x148] sm:$0xff]
  %v59 = vld [vmem:[%s0 + $0x150] sm:$0xff]
  %v60 = vld [vmem:[%s0 + $0x158] sm:$0xff]
  %v61 = vld [vmem:[%s0 + $0x160] sm:$0xff]
  %v62 = vld [vmem:[%s0 + $0x168] sm:$0xff]
  %v63 = vld [vmem:[%s0 + $0x170] sm:$0xff]
  %v64 = vld [vmem:[%s0 + $0x178] sm:$0xff]
  %v65 = vld [vmem:[%s0 + $0x180] sm:$0xff]
  %v66 = vld [vmem:[%s0 + $0x188] sm:$0xff]
  %v67 = vld [vmem:[%s0 + $0x190] sm:$0xff]
  %v68 = vld [vmem:[%s0 + $0x198] sm:$0xff]
  %v69 = vld [vmem:[%s0 + $0x1a0] sm:$0xff]
  %v70 = vld [vmem:[%s0 + $0x1a8] sm:$0xff]
  %v71 = vld [vmem:[%s0 + $0x1b0] sm:$0xff]
  %v72 = vld [vmem:[%s0 + $0x1b8] sm:$0xff]
  %v73 = vld [vmem:[%s0 + $0x1c0] sm:$0xff]
  %v74 = vld [vmem:[%s0 + $0x1c8] sm:$0xff]
  %v75 = vld [vmem:[%s0 + $0x1d0] sm:$0xff]
  %v76 = vld [vmem:[%s0 + $0x1d8] sm:$0xff]
  %v77 = vld [vmem:[%s0 + $0x1e0] sm:$0xff]
  %v78 = vld [vmem:[%s0 + $0x1e8] sm:$0xff]
  %v79 = vld [vmem:[%s0 + $0x1f0] sm:$0xff]
  %v80 = vld [vmem:[%s0 + $0x1f8] sm:$0xff]
  %v81 = vld [vmem:[%s0 + $0x200] sm:$0xff]
  %v82 = vld [vmem:[%s0 + $0x208] sm:$0xff]
  %v83 = vld [vmem:[%s0 + $0x210] sm:$0xff]
  %v84 = vld [vmem:[%s0 + $0x218] sm:$0xff]
  %v85 = vld [vmem:[%s0 + $0x220] sm:$0xff]
  %v86 = vld [vmem:[%s0 + $0x228] sm:$0xff]
  %v87 = vld [vmem:[%s0 + $0x230] sm:$0xff]
  %v88 = vld [vmem:[%s0 + $0x238] sm:$0xff]
  %v89 = vld [vmem:[%s0 + $0x240] sm:$0xff]
  %v90 = vld [vmem:[%s0 + $0x248] sm:$0xff]
  %v91 = vld [vmem:[%s0 + $0x250] sm:$0xff]
  %v92 = vld [vmem:[%s0 + $0x258] sm:$0xff]
  %v93 = vld [vmem:[%s0 + $0x260] sm:$0xff]
  %v94 = vld [vmem:[%s0 + $0x268] sm:$0xff]
  %v95 = vld [vmem:[%s0 + $0x270] sm:$0xff]
  %v96 = vld [vmem:[%s0 + $0x278] sm:$0xff]
  %v97 = vld [vmem:[%s0 + $0x280] sm:$0xff]
  %v98 = vld [vmem:[%s0 + $0x288] sm:$0xff]
  %v99 = vld [vmem:[%s0 + $0x290] sm:$0xff]
  %v100 = vld [vmem:[%s0 + $0x298] sm:$0xff]
  %v101 = vld [vmem:[%s0 + $0x2a0] sm:$0xff]
  %v102 = vld [vmem:[%s0 + $0x2a8] sm:$0xff]
  %v103 = vld [vmem:[%s0 + $0x2b0] sm:$0xff]
  %v104 = vld [vmem:[%s0 + $0x2b8] sm:$0xff]
  %v105 = vld [vmem:[%s0 + $0x2c0] sm:$0xff]
  %v106 = vld [vmem:[%s0 + $0x2c8] sm:$0xff]
  %v107 = vld [vmem:[%s0 + $0x2d0] sm:$0xff]
  %v108 = vld [vmem:[%s0 + $0x2d8] sm:$0xff]
  %v109 = vld [vmem:[%s0 + $0x2e0] sm:$0xff]
  %v110 = vld [vmem:[%s0 + $0x2e8] sm:$0xff]
  %v111 = vld [vmem:[%s0 + $0x2f0] sm:$0xff]
  %v112 = vld [vmem:[%s0 + $0x2f8] sm:$0xff]
  %v113 = vld [vmem:[%s0 + $0x300] sm:$0xff]
  %v114 = vld [vmem:[%s0 + $0x308] sm:$0xff]
  %v115 = vld [vmem:[%s0 + $0x310] sm:$0xff]
  %v116 = vld [vmem:[%s0 + $0x318] sm:$0xff]
  %v117 = vld [vmem:[%s0 + $0x320] sm:$0xff]
  %v118 = vld [vmem:[%s0 + $0x328] sm:$0xff]
  %v119 = vld [vmem:[%s0 + $0x330] sm:$0xff]
  %v120 = vld [vmem:[%s0 + $0x338] sm:$0xff]
  %v121 = vld [vmem:[%s0 + $0x340] sm:$0xff]
  %v122 = vld [vmem:[%s0 + $0x348] sm:$0xff]
  %v123 = vld [vmem:[%s0 + $0x350] sm:$0xff]
  %v124 = vld [vmem:[%s0 + $0x358] sm:$0xff]
  %v125 = vld [vmem:[%s0 + $0x360] sm:$0xff]
  %v126 = vld [vmem:[%s0 + $0x368] sm:$0xff]
  %v127 = vld [vmem:[%s0 + $0x370] sm:$0xff]
  %v128 = vld [vmem:[%s0 + $0x378] sm:$0xff]
  %v129 = vld [vmem:[%s0 + $0x380] sm:$0xff]
  %v130 = vld [vmem:[%s0 + $0x388] sm:$0xff]
  %v131 = vld [vmem:[%s0 + $0x390] sm:$0xff]
  %v132 = vld [vmem:[%s0 + $0x398] sm:$0xff]
  %v133 = vld [vmem:[%s0 + $0x3a0] sm:$0xff]
  %v134 = vld [vmem:[%s0 + $0x3a8] sm:$0xff]
  %v135 = vld [vmem:[%s0 + $0x3b0] sm:$0xff]
  %v136 = vld [vmem:[%s0 + $0x3b8] sm:$0xff]
  %v137 = vld [vmem:[%s0 + $0x3c0] sm:$0xff]
  %v138 = vld [vmem:[%s0 + $0x3c8] sm:$0xff]
  %v139 = vld [vmem:[%s0 + $0x3d0] sm:$0xff]
  %v140 = vld [vmem:[%s0 + $0x3d8] sm:$0xff]
  %v141 = vld [vmem:[%s0 + $0x3e0] sm:$0xff]
  %v142 = vld [vmem:[%s0 + $0x3e8] sm:$0xff]
  %v143 = vld [vmem:[%s0 + $0x3f0] sm:$0xff]
  %v144 = vld [vmem:[%s0 + $0x3f8] sm:$0xff]
  %v145 = vld [vmem:[%s0 + $0x400] sm:$0xff]
  %v146 = vld [vmem:[%s0 + $0x408] sm:$0xff]
  %v147 = vld [vmem:[%s0 + $0x410] sm:$0xff]
  %v148 = vld [vmem:[%s0 + $0x418] sm:$0xff]
  %v149 = vld [vmem:[%s0 + $0x420] sm:$0xff]
  %v150 = vld [vmem:[%s0 + $0x428] sm:$0xff]
  %v151 = vld [vmem:[%s0 + $0x430] sm:$0xff]
  %v152 = vld [vmem:[%s0 + $0x438] sm:$0xff]
  %v153 = vld [vmem:[%s0 + $0x440] sm:$0xff]
  %v154 = vld [vmem:[%s0 + $0x448] sm:$0xff]
  %v155 = vld [vmem:[%s0 + $0x450] sm:$0xff]
  %v156 = vld [vmem:[%s0 + $0x458] sm:$0xff]
  %v157 = vld [vmem:[%s0 + $0x460] sm:$0xff]
  %v158 = vld [vmem:[%s0 + $0x468] sm:$0xff]
  %v159 = vld [vmem:[%s0 + $0x470] sm:$0xff]
  %v160 = vld [vmem:[%s0 + $0x478] sm:$0xff]
  %v161 = vld [vmem:[%s0 + $0x480] sm:$0xff]
  %v162 = vld [vmem:[%s0 + $0x488] sm:$0xff]
  %v163 = vld [vmem:[%s0 + $0x490] sm:$0xff]
  %v164 = vld [vmem:[%s0 + $0x498] sm:$0xff]
  %v165 = vld [vmem:[%s0 + $0x4a0] sm:$0xff]
  %v166 = vld [vmem:[%s0 + $0x4a8] sm:$0xff]
  %v167 = vld [vmem:[%s0 + $0x4b0] sm:$0xff]
  %v168 = vld [vmem:[%s0 + $0x4b8] sm:$0xff]
  %v169 = vld [vmem:[%s0 + $0x4c0] sm:$0xff]
  %v170 = vld [vmem:[%s0 + $0x4c8] sm:$0xff]
  %v171 = vld [vmem:[%s0 + $0x4d0] sm:$0xff]
  %v172 = vld [vmem:[%s0 + $0x4d8] sm:$0xff]
  %v173 = vld [vmem:[%s0 + $0x4e0] sm:$0xff]
  %v174 = vld [vmem:[%s0 + $0x4e8] sm:$0xff]
  %v175 = vld [vmem:[%s0 + $0x4f0] sm:$0xff]
  %v176 = vld [vmem:[%s0 + $0x4f8] sm:$0xff]
  %v177 = vld [vmem:[%s0 + $0x500] sm:$0xff]
  %v178 = vld [vmem:[%s0 + $0x508] sm:$0xff]
  %v179 = vld [vmem:[%s0 + $0x510] sm:$0xff]
  %v180 = vld [vmem:[%s0 + $0x518] sm:$0xff]
  %v181 = vld [vmem:[%s0 + $0x520] sm:$0xff]
  %v182 = vld [vmem:[%s0 + $0x528] sm:$0xff]
  %v183 = vld [vmem:[%s0 + $0x530] sm:$0xff]
  %v184 = vld [vmem:[%s0 + $0x538] sm:$0xff]
  %v185 = vld [vmem:[%s0 + $0x540] sm:$0xff]
  %v186 = vld [vmem:[%s0 + $0x548] sm:$0xff]
  %v187 = vld [vmem:[%s0 + $0x550] sm:$0xff]
  %v188 = vld [vmem:[%s0 + $0x558] sm:$0xff]
  %v189 = vld [vmem:[%s0 + $0x560] sm:$0xff]
  %v190 = vld [vmem:[%s0 + $0x568] sm:$0xff]
  %v191 = vld [vmem:[%s0 + $0x570] sm:$0xff]
  %v192 = vld [vmem:[%s0 + $0x578] sm:$0xff]
  %v193 = vld [vmem:[%s0 + $0x580] sm:$0xff]
  %v194 = vld [vmem:[%s0 + $0x588] sm:$0xff]
  %v195 = vld [vmem:[%s0 + $0x590] sm:$0xff]
  %v196 = vld [vmem:[%s0 + $0x598] sm:$0xff]
  %v197 = vld [vmem:[%s0 + $0x5a0] sm:$0xff]
  %v198 = vld [vmem:[%s0 + $0x5a8] sm:$0xff]
  %v199 = vld [vmem:[%s0 + $0x5b0] sm:$0xff]
  %v200 = vld [vmem:[%s0 + $0x5b8] sm:$0xff]
  %v201 = vld [vmem:[%s0 + $0x5c0] sm:$0xff]
  %v202 = vld [vmem:[%s0 + $0x5c8] sm:$0xff]
  %v203 = vld [vmem:[%s0 + $0x5d0] sm:$0xff]
  %v204 = vld [vmem:[%s0 + $0x5d8] sm:$0xff]
  %v205 = vld [vmem:[%s0 + $0x5e0] sm:$0xff]
  %v206 = vld [vmem:[%s0 + $0x5e8] sm:$0xff]
  %v207 = vld [vmem:[%s0 + $0x5f0] sm:$0xff]
  %v208 = vld [vmem:[%s0 + $0x5f8] sm:$0xff]
  %v209 = vld [vmem:[%s0 + $0x600] sm:$0xff]
  %v210 = vld [vmem:[%s0 + $0x608] sm:$0xff]
  %v211 = vld [vmem:[%s0 + $0x610] sm:$0xff]
  %v212 = vld [vmem:[%s0 + $0x618] sm:$0xff]
  %v213 = vld [vmem:[%s0 + $0x620] sm:$0xff]
  %v214 = vld [vmem:[%s0 + $0x628] sm:$0xff]
  %v215 = vld [vmem:[%s0 + $0x630] sm:$0xff]
  %v216 = vld [vmem:[%s0 + $0x638] sm:$0xff]
  %v217 = vld [vmem:[%s0 + $0x640] sm:$0xff]
  %v218 = vld [vmem:[%s0 + $0x648] sm:$0xff]
  %v219 = vld [vmem:[%s0 + $0x650] sm:$0xff]
  %v220 = vld [vmem:[%s0 + $0x658] sm:$0xff]
  %v221 = vld [vmem:[%s0 + $0x660] sm:$0xff]
  %v222 = vld [vmem:[%s0 + $0x668] sm:$0xff]
  %v223 = vld [vmem:[%s0 + $0x670] sm:$0xff]
  %v224 = vld [vmem:[%s0 + $0x678] sm:$0xff]
  %v225 = vld [vmem:[%s0 + $0x680] sm:$0xff]
  %v226 = vld [vmem:[%s0 + $0x688] sm:$0xff]
  %v227 = vld [vmem:[%s0 + $0x690] sm:$0xff]
  %v228 = vld [vmem:[%s0 + $0x698] sm:$0xff]
  %v229 = vld [vmem:[%s0 + $0x6a0] sm:$0xff]
  %v230 = vld [vmem:[%s0 + $0x6a8] sm:$0xff]
  %v231 = vld [vmem:[%s0 + $0x6b0] sm:$0xff]
  %v232 = vld [vmem:[%s0 + $0x6b8] sm:$0xff]
  %v233 = vld [vmem:[%s0 + $0x6c0] sm:$0xff]
  %v234 = vld [vmem:[%s0 + $0x6c8] sm:$0xff]
  %v235 = vld [vmem:[%s0 + $0x6d0] sm:$0xff]
  %v236 = vld [vmem:[%s0 + $0x6d8] sm:$0xff]
  %v237 = vld [vmem:[%s0 + $0x6e0] sm:$0xff]
  %v238 = vld [vmem:[%s0 + $0x6e8] sm:$0xff]
  %v239 = vld [vmem:[%s0 + $0x6f0] sm:$0xff]
  %v240 = vld [vmem:[%s0 + $0x6f8] sm:$0xff]
  %v241 = vld [vmem:[%s0 + $0x700] sm:$0xff]
  %v242 = vld [vmem:[%s0 + $0x708] sm:$0xff]
  %v243 = vld [vmem:[%s0 + $0x710] sm:$0xff]
  %v244 = vld [vmem:[%s0 + $0x718] sm:$0xff]
  %v245 = vld [vmem:[%s0 + $0x720] sm:$0xff]
  %v246 = vld [vmem:[%s0 + $0x728] sm:$0xff]
  %v247 = vld [vmem:[%s0 + $0x730] sm:$0xff]
  %v248 = vld [vmem:[%s0 + $0x738] sm:$0xff]
  %v249 = vld [vmem:[%s0 + $0x740] sm:$0xff]
  %v250 = vld [vmem:[%s0 + $0x748] sm:$0xff]
  %v251 = vld [vmem:[%s0 + $0x750] sm:$0xff]
  %v252 = vld [vmem:[%s0 + $0x758] sm:$0xff]
  %v253 = vld [vmem:[%s0 + $0x760] sm:$0xff]
  %v254 = vld [vmem:[%s0 + $0x768] sm:$0xff]
  %v255 = vld [vmem:[%s0 + $0x770] sm:$0xff]
  %v256 = vld [vmem:[%s0 + $0x778] sm:$0xff]
  %v257 = vld [vmem:[%s0 + $0x780] sm:$0xff]
  %v258 = vld [vmem:[%s0 + $0x788] sm:$0xff]
  %v259 = vld [vmem:[%s0 + $0x790] sm:$0xff]
  %v260 = vld [vmem:[%s0 + $0x798] sm:$0xff]
  %v261 = vld [vmem:[%s0 + $0x7a0] sm:$0xff]
  %v262 = vld [vmem:[%s0 + $0x7a8] sm:$0xff]
  %v263 = vld [vmem:[%s0 + $0x7b0] sm:$0xff]
  %v264 = vld [vmem:[%s0 + $0x7b8] sm:$0xff]
  %v265 = vld [vmem:[%s0 + $0x7c0] sm:$0xff]
  %v266 = vld [vmem:[%s0 + $0x7c8] sm:$0xff]
  %v267 = vld [vmem:[%s0 + $0x7d0] sm:$0xff]
  %v268 = vld [vmem:[%s0 + $0x7d8] sm:$0xff]
  %v269 = vld [vmem:[%s0 + $0x7e0] sm:$0xff]
  %v270 = vld [vmem:[%s0 + $0x7e8] sm:$0xff]
  %v271 = vld [vmem:[%s0 + $0x7f0] sm:$0xff]
  %v272 = vld [vmem:[%s0 + $0x7f8] sm:$0xff]
  %v273 = vld [vmem:[%s1] sm:$0xff]
  %v274 = vld [vmem:[%s1 + $0x8] sm:$0xff]
  %v275 = vld [vmem:[%s1 + $0x10] sm:$0xff]
  %v276 = vld [vmem:[%s1 + $0x18] sm:$0xff]
  %v277 = vld [vmem:[%s1 + $0x20] sm:$0xff]
  %v278 = vld [vmem:[%s1 + $0x28] sm:$0xff]
  %v279 = vld [vmem:[%s1 + $0x30] sm:$0xff]
  %v280 = vld [vmem:[%s1 + $0x38] sm:$0xff]
  %v281 = vld [vmem:[%s1 + $0x40] sm:$0xff]
  %v282 = vld [vmem:[%s1 + $0x48] sm:$0xff]
  %v283 = vld [vmem:[%s1 + $0x50] sm:$0xff]
  %v284 = vld [vmem:[%s1 + $0x58] sm:$0xff]
  %v285 = vld [vmem:[%s1 + $0x60] sm:$0xff]
  %v286 = vld [vmem:[%s1 + $0x68] sm:$0xff]
  %v287 = vld [vmem:[%s1 + $0x70] sm:$0xff]
  %v288 = vld [vmem:[%s1 + $0x78] sm:$0xff]
  %v289 = vld [vmem:[%s1 + $0x80] sm:$0xff]
  %v290 = vld [vmem:[%s1 + $0x88] sm:$0xff]
  %v291 = vld [vmem:[%s1 + $0x90] sm:$0xff]
  %v292 = vld [vmem:[%s1 + $0x98] sm:$0xff]
  %v293 = vld [vmem:[%s1 + $0xa0] sm:$0xff]
  %v294 = vld [vmem:[%s1 + $0xa8] sm:$0xff]
  %v295 = vld [vmem:[%s1 + $0xb0] sm:$0xff]
  %v296 = vld [vmem:[%s1 + $0xb8] sm:$0xff]
  %v297 = vld [vmem:[%s1 + $0xc0] sm:$0xff]
  %v298 = vld [vmem:[%s1 + $0xc8] sm:$0xff]
  %v299 = vld [vmem:[%s1 + $0xd0] sm:$0xff]
  %v300 = vld [vmem:[%s1 + $0xd8] sm:$0xff]
  %v301 = vld [vmem:[%s1 + $0xe0] sm:$0xff]
  %v302 = vld [vmem:[%s1 + $0xe8] sm:$0xff]
  %v303 = vld [vmem:[%s1 + $0xf0] sm:$0xff]
  %v304 = vld [vmem:[%s1 + $0xf8] sm:$0xff]
  %v305 = vld [vmem:[%s1 + $0x100] sm:$0xff]
  %v306 = vld [vmem:[%s1 + $0x108] sm:$0xff]
  %v307 = vld [vmem:[%s1 + $0x110] sm:$0xff]
  %v308 = vld [vmem:[%s1 + $0x118] sm:$0xff]
  %v309 = vld [vmem:[%s1 + $0x120] sm:$0xff]
  %v310 = vld [vmem:[%s1 + $0x128] sm:$0xff]
  %v311 = vld [vmem:[%s1 + $0x130] sm:$0xff]
  %v312 = vld [vmem:[%s1 + $0x138] sm:$0xff]
  %v313 = vld [vmem:[%s1 + $0x140] sm:$0xff]
  %v314 = vld [vmem:[%s1 + $0x148] sm:$0xff]
  %v315 = vld [vmem:[%s1 + $0x150] sm:$0xff]
  %v316 = vld [vmem:[%s1 + $0x158] sm:$0xff]
  %v317 = vld [vmem:[%s1 + $0x160] sm:$0xff]
  %v318 = vld [vmem:[%s1 + $0x168] sm:$0xff]
  %v319 = vld [vmem:[%s1 + $0x170] sm:$0xff]
  %v320 = vld [vmem:[%s1 + $0x178] sm:$0xff]
  %v321 = vld [vmem:[%s1 + $0x180] sm:$0xff]
  %v322 = vld [vmem:[%s1 + $0x188] sm:$0xff]
  %v323 = vld [vmem:[%s1 + $0x190] sm:$0xff]
  %v324 = vld [vmem:[%s1 + $0x198] sm:$0xff]
  %v325 = vld [vmem:[%s1 + $0x1a0] sm:$0xff]
  %v326 = vld [vmem:[%s1 + $0x1a8] sm:$0xff]
  %v327 = vld [vmem:[%s1 + $0x1b0] sm:$0xff]
  %v328 = vld [vmem:[%s1 + $0x1b8] sm:$0xff]
  %v329 = vld [vmem:[%s1 + $0x1c0] sm:$0xff]
  %v330 = vld [vmem:[%s1 + $0x1c8] sm:$0xff]
  %v331 = vld [vmem:[%s1 + $0x1d0] sm:$0xff]
  %v332 = vld [vmem:[%s1 + $0x1d8] sm:$0xff]
  %v333 = vld [vmem:[%s1 + $0x1e0] sm:$0xff]
  %v334 = vld [vmem:[%s1 + $0x1e8] sm:$0xff]
  %v335 = vld [vmem:[%s1 + $0x1f0] sm:$0xff]
  %v336 = vld [vmem:[%s1 + $0x1f8] sm:$0xff]
  %337 = vmatpush.msra.mxu0 %v288
  %338 = vmatpush.msra.mxu0 %v287
  %339 = vmatpush.msra.mxu0 %v286
  %340 = vmatpush.msra.mxu0 %v285
  %341 = vmatpush.msra.mxu0 %v284
  %342 = vmatpush.msra.mxu0 %v283
  %343 = vmatpush.msra.mxu0 %v282
  %344 = vmatpush.msra.mxu0 %v281
  %345 = vmatpush.msra.mxu0 %v280
  %346 = vmatpush.msra.mxu0 %v279
  %347 = vmatpush.msra.mxu0 %v278
  %348 = vmatpush.msra.mxu0 %v277
  %349 = vmatpush.msra.mxu0 %v276
  %350 = vmatpush.msra.mxu0 %v275
  %351 = vmatpush.msra.mxu0 %v274
  %352 = vmatpush.msra.mxu0 %v273
  %353 = vmatmul.f32.gmra.mxu0 %v17
  %v354 = vpop.f32.mrf.mxu0
  %v355 = vadd.f32 0.0, %v354
  %356 = vmatmul.f32.gmra.mxu0 %v21
  %v357 = vpop.f32.mrf.mxu0
  %v358 = vadd.f32 0.0, %v357
  %359 = vmatmul.f32.gmra.mxu0 %v25
  %v360 = vpop.f32.mrf.mxu0
  %v361 = vadd.f32 0.0, %v360
  %362 = vmatmul.f32.gmra.mxu0 %v29
  %v363 = vpop.f32.mrf.mxu0
  %v364 = vadd.f32 0.0, %v363
  %365 = vmatmul.f32.gmra.mxu0 %v33
  %v366 = vpop.f32.mrf.mxu0
  %v367 = vadd.f32 0.0, %v366
  %368 = vmatmul.f32.gmra.mxu0 %v37
  %v369 = vpop.f32.mrf.mxu0
  %v370 = vadd.f32 0.0, %v369
  %371 = vmatmul.f32.gmra.mxu0 %v41
  %v372 = vpop.f32.mrf.mxu0
  %v373 = vadd.f32 0.0, %v372
  %374 = vmatmul.f32.gmra.mxu0 %v45
  %v375 = vpop.f32.mrf.mxu0
  %v376 = vadd.f32 0.0, %v375
  %377 = vmatmul.f32.gmra.mxu0 %v49
  %v378 = vpop.f32.mrf.mxu0
  %v379 = vadd.f32 0.0, %v378
  %380 = vmatmul.f32.gmra.mxu0 %v53
  %v381 = vpop.f32.mrf.mxu0
  %v382 = vadd.f32 0.0, %v381
  %383 = vmatmul.f32.gmra.mxu0 %v57
  %v384 = vpop.f32.mrf.mxu0
  %v385 = vadd.f32 0.0, %v384
  %386 = vmatmul.f32.gmra.mxu0 %v61
  %v387 = vpop.f32.mrf.mxu0
  %v388 = vadd.f32 0.0, %v387
  %389 = vmatmul.f32.gmra.mxu0 %v65
  %v390 = vpop.f32.mrf.mxu0
  %v391 = vadd.f32 0.0, %v390
  %392 = vmatmul.f32.gmra.mxu0 %v69
  %v393 = vpop.f32.mrf.mxu0
  %v394 = vadd.f32 0.0, %v393
  %395 = vmatmul.f32.gmra.mxu0 %v73
  %v396 = vpop.f32.mrf.mxu0
  %v397 = vadd.f32 0.0, %v396
  %398 = vmatmul.f32.gmra.mxu0 %v77
  %v399 = vpop.f32.mrf.mxu0
  %v400 = vadd.f32 0.0, %v399
  %401 = vmatmul.f32.gmra.mxu0 %v81
  %v402 = vpop.f32.mrf.mxu0
  %v403 = vadd.f32 0.0, %v402
  %404 = vmatmul.f32.gmra.mxu0 %v85
  %v405 = vpop.f32.mrf.mxu0
  %v406 = vadd.f32 0.0, %v405
  %407 = vmatmul.f32.gmra.mxu0 %v89
  %v408 = vpop.f32.mrf.mxu0
  %v409 = vadd.f32 0.0, %v408
  %410 = vmatmul.f32.gmra.mxu0 %v93
  %v411 = vpop.f32.mrf.mxu0
  %v412 = vadd.f32 0.0, %v411
  %413 = vmatmul.f32.gmra.mxu0 %v97
  %v414 = vpop.f32.mrf.mxu0
  %v415 = vadd.f32 0.0, %v414
  %416 = vmatmul.f32.gmra.mxu0 %v101
  %v417 = vpop.f32.mrf.mxu0
  %v418 = vadd.f32 0.0, %v417
  %419 = vmatmul.f32.gmra.mxu0 %v105
  %v420 = vpop.f32.mrf.mxu0
  %v421 = vadd.f32 0.0, %v420
  %422 = vmatmul.f32.gmra.mxu0 %v109
  %v423 = vpop.f32.mrf.mxu0
  %v424 = vadd.f32 0.0, %v423
  %425 = vmatmul.f32.gmra.mxu0 %v113
  %v426 = vpop.f32.mrf.mxu0
  %v427 = vadd.f32 0.0, %v426
  %428 = vmatmul.f32.gmra.mxu0 %v117
  %v429 = vpop.f32.mrf.mxu0
  %v430 = vadd.f32 0.0, %v429
  %431 = vmatmul.f32.gmra.mxu0 %v121
  %v432 = vpop.f32.mrf.mxu0
  %v433 = vadd.f32 0.0, %v432
  %434 = vmatmul.f32.gmra.mxu0 %v125
  %v435 = vpop.f32.mrf.mxu0
  %v436 = vadd.f32 0.0, %v435
  %437 = vmatmul.f32.gmra.mxu0 %v129
  %v438 = vpop.f32.mrf.mxu0
  %v439 = vadd.f32 0.0, %v438
  %440 = vmatmul.f32.gmra.mxu0 %v133
  %v441 = vpop.f32.mrf.mxu0
  %v442 = vadd.f32 0.0, %v441
  %443 = vmatmul.f32.gmra.mxu0 %v137
  %v444 = vpop.f32.mrf.mxu0
  %v445 = vadd.f32 0.0, %v444
  %446 = vmatmul.f32.gmra.mxu0 %v141
  %v447 = vpop.f32.mrf.mxu0
  %v448 = vadd.f32 0.0, %v447
  %449 = vmatmul.f32.gmra.mxu0 %v145
  %v450 = vpop.f32.mrf.mxu0
  %v451 = vadd.f32 0.0, %v450
  %452 = vmatmul.f32.gmra.mxu0 %v149
  %v453 = vpop.f32.mrf.mxu0
  %v454 = vadd.f32 0.0, %v453
  %455 = vmatmul.f32.gmra.mxu0 %v153
  %v456 = vpop.f32.mrf.mxu0
  %v457 = vadd.f32 0.0, %v456
  %458 = vmatmul.f32.gmra.mxu0 %v157
  %v459 = vpop.f32.mrf.mxu0
  %v460 = vadd.f32 0.0, %v459
  %461 = vmatmul.f32.gmra.mxu0 %v161
  %v462 = vpop.f32.mrf.mxu0
  %v463 = vadd.f32 0.0, %v462
  %464 = vmatmul.f32.gmra.mxu0 %v165
  %v465 = vpop.f32.mrf.mxu0
  %v466 = vadd.f32 0.0, %v465
  %467 = vmatmul.f32.gmra.mxu0 %v169
  %v468 = vpop.f32.mrf.mxu0
  %v469 = vadd.f32 0.0, %v468
  %470 = vmatmul.f32.gmra.mxu0 %v173
  %v471 = vpop.f32.mrf.mxu0
  %v472 = vadd.f32 0.0, %v471
  %473 = vmatmul.f32.gmra.mxu0 %v177
  %v474 = vpop.f32.mrf.mxu0
  %v475 = vadd.f32 0.0, %v474
  %476 = vmatmul.f32.gmra.mxu0 %v181
  %v477 = vpop.f32.mrf.mxu0
  %v478 = vadd.f32 0.0, %v477
  %479 = vmatmul.f32.gmra.mxu0 %v185
  %v480 = vpop.f32.mrf.mxu0
  %v481 = vadd.f32 0.0, %v480
  %482 = vmatmul.f32.gmra.mxu0 %v189
  %v483 = vpop.f32.mrf.mxu0
  %v484 = vadd.f32 0.0, %v483
  %485 = vmatmul.f32.gmra.mxu0 %v193
  %v486 = vpop.f32.mrf.mxu0
  %v487 = vadd.f32 0.0, %v486
  %488 = vmatmul.f32.gmra.mxu0 %v197
  %v489 = vpop.f32.mrf.mxu0
  %v490 = vadd.f32 0.0, %v489
  %491 = vmatmul.f32.gmra.mxu0 %v201
  %v492 = vpop.f32.mrf.mxu0
  %v493 = vadd.f32 0.0, %v492
  %494 = vmatmul.f32.gmra.mxu0 %v205
  %v495 = vpop.f32.mrf.mxu0
  %v496 = vadd.f32 0.0, %v495
  %497 = vmatmul.f32.gmra.mxu0 %v209
  %v498 = vpop.f32.mrf.mxu0
  %v499 = vadd.f32 0.0, %v498
  %500 = vmatmul.f32.gmra.mxu0 %v213
  %v501 = vpop.f32.mrf.mxu0
  %v502 = vadd.f32 0.0, %v501
  %503 = vmatmul.f32.gmra.mxu0 %v217
  %v504 = vpop.f32.mrf.mxu0
  %v505 = vadd.f32 0.0, %v504
  %506 = vmatmul.f32.gmra.mxu0 %v221
  %v507 = vpop.f32.mrf.mxu0
  %v508 = vadd.f32 0.0, %v507
  %509 = vmatmul.f32.gmra.mxu0 %v225
  %v510 = vpop.f32.mrf.mxu0
  %v511 = vadd.f32 0.0, %v510
  %512 = vmatmul.f32.gmra.mxu0 %v229
  %v513 = vpop.f32.mrf.mxu0
  %v514 = vadd.f32 0.0, %v513
  %515 = vmatmul.f32.gmra.mxu0 %v233
  %v516 = vpop.f32.mrf.mxu0
  %v517 = vadd.f32 0.0, %v516
  %518 = vmatmul.f32.gmra.mxu0 %v237
  %v519 = vpop.f32.mrf.mxu0
  %v520 = vadd.f32 0.0, %v519
  %521 = vmatmul.f32.gmra.mxu0 %v241
  %v522 = vpop.f32.mrf.mxu0
  %v523 = vadd.f32 0.0, %v522
  %524 = vmatmul.f32.gmra.mxu0 %v245
  %v525 = vpop.f32.mrf.mxu0
  %v526 = vadd.f32 0.0, %v525
  %527 = vmatmul.f32.gmra.mxu0 %v249
  %v528 = vpop.f32.mrf.mxu0
  %v529 = vadd.f32 0.0, %v528
  %530 = vmatmul.f32.gmra.mxu0 %v253
  %v531 = vpop.f32.mrf.mxu0
  %v532 = vadd.f32 0.0, %v531
  %533 = vmatmul.f32.gmra.mxu0 %v257
  %v534 = vpop.f32.mrf.mxu0
  %v535 = vadd.f32 0.0, %v534
  %536 = vmatmul.f32.gmra.mxu0 %v261
  %v537 = vpop.f32.mrf.mxu0
  %v538 = vadd.f32 0.0, %v537
  %539 = vmatmul.f32.gmra.mxu0 %v265
  %v540 = vpop.f32.mrf.mxu0
  %v541 = vadd.f32 0.0, %v540
  %542 = vmatmul.f32.gmra.mxu0 %v269
  %v543 = vpop.f32.mrf.mxu0
  %v544 = vadd.f32 0.0, %v543
  %545 = vdwg.mxu0
  %546 = vmatpush.msra.mxu0 %v304
  %547 = vmatpush.msra.mxu0 %v303
  %548 = vmatpush.msra.mxu0 %v302
  %549 = vmatpush.msra.mxu0 %v301
  %550 = vmatpush.msra.mxu0 %v300
  %551 = vmatpush.msra.mxu0 %v299
  %552 = vmatpush.msra.mxu0 %v298
  %553 = vmatpush.msra.mxu0 %v297
  %554 = vmatpush.msra.mxu0 %v296
  %555 = vmatpush.msra.mxu0 %v295
  %556 = vmatpush.msra.mxu0 %v294
  %557 = vmatpush.msra.mxu0 %v293
  %558 = vmatpush.msra.mxu0 %v292
  %559 = vmatpush.msra.mxu0 %v291
  %560 = vmatpush.msra.mxu0 %v290
  %561 = vmatpush.msra.mxu0 %v289
  %562 = vmatmul.f32.gmra.mxu0 %v18
  %v563 = vpop.f32.mrf.mxu0
  %v564 = vadd.f32 %v355, %v563
  %565 = vmatmul.f32.gmra.mxu0 %v22
  %v566 = vpop.f32.mrf.mxu0
  %v567 = vadd.f32 %v358, %v566
  %568 = vmatmul.f32.gmra.mxu0 %v26
  %v569 = vpop.f32.mrf.mxu0
  %v570 = vadd.f32 %v361, %v569
  %571 = vmatmul.f32.gmra.mxu0 %v30
  %v572 = vpop.f32.mrf.mxu0
  %v573 = vadd.f32 %v364, %v572
  %574 = vmatmul.f32.gmra.mxu0 %v34
  %v575 = vpop.f32.mrf.mxu0
  %v576 = vadd.f32 %v367, %v575
  %577 = vmatmul.f32.gmra.mxu0 %v38
  %v578 = vpop.f32.mrf.mxu0
  %v579 = vadd.f32 %v370, %v578
  %580 = vmatmul.f32.gmra.mxu0 %v42
  %v581 = vpop.f32.mrf.mxu0
  %v582 = vadd.f32 %v373, %v581
  %583 = vmatmul.f32.gmra.mxu0 %v46
  %v584 = vpop.f32.mrf.mxu0
  %v585 = vadd.f32 %v376, %v584
  %586 = vmatmul.f32.gmra.mxu0 %v50
  %v587 = vpop.f32.mrf.mxu0
  %v588 = vadd.f32 %v379, %v587
  %589 = vmatmul.f32.gmra.mxu0 %v54
  %v590 = vpop.f32.mrf.mxu0
  %v591 = vadd.f32 %v382, %v590
  %592 = vmatmul.f32.gmra.mxu0 %v58
  %v593 = vpop.f32.mrf.mxu0
  %v594 = vadd.f32 %v385, %v593
  %595 = vmatmul.f32.gmra.mxu0 %v62
  %v596 = vpop.f32.mrf.mxu0
  %v597 = vadd.f32 %v388, %v596
  %598 = vmatmul.f32.gmra.mxu0 %v66
  %v599 = vpop.f32.mrf.mxu0
  %v600 = vadd.f32 %v391, %v599
  %601 = vmatmul.f32.gmra.mxu0 %v70
  %v602 = vpop.f32.mrf.mxu0
  %v603 = vadd.f32 %v394, %v602
  %604 = vmatmul.f32.gmra.mxu0 %v74
  %v605 = vpop.f32.mrf.mxu0
  %v606 = vadd.f32 %v397, %v605
  %607 = vmatmul.f32.gmra.mxu0 %v78
  %v608 = vpop.f32.mrf.mxu0
  %v609 = vadd.f32 %v400, %v608
  %610 = vmatmul.f32.gmra.mxu0 %v82
  %v611 = vpop.f32.mrf.mxu0
  %v612 = vadd.f32 %v403, %v611
  %613 = vmatmul.f32.gmra.mxu0 %v86
  %v614 = vpop.f32.mrf.mxu0
  %v615 = vadd.f32 %v406, %v614
  %616 = vmatmul.f32.gmra.mxu0 %v90
  %v617 = vpop.f32.mrf.mxu0
  %v618 = vadd.f32 %v409, %v617
  %619 = vmatmul.f32.gmra.mxu0 %v94
  %v620 = vpop.f32.mrf.mxu0
  %v621 = vadd.f32 %v412, %v620
  %622 = vmatmul.f32.gmra.mxu0 %v98
  %v623 = vpop.f32.mrf.mxu0
  %v624 = vadd.f32 %v415, %v623
  %625 = vmatmul.f32.gmra.mxu0 %v102
  %v626 = vpop.f32.mrf.mxu0
  %v627 = vadd.f32 %v418, %v626
  %628 = vmatmul.f32.gmra.mxu0 %v106
  %v629 = vpop.f32.mrf.mxu0
  %v630 = vadd.f32 %v421, %v629
  %631 = vmatmul.f32.gmra.mxu0 %v110
  %v632 = vpop.f32.mrf.mxu0
  %v633 = vadd.f32 %v424, %v632
  %634 = vmatmul.f32.gmra.mxu0 %v114
  %v635 = vpop.f32.mrf.mxu0
  %v636 = vadd.f32 %v427, %v635
  %637 = vmatmul.f32.gmra.mxu0 %v118
  %v638 = vpop.f32.mrf.mxu0
  %v639 = vadd.f32 %v430, %v638
  %640 = vmatmul.f32.gmra.mxu0 %v122
  %v641 = vpop.f32.mrf.mxu0
  %v642 = vadd.f32 %v433, %v641
  %643 = vmatmul.f32.gmra.mxu0 %v126
  %v644 = vpop.f32.mrf.mxu0
  %v645 = vadd.f32 %v436, %v644
  %646 = vmatmul.f32.gmra.mxu0 %v130
  %v647 = vpop.f32.mrf.mxu0
  %v648 = vadd.f32 %v439, %v647
  %649 = vmatmul.f32.gmra.mxu0 %v134
  %v650 = vpop.f32.mrf.mxu0
  %v651 = vadd.f32 %v442, %v650
  %652 = vmatmul.f32.gmra.mxu0 %v138
  %v653 = vpop.f32.mrf.mxu0
  %v654 = vadd.f32 %v445, %v653
  %655 = vmatmul.f32.gmra.mxu0 %v142
  %v656 = vpop.f32.mrf.mxu0
  %v657 = vadd.f32 %v448, %v656
  %658 = vmatmul.f32.gmra.mxu0 %v146
  %v659 = vpop.f32.mrf.mxu0
  %v660 = vadd.f32 %v451, %v659
  %661 = vmatmul.f32.gmra.mxu0 %v150
  %v662 = vpop.f32.mrf.mxu0
  %v663 = vadd.f32 %v454, %v662
  %664 = vmatmul.f32.gmra.mxu0 %v154
  %v665 = vpop.f32.mrf.mxu0
  %v666 = vadd.f32 %v457, %v665
  %667 = vmatmul.f32.gmra.mxu0 %v158
  %v668 = vpop.f32.mrf.mxu0
  %v669 = vadd.f32 %v460, %v668
  %670 = vmatmul.f32.gmra.mxu0 %v162
  %v671 = vpop.f32.mrf.mxu0
  %v672 = vadd.f32 %v463, %v671
  %673 = vmatmul.f32.gmra.mxu0 %v166
  %v674 = vpop.f32.mrf.mxu0
  %v675 = vadd.f32 %v466, %v674
  %676 = vmatmul.f32.gmra.mxu0 %v170
  %v677 = vpop.f32.mrf.mxu0
  %v678 = vadd.f32 %v469, %v677
  %679 = vmatmul.f32.gmra.mxu0 %v174
  %v680 = vpop.f32.mrf.mxu0
  %v681 = vadd.f32 %v472, %v680
  %682 = vmatmul.f32.gmra.mxu0 %v178
  %v683 = vpop.f32.mrf.mxu0
  %v684 = vadd.f32 %v475, %v683
  %685 = vmatmul.f32.gmra.mxu0 %v182
  %v686 = vpop.f32.mrf.mxu0
  %v687 = vadd.f32 %v478, %v686
  %688 = vmatmul.f32.gmra.mxu0 %v186
  %v689 = vpop.f32.mrf.mxu0
  %v690 = vadd.f32 %v481, %v689
  %691 = vmatmul.f32.gmra.mxu0 %v190
  %v692 = vpop.f32.mrf.mxu0
  %v693 = vadd.f32 %v484, %v692
  %694 = vmatmul.f32.gmra.mxu0 %v194
  %v695 = vpop.f32.mrf.mxu0
  %v696 = vadd.f32 %v487, %v695
  %697 = vmatmul.f32.gmra.mxu0 %v198
  %v698 = vpop.f32.mrf.mxu0
  %v699 = vadd.f32 %v490, %v698
  %700 = vmatmul.f32.gmra.mxu0 %v202
  %v701 = vpop.f32.mrf.mxu0
  %v702 = vadd.f32 %v493, %v701
  %703 = vmatmul.f32.gmra.mxu0 %v206
  %v704 = vpop.f32.mrf.mxu0
  %v705 = vadd.f32 %v496, %v704
  %706 = vmatmul.f32.gmra.mxu0 %v210
  %v707 = vpop.f32.mrf.mxu0
  %v708 = vadd.f32 %v499, %v707
  %709 = vmatmul.f32.gmra.mxu0 %v214
  %v710 = vpop.f32.mrf.mxu0
  %v711 = vadd.f32 %v502, %v710
  %712 = vmatmul.f32.gmra.mxu0 %v218
  %v713 = vpop.f32.mrf.mxu0
  %v714 = vadd.f32 %v505, %v713
  %715 = vmatmul.f32.gmra.mxu0 %v222
  %v716 = vpop.f32.mrf.mxu0
  %v717 = vadd.f32 %v508, %v716
  %718 = vmatmul.f32.gmra.mxu0 %v226
  %v719 = vpop.f32.mrf.mxu0
  %v720 = vadd.f32 %v511, %v719
  %721 = vmatmul.f32.gmra.mxu0 %v230
  %v722 = vpop.f32.mrf.mxu0
  %v723 = vadd.f32 %v514, %v722
  %724 = vmatmul.f32.gmra.mxu0 %v234
  %v725 = vpop.f32.mrf.mxu0
  %v726 = vadd.f32 %v517, %v725
  %727 = vmatmul.f32.gmra.mxu0 %v238
  %v728 = vpop.f32.mrf.mxu0
  %v729 = vadd.f32 %v520, %v728
  %730 = vmatmul.f32.gmra.mxu0 %v242
  %v731 = vpop.f32.mrf.mxu0
  %v732 = vadd.f32 %v523, %v731
  %733 = vmatmul.f32.gmra.mxu0 %v246
  %v734 = vpop.f32.mrf.mxu0
  %v735 = vadd.f32 %v526, %v734
  %736 = vmatmul.f32.gmra.mxu0 %v250
  %v737 = vpop.f32.mrf.mxu0
  %v738 = vadd.f32 %v529, %v737
  %739 = vmatmul.f32.gmra.mxu0 %v254
  %v740 = vpop.f32.mrf.mxu0
  %v741 = vadd.f32 %v532, %v740
  %742 = vmatmul.f32.gmra.mxu0 %v258
  %v743 = vpop.f32.mrf.mxu0
  %v744 = vadd.f32 %v535, %v743
  %745 = vmatmul.f32.gmra.mxu0 %v262
  %v746 = vpop.f32.mrf.mxu0
  %v747 = vadd.f32 %v538, %v746
  %748 = vmatmul.f32.gmra.mxu0 %v266
  %v749 = vpop.f32.mrf.mxu0
  %v750 = vadd.f32 %v541, %v749
  %751 = vmatmul.f32.gmra.mxu0 %v270
  %v752 = vpop.f32.mrf.mxu0
  %v753 = vadd.f32 %v544, %v752
  %754 = vdwg.mxu0
  %755 = vmatpush.msra.mxu0 %v320
  %756 = vmatpush.msra.mxu0 %v319
  %757 = vmatpush.msra.mxu0 %v318
  %758 = vmatpush.msra.mxu0 %v317
  %759 = vmatpush.msra.mxu0 %v316
  %760 = vmatpush.msra.mxu0 %v315
  %761 = vmatpush.msra.mxu0 %v314
  %762 = vmatpush.msra.mxu0 %v313
  %763 = vmatpush.msra.mxu0 %v312
  %764 = vmatpush.msra.mxu0 %v311
  %765 = vmatpush.msra.mxu0 %v310
  %766 = vmatpush.msra.mxu0 %v309
  %767 = vmatpush.msra.mxu0 %v308
  %768 = vmatpush.msra.mxu0 %v307
  %769 = vmatpush.msra.mxu0 %v306
  %770 = vmatpush.msra.mxu0 %v305
  %771 = vmatmul.f32.gmra.mxu0 %v19
  %v772 = vpop.f32.mrf.mxu0
  %v773 = vadd.f32 %v564, %v772
  %774 = vmatmul.f32.gmra.mxu0 %v23
  %v775 = vpop.f32.mrf.mxu0
  %v776 = vadd.f32 %v567, %v775
  %777 = vmatmul.f32.gmra.mxu0 %v27
  %v778 = vpop.f32.mrf.mxu0
  %v779 = vadd.f32 %v570, %v778
  %780 = vmatmul.f32.gmra.mxu0 %v31
  %v781 = vpop.f32.mrf.mxu0
  %v782 = vadd.f32 %v573, %v781
  %783 = vmatmul.f32.gmra.mxu0 %v35
  %v784 = vpop.f32.mrf.mxu0
  %v785 = vadd.f32 %v576, %v784
  %786 = vmatmul.f32.gmra.mxu0 %v39
  %v787 = vpop.f32.mrf.mxu0
  %v788 = vadd.f32 %v579, %v787
  %789 = vmatmul.f32.gmra.mxu0 %v43
  %v790 = vpop.f32.mrf.mxu0
  %v791 = vadd.f32 %v582, %v790
  %792 = vmatmul.f32.gmra.mxu0 %v47
  %v793 = vpop.f32.mrf.mxu0
  %v794 = vadd.f32 %v585, %v793
  %795 = vmatmul.f32.gmra.mxu0 %v51
  %v796 = vpop.f32.mrf.mxu0
  %v797 = vadd.f32 %v588, %v796
  %798 = vmatmul.f32.gmra.mxu0 %v55
  %v799 = vpop.f32.mrf.mxu0
  %v800 = vadd.f32 %v591, %v799
  %801 = vmatmul.f32.gmra.mxu0 %v59
  %v802 = vpop.f32.mrf.mxu0
  %v803 = vadd.f32 %v594, %v802
  %804 = vmatmul.f32.gmra.mxu0 %v63
  %v805 = vpop.f32.mrf.mxu0
  %v806 = vadd.f32 %v597, %v805
  %807 = vmatmul.f32.gmra.mxu0 %v67
  %v808 = vpop.f32.mrf.mxu0
  %v809 = vadd.f32 %v600, %v808
  %810 = vmatmul.f32.gmra.mxu0 %v71
  %v811 = vpop.f32.mrf.mxu0
  %v812 = vadd.f32 %v603, %v811
  %813 = vmatmul.f32.gmra.mxu0 %v75
  %v814 = vpop.f32.mrf.mxu0
  %v815 = vadd.f32 %v606, %v814
  %816 = vmatmul.f32.gmra.mxu0 %v79
  %v817 = vpop.f32.mrf.mxu0
  %v818 = vadd.f32 %v609, %v817
  %819 = vmatmul.f32.gmra.mxu0 %v83
  %v820 = vpop.f32.mrf.mxu0
  %v821 = vadd.f32 %v612, %v820
  %822 = vmatmul.f32.gmra.mxu0 %v87
  %v823 = vpop.f32.mrf.mxu0
  %v824 = vadd.f32 %v615, %v823
  %825 = vmatmul.f32.gmra.mxu0 %v91
  %v826 = vpop.f32.mrf.mxu0
  %v827 = vadd.f32 %v618, %v826
  %828 = vmatmul.f32.gmra.mxu0 %v95
  %v829 = vpop.f32.mrf.mxu0
  %v830 = vadd.f32 %v621, %v829
  %831 = vmatmul.f32.gmra.mxu0 %v99
  %v832 = vpop.f32.mrf.mxu0
  %v833 = vadd.f32 %v624, %v832
  %834 = vmatmul.f32.gmra.mxu0 %v103
  %v835 = vpop.f32.mrf.mxu0
  %v836 = vadd.f32 %v627, %v835
  %837 = vmatmul.f32.gmra.mxu0 %v107
  %v838 = vpop.f32.mrf.mxu0
  %v839 = vadd.f32 %v630, %v838
  %840 = vmatmul.f32.gmra.mxu0 %v111
  %v841 = vpop.f32.mrf.mxu0
  %v842 = vadd.f32 %v633, %v841
  %843 = vmatmul.f32.gmra.mxu0 %v115
  %v844 = vpop.f32.mrf.mxu0
  %v845 = vadd.f32 %v636, %v844
  %846 = vmatmul.f32.gmra.mxu0 %v119
  %v847 = vpop.f32.mrf.mxu0
  %v848 = vadd.f32 %v639, %v847
  %849 = vmatmul.f32.gmra.mxu0 %v123
  %v850 = vpop.f32.mrf.mxu0
  %v851 = vadd.f32 %v642, %v850
  %852 = vmatmul.f32.gmra.mxu0 %v127
  %v853 = vpop.f32.mrf.mxu0
  %v854 = vadd.f32 %v645, %v853
  %855 = vmatmul.f32.gmra.mxu0 %v131
  %v856 = vpop.f32.mrf.mxu0
  %v857 = vadd.f32 %v648, %v856
  %858 = vmatmul.f32.gmra.mxu0 %v135
  %v859 = vpop.f32.mrf.mxu0
  %v860 = vadd.f32 %v651, %v859
  %861 = vmatmul.f32.gmra.mxu0 %v139
  %v862 = vpop.f32.mrf.mxu0
  %v863 = vadd.f32 %v654, %v862
  %864 = vmatmul.f32.gmra.mxu0 %v143
  %v865 = vpop.f32.mrf.mxu0
  %v866 = vadd.f32 %v657, %v865
  %867 = vmatmul.f32.gmra.mxu0 %v147
  %v868 = vpop.f32.mrf.mxu0
  %v869 = vadd.f32 %v660, %v868
  %870 = vmatmul.f32.gmra.mxu0 %v151
  %v871 = vpop.f32.mrf.mxu0
  %v872 = vadd.f32 %v663, %v871
  %873 = vmatmul.f32.gmra.mxu0 %v155
  %v874 = vpop.f32.mrf.mxu0
  %v875 = vadd.f32 %v666, %v874
  %876 = vmatmul.f32.gmra.mxu0 %v159
  %v877 = vpop.f32.mrf.mxu0
  %v878 = vadd.f32 %v669, %v877
  %879 = vmatmul.f32.gmra.mxu0 %v163
  %v880 = vpop.f32.mrf.mxu0
  %v881 = vadd.f32 %v672, %v880
  %882 = vmatmul.f32.gmra.mxu0 %v167
  %v883 = vpop.f32.mrf.mxu0
  %v884 = vadd.f32 %v675, %v883
  %885 = vmatmul.f32.gmra.mxu0 %v171
  %v886 = vpop.f32.mrf.mxu0
  %v887 = vadd.f32 %v678, %v886
  %888 = vmatmul.f32.gmra.mxu0 %v175
  %v889 = vpop.f32.mrf.mxu0
  %v890 = vadd.f32 %v681, %v889
  %891 = vmatmul.f32.gmra.mxu0 %v179
  %v892 = vpop.f32.mrf.mxu0
  %v893 = vadd.f32 %v684, %v892
  %894 = vmatmul.f32.gmra.mxu0 %v183
  %v895 = vpop.f32.mrf.mxu0
  %v896 = vadd.f32 %v687, %v895
  %897 = vmatmul.f32.gmra.mxu0 %v187
  %v898 = vpop.f32.mrf.mxu0
  %v899 = vadd.f32 %v690, %v898
  %900 = vmatmul.f32.gmra.mxu0 %v191
  %v901 = vpop.f32.mrf.mxu0
  %v902 = vadd.f32 %v693, %v901
  %903 = vmatmul.f32.gmra.mxu0 %v195
  %v904 = vpop.f32.mrf.mxu0
  %v905 = vadd.f32 %v696, %v904
  %906 = vmatmul.f32.gmra.mxu0 %v199
  %v907 = vpop.f32.mrf.mxu0
  %v908 = vadd.f32 %v699, %v907
  %909 = vmatmul.f32.gmra.mxu0 %v203
  %v910 = vpop.f32.mrf.mxu0
  %v911 = vadd.f32 %v702, %v910
  %912 = vmatmul.f32.gmra.mxu0 %v207
  %v913 = vpop.f32.mrf.mxu0
  %v914 = vadd.f32 %v705, %v913
  %915 = vmatmul.f32.gmra.mxu0 %v211
  %v916 = vpop.f32.mrf.mxu0
  %v917 = vadd.f32 %v708, %v916
  %918 = vmatmul.f32.gmra.mxu0 %v215
  %v919 = vpop.f32.mrf.mxu0
  %v920 = vadd.f32 %v711, %v919
  %921 = vmatmul.f32.gmra.mxu0 %v219
  %v922 = vpop.f32.mrf.mxu0
  %v923 = vadd.f32 %v714, %v922
  %924 = vmatmul.f32.gmra.mxu0 %v223
  %v925 = vpop.f32.mrf.mxu0
  %v926 = vadd.f32 %v717, %v925
  %927 = vmatmul.f32.gmra.mxu0 %v227
  %v928 = vpop.f32.mrf.mxu0
  %v929 = vadd.f32 %v720, %v928
  %930 = vmatmul.f32.gmra.mxu0 %v231
  %v931 = vpop.f32.mrf.mxu0
  %v932 = vadd.f32 %v723, %v931
  %933 = vmatmul.f32.gmra.mxu0 %v235
  %v934 = vpop.f32.mrf.mxu0
  %v935 = vadd.f32 %v726, %v934
  %936 = vmatmul.f32.gmra.mxu0 %v239
  %v937 = vpop.f32.mrf.mxu0
  %v938 = vadd.f32 %v729, %v937
  %939 = vmatmul.f32.gmra.mxu0 %v243
  %v940 = vpop.f32.mrf.mxu0
  %v941 = vadd.f32 %v732, %v940
  %942 = vmatmul.f32.gmra.mxu0 %v247
  %v943 = vpop.f32.mrf.mxu0
  %v944 = vadd.f32 %v735, %v943
  %945 = vmatmul.f32.gmra.mxu0 %v251
  %v946 = vpop.f32.mrf.mxu0
  %v947 = vadd.f32 %v738, %v946
  %948 = vmatmul.f32.gmra.mxu0 %v255
  %v949 = vpop.f32.mrf.mxu0
  %v950 = vadd.f32 %v741, %v949
  %951 = vmatmul.f32.gmra.mxu0 %v259
  %v952 = vpop.f32.mrf.mxu0
  %v953 = vadd.f32 %v744, %v952
  %954 = vmatmul.f32.gmra.mxu0 %v263
  %v955 = vpop.f32.mrf.mxu0
  %v956 = vadd.f32 %v747, %v955
  %957 = vmatmul.f32.gmra.mxu0 %v267
  %v958 = vpop.f32.mrf.mxu0
  %v959 = vadd.f32 %v750, %v958
  %960 = vmatmul.f32.gmra.mxu0 %v271
  %v961 = vpop.f32.mrf.mxu0
  %v962 = vadd.f32 %v753, %v961
  %963 = vdwg.mxu0
  %964 = vmatpush.msra.mxu0 %v336
  %965 = vmatpush.msra.mxu0 %v335
  %966 = vmatpush.msra.mxu0 %v334
  %967 = vmatpush.msra.mxu0 %v333
  %968 = vmatpush.msra.mxu0 %v332
  %969 = vmatpush.msra.mxu0 %v331
  %970 = vmatpush.msra.mxu0 %v330
  %971 = vmatpush.msra.mxu0 %v329
  %972 = vmatpush.msra.mxu0 %v328
  %973 = vmatpush.msra.mxu0 %v327
  %974 = vmatpush.msra.mxu0 %v326
  %975 = vmatpush.msra.mxu0 %v325
  %976 = vmatpush.msra.mxu0 %v324
  %977 = vmatpush.msra.mxu0 %v323
  %978 = vmatpush.msra.mxu0 %v322
  %979 = vmatpush.msra.mxu0 %v321
  %980 = vmatmul.f32.gmra.mxu0 %v20
  %v981 = vpop.f32.mrf.mxu0
  %v982 = vadd.f32 %v773, %v981
  %983 = vmatmul.f32.gmra.mxu0 %v24
  %v984 = vpop.f32.mrf.mxu0
  %v985 = vadd.f32 %v776, %v984
  %986 = vmatmul.f32.gmra.mxu0 %v28
  %v987 = vpop.f32.mrf.mxu0
  %v988 = vadd.f32 %v779, %v987
  %989 = vmatmul.f32.gmra.mxu0 %v32
  %v990 = vpop.f32.mrf.mxu0
  %v991 = vadd.f32 %v782, %v990
  %992 = vmatmul.f32.gmra.mxu0 %v36
  %v993 = vpop.f32.mrf.mxu0
  %v994 = vadd.f32 %v785, %v993
  %995 = vmatmul.f32.gmra.mxu0 %v40
  %v996 = vpop.f32.mrf.mxu0
  %v997 = vadd.f32 %v788, %v996
  %998 = vmatmul.f32.gmra.mxu0 %v44
  %v999 = vpop.f32.mrf.mxu0
  %v1000 = vadd.f32 %v791, %v999
  %1001 = vmatmul.f32.gmra.mxu0 %v48
  %v1002 = vpop.f32.mrf.mxu0
  %v1003 = vadd.f32 %v794, %v1002
  %1004 = vmatmul.f32.gmra.mxu0 %v52
  %v1005 = vpop.f32.mrf.mxu0
  %v1006 = vadd.f32 %v797, %v1005
  %1007 = vmatmul.f32.gmra.mxu0 %v56
  %v1008 = vpop.f32.mrf.mxu0
  %v1009 = vadd.f32 %v800, %v1008
  %1010 = vmatmul.f32.gmra.mxu0 %v60
  %v1011 = vpop.f32.mrf.mxu0
  %v1012 = vadd.f32 %v803, %v1011
  %1013 = vmatmul.f32.gmra.mxu0 %v64
  %v1014 = vpop.f32.mrf.mxu0
  %v1015 = vadd.f32 %v806, %v1014
  %1016 = vmatmul.f32.gmra.mxu0 %v68
  %v1017 = vpop.f32.mrf.mxu0
  %v1018 = vadd.f32 %v809, %v1017
  %1019 = vmatmul.f32.gmra.mxu0 %v72
  %v1020 = vpop.f32.mrf.mxu0
  %v1021 = vadd.f32 %v812, %v1020
  %1022 = vmatmul.f32.gmra.mxu0 %v76
  %v1023 = vpop.f32.mrf.mxu0
  %v1024 = vadd.f32 %v815, %v1023
  %1025 = vmatmul.f32.gmra.mxu0 %v80
  %v1026 = vpop.f32.mrf.mxu0
  %v1027 = vadd.f32 %v818, %v1026
  %1028 = vmatmul.f32.gmra.mxu0 %v84
  %v1029 = vpop.f32.mrf.mxu0
  %v1030 = vadd.f32 %v821, %v1029
  %1031 = vmatmul.f32.gmra.mxu0 %v88
  %v1032 = vpop.f32.mrf.mxu0
  %v1033 = vadd.f32 %v824, %v1032
  %1034 = vmatmul.f32.gmra.mxu0 %v92
  %v1035 = vpop.f32.mrf.mxu0
  %v1036 = vadd.f32 %v827, %v1035
  %1037 = vmatmul.f32.gmra.mxu0 %v96
  %v1038 = vpop.f32.mrf.mxu0
  %v1039 = vadd.f32 %v830, %v1038
  %1040 = vmatmul.f32.gmra.mxu0 %v100
  %v1041 = vpop.f32.mrf.mxu0
  %v1042 = vadd.f32 %v833, %v1041
  %1043 = vmatmul.f32.gmra.mxu0 %v104
  %v1044 = vpop.f32.mrf.mxu0
  %v1045 = vadd.f32 %v836, %v1044
  %1046 = vmatmul.f32.gmra.mxu0 %v108
  %v1047 = vpop.f32.mrf.mxu0
  %v1048 = vadd.f32 %v839, %v1047
  %1049 = vmatmul.f32.gmra.mxu0 %v112
  %v1050 = vpop.f32.mrf.mxu0
  %v1051 = vadd.f32 %v842, %v1050
  %1052 = vmatmul.f32.gmra.mxu0 %v116
  %v1053 = vpop.f32.mrf.mxu0
  %v1054 = vadd.f32 %v845, %v1053
  %1055 = vmatmul.f32.gmra.mxu0 %v120
  %v1056 = vpop.f32.mrf.mxu0
  %v1057 = vadd.f32 %v848, %v1056
  %1058 = vmatmul.f32.gmra.mxu0 %v124
  %v1059 = vpop.f32.mrf.mxu0
  %v1060 = vadd.f32 %v851, %v1059
  %1061 = vmatmul.f32.gmra.mxu0 %v128
  %v1062 = vpop.f32.mrf.mxu0
  %v1063 = vadd.f32 %v854, %v1062
  %1064 = vmatmul.f32.gmra.mxu0 %v132
  %v1065 = vpop.f32.mrf.mxu0
  %v1066 = vadd.f32 %v857, %v1065
  %1067 = vmatmul.f32.gmra.mxu0 %v136
  %v1068 = vpop.f32.mrf.mxu0
  %v1069 = vadd.f32 %v860, %v1068
  %1070 = vmatmul.f32.gmra.mxu0 %v140
  %v1071 = vpop.f32.mrf.mxu0
  %v1072 = vadd.f32 %v863, %v1071
  %1073 = vmatmul.f32.gmra.mxu0 %v144
  %v1074 = vpop.f32.mrf.mxu0
  %v1075 = vadd.f32 %v866, %v1074
  %1076 = vmatmul.f32.gmra.mxu0 %v148
  %v1077 = vpop.f32.mrf.mxu0
  %v1078 = vadd.f32 %v869, %v1077
  %1079 = vmatmul.f32.gmra.mxu0 %v152
  %v1080 = vpop.f32.mrf.mxu0
  %v1081 = vadd.f32 %v872, %v1080
  %1082 = vmatmul.f32.gmra.mxu0 %v156
  %v1083 = vpop.f32.mrf.mxu0
  %v1084 = vadd.f32 %v875, %v1083
  %1085 = vmatmul.f32.gmra.mxu0 %v160
  %v1086 = vpop.f32.mrf.mxu0
  %v1087 = vadd.f32 %v878, %v1086
  %1088 = vmatmul.f32.gmra.mxu0 %v164
  %v1089 = vpop.f32.mrf.mxu0
  %v1090 = vadd.f32 %v881, %v1089
  %1091 = vmatmul.f32.gmra.mxu0 %v168
  %v1092 = vpop.f32.mrf.mxu0
  %v1093 = vadd.f32 %v884, %v1092
  %1094 = vmatmul.f32.gmra.mxu0 %v172
  %v1095 = vpop.f32.mrf.mxu0
  %v1096 = vadd.f32 %v887, %v1095
  %1097 = vmatmul.f32.gmra.mxu0 %v176
  %v1098 = vpop.f32.mrf.mxu0
  %v1099 = vadd.f32 %v890, %v1098
  %1100 = vmatmul.f32.gmra.mxu0 %v180
  %v1101 = vpop.f32.mrf.mxu0
  %v1102 = vadd.f32 %v893, %v1101
  %1103 = vmatmul.f32.gmra.mxu0 %v184
  %v1104 = vpop.f32.mrf.mxu0
  %v1105 = vadd.f32 %v896, %v1104
  %1106 = vmatmul.f32.gmra.mxu0 %v188
  %v1107 = vpop.f32.mrf.mxu0
  %v1108 = vadd.f32 %v899, %v1107
  %1109 = vmatmul.f32.gmra.mxu0 %v192
  %v1110 = vpop.f32.mrf.mxu0
  %v1111 = vadd.f32 %v902, %v1110
  %1112 = vmatmul.f32.gmra.mxu0 %v196
  %v1113 = vpop.f32.mrf.mxu0
  %v1114 = vadd.f32 %v905, %v1113
  %1115 = vmatmul.f32.gmra.mxu0 %v200
  %v1116 = vpop.f32.mrf.mxu0
  %v1117 = vadd.f32 %v908, %v1116
  %1118 = vmatmul.f32.gmra.mxu0 %v204
  %v1119 = vpop.f32.mrf.mxu0
  %v1120 = vadd.f32 %v911, %v1119
  %1121 = vmatmul.f32.gmra.mxu0 %v208
  %v1122 = vpop.f32.mrf.mxu0
  %v1123 = vadd.f32 %v914, %v1122
  %1124 = vmatmul.f32.gmra.mxu0 %v212
  %v1125 = vpop.f32.mrf.mxu0
  %v1126 = vadd.f32 %v917, %v1125
  %1127 = vmatmul.f32.gmra.mxu0 %v216
  %v1128 = vpop.f32.mrf.mxu0
  %v1129 = vadd.f32 %v920, %v1128
  %1130 = vmatmul.f32.gmra.mxu0 %v220
  %v1131 = vpop.f32.mrf.mxu0
  %v1132 = vadd.f32 %v923, %v1131
  %1133 = vmatmul.f32.gmra.mxu0 %v224
  %v1134 = vpop.f32.mrf.mxu0
  %v1135 = vadd.f32 %v926, %v1134
  %1136 = vmatmul.f32.gmra.mxu0 %v228
  %v1137 = vpop.f32.mrf.mxu0
  %v1138 = vadd.f32 %v929, %v1137
  %1139 = vmatmul.f32.gmra.mxu0 %v232
  %v1140 = vpop.f32.mrf.mxu0
  %v1141 = vadd.f32 %v932, %v1140
  %1142 = vmatmul.f32.gmra.mxu0 %v236
  %v1143 = vpop.f32.mrf.mxu0
  %v1144 = vadd.f32 %v935, %v1143
  %1145 = vmatmul.f32.gmra.mxu0 %v240
  %v1146 = vpop.f32.mrf.mxu0
  %v1147 = vadd.f32 %v938, %v1146
  %1148 = vmatmul.f32.gmra.mxu0 %v244
  %v1149 = vpop.f32.mrf.mxu0
  %v1150 = vadd.f32 %v941, %v1149
  %1151 = vmatmul.f32.gmra.mxu0 %v248
  %v1152 = vpop.f32.mrf.mxu0
  %v1153 = vadd.f32 %v944, %v1152
  %1154 = vmatmul.f32.gmra.mxu0 %v252
  %v1155 = vpop.f32.mrf.mxu0
  %v1156 = vadd.f32 %v947, %v1155
  %1157 = vmatmul.f32.gmra.mxu0 %v256
  %v1158 = vpop.f32.mrf.mxu0
  %v1159 = vadd.f32 %v950, %v1158
  %1160 = vmatmul.f32.gmra.mxu0 %v260
  %v1161 = vpop.f32.mrf.mxu0
  %v1162 = vadd.f32 %v953, %v1161
  %1163 = vmatmul.f32.gmra.mxu0 %v264
  %v1164 = vpop.f32.mrf.mxu0
  %v1165 = vadd.f32 %v956, %v1164
  %1166 = vmatmul.f32.gmra.mxu0 %v268
  %v1167 = vpop.f32.mrf.mxu0
  %v1168 = vadd.f32 %v959, %v1167
  %1169 = vmatmul.f32.gmra.mxu0 %v272
  %v1170 = vpop.f32.mrf.mxu0
  %v1171 = vadd.f32 %v962, %v1170
  %1172 = vdwg.mxu0
  %v1173 = vadd.f32 %v982, %v985
  %v1174 = vadd.f32 %v1173, %v988
  %v1175 = vadd.f32 %v1174, %v991
  %v1176 = vadd.f32 %v1175, %v994
  %v1177 = vadd.f32 %v1176, %v997
  %v1178 = vadd.f32 %v1177, %v1000
  %v1179 = vadd.f32 %v1178, %v1003
  %v1180 = vadd.f32 %v1179, %v1006
  %v1181 = vadd.f32 %v1180, %v1009
  %v1182 = vadd.f32 %v1181, %v1012
  %v1183 = vadd.f32 %v1182, %v1015
  %v1184 = vadd.f32 %v1183, %v1018
  %v1185 = vadd.f32 %v1184, %v1021
  %v1186 = vadd.f32 %v1185, %v1024
  %v1187 = vadd.f32 %v1186, %v1027
  %v1188 = vadd.f32 %v1187, %v1030
  %v1189 = vadd.f32 %v1188, %v1033
  %v1190 = vadd.f32 %v1189, %v1036
  %v1191 = vadd.f32 %v1190, %v1039
  %v1192 = vadd.f32 %v1191, %v1042
  %v1193 = vadd.f32 %v1192, %v1045
  %v1194 = vadd.f32 %v1193, %v1048
  %v1195 = vadd.f32 %v1194, %v1051
  %v1196 = vadd.f32 %v1195, %v1054
  %v1197 = vadd.f32 %v1196, %v1057
  %v1198 = vadd.f32 %v1197, %v1060
  %v1199 = vadd.f32 %v1198, %v1063
  %v1200 = vadd.f32 %v1199, %v1066
  %v1201 = vadd.f32 %v1200, %v1069
  %v1202 = vadd.f32 %v1201, %v1072
  %v1203 = vadd.f32 %v1202, %v1075
  %v1204 = vadd.f32 %v1203, %v1078
  %v1205 = vadd.f32 %v1204, %v1081
  %v1206 = vadd.f32 %v1205, %v1084
  %v1207 = vadd.f32 %v1206, %v1087
  %v1208 = vadd.f32 %v1207, %v1090
  %v1209 = vadd.f32 %v1208, %v1093
  %v1210 = vadd.f32 %v1209, %v1096
  %v1211 = vadd.f32 %v1210, %v1099
  %v1212 = vadd.f32 %v1211, %v1102
  %v1213 = vadd.f32 %v1212, %v1105
  %v1214 = vadd.f32 %v1213, %v1108
  %v1215 = vadd.f32 %v1214, %v1111
  %v1216 = vadd.f32 %v1215, %v1114
  %v1217 = vadd.f32 %v1216, %v1117
  %v1218 = vadd.f32 %v1217, %v1120
  %v1219 = vadd.f32 %v1218, %v1123
  %v1220 = vadd.f32 %v1219, %v1126
  %v1221 = vadd.f32 %v1220, %v1129
  %v1222 = vadd.f32 %v1221, %v1132
  %v1223 = vadd.f32 %v1222, %v1135
  %v1224 = vadd.f32 %v1223, %v1138
  %v1225 = vadd.f32 %v1224, %v1141
  %v1226 = vadd.f32 %v1225, %v1144
  %v1227 = vadd.f32 %v1226, %v1147
  %v1228 = vadd.f32 %v1227, %v1150
  %v1229 = vadd.f32 %v1228, %v1153
  %v1230 = vadd.f32 %v1229, %v1156
  %v1231 = vadd.f32 %v1230, %v1159
  %v1232 = vadd.f32 %v1231, %v1162
  %v1233 = vadd.f32 %v1232, %v1165
  %v1234 = vadd.f32 %v1233, %v1168
  %v1235 = vadd.f32 %v1234, %v1171
  %v1236 = vrot.slane %v1235, 4
  %v1237 = vadd.f32 %v1235, %v1236
  %v1238 = vrot.slane %v1237, 2
  %v1239 = vadd.f32 %v1237, %v1238
  %v1240 = vrot.slane %v1239, 1
  %v1241 = vadd.f32 %v1239, %v1240
  %v1242 = vrcp.pop 512.0
  %v1243 = vmul.f32 512.0, %v1242
  %v1244 = vsub.f32 1.0, %v1243
  %v1245 = vmul.f32 %v1242, %v1244
  %v1246 = vadd.f32 %v1242, %v1245
  %vm1247 = vweird.f32 %v1242
  %v1248 = vsel %vm1247, %v1242, %v1246
  %v1249 = vmul.f32 %v1241, %v1248
  %v1250 = vsub.f32 %v982, %v1249
  %v1251 = vsub.f32 %v985, %v1249
  %v1252 = vsub.f32 %v988, %v1249
  %v1253 = vsub.f32 %v991, %v1249
  %v1254 = vsub.f32 %v994, %v1249
  %v1255 = vsub.f32 %v997, %v1249
  %v1256 = vsub.f32 %v1000, %v1249
  %v1257 = vsub.f32 %v1003, %v1249
  %v1258 = vsub.f32 %v1006, %v1249
  %v1259 = vsub.f32 %v1009, %v1249
  %v1260 = vsub.f32 %v1012, %v1249
  %v1261 = vsub.f32 %v1015, %v1249
  %v1262 = vsub.f32 %v1018, %v1249
  %v1263 = vsub.f32 %v1021, %v1249
  %v1264 = vsub.f32 %v1024, %v1249
  %v1265 = vsub.f32 %v1027, %v1249
  %v1266 = vsub.f32 %v1030, %v1249
  %v1267 = vsub.f32 %v1033, %v1249
  %v1268 = vsub.f32 %v1036, %v1249
  %v1269 = vsub.f32 %v1039, %v1249
  %v1270 = vsub.f32 %v1042, %v1249
  %v1271 = vsub.f32 %v1045, %v1249
  %v1272 = vsub.f32 %v1048, %v1249
  %v1273 = vsub.f32 %v1051, %v1249
  %v1274 = vsub.f32 %v1054, %v1249
  %v1275 = vsub.f32 %v1057, %v1249
  %v1276 = vsub.f32 %v1060, %v1249
  %v1277 = vsub.f32 %v1063, %v1249
  %v1278 = vsub.f32 %v1066, %v1249
  %v1279 = vsub.f32 %v1069, %v1249
  %v1280 = vsub.f32 %v1072, %v1249
  %v1281 = vsub.f32 %v1075, %v1249
  %v1282 = vsub.f32 %v1078, %v1249
  %v1283 = vsub.f32 %v1081, %v1249
  %v1284 = vsub.f32 %v1084, %v1249
  %v1285 = vsub.f32 %v1087, %v1249
  %v1286 = vsub.f32 %v1090, %v1249
  %v1287 = vsub.f32 %v1093, %v1249
  %v1288 = vsub.f32 %v1096, %v1249
  %v1289 = vsub.f32 %v1099, %v1249
  %v1290 = vsub.f32 %v1102, %v1249
  %v1291 = vsub.f32 %v1105, %v1249
  %v1292 = vsub.f32 %v1108, %v1249
  %v1293 = vsub.f32 %v1111, %v1249
  %v1294 = vsub.f32 %v1114, %v1249
  %v1295 = vsub.f32 %v1117, %v1249
  %v1296 = vsub.f32 %v1120, %v1249
  %v1297 = vsub.f32 %v1123, %v1249
  %v1298 = vsub.f32 %v1126, %v1249
  %v1299 = vsub.f32 %v1129, %v1249
  %v1300 = vsub.f32 %v1132, %v1249
  %v1301 = vsub.f32 %v1135, %v1249
  %v1302 = vsub.f32 %v1138, %v1249
  %v1303 = vsub.f32 %v1141, %v1249
  %v1304 = vsub.f32 %v1144, %v1249
  %v1305 = vsub.f32 %v1147, %v1249
  %v1306 = vsub.f32 %v1150, %v1249
  %v1307 = vsub.f32 %v1153, %v1249
  %v1308 = vsub.f32 %v1156, %v1249
  %v1309 = vsub.f32 %v1159, %v1249
  %v1310 = vsub.f32 %v1162, %v1249
  %v1311 = vsub.f32 %v1165, %v1249
  %v1312 = vsub.f32 %v1168, %v1249
  %v1313 = vsub.f32 %v1171, %v1249
  %v1314 = vmul.f32 %v1250, %v1250
  %v1315 = vmul.f32 %v1251, %v1251
  %v1316 = vmul.f32 %v1252, %v1252
  %v1317 = vmul.f32 %v1253, %v1253
  %v1318 = vmul.f32 %v1254, %v1254
  %v1319 = vmul.f32 %v1255, %v1255
  %v1320 = vmul.f32 %v1256, %v1256
  %v1321 = vmul.f32 %v1257, %v1257
  %v1322 = vmul.f32 %v1258, %v1258
  %v1323 = vmul.f32 %v1259, %v1259
  %v1324 = vmul.f32 %v1260, %v1260
  %v1325 = vmul.f32 %v1261, %v1261
  %v1326 = vmul.f32 %v1262, %v1262
  %v1327 = vmul.f32 %v1263, %v1263
  %v1328 = vmul.f32 %v1264, %v1264
  %v1329 = vmul.f32 %v1265, %v1265
  %v1330 = vmul.f32 %v1266, %v1266
  %v1331 = vmul.f32 %v1267, %v1267
  %v1332 = vmul.f32 %v1268, %v1268
  %v1333 = vmul.f32 %v1269, %v1269
  %v1334 = vmul.f32 %v1270, %v1270
  %v1335 = vmul.f32 %v1271, %v1271
  %v1336 = vmul.f32 %v1272, %v1272
  %v1337 = vmul.f32 %v1273, %v1273
  %v1338 = vmul.f32 %v1274, %v1274
  %v1339 = vmul.f32 %v1275, %v1275
  %v1340 = vmul.f32 %v1276, %v1276
  %v1341 = vmul.f32 %v1277, %v1277
  %v1342 = vmul.f32 %v1278, %v1278
  %v1343 = vmul.f32 %v1279, %v1279
  %v1344 = vmul.f32 %v1280, %v1280
  %v1345 = vmul.f32 %v1281, %v1281
  %v1346 = vmul.f32 %v1282, %v1282
  %v1347 = vmul.f32 %v1283, %v1283
  %v1348 = vmul.f32 %v1284, %v1284
  %v1349 = vmul.f32 %v1285, %v1285
  %v1350 = vmul.f32 %v1286, %v1286
  %v1351 = vmul.f32 %v1287, %v1287
  %v1352 = vmul.f32 %v1288, %v1288
  %v1353 = vmul.f32 %v1289, %v1289
  %v1354 = vmul.f32 %v1290, %v1290
  %v1355 = vmul.f32 %v1291, %v1291
  %v1356 = vmul.f32 %v1292, %v1292
  %v1357 = vmul.f32 %v1293, %v1293
  %v1358 = vmul.f32 %v1294, %v1294
  %v1359 = vmul.f32 %v1295, %v1295
  %v1360 = vmul.f32 %v1296, %v1296
  %v1361 = vmul.f32 %v1297, %v1297
  %v1362 = vmul.f32 %v1298, %v1298
  %v1363 = vmul.f32 %v1299, %v1299
  %v1364 = vmul.f32 %v1300, %v1300
  %v1365 = vmul.f32 %v1301, %v1301
  %v1366 = vmul.f32 %v1302, %v1302
  %v1367 = vmul.f32 %v1303, %v1303
  %v1368 = vmul.f32 %v1304, %v1304
  %v1369 = vmul.f32 %v1305, %v1305
  %v1370 = vmul.f32 %v1306, %v1306
  %v1371 = vmul.f32 %v1307, %v1307
  %v1372 = vmul.f32 %v1308, %v1308
  %v1373 = vmul.f32 %v1309, %v1309
  %v1374 = vmul.f32 %v1310, %v1310
  %v1375 = vmul.f32 %v1311, %v1311
  %v1376 = vmul.f32 %v1312, %v1312
  %v1377 = vmul.f32 %v1313, %v1313
  %v1378 = vadd.f32 %v1314, %v1315
  %v1379 = vadd.f32 %v1378, %v1316
  %v1380 = vadd.f32 %v1379, %v1317
  %v1381 = vadd.f32 %v1380, %v1318
  %v1382 = vadd.f32 %v1381, %v1319
  %v1383 = vadd.f32 %v1382, %v1320
  %v1384 = vadd.f32 %v1383, %v1321
  %v1385 = vadd.f32 %v1384, %v1322
  %v1386 = vadd.f32 %v1385, %v1323
  %v1387 = vadd.f32 %v1386, %v1324
  %v1388 = vadd.f32 %v1387, %v1325
  %v1389 = vadd.f32 %v1388, %v1326
  %v1390 = vadd.f32 %v1389, %v1327
  %v1391 = vadd.f32 %v1390, %v1328
  %v1392 = vadd.f32 %v1391, %v1329
  %v1393 = vadd.f32 %v1392, %v1330
  %v1394 = vadd.f32 %v1393, %v1331
  %v1395 = vadd.f32 %v1394, %v1332
  %v1396 = vadd.f32 %v1395, %v1333
  %v1397 = vadd.f32 %v1396, %v1334
  %v1398 = vadd.f32 %v1397, %v1335
  %v1399 = vadd.f32 %v1398, %v1336
  %v1400 = vadd.f32 %v1399, %v1337
  %v1401 = vadd.f32 %v1400, %v1338
  %v1402 = vadd.f32 %v1401, %v1339
  %v1403 = vadd.f32 %v1402, %v1340
  %v1404 = vadd.f32 %v1403, %v1341
  %v1405 = vadd.f32 %v1404, %v1342
  %v1406 = vadd.f32 %v1405, %v1343
  %v1407 = vadd.f32 %v1406, %v1344
  %v1408 = vadd.f32 %v1407, %v1345
  %v1409 = vadd.f32 %v1408, %v1346
  %v1410 = vadd.f32 %v1409, %v1347
  %v1411 = vadd.f32 %v1410, %v1348
  %v1412 = vadd.f32 %v1411, %v1349
  %v1413 = vadd.f32 %v1412, %v1350
  %v1414 = vadd.f32 %v1413, %v1351
  %v1415 = vadd.f32 %v1414, %v1352
  %v1416 = vadd.f32 %v1415, %v1353
  %v1417 = vadd.f32 %v1416, %v1354
  %v1418 = vadd.f32 %v1417, %v1355
  %v1419 = vadd.f32 %v1418, %v1356
  %v1420 = vadd.f32 %v1419, %v1357
  %v1421 = vadd.f32 %v1420, %v1358
  %v1422 = vadd.f32 %v1421, %v1359
  %v1423 = vadd.f32 %v1422, %v1360
  %v1424 = vadd.f32 %v1423, %v1361
  %v1425 = vadd.f32 %v1424, %v1362
  %v1426 = vadd.f32 %v1425, %v1363
  %v1427 = vadd.f32 %v1426, %v1364
  %v1428 = vadd.f32 %v1427, %v1365
  %v1429 = vadd.f32 %v1428, %v1366
  %v1430 = vadd.f32 %v1429, %v1367
  %v1431 = vadd.f32 %v1430, %v1368
  %v1432 = vadd.f32 %v1431, %v1369
  %v1433 = vadd.f32 %v1432, %v1370
  %v1434 = vadd.f32 %v1433, %v1371
  %v1435 = vadd.f32 %v1434, %v1372
  %v1436 = vadd.f32 %v1435, %v1373
  %v1437 = vadd.f32 %v1436, %v1374
  %v1438 = vadd.f32 %v1437, %v1375
  %v1439 = vadd.f32 %v1438, %v1376
  %v1440 = vadd.f32 %v1439, %v1377
  %v1441 = vrot.slane %v1440, 4
  %v1442 = vadd.f32 %v1440, %v1441
  %v1443 = vrot.slane %v1442, 2
  %v1444 = vadd.f32 %v1442, %v1443
  %v1445 = vrot.slane %v1444, 1
  %v1446 = vadd.f32 %v1444, %v1445
  %v1447 = vmul.f32 %v1446, %v1248
  %v1448 = vadd.f32 %v1447, 1e-05
  %v1449 = vrsqrt.pop %v1448
  %v1450 = vmul.f32 %v1449, %v1448
  %v1451 = vmul.f32 %v1450, %v1449
  %v1452 = vmul.f32 0.5, %v1451
  %v1453 = vsub.f32 1.5, %v1452
  %v1454 = vmul.f32 %v1449, %v1453
  %vm1455 = vweird.f32 %v1448
  %vm1456 = vweird.f32 %v1449
  %vm1457 = vmor %vm1455, %vm1456
  %v1458 = vsel %vm1457, %v1449, %v1454
  %v1459 = vmul.f32 %v1250, %v1458
  %v1460 = vmul.f32 %v1251, %v1458
  %v1461 = vmul.f32 %v1252, %v1458
  %v1462 = vmul.f32 %v1253, %v1458
  %v1463 = vmul.f32 %v1254, %v1458
  %v1464 = vmul.f32 %v1255, %v1458
  %v1465 = vmul.f32 %v1256, %v1458
  %v1466 = vmul.f32 %v1257, %v1458
  %v1467 = vmul.f32 %v1258, %v1458
  %v1468 = vmul.f32 %v1259, %v1458
  %v1469 = vmul.f32 %v1260, %v1458
  %v1470 = vmul.f32 %v1261, %v1458
  %v1471 = vmul.f32 %v1262, %v1458
  %v1472 = vmul.f32 %v1263, %v1458
  %v1473 = vmul.f32 %v1264, %v1458
  %v1474 = vmul.f32 %v1265, %v1458
  %v1475 = vmul.f32 %v1266, %v1458
  %v1476 = vmul.f32 %v1267, %v1458
  %v1477 = vmul.f32 %v1268, %v1458
  %v1478 = vmul.f32 %v1269, %v1458
  %v1479 = vmul.f32 %v1270, %v1458
  %v1480 = vmul.f32 %v1271, %v1458
  %v1481 = vmul.f32 %v1272, %v1458
  %v1482 = vmul.f32 %v1273, %v1458
  %v1483 = vmul.f32 %v1274, %v1458
  %v1484 = vmul.f32 %v1275, %v1458
  %v1485 = vmul.f32 %v1276, %v1458
  %v1486 = vmul.f32 %v1277, %v1458
  %v1487 = vmul.f32 %v1278, %v1458
  %v1488 = vmul.f32 %v1279, %v1458
  %v1489 = vmul.f32 %v1280, %v1458
  %v1490 = vmul.f32 %v1281, %v1458
  %v1491 = vmul.f32 %v1282, %v1458
  %v1492 = vmul.f32 %v1283, %v1458
  %v1493 = vmul.f32 %v1284, %v1458
  %v1494 = vmul.f32 %v1285, %v1458
  %v1495 = vmul.f32 %v1286, %v1458
  %v1496 = vmul.f32 %v1287, %v1458
  %v1497 = vmul.f32 %v1288, %v1458
  %v1498 = vmul.f32 %v1289, %v1458
  %v1499 = vmul.f32 %v1290, %v1458
  %v1500 = vmul.f32 %v1291, %v1458
  %v1501 = vmul.f32 %v1292, %v1458
  %v1502 = vmul.f32 %v1293, %v1458
  %v1503 = vmul.f32 %v1294, %v1458
  %v1504 = vmul.f32 %v1295, %v1458
  %v1505 = vmul.f32 %v1296, %v1458
  %v1506 = vmul.f32 %v1297, %v1458
  %v1507 = vmul.f32 %v1298, %v1458
  %v1508 = vmul.f32 %v1299, %v1458
  %v1509 = vmul.f32 %v1300, %v1458
  %v1510 = vmul.f32 %v1301, %v1458
  %v1511 = vmul.f32 %v1302, %v1458
  %v1512 = vmul.f32 %v1303, %v1458
  %v1513 = vmul.f32 %v1304, %v1458
  %v1514 = vmul.f32 %v1305, %v1458
  %v1515 = vmul.f32 %v1306, %v1458
  %v1516 = vmul.f32 %v1307, %v1458
  %v1517 = vmul.f32 %v1308, %v1458
  %v1518 = vmul.f32 %v1309, %v1458
  %v1519 = vmul.f32 %v1310, %v1458
  %v1520 = vmul.f32 %v1311, %v1458
  %v1521 = vmul.f32 %v1312, %v1458
  %v1522 = vmul.f32 %v1313, %v1458
  %v1523 = vld [vmem:[%s2] sm:$0x1]
  %v1525 = vperm.slane %v1523, 0
  %v1527 = vmul.f32 %v1459, %v1525
  %v1528 = vmul.f32 %v1460, %v1525
  %v1529 = vmul.f32 %v1461, %v1525
  %v1530 = vmul.f32 %v1462, %v1525
  %v1531 = vmul.f32 %v1463, %v1525
  %v1532 = vmul.f32 %v1464, %v1525
  %v1533 = vmul.f32 %v1465, %v1525
  %v1534 = vmul.f32 %v1466, %v1525
  %v1535 = vmul.f32 %v1467, %v1525
  %v1536 = vmul.f32 %v1468, %v1525
  %v1537 = vmul.f32 %v1469, %v1525
  %v1538 = vmul.f32 %v1470, %v1525
  %v1539 = vmul.f32 %v1471, %v1525
  %v1540 = vmul.f32 %v1472, %v1525
  %v1541 = vmul.f32 %v1473, %v1525
  %v1542 = vmul.f32 %v1474, %v1525
  %v1543 = vmul.f32 %v1475, %v1525
  %v1544 = vmul.f32 %v1476, %v1525
  %v1545 = vmul.f32 %v1477, %v1525
  %v1546 = vmul.f32 %v1478, %v1525
  %v1547 = vmul.f32 %v1479, %v1525
  %v1548 = vmul.f32 %v1480, %v1525
  %v1549 = vmul.f32 %v1481, %v1525
  %v1550 = vmul.f32 %v1482, %v1525
  %v1551 = vmul.f32 %v1483, %v1525
  %v1552 = vmul.f32 %v1484, %v1525
  %v1553 = vmul.f32 %v1485, %v1525
  %v1554 = vmul.f32 %v1486, %v1525
  %v1555 = vmul.f32 %v1487, %v1525
  %v1556 = vmul.f32 %v1488, %v1525
  %v1557 = vmul.f32 %v1489, %v1525
  %v1558 = vmul.f32 %v1490, %v1525
  %v1559 = vmul.f32 %v1491, %v1525
  %v1560 = vmul.f32 %v1492, %v1525
  %v1561 = vmul.f32 %v1493, %v1525
  %v1562 = vmul.f32 %v1494, %v1525
  %v1563 = vmul.f32 %v1495, %v1525
  %v1564 = vmul.f32 %v1496, %v1525
  %v1565 = vmul.f32 %v1497, %v1525
  %v1566 = vmul.f32 %v1498, %v1525
  %v1567 = vmul.f32 %v1499, %v1525
  %v1568 = vmul.f32 %v1500, %v1525
  %v1569 = vmul.f32 %v1501, %v1525
  %v1570 = vmul.f32 %v1502, %v1525
  %v1571 = vmul.f32 %v1503, %v1525
  %v1572 = vmul.f32 %v1504, %v1525
  %v1573 = vmul.f32 %v1505, %v1525
  %v1574 = vmul.f32 %v1506, %v1525
  %v1575 = vmul.f32 %v1507, %v1525
  %v1576 = vmul.f32 %v1508, %v1525
  %v1577 = vmul.f32 %v1509, %v1525
  %v1578 = vmul.f32 %v1510, %v1525
  %v1579 = vmul.f32 %v1511, %v1525
  %v1580 = vmul.f32 %v1512, %v1525
  %v1581 = vmul.f32 %v1513, %v1525
  %v1582 = vmul.f32 %v1514, %v1525
  %v1583 = vmul.f32 %v1515, %v1525
  %v1584 = vmul.f32 %v1516, %v1525
  %v1585 = vmul.f32 %v1517, %v1525
  %v1586 = vmul.f32 %v1518, %v1525
  %v1587 = vmul.f32 %v1519, %v1525
  %v1588 = vmul.f32 %v1520, %v1525
  %v1589 = vmul.f32 %v1521, %v1525
  %v1590 = vmul.f32 %v1522, %v1525
  %v1591 = vld [vmem:[%s3] sm:$0x1]
  %v1593 = vperm.slane %v1591, 0
  %v1595 = vadd.f32 %v1527, %v1593
  %v1596 = vadd.f32 %v1528, %v1593
  %v1597 = vadd.f32 %v1529, %v1593
  %v1598 = vadd.f32 %v1530, %v1593
  %v1599 = vadd.f32 %v1531, %v1593
  %v1600 = vadd.f32 %v1532, %v1593
  %v1601 = vadd.f32 %v1533, %v1593
  %v1602 = vadd.f32 %v1534, %v1593
  %v1603 = vadd.f32 %v1535, %v1593
  %v1604 = vadd.f32 %v1536, %v1593
  %v1605 = vadd.f32 %v1537, %v1593
  %v1606 = vadd.f32 %v1538, %v1593
  %v1607 = vadd.f32 %v1539, %v1593
  %v1608 = vadd.f32 %v1540, %v1593
  %v1609 = vadd.f32 %v1541, %v1593
  %v1610 = vadd.f32 %v1542, %v1593
  %v1611 = vadd.f32 %v1543, %v1593
  %v1612 = vadd.f32 %v1544, %v1593
  %v1613 = vadd.f32 %v1545, %v1593
  %v1614 = vadd.f32 %v1546, %v1593
  %v1615 = vadd.f32 %v1547, %v1593
  %v1616 = vadd.f32 %v1548, %v1593
  %v1617 = vadd.f32 %v1549, %v1593
  %v1618 = vadd.f32 %v1550, %v1593
  %v1619 = vadd.f32 %v1551, %v1593
  %v1620 = vadd.f32 %v1552, %v1593
  %v1621 = vadd.f32 %v1553, %v1593
  %v1622 = vadd.f32 %v1554, %v1593
  %v1623 = vadd.f32 %v1555, %v1593
  %v1624 = vadd.f32 %v1556, %v1593
  %v1625 = vadd.f32 %v1557, %v1593
  %v1626 = vadd.f32 %v1558, %v1593
  %v1627 = vadd.f32 %v1559, %v1593
  %v1628 = vadd.f32 %v1560, %v1593
  %v1629 = vadd.f32 %v1561, %v1593
  %v1630 = vadd.f32 %v1562, %v1593
  %v1631 = vadd.f32 %v1563, %v1593
  %v1632 = vadd.f32 %v1564, %v1593
  %v1633 = vadd.f32 %v1565, %v1593
  %v1634 = vadd.f32 %v1566, %v1593
  %v1635 = vadd.f32 %v1567, %v1593
  %v1636 = vadd.f32 %v1568, %v1593
  %v1637 = vadd.f32 %v1569, %v1593
  %v1638 = vadd.f32 %v1570, %v1593
  %v1639 = vadd.f32 %v1571, %v1593
  %v1640 = vadd.f32 %v1572, %v1593
  %v1641 = vadd.f32 %v1573, %v1593
  %v1642 = vadd.f32 %v1574, %v1593
  %v1643 = vadd.f32 %v1575, %v1593
  %v1644 = vadd.f32 %v1576, %v1593
  %v1645 = vadd.f32 %v1577, %v1593
  %v1646 = vadd.f32 %v1578, %v1593
  %v1647 = vadd.f32 %v1579, %v1593
  %v1648 = vadd.f32 %v1580, %v1593
  %v1649 = vadd.f32 %v1581, %v1593
  %v1650 = vadd.f32 %v1582, %v1593
  %v1651 = vadd.f32 %v1583, %v1593
  %v1652 = vadd.f32 %v1584, %v1593
  %v1653 = vadd.f32 %v1585, %v1593
  %v1654 = vadd.f32 %v1586, %v1593
  %v1655 = vadd.f32 %v1587, %v1593
  %v1656 = vadd.f32 %v1588, %v1593
  %v1657 = vadd.f32 %v1589, %v1593
  %v1658 = vadd.f32 %v1590, %v1593
  %vm1659 = vcmp.gt.f32.partialorder %v1595, 0.0
  %vm1660 = vcmp.gt.f32.partialorder %v1596, 0.0
  %vm1661 = vcmp.gt.f32.partialorder %v1597, 0.0
  %vm1662 = vcmp.gt.f32.partialorder %v1598, 0.0
  %vm1663 = vcmp.gt.f32.partialorder %v1599, 0.0
  %vm1664 = vcmp.gt.f32.partialorder %v1600, 0.0
  %vm1665 = vcmp.gt.f32.partialorder %v1601, 0.0
  %vm1666 = vcmp.gt.f32.partialorder %v1602, 0.0
  %vm1667 = vcmp.gt.f32.partialorder %v1603, 0.0
  %vm1668 = vcmp.gt.f32.partialorder %v1604, 0.0
  %vm1669 = vcmp.gt.f32.partialorder %v1605, 0.0
  %vm1670 = vcmp.gt.f32.partialorder %v1606, 0.0
  %vm1671 = vcmp.gt.f32.partialorder %v1607, 0.0
  %vm1672 = vcmp.gt.f32.partialorder %v1608, 0.0
  %vm1673 = vcmp.gt.f32.partialorder %v1609, 0.0
  %vm1674 = vcmp.gt.f32.partialorder %v1610, 0.0
  %vm1675 = vcmp.gt.f32.partialorder %v1611, 0.0
  %vm1676 = vcmp.gt.f32.partialorder %v1612, 0.0
  %vm1677 = vcmp.gt.f32.partialorder %v1613, 0.0
  %vm1678 = vcmp.gt.f32.partialorder %v1614, 0.0
  %vm1679 = vcmp.gt.f32.partialorder %v1615, 0.0
  %vm1680 = vcmp.gt.f32.partialorder %v1616, 0.0
  %vm1681 = vcmp.gt.f32.partialorder %v1617, 0.0
  %vm1682 = vcmp.gt.f32.partialorder %v1618, 0.0
  %vm1683 = vcmp.gt.f32.partialorder %v1619, 0.0
  %vm1684 = vcmp.gt.f32.partialorder %v1620, 0.0
  %vm1685 = vcmp.gt.f32.partialorder %v1621, 0.0
  %vm1686 = vcmp.gt.f32.partialorder %v1622, 0.0
  %vm1687 = vcmp.gt.f32.partialorder %v1623, 0.0
  %vm1688 = vcmp.gt.f32.partialorder %v1624, 0.0
  %vm1689 = vcmp.gt.f32.partialorder %v1625, 0.0
  %vm1690 = vcmp.gt.f32.partialorder %v1626, 0.0
  %vm1691 = vcmp.gt.f32.partialorder %v1627, 0.0
  %vm1692 = vcmp.gt.f32.partialorder %v1628, 0.0
  %vm1693 = vcmp.gt.f32.partialorder %v1629, 0.0
  %vm1694 = vcmp.gt.f32.partialorder %v1630, 0.0
  %vm1695 = vcmp.gt.f32.partialorder %v1631, 0.0
  %vm1696 = vcmp.gt.f32.partialorder %v1632, 0.0
  %vm1697 = vcmp.gt.f32.partialorder %v1633, 0.0
  %vm1698 = vcmp.gt.f32.partialorder %v1634, 0.0
  %vm1699 = vcmp.gt.f32.partialorder %v1635, 0.0
  %vm1700 = vcmp.gt.f32.partialorder %v1636, 0.0
  %vm1701 = vcmp.gt.f32.partialorder %v1637, 0.0
  %vm1702 = vcmp.gt.f32.partialorder %v1638, 0.0
  %vm1703 = vcmp.gt.f32.partialorder %v1639, 0.0
  %vm1704 = vcmp.gt.f32.partialorder %v1640, 0.0
  %vm1705 = vcmp.gt.f32.partialorder %v1641, 0.0
  %vm1706 = vcmp.gt.f32.partialorder %v1642, 0.0
  %vm1707 = vcmp.gt.f32.partialorder %v1643, 0.0
  %vm1708 = vcmp.gt.f32.partialorder %v1644, 0.0
  %vm1709 = vcmp.gt.f32.partialorder %v1645, 0.0
  %vm1710 = vcmp.gt.f32.partialorder %v1646, 0.0
  %vm1711 = vcmp.gt.f32.partialorder %v1647, 0.0
  %vm1712 = vcmp.gt.f32.partialorder %v1648, 0.0
  %vm1713 = vcmp.gt.f32.partialorder %v1649, 0.0
  %vm1714 = vcmp.gt.f32.partialorder %v1650, 0.0
  %vm1715 = vcmp.gt.f32.partialorder %v1651, 0.0
  %vm1716 = vcmp.gt.f32.partialorder %v1652, 0.0
  %vm1717 = vcmp.gt.f32.partialorder %v1653, 0.0
  %vm1718 = vcmp.gt.f32.partialorder %v1654, 0.0
  %vm1719 = vcmp.gt.f32.partialorder %v1655, 0.0
  %vm1720 = vcmp.gt.f32.partialorder %v1656, 0.0
  %vm1721 = vcmp.gt.f32.partialorder %v1657, 0.0
  %vm1722 = vcmp.gt.f32.partialorder %v1658, 0.0
  %v1723 = vmul.f32 %v1595, 0.2
  %v1724 = vmul.f32 %v1596, 0.2
  %v1725 = vmul.f32 %v1597, 0.2
  %v1726 = vmul.f32 %v1598, 0.2
  %v1727 = vmul.f32 %v1599, 0.2
  %v1728 = vmul.f32 %v1600, 0.2
  %v1729 = vmul.f32 %v1601, 0.2
  %v1730 = vmul.f32 %v1602, 0.2
  %v1731 = vmul.f32 %v1603, 0.2
  %v1732 = vmul.f32 %v1604, 0.2
  %v1733 = vmul.f32 %v1605, 0.2
  %v1734 = vmul.f32 %v1606, 0.2
  %v1735 = vmul.f32 %v1607, 0.2
  %v1736 = vmul.f32 %v1608, 0.2
  %v1737 = vmul.f32 %v1609, 0.2
  %v1738 = vmul.f32 %v1610, 0.2
  %v1739 = vmul.f32 %v1611, 0.2
  %v1740 = vmul.f32 %v1612, 0.2
  %v1741 = vmul.f32 %v1613, 0.2
  %v1742 = vmul.f32 %v1614, 0.2
  %v1743 = vmul.f32 %v1615, 0.2
  %v1744 = vmul.f32 %v1616, 0.2
  %v1745 = vmul.f32 %v1617, 0.2
  %v1746 = vmul.f32 %v1618, 0.2
  %v1747 = vmul.f32 %v1619, 0.2
  %v1748 = vmul.f32 %v1620, 0.2
  %v1749 = vmul.f32 %v1621, 0.2
  %v1750 = vmul.f32 %v1622, 0.2
  %v1751 = vmul.f32 %v1623, 0.2
  %v1752 = vmul.f32 %v1624, 0.2
  %v1753 = vmul.f32 %v1625, 0.2
  %v1754 = vmul.f32 %v1626, 0.2
  %v1755 = vmul.f32 %v1627, 0.2
  %v1756 = vmul.f32 %v1628, 0.2
  %v1757 = vmul.f32 %v1629, 0.2
  %v1758 = vmul.f32 %v1630, 0.2
  %v1759 = vmul.f32 %v1631, 0.2
  %v1760 = vmul.f32 %v1632, 0.2
  %v1761 = vmul.f32 %v1633, 0.2
  %v1762 = vmul.f32 %v1634, 0.2
  %v1763 = vmul.f32 %v1635, 0.2
  %v1764 = vmul.f32 %v1636, 0.2
  %v1765 = vmul.f32 %v1637, 0.2
  %v1766 = vmul.f32 %v1638, 0.2
  %v1767 = vmul.f32 %v1639, 0.2
  %v1768 = vmul.f32 %v1640, 0.2
  %v1769 = vmul.f32 %v1641, 0.2
  %v1770 = vmul.f32 %v1642, 0.2
  %v1771 = vmul.f32 %v1643, 0.2
  %v1772 = vmul.f32 %v1644, 0.2
  %v1773 = vmul.f32 %v1645, 0.2
  %v1774 = vmul.f32 %v1646, 0.2
  %v1775 = vmul.f32 %v1647, 0.2
  %v1776 = vmul.f32 %v1648, 0.2
  %v1777 = vmul.f32 %v1649, 0.2
  %v1778 = vmul.f32 %v1650, 0.2
  %v1779 = vmul.f32 %v1651, 0.2
  %v1780 = vmul.f32 %v1652, 0.2
  %v1781 = vmul.f32 %v1653, 0.2
  %v1782 = vmul.f32 %v1654, 0.2
  %v1783 = vmul.f32 %v1655, 0.2
  %v1784 = vmul.f32 %v1656, 0.2
  %v1785 = vmul.f32 %v1657, 0.2
  %v1786 = vmul.f32 %v1658, 0.2
  %v1787 = vsel %vm1659, %v1595, %v1723
  %v1788 = vsel %vm1660, %v1596, %v1724
  %v1789 = vsel %vm1661, %v1597, %v1725
  %v1790 = vsel %vm1662, %v1598, %v1726
  %v1791 = vsel %vm1663, %v1599, %v1727
  %v1792 = vsel %vm1664, %v1600, %v1728
  %v1793 = vsel %vm1665, %v1601, %v1729
  %v1794 = vsel %vm1666, %v1602, %v1730
  %v1795 = vsel %vm1667, %v1603, %v1731
  %v1796 = vsel %vm1668, %v1604, %v1732
  %v1797 = vsel %vm1669, %v1605, %v1733
  %v1798 = vsel %vm1670, %v1606, %v1734
  %v1799 = vsel %vm1671, %v1607, %v1735
  %v1800 = vsel %vm1672, %v1608, %v1736
  %v1801 = vsel %vm1673, %v1609, %v1737
  %v1802 = vsel %vm1674, %v1610, %v1738
  %v1803 = vsel %vm1675, %v1611, %v1739
  %v1804 = vsel %vm1676, %v1612, %v1740
  %v1805 = vsel %vm1677, %v1613, %v1741
  %v1806 = vsel %vm1678, %v1614, %v1742
  %v1807 = vsel %vm1679, %v1615, %v1743
  %v1808 = vsel %vm1680, %v1616, %v1744
  %v1809 = vsel %vm1681, %v1617, %v1745
  %v1810 = vsel %vm1682, %v1618, %v1746
  %v1811 = vsel %vm1683, %v1619, %v1747
  %v1812 = vsel %vm1684, %v1620, %v1748
  %v1813 = vsel %vm1685, %v1621, %v1749
  %v1814 = vsel %vm1686, %v1622, %v1750
  %v1815 = vsel %vm1687, %v1623, %v1751
  %v1816 = vsel %vm1688, %v1624, %v1752
  %v1817 = vsel %vm1689, %v1625, %v1753
  %v1818 = vsel %vm1690, %v1626, %v1754
  %v1819 = vsel %vm1691, %v1627, %v1755
  %v1820 = vsel %vm1692, %v1628, %v1756
  %v1821 = vsel %vm1693, %v1629, %v1757
  %v1822 = vsel %vm1694, %v1630, %v1758
  %v1823 = vsel %vm1695, %v1631, %v1759
  %v1824 = vsel %vm1696, %v1632, %v1760
  %v1825 = vsel %vm1697, %v1633, %v1761
  %v1826 = vsel %vm1698, %v1634, %v1762
  %v1827 = vsel %vm1699, %v1635, %v1763
  %v1828 = vsel %vm1700, %v1636, %v1764
  %v1829 = vsel %vm1701, %v1637, %v1765
  %v1830 = vsel %vm1702, %v1638, %v1766
  %v1831 = vsel %vm1703, %v1639, %v1767
  %v1832 = vsel %vm1704, %v1640, %v1768
  %v1833 = vsel %vm1705, %v1641, %v1769
  %v1834 = vsel %vm1706, %v1642, %v1770
  %v1835 = vsel %vm1707, %v1643, %v1771
  %v1836 = vsel %vm1708, %v1644, %v1772
  %v1837 = vsel %vm1709, %v1645, %v1773
  %v1838 = vsel %vm1710, %v1646, %v1774
  %v1839 = vsel %vm1711, %v1647, %v1775
  %v1840 = vsel %vm1712, %v1648, %v1776
  %v1841 = vsel %vm1713, %v1649, %v1777
  %v1842 = vsel %vm1714, %v1650, %v1778
  %v1843 = vsel %vm1715, %v1651, %v1779
  %v1844 = vsel %vm1716, %v1652, %v1780
  %v1845 = vsel %vm1717, %v1653, %v1781
  %v1846 = vsel %vm1718, %v1654, %v1782
  %v1847 = vsel %vm1719, %v1655, %v1783
  %v1848 = vsel %vm1720, %v1656, %v1784
  %v1849 = vsel %vm1721, %v1657, %v1785
  %v1850 = vsel %vm1722, %v1658, %v1786
  %1851 = vst [vmem:[%s4] sm:$0xff] %v1787
  %1852 = vst [vmem:[%s4 + $0x8] sm:$0xff] %v1788
  %1853 = vst [vmem:[%s4 + $0x10] sm:$0xff] %v1789
  %1854 = vst [vmem:[%s4 + $0x18] sm:$0xff] %v1790
  %1855 = vst [vmem:[%s4 + $0x20] sm:$0xff] %v1791
  %1856 = vst [vmem:[%s4 + $0x28] sm:$0xff] %v1792
  %1857 = vst [vmem:[%s4 + $0x30] sm:$0xff] %v1793
  %1858 = vst [vmem:[%s4 + $0x38] sm:$0xff] %v1794
  %1859 = vst [vmem:[%s4 + $0x40] sm:$0xff] %v1795
  %1860 = vst [vmem:[%s4 + $0x48] sm:$0xff] %v1796
  %1861 = vst [vmem:[%s4 + $0x50] sm:$0xff] %v1797
  %1862 = vst [vmem:[%s4 + $0x58] sm:$0xff] %v1798
  %1863 = vst [vmem:[%s4 + $0x60] sm:$0xff] %v1799
  %1864 = vst [vmem:[%s4 + $0x68] sm:$0xff] %v1800
  %1865 = vst [vmem:[%s4 + $0x70] sm:$0xff] %v1801
  %1866 = vst [vmem:[%s4 + $0x78] sm:$0xff] %v1802
  %1867 = vst [vmem:[%s4 + $0x80] sm:$0xff] %v1803
  %1868 = vst [vmem:[%s4 + $0x88] sm:$0xff] %v1804
  %1869 = vst [vmem:[%s4 + $0x90] sm:$0xff] %v1805
  %1870 = vst [vmem:[%s4 + $0x98] sm:$0xff] %v1806
  %1871 = vst [vmem:[%s4 + $0xa0] sm:$0xff] %v1807
  %1872 = vst [vmem:[%s4 + $0xa8] sm:$0xff] %v1808
  %1873 = vst [vmem:[%s4 + $0xb0] sm:$0xff] %v1809
  %1874 = vst [vmem:[%s4 + $0xb8] sm:$0xff] %v1810
  %1875 = vst [vmem:[%s4 + $0xc0] sm:$0xff] %v1811
  %1876 = vst [vmem:[%s4 + $0xc8] sm:$0xff] %v1812
  %1877 = vst [vmem:[%s4 + $0xd0] sm:$0xff] %v1813
  %1878 = vst [vmem:[%s4 + $0xd8] sm:$0xff] %v1814
  %1879 = vst [vmem:[%s4 + $0xe0] sm:$0xff] %v1815
  %1880 = vst [vmem:[%s4 + $0xe8] sm:$0xff] %v1816
  %1881 = vst [vmem:[%s4 + $0xf0] sm:$0xff] %v1817
  %1882 = vst [vmem:[%s4 + $0xf8] sm:$0xff] %v1818
  %1883 = vst [vmem:[%s4 + $0x100] sm:$0xff] %v1819
  %1884 = vst [vmem:[%s4 + $0x108] sm:$0xff] %v1820
  %1885 = vst [vmem:[%s4 + $0x110] sm:$0xff] %v1821
  %1886 = vst [vmem:[%s4 + $0x118] sm:$0xff] %v1822
  %1887 = vst [vmem:[%s4 + $0x120] sm:$0xff] %v1823
  %1888 = vst [vmem:[%s4 + $0x128] sm:$0xff] %v1824
  %1889 = vst [vmem:[%s4 + $0x130] sm:$0xff] %v1825
  %1890 = vst [vmem:[%s4 + $0x138] sm:$0xff] %v1826
  %1891 = vst [vmem:[%s4 + $0x140] sm:$0xff] %v1827
  %1892 = vst [vmem:[%s4 + $0x148] sm:$0xff] %v1828
  %1893 = vst [vmem:[%s4 + $0x150] sm:$0xff] %v1829
  %1894 = vst [vmem:[%s4 + $0x158] sm:$0xff] %v1830
  %1895 = vst [vmem:[%s4 + $0x160] sm:$0xff] %v1831
  %1896 = vst [vmem:[%s4 + $0x168] sm:$0xff] %v1832
  %1897 = vst [vmem:[%s4 + $0x170] sm:$0xff] %v1833
  %1898 = vst [vmem:[%s4 + $0x178] sm:$0xff] %v1834
  %1899 = vst [vmem:[%s4 + $0x180] sm:$0xff] %v1835
  %1900 = vst [vmem:[%s4 + $0x188] sm:$0xff] %v1836
  %1901 = vst [vmem:[%s4 + $0x190] sm:$0xff] %v1837
  %1902 = vst [vmem:[%s4 + $0x198] sm:$0xff] %v1838
  %1903 = vst [vmem:[%s4 + $0x1a0] sm:$0xff] %v1839
  %1904 = vst [vmem:[%s4 + $0x1a8] sm:$0xff] %v1840
  %1905 = vst [vmem:[%s4 + $0x1b0] sm:$0xff] %v1841
  %1906 = vst [vmem:[%s4 + $0x1b8] sm:$0xff] %v1842
  %1907 = vst [vmem:[%s4 + $0x1c0] sm:$0xff] %v1843
  %1908 = vst [vmem:[%s4 + $0x1c8] sm:$0xff] %v1844
  %1909 = vst [vmem:[%s4 + $0x1d0] sm:$0xff] %v1845
  %1910 = vst [vmem:[%s4 + $0x1d8] sm:$0xff] %v1846
  %1911 = vst [vmem:[%s4 + $0x1e0] sm:$0xff] %v1847
  %1912 = vst [vmem:[%s4 + $0x1e8] sm:$0xff] %v1848
  %1913 = vst [vmem:[%s4 + $0x1f0] sm:$0xff] %v1849
  %1914 = vst [vmem:[%s4 + $0x1f8] sm:$0xff] %v1850
  // Predicated region
  $region18: #{_apply.7} parent=0 // pred_check
    _
  $region19: #{_apply.7} parent=0 // pred_check_branch
    %1916 = sbr.rel (0) target = $region21
  $region20: #{_apply.7} parent=0 // pred_region
    _
  $region21: #{_apply.7} parent=0 // pred_fallthru
    _
  // Predicated region
  $region22: #{_apply.7} parent=0 // pred_check
    _
  $region23: #{_apply.7} parent=0 // pred_check_branch
    %1918 = sbr.rel (0) target = $region25
  $region24: #{_apply.7} parent=0 // pred_region
    _
  $region25: #{_apply.7} parent=0 // pred_fallthru
    _

// kernel: _apply.8
$region0: #{_apply.8}
  #allocation0 [shape = 'u32[]', space=smem, size = 0x4, offset = 0x4, fixed_abs, tag = 'smem constant byte address 0x4 - core index']
  #allocation1 [shape = 'u32[72,128]{1,0:T(1,128)}', space=vmem, size = 0x9000, scoped, tag = 'internal scratch']
  %s0 = inlined_call_operand.vmem [shape: f32[2048,256], index: 0, kind: input, shape index: {}]
  %s1 = inlined_call_operand.vmem [shape: f32[256,128], index: 1, kind: input, shape index: {}]
  %s2 = inlined_call_operand.vmem [shape: f32[1,128], index: 2, kind: input, shape index: {}]
  %s3 = inlined_call_operand.vmem [shape: f32[1,128], index: 3, kind: input, shape index: {}]
  %s4 = inlined_call_operand.vmem [shape: f32[2048,128], index: 4, kind: output, shape index: {}]
  %s5 = sld [smem:[#allocation0]]
  $region26: #{_apply.8} parent=0
    _
  %s7 = ssub.s32 1, %s5
  %s8 = scalar_select 0, %s7, %s5
  // Predicated region
  $region2: #{_apply.8} parent=0 // pred_check
    _
  $region3: #{_apply.8} parent=0 // pred_check_branch
    %10 = sbr.rel (0) target = $region5
  $region4: #{_apply.8} parent=0 // pred_region
    _
  $region5: #{_apply.8} parent=0 // pred_fallthru
    _
  // Predicated region
  $region6: #{_apply.8} parent=0 // pred_check
    _
  $region7: #{_apply.8} parent=0 // pred_check_branch
    %12 = sbr.rel (0) target = $region9
  $region8: #{_apply.8} parent=0 // pred_region
    _
  $region9: #{_apply.8} parent=0 // pred_fallthru
    _
  // Predicated region
  $region10: #{_apply.8} parent=0 // pred_check
    _
  $region11: #{_apply.8} parent=0 // pred_check_branch
    %14 = sbr.rel (0) target = $region13
  $region12: #{_apply.8} parent=0 // pred_region
    _
  $region13: #{_apply.8} parent=0 // pred_fallthru
    _
  // Predicated region
  $region14: #{_apply.8} parent=0 // pred_check
    _
  $region15: #{_apply.8} parent=0 // pred_check_branch
    %16 = sbr.rel (0) target = $region17
  $region16: #{_apply.8} parent=0 // pred_region
    _
  $region17: #{_apply.8} parent=0 // pred_fallthru
    _
  %v17 = vld [vmem:[%s0] sm:$0xff]
  %v18 = vld [vmem:[%s0 + $0x8] sm:$0xff]
  %v19 = vld [vmem:[%s0 + $0x10] sm:$0xff]
  %v20 = vld [vmem:[%s0 + $0x18] sm:$0xff]
  %v21 = vld [vmem:[%s0 + $0x20] sm:$0xff]
  %v22 = vld [vmem:[%s0 + $0x28] sm:$0xff]
  %v23 = vld [vmem:[%s0 + $0x30] sm:$0xff]
  %v24 = vld [vmem:[%s0 + $0x38] sm:$0xff]
  %v25 = vld [vmem:[%s0 + $0x40] sm:$0xff]
  %v26 = vld [vmem:[%s0 + $0x48] sm:$0xff]
  %v27 = vld [vmem:[%s0 + $0x50] sm:$0xff]
  %v28 = vld [vmem:[%s0 + $0x58] sm:$0xff]
  %v29 = vld [vmem:[%s0 + $0x60] sm:$0xff]
  %v30 = vld [vmem:[%s0 + $0x68] sm:$0xff]
  %v31 = vld [vmem:[%s0 + $0x70] sm:$0xff]
  %v32 = vld [vmem:[%s0 + $0x78] sm:$0xff]
  %v33 = vld [vmem:[%s0 + $0x80] sm:$0xff]
  %v34 = vld [vmem:[%s0 + $0x88] sm:$0xff]
  %v35 = vld [vmem:[%s0 + $0x90] sm:$0xff]
  %v36 = vld [vmem:[%s0 + $0x98] sm:$0xff]
  %v37 = vld [vmem:[%s0 + $0xa0] sm:$0xff]
  %v38 = vld [vmem:[%s0 + $0xa8] sm:$0xff]
  %v39 = vld [vmem:[%s0 + $0xb0] sm:$0xff]
  %v40 = vld [vmem:[%s0 + $0xb8] sm:$0xff]
  %v41 = vld [vmem:[%s0 + $0xc0] sm:$0xff]
  %v42 = vld [vmem:[%s0 + $0xc8] sm:$0xff]
  %v43 = vld [vmem:[%s0 + $0xd0] sm:$0xff]
  %v44 = vld [vmem:[%s0 + $0xd8] sm:$0xff]
  %v45 = vld [vmem:[%s0 + $0xe0] sm:$0xff]
  %v46 = vld [vmem:[%s0 + $0xe8] sm:$0xff]
  %v47 = vld [vmem:[%s0 + $0xf0] sm:$0xff]
  %v48 = vld [vmem:[%s0 + $0xf8] sm:$0xff]
  %v49 = vld [vmem:[%s0 + $0x100] sm:$0xff]
  %v50 = vld [vmem:[%s0 + $0x108] sm:$0xff]
  %v51 = vld [vmem:[%s0 + $0x110] sm:$0xff]
  %v52 = vld [vmem:[%s0 + $0x118] sm:$0xff]
  %v53 = vld [vmem:[%s0 + $0x120] sm:$0xff]
  %v54 = vld [vmem:[%s0 + $0x128] sm:$0xff]
  %v55 = vld [vmem:[%s0 + $0x130] sm:$0xff]
  %v56 = vld [vmem:[%s0 + $0x138] sm:$0xff]
  %v57 = vld [vmem:[%s0 + $0x140] sm:$0xff]
  %v58 = vld [vmem:[%s0 + $0x148] sm:$0xff]
  %v59 = vld [vmem:[%s0 + $0x150] sm:$0xff]
  %v60 = vld [vmem:[%s0 + $0x158] sm:$0xff]
  %v61 = vld [vmem:[%s0 + $0x160] sm:$0xff]
  %v62 = vld [vmem:[%s0 + $0x168] sm:$0xff]
  %v63 = vld [vmem:[%s0 + $0x170] sm:$0xff]
  %v64 = vld [vmem:[%s0 + $0x178] sm:$0xff]
  %v65 = vld [vmem:[%s0 + $0x180] sm:$0xff]
  %v66 = vld [vmem:[%s0 + $0x188] sm:$0xff]
  %v67 = vld [vmem:[%s0 + $0x190] sm:$0xff]
  %v68 = vld [vmem:[%s0 + $0x198] sm:$0xff]
  %v69 = vld [vmem:[%s0 + $0x1a0] sm:$0xff]
  %v70 = vld [vmem:[%s0 + $0x1a8] sm:$0xff]
  %v71 = vld [vmem:[%s0 + $0x1b0] sm:$0xff]
  %v72 = vld [vmem:[%s0 + $0x1b8] sm:$0xff]
  %v73 = vld [vmem:[%s0 + $0x1c0] sm:$0xff]
  %v74 = vld [vmem:[%s0 + $0x1c8] sm:$0xff]
  %v75 = vld [vmem:[%s0 + $0x1d0] sm:$0xff]
  %v76 = vld [vmem:[%s0 + $0x1d8] sm:$0xff]
  %v77 = vld [vmem:[%s0 + $0x1e0] sm:$0xff]
  %v78 = vld [vmem:[%s0 + $0x1e8] sm:$0xff]
  %v79 = vld [vmem:[%s0 + $0x1f0] sm:$0xff]
  %v80 = vld [vmem:[%s0 + $0x1f8] sm:$0xff]
  %v81 = vld [vmem:[%s0 + $0x200] sm:$0xff]
  %v82 = vld [vmem:[%s0 + $0x208] sm:$0xff]
  %v83 = vld [vmem:[%s0 + $0x210] sm:$0xff]
  %v84 = vld [vmem:[%s0 + $0x218] sm:$0xff]
  %v85 = vld [vmem:[%s0 + $0x220] sm:$0xff]
  %v86 = vld [vmem:[%s0 + $0x228] sm:$0xff]
  %v87 = vld [vmem:[%s0 + $0x230] sm:$0xff]
  %v88 = vld [vmem:[%s0 + $0x238] sm:$0xff]
  %v89 = vld [vmem:[%s0 + $0x240] sm:$0xff]
  %v90 = vld [vmem:[%s0 + $0x248] sm:$0xff]
  %v91 = vld [vmem:[%s0 + $0x250] sm:$0xff]
  %v92 = vld [vmem:[%s0 + $0x258] sm:$0xff]
  %v93 = vld [vmem:[%s0 + $0x260] sm:$0xff]
  %v94 = vld [vmem:[%s0 + $0x268] sm:$0xff]
  %v95 = vld [vmem:[%s0 + $0x270] sm:$0xff]
  %v96 = vld [vmem:[%s0 + $0x278] sm:$0xff]
  %v97 = vld [vmem:[%s0 + $0x280] sm:$0xff]
  %v98 = vld [vmem:[%s0 + $0x288] sm:$0xff]
  %v99 = vld [vmem:[%s0 + $0x290] sm:$0xff]
  %v100 = vld [vmem:[%s0 + $0x298] sm:$0xff]
  %v101 = vld [vmem:[%s0 + $0x2a0] sm:$0xff]
  %v102 = vld [vmem:[%s0 + $0x2a8] sm:$0xff]
  %v103 = vld [vmem:[%s0 + $0x2b0] sm:$0xff]
  %v104 = vld [vmem:[%s0 + $0x2b8] sm:$0xff]
  %v105 = vld [vmem:[%s0 + $0x2c0] sm:$0xff]
  %v106 = vld [vmem:[%s0 + $0x2c8] sm:$0xff]
  %v107 = vld [vmem:[%s0 + $0x2d0] sm:$0xff]
  %v108 = vld [vmem:[%s0 + $0x2d8] sm:$0xff]
  %v109 = vld [vmem:[%s0 + $0x2e0] sm:$0xff]
  %v110 = vld [vmem:[%s0 + $0x2e8] sm:$0xff]
  %v111 = vld [vmem:[%s0 + $0x2f0] sm:$0xff]
  %v112 = vld [vmem:[%s0 + $0x2f8] sm:$0xff]
  %v113 = vld [vmem:[%s0 + $0x300] sm:$0xff]
  %v114 = vld [vmem:[%s0 + $0x308] sm:$0xff]
  %v115 = vld [vmem:[%s0 + $0x310] sm:$0xff]
  %v116 = vld [vmem:[%s0 + $0x318] sm:$0xff]
  %v117 = vld [vmem:[%s0 + $0x320] sm:$0xff]
  %v118 = vld [vmem:[%s0 + $0x328] sm:$0xff]
  %v119 = vld [vmem:[%s0 + $0x330] sm:$0xff]
  %v120 = vld [vmem:[%s0 + $0x338] sm:$0xff]
  %v121 = vld [vmem:[%s0 + $0x340] sm:$0xff]
  %v122 = vld [vmem:[%s0 + $0x348] sm:$0xff]
  %v123 = vld [vmem:[%s0 + $0x350] sm:$0xff]
  %v124 = vld [vmem:[%s0 + $0x358] sm:$0xff]
  %v125 = vld [vmem:[%s0 + $0x360] sm:$0xff]
  %v126 = vld [vmem:[%s0 + $0x368] sm:$0xff]
  %v127 = vld [vmem:[%s0 + $0x370] sm:$0xff]
  %v128 = vld [vmem:[%s0 + $0x378] sm:$0xff]
  %v129 = vld [vmem:[%s0 + $0x380] sm:$0xff]
  %v130 = vld [vmem:[%s0 + $0x388] sm:$0xff]
  %v131 = vld [vmem:[%s0 + $0x390] sm:$0xff]
  %v132 = vld [vmem:[%s0 + $0x398] sm:$0xff]
  %v133 = vld [vmem:[%s0 + $0x3a0] sm:$0xff]
  %v134 = vld [vmem:[%s0 + $0x3a8] sm:$0xff]
  %v135 = vld [vmem:[%s0 + $0x3b0] sm:$0xff]
  %v136 = vld [vmem:[%s0 + $0x3b8] sm:$0xff]
  %v137 = vld [vmem:[%s0 + $0x3c0] sm:$0xff]
  %v138 = vld [vmem:[%s0 + $0x3c8] sm:$0xff]
  %v139 = vld [vmem:[%s0 + $0x3d0] sm:$0xff]
  %v140 = vld [vmem:[%s0 + $0x3d8] sm:$0xff]
  %v141 = vld [vmem:[%s0 + $0x3e0] sm:$0xff]
  %v142 = vld [vmem:[%s0 + $0x3e8] sm:$0xff]
  %v143 = vld [vmem:[%s0 + $0x3f0] sm:$0xff]
  %v144 = vld [vmem:[%s0 + $0x3f8] sm:$0xff]
  %v145 = vld [vmem:[%s0 + $0x400] sm:$0xff]
  %v146 = vld [vmem:[%s0 + $0x408] sm:$0xff]
  %v147 = vld [vmem:[%s0 + $0x410] sm:$0xff]
  %v148 = vld [vmem:[%s0 + $0x418] sm:$0xff]
  %v149 = vld [vmem:[%s0 + $0x420] sm:$0xff]
  %v150 = vld [vmem:[%s0 + $0x428] sm:$0xff]
  %v151 = vld [vmem:[%s0 + $0x430] sm:$0xff]
  %v152 = vld [vmem:[%s0 + $0x438] sm:$0xff]
  %v153 = vld [vmem:[%s0 + $0x440] sm:$0xff]
  %v154 = vld [vmem:[%s0 + $0x448] sm:$0xff]
  %v155 = vld [vmem:[%s0 + $0x450] sm:$0xff]
  %v156 = vld [vmem:[%s0 + $0x458] sm:$0xff]
  %v157 = vld [vmem:[%s0 + $0x460] sm:$0xff]
  %v158 = vld [vmem:[%s0 + $0x468] sm:$0xff]
  %v159 = vld [vmem:[%s0 + $0x470] sm:$0xff]
  %v160 = vld [vmem:[%s0 + $0x478] sm:$0xff]
  %v161 = vld [vmem:[%s0 + $0x480] sm:$0xff]
  %v162 = vld [vmem:[%s0 + $0x488] sm:$0xff]
  %v163 = vld [vmem:[%s0 + $0x490] sm:$0xff]
  %v164 = vld [vmem:[%s0 + $0x498] sm:$0xff]
  %v165 = vld [vmem:[%s0 + $0x4a0] sm:$0xff]
  %v166 = vld [vmem:[%s0 + $0x4a8] sm:$0xff]
  %v167 = vld [vmem:[%s0 + $0x4b0] sm:$0xff]
  %v168 = vld [vmem:[%s0 + $0x4b8] sm:$0xff]
  %v169 = vld [vmem:[%s0 + $0x4c0] sm:$0xff]
  %v170 = vld [vmem:[%s0 + $0x4c8] sm:$0xff]
  %v171 = vld [vmem:[%s0 + $0x4d0] sm:$0xff]
  %v172 = vld [vmem:[%s0 + $0x4d8] sm:$0xff]
  %v173 = vld [vmem:[%s0 + $0x4e0] sm:$0xff]
  %v174 = vld [vmem:[%s0 + $0x4e8] sm:$0xff]
  %v175 = vld [vmem:[%s0 + $0x4f0] sm:$0xff]
  %v176 = vld [vmem:[%s0 + $0x4f8] sm:$0xff]
  %v177 = vld [vmem:[%s0 + $0x500] sm:$0xff]
  %v178 = vld [vmem:[%s0 + $0x508] sm:$0xff]
  %v179 = vld [vmem:[%s0 + $0x510] sm:$0xff]
  %v180 = vld [vmem:[%s0 + $0x518] sm:$0xff]
  %v181 = vld [vmem:[%s0 + $0x520] sm:$0xff]
  %v182 = vld [vmem:[%s0 + $0x528] sm:$0xff]
  %v183 = vld [vmem:[%s0 + $0x530] sm:$0xff]
  %v184 = vld [vmem:[%s0 + $0x538] sm:$0xff]
  %v185 = vld [vmem:[%s0 + $0x540] sm:$0xff]
  %v186 = vld [vmem:[%s0 + $0x548] sm:$0xff]
  %v187 = vld [vmem:[%s0 + $0x550] sm:$0xff]
  %v188 = vld [vmem:[%s0 + $0x558] sm:$0xff]
  %v189 = vld [vmem:[%s0 + $0x560] sm:$0xff]
  %v190 = vld [vmem:[%s0 + $0x568] sm:$0xff]
  %v191 = vld [vmem:[%s0 + $0x570] sm:$0xff]
  %v192 = vld [vmem:[%s0 + $0x578] sm:$0xff]
  %v193 = vld [vmem:[%s0 + $0x580] sm:$0xff]
  %v194 = vld [vmem:[%s0 + $0x588] sm:$0xff]
  %v195 = vld [vmem:[%s0 + $0x590] sm:$0xff]
  %v196 = vld [vmem:[%s0 + $0x598] sm:$0xff]
  %v197 = vld [vmem:[%s0 + $0x5a0] sm:$0xff]
  %v198 = vld [vmem:[%s0 + $0x5a8] sm:$0xff]
  %v199 = vld [vmem:[%s0 + $0x5b0] sm:$0xff]
  %v200 = vld [vmem:[%s0 + $0x5b8] sm:$0xff]
  %v201 = vld [vmem:[%s0 + $0x5c0] sm:$0xff]
  %v202 = vld [vmem:[%s0 + $0x5c8] sm:$0xff]
  %v203 = vld [vmem:[%s0 + $0x5d0] sm:$0xff]
  %v204 = vld [vmem:[%s0 + $0x5d8] sm:$0xff]
  %v205 = vld [vmem:[%s0 + $0x5e0] sm:$0xff]
  %v206 = vld [vmem:[%s0 + $0x5e8] sm:$0xff]
  %v207 = vld [vmem:[%s0 + $0x5f0] sm:$0xff]
  %v208 = vld [vmem:[%s0 + $0x5f8] sm:$0xff]
  %v209 = vld [vmem:[%s0 + $0x600] sm:$0xff]
  %v210 = vld [vmem:[%s0 + $0x608] sm:$0xff]
  %v211 = vld [vmem:[%s0 + $0x610] sm:$0xff]
  %v212 = vld [vmem:[%s0 + $0x618] sm:$0xff]
  %v213 = vld [vmem:[%s0 + $0x620] sm:$0xff]
  %v214 = vld [vmem:[%s0 + $0x628] sm:$0xff]
  %v215 = vld [vmem:[%s0 + $0x630] sm:$0xff]
  %v216 = vld [vmem:[%s0 + $0x638] sm:$0xff]
  %v217 = vld [vmem:[%s0 + $0x640] sm:$0xff]
  %v218 = vld [vmem:[%s0 + $0x648] sm:$0xff]
  %v219 = vld [vmem:[%s0 + $0x650] sm:$0xff]
  %v220 = vld [vmem:[%s0 + $0x658] sm:$0xff]
  %v221 = vld [vmem:[%s0 + $0x660] sm:$0xff]
  %v222 = vld [vmem:[%s0 + $0x668] sm:$0xff]
  %v223 = vld [vmem:[%s0 + $0x670] sm:$0xff]
  %v224 = vld [vmem:[%s0 + $0x678] sm:$0xff]
  %v225 = vld [vmem:[%s0 + $0x680] sm:$0xff]
  %v226 = vld [vmem:[%s0 + $0x688] sm:$0xff]
  %v227 = vld [vmem:[%s0 + $0x690] sm:$0xff]
  %v228 = vld [vmem:[%s0 + $0x698] sm:$0xff]
  %v229 = vld [vmem:[%s0 + $0x6a0] sm:$0xff]
  %v230 = vld [vmem:[%s0 + $0x6a8] sm:$0xff]
  %v231 = vld [vmem:[%s0 + $0x6b0] sm:$0xff]
  %v232 = vld [vmem:[%s0 + $0x6b8] sm:$0xff]
  %v233 = vld [vmem:[%s0 + $0x6c0] sm:$0xff]
  %v234 = vld [vmem:[%s0 + $0x6c8] sm:$0xff]
  %v235 = vld [vmem:[%s0 + $0x6d0] sm:$0xff]
  %v236 = vld [vmem:[%s0 + $0x6d8] sm:$0xff]
  %v237 = vld [vmem:[%s0 + $0x6e0] sm:$0xff]
  %v238 = vld [vmem:[%s0 + $0x6e8] sm:$0xff]
  %v239 = vld [vmem:[%s0 + $0x6f0] sm:$0xff]
  %v240 = vld [vmem:[%s0 + $0x6f8] sm:$0xff]
  %v241 = vld [vmem:[%s0 + $0x700] sm:$0xff]
  %v242 = vld [vmem:[%s0 + $0x708] sm:$0xff]
  %v243 = vld [vmem:[%s0 + $0x710] sm:$0xff]
  %v244 = vld [vmem:[%s0 + $0x718] sm:$0xff]
  %v245 = vld [vmem:[%s0 + $0x720] sm:$0xff]
  %v246 = vld [vmem:[%s0 + $0x728] sm:$0xff]
  %v247 = vld [vmem:[%s0 + $0x730] sm:$0xff]
  %v248 = vld [vmem:[%s0 + $0x738] sm:$0xff]
  %v249 = vld [vmem:[%s0 + $0x740] sm:$0xff]
  %v250 = vld [vmem:[%s0 + $0x748] sm:$0xff]
  %v251 = vld [vmem:[%s0 + $0x750] sm:$0xff]
  %v252 = vld [vmem:[%s0 + $0x758] sm:$0xff]
  %v253 = vld [vmem:[%s0 + $0x760] sm:$0xff]
  %v254 = vld [vmem:[%s0 + $0x768] sm:$0xff]
  %v255 = vld [vmem:[%s0 + $0x770] sm:$0xff]
  %v256 = vld [vmem:[%s0 + $0x778] sm:$0xff]
  %v257 = vld [vmem:[%s0 + $0x780] sm:$0xff]
  %v258 = vld [vmem:[%s0 + $0x788] sm:$0xff]
  %v259 = vld [vmem:[%s0 + $0x790] sm:$0xff]
  %v260 = vld [vmem:[%s0 + $0x798] sm:$0xff]
  %v261 = vld [vmem:[%s0 + $0x7a0] sm:$0xff]
  %v262 = vld [vmem:[%s0 + $0x7a8] sm:$0xff]
  %v263 = vld [vmem:[%s0 + $0x7b0] sm:$0xff]
  %v264 = vld [vmem:[%s0 + $0x7b8] sm:$0xff]
  %v265 = vld [vmem:[%s0 + $0x7c0] sm:$0xff]
  %v266 = vld [vmem:[%s0 + $0x7c8] sm:$0xff]
  %v267 = vld [vmem:[%s0 + $0x7d0] sm:$0xff]
  %v268 = vld [vmem:[%s0 + $0x7d8] sm:$0xff]
  %v269 = vld [vmem:[%s0 + $0x7e0] sm:$0xff]
  %v270 = vld [vmem:[%s0 + $0x7e8] sm:$0xff]
  %v271 = vld [vmem:[%s0 + $0x7f0] sm:$0xff]
  %v272 = vld [vmem:[%s0 + $0x7f8] sm:$0xff]
  %v273 = vld [vmem:[%s0 + $0x800] sm:$0xff]
  %v274 = vld [vmem:[%s0 + $0x808] sm:$0xff]
  %v275 = vld [vmem:[%s0 + $0x810] sm:$0xff]
  %v276 = vld [vmem:[%s0 + $0x818] sm:$0xff]
  %v277 = vld [vmem:[%s0 + $0x820] sm:$0xff]
  %v278 = vld [vmem:[%s0 + $0x828] sm:$0xff]
  %v279 = vld [vmem:[%s0 + $0x830] sm:$0xff]
  %v280 = vld [vmem:[%s0 + $0x838] sm:$0xff]
  %v281 = vld [vmem:[%s0 + $0x840] sm:$0xff]
  %v282 = vld [vmem:[%s0 + $0x848] sm:$0xff]
  %v283 = vld [vmem:[%s0 + $0x850] sm:$0xff]
  %v284 = vld [vmem:[%s0 + $0x858] sm:$0xff]
  %v285 = vld [vmem:[%s0 + $0x860] sm:$0xff]
  %v286 = vld [vmem:[%s0 + $0x868] sm:$0xff]
  %v287 = vld [vmem:[%s0 + $0x870] sm:$0xff]
  %v288 = vld [vmem:[%s0 + $0x878] sm:$0xff]
  %v289 = vld [vmem:[%s0 + $0x880] sm:$0xff]
  %v290 = vld [vmem:[%s0 + $0x888] sm:$0xff]
  %v291 = vld [vmem:[%s0 + $0x890] sm:$0xff]
  %v292 = vld [vmem:[%s0 + $0x898] sm:$0xff]
  %v293 = vld [vmem:[%s0 + $0x8a0] sm:$0xff]
  %v294 = vld [vmem:[%s0 + $0x8a8] sm:$0xff]
  %v295 = vld [vmem:[%s0 + $0x8b0] sm:$0xff]
  %v296 = vld [vmem:[%s0 + $0x8b8] sm:$0xff]
  %v297 = vld [vmem:[%s0 + $0x8c0] sm:$0xff]
  %v298 = vld [vmem:[%s0 + $0x8c8] sm:$0xff]
  %v299 = vld [vmem:[%s0 + $0x8d0] sm:$0xff]
  %v300 = vld [vmem:[%s0 + $0x8d8] sm:$0xff]
  %v301 = vld [vmem:[%s0 + $0x8e0] sm:$0xff]
  %v302 = vld [vmem:[%s0 + $0x8e8] sm:$0xff]
  %v303 = vld [vmem:[%s0 + $0x8f0] sm:$0xff]
  %v304 = vld [vmem:[%s0 + $0x8f8] sm:$0xff]
  %v305 = vld [vmem:[%s0 + $0x900] sm:$0xff]
  %v306 = vld [vmem:[%s0 + $0x908] sm:$0xff]
  %v307 = vld [vmem:[%s0 + $0x910] sm:$0xff]
  %v308 = vld [vmem:[%s0 + $0x918] sm:$0xff]
  %v309 = vld [vmem:[%s0 + $0x920] sm:$0xff]
  %v310 = vld [vmem:[%s0 + $0x928] sm:$0xff]
  %v311 = vld [vmem:[%s0 + $0x930] sm:$0xff]
  %v312 = vld [vmem:[%s0 + $0x938] sm:$0xff]
  %v313 = vld [vmem:[%s0 + $0x940] sm:$0xff]
  %v314 = vld [vmem:[%s0 + $0x948] sm:$0xff]
  %v315 = vld [vmem:[%s0 + $0x950] sm:$0xff]
  %v316 = vld [vmem:[%s0 + $0x958] sm:$0xff]
  %v317 = vld [vmem:[%s0 + $0x960] sm:$0xff]
  %v318 = vld [vmem:[%s0 + $0x968] sm:$0xff]
  %v319 = vld [vmem:[%s0 + $0x970] sm:$0xff]
  %v320 = vld [vmem:[%s0 + $0x978] sm:$0xff]
  %v321 = vld [vmem:[%s0 + $0x980] sm:$0xff]
  %v322 = vld [vmem:[%s0 + $0x988] sm:$0xff]
  %v323 = vld [vmem:[%s0 + $0x990] sm:$0xff]
  %v324 = vld [vmem:[%s0 + $0x998] sm:$0xff]
  %v325 = vld [vmem:[%s0 + $0x9a0] sm:$0xff]
  %v326 = vld [vmem:[%s0 + $0x9a8] sm:$0xff]
  %v327 = vld [vmem:[%s0 + $0x9b0] sm:$0xff]
  %v328 = vld [vmem:[%s0 + $0x9b8] sm:$0xff]
  %v329 = vld [vmem:[%s0 + $0x9c0] sm:$0xff]
  %v330 = vld [vmem:[%s0 + $0x9c8] sm:$0xff]
  %v331 = vld [vmem:[%s0 + $0x9d0] sm:$0xff]
  %v332 = vld [vmem:[%s0 + $0x9d8] sm:$0xff]
  %v333 = vld [vmem:[%s0 + $0x9e0] sm:$0xff]
  %v334 = vld [vmem:[%s0 + $0x9e8] sm:$0xff]
  %v335 = vld [vmem:[%s0 + $0x9f0] sm:$0xff]
  %v336 = vld [vmem:[%s0 + $0x9f8] sm:$0xff]
  %v337 = vld [vmem:[%s0 + $0xa00] sm:$0xff]
  %v338 = vld [vmem:[%s0 + $0xa08] sm:$0xff]
  %v339 = vld [vmem:[%s0 + $0xa10] sm:$0xff]
  %v340 = vld [vmem:[%s0 + $0xa18] sm:$0xff]
  %v341 = vld [vmem:[%s0 + $0xa20] sm:$0xff]
  %v342 = vld [vmem:[%s0 + $0xa28] sm:$0xff]
  %v343 = vld [vmem:[%s0 + $0xa30] sm:$0xff]
  %v344 = vld [vmem:[%s0 + $0xa38] sm:$0xff]
  %v345 = vld [vmem:[%s0 + $0xa40] sm:$0xff]
  %v346 = vld [vmem:[%s0 + $0xa48] sm:$0xff]
  %v347 = vld [vmem:[%s0 + $0xa50] sm:$0xff]
  %v348 = vld [vmem:[%s0 + $0xa58] sm:$0xff]
  %v349 = vld [vmem:[%s0 + $0xa60] sm:$0xff]
  %v350 = vld [vmem:[%s0 + $0xa68] sm:$0xff]
  %v351 = vld [vmem:[%s0 + $0xa70] sm:$0xff]
  %v352 = vld [vmem:[%s0 + $0xa78] sm:$0xff]
  %v353 = vld [vmem:[%s0 + $0xa80] sm:$0xff]
  %v354 = vld [vmem:[%s0 + $0xa88] sm:$0xff]
  %v355 = vld [vmem:[%s0 + $0xa90] sm:$0xff]
  %v356 = vld [vmem:[%s0 + $0xa98] sm:$0xff]
  %v357 = vld [vmem:[%s0 + $0xaa0] sm:$0xff]
  %v358 = vld [vmem:[%s0 + $0xaa8] sm:$0xff]
  %v359 = vld [vmem:[%s0 + $0xab0] sm:$0xff]
  %v360 = vld [vmem:[%s0 + $0xab8] sm:$0xff]
  %v361 = vld [vmem:[%s0 + $0xac0] sm:$0xff]
  %v362 = vld [vmem:[%s0 + $0xac8] sm:$0xff]
  %v363 = vld [vmem:[%s0 + $0xad0] sm:$0xff]
  %v364 = vld [vmem:[%s0 + $0xad8] sm:$0xff]
  %v365 = vld [vmem:[%s0 + $0xae0] sm:$0xff]
  %v366 = vld [vmem:[%s0 + $0xae8] sm:$0xff]
  %v367 = vld [vmem:[%s0 + $0xaf0] sm:$0xff]
  %v368 = vld [vmem:[%s0 + $0xaf8] sm:$0xff]
  %v369 = vld [vmem:[%s0 + $0xb00] sm:$0xff]
  %v370 = vld [vmem:[%s0 + $0xb08] sm:$0xff]
  %v371 = vld [vmem:[%s0 + $0xb10] sm:$0xff]
  %v372 = vld [vmem:[%s0 + $0xb18] sm:$0xff]
  %v373 = vld [vmem:[%s0 + $0xb20] sm:$0xff]
  %v374 = vld [vmem:[%s0 + $0xb28] sm:$0xff]
  %v375 = vld [vmem:[%s0 + $0xb30] sm:$0xff]
  %v376 = vld [vmem:[%s0 + $0xb38] sm:$0xff]
  %v377 = vld [vmem:[%s0 + $0xb40] sm:$0xff]
  %v378 = vld [vmem:[%s0 + $0xb48] sm:$0xff]
  %v379 = vld [vmem:[%s0 + $0xb50] sm:$0xff]
  %v380 = vld [vmem:[%s0 + $0xb58] sm:$0xff]
  %v381 = vld [vmem:[%s0 + $0xb60] sm:$0xff]
  %v382 = vld [vmem:[%s0 + $0xb68] sm:$0xff]
  %v383 = vld [vmem:[%s0 + $0xb70] sm:$0xff]
  %v384 = vld [vmem:[%s0 + $0xb78] sm:$0xff]
  %v385 = vld [vmem:[%s0 + $0xb80] sm:$0xff]
  %v386 = vld [vmem:[%s0 + $0xb88] sm:$0xff]
  %v387 = vld [vmem:[%s0 + $0xb90] sm:$0xff]
  %v388 = vld [vmem:[%s0 + $0xb98] sm:$0xff]
  %v389 = vld [vmem:[%s0 + $0xba0] sm:$0xff]
  %v390 = vld [vmem:[%s0 + $0xba8] sm:$0xff]
  %v391 = vld [vmem:[%s0 + $0xbb0] sm:$0xff]
  %v392 = vld [vmem:[%s0 + $0xbb8] sm:$0xff]
  %v393 = vld [vmem:[%s0 + $0xbc0] sm:$0xff]
  %v394 = vld [vmem:[%s0 + $0xbc8] sm:$0xff]
  %v395 = vld [vmem:[%s0 + $0xbd0] sm:$0xff]
  %v396 = vld [vmem:[%s0 + $0xbd8] sm:$0xff]
  %v397 = vld [vmem:[%s0 + $0xbe0] sm:$0xff]
  %v398 = vld [vmem:[%s0 + $0xbe8] sm:$0xff]
  %v399 = vld [vmem:[%s0 + $0xbf0] sm:$0xff]
  %v400 = vld [vmem:[%s0 + $0xbf8] sm:$0xff]
  %v401 = vld [vmem:[%s0 + $0xc00] sm:$0xff]
  %v402 = vld [vmem:[%s0 + $0xc08] sm:$0xff]
  %v403 = vld [vmem:[%s0 + $0xc10] sm:$0xff]
  %v404 = vld [vmem:[%s0 + $0xc18] sm:$0xff]
  %v405 = vld [vmem:[%s0 + $0xc20] sm:$0xff]
  %v406 = vld [vmem:[%s0 + $0xc28] sm:$0xff]
  %v407 = vld [vmem:[%s0 + $0xc30] sm:$0xff]
  %v408 = vld [vmem:[%s0 + $0xc38] sm:$0xff]
  %v409 = vld [vmem:[%s0 + $0xc40] sm:$0xff]
  %v410 = vld [vmem:[%s0 + $0xc48] sm:$0xff]
  %v411 = vld [vmem:[%s0 + $0xc50] sm:$0xff]
  %v412 = vld [vmem:[%s0 + $0xc58] sm:$0xff]
  %v413 = vld [vmem:[%s0 + $0xc60] sm:$0xff]
  %v414 = vld [vmem:[%s0 + $0xc68] sm:$0xff]
  %v415 = vld [vmem:[%s0 + $0xc70] sm:$0xff]
  %v416 = vld [vmem:[%s0 + $0xc78] sm:$0xff]
  %v417 = vld [vmem:[%s0 + $0xc80] sm:$0xff]
  %v418 = vld [vmem:[%s0 + $0xc88] sm:$0xff]
  %v419 = vld [vmem:[%s0 + $0xc90] sm:$0xff]
  %v420 = vld [vmem:[%s0 + $0xc98] sm:$0xff]
  %v421 = vld [vmem:[%s0 + $0xca0] sm:$0xff]
  %v422 = vld [vmem:[%s0 + $0xca8] sm:$0xff]
  %v423 = vld [vmem:[%s0 + $0xcb0] sm:$0xff]
  %v424 = vld [vmem:[%s0 + $0xcb8] sm:$0xff]
  %v425 = vld [vmem:[%s0 + $0xcc0] sm:$0xff]
  %v426 = vld [vmem:[%s0 + $0xcc8] sm:$0xff]
  %v427 = vld [vmem:[%s0 + $0xcd0] sm:$0xff]
  %v428 = vld [vmem:[%s0 + $0xcd8] sm:$0xff]
  %v429 = vld [vmem:[%s0 + $0xce0] sm:$0xff]
  %v430 = vld [vmem:[%s0 + $0xce8] sm:$0xff]
  %v431 = vld [vmem:[%s0 + $0xcf0] sm:$0xff]
  %v432 = vld [vmem:[%s0 + $0xcf8] sm:$0xff]
  %v433 = vld [vmem:[%s0 + $0xd00] sm:$0xff]
  %v434 = vld [vmem:[%s0 + $0xd08] sm:$0xff]
  %v435 = vld [vmem:[%s0 + $0xd10] sm:$0xff]
  %v436 = vld [vmem:[%s0 + $0xd18] sm:$0xff]
  %v437 = vld [vmem:[%s0 + $0xd20] sm:$0xff]
  %v438 = vld [vmem:[%s0 + $0xd28] sm:$0xff]
  %v439 = vld [vmem:[%s0 + $0xd30] sm:$0xff]
  %v440 = vld [vmem:[%s0 + $0xd38] sm:$0xff]
  %v441 = vld [vmem:[%s0 + $0xd40] sm:$0xff]
  %v442 = vld [vmem:[%s0 + $0xd48] sm:$0xff]
  %v443 = vld [vmem:[%s0 + $0xd50] sm:$0xff]
  %v444 = vld [vmem:[%s0 + $0xd58] sm:$0xff]
  %v445 = vld [vmem:[%s0 + $0xd60] sm:$0xff]
  %v446 = vld [vmem:[%s0 + $0xd68] sm:$0xff]
  %v447 = vld [vmem:[%s0 + $0xd70] sm:$0xff]
  %v448 = vld [vmem:[%s0 + $0xd78] sm:$0xff]
  %v449 = vld [vmem:[%s0 + $0xd80] sm:$0xff]
  %v450 = vld [vmem:[%s0 + $0xd88] sm:$0xff]
  %v451 = vld [vmem:[%s0 + $0xd90] sm:$0xff]
  %v452 = vld [vmem:[%s0 + $0xd98] sm:$0xff]
  %v453 = vld [vmem:[%s0 + $0xda0] sm:$0xff]
  %v454 = vld [vmem:[%s0 + $0xda8] sm:$0xff]
  %v455 = vld [vmem:[%s0 + $0xdb0] sm:$0xff]
  %v456 = vld [vmem:[%s0 + $0xdb8] sm:$0xff]
  %v457 = vld [vmem:[%s0 + $0xdc0] sm:$0xff]
  %v458 = vld [vmem:[%s0 + $0xdc8] sm:$0xff]
  %v459 = vld [vmem:[%s0 + $0xdd0] sm:$0xff]
  %v460 = vld [vmem:[%s0 + $0xdd8] sm:$0xff]
  %v461 = vld [vmem:[%s0 + $0xde0] sm:$0xff]
  %v462 = vld [vmem:[%s0 + $0xde8] sm:$0xff]
  %v463 = vld [vmem:[%s0 + $0xdf0] sm:$0xff]
  %v464 = vld [vmem:[%s0 + $0xdf8] sm:$0xff]
  %v465 = vld [vmem:[%s0 + $0xe00] sm:$0xff]
  %v466 = vld [vmem:[%s0 + $0xe08] sm:$0xff]
  %v467 = vld [vmem:[%s0 + $0xe10] sm:$0xff]
  %v468 = vld [vmem:[%s0 + $0xe18] sm:$0xff]
  %v469 = vld [vmem:[%s0 + $0xe20] sm:$0xff]
  %v470 = vld [vmem:[%s0 + $0xe28] sm:$0xff]
  %v471 = vld [vmem:[%s0 + $0xe30] sm:$0xff]
  %v472 = vld [vmem:[%s0 + $0xe38] sm:$0xff]
  %v473 = vld [vmem:[%s0 + $0xe40] sm:$0xff]
  %v474 = vld [vmem:[%s0 + $0xe48] sm:$0xff]
  %v475 = vld [vmem:[%s0 + $0xe50] sm:$0xff]
  %v476 = vld [vmem:[%s0 + $0xe58] sm:$0xff]
  %v477 = vld [vmem:[%s0 + $0xe60] sm:$0xff]
  %v478 = vld [vmem:[%s0 + $0xe68] sm:$0xff]
  %v479 = vld [vmem:[%s0 + $0xe70] sm:$0xff]
  %v480 = vld [vmem:[%s0 + $0xe78] sm:$0xff]
  %v481 = vld [vmem:[%s0 + $0xe80] sm:$0xff]
  %v482 = vld [vmem:[%s0 + $0xe88] sm:$0xff]
  %v483 = vld [vmem:[%s0 + $0xe90] sm:$0xff]
  %v484 = vld [vmem:[%s0 + $0xe98] sm:$0xff]
  %v485 = vld [vmem:[%s0 + $0xea0] sm:$0xff]
  %v486 = vld [vmem:[%s0 + $0xea8] sm:$0xff]
  %v487 = vld [vmem:[%s0 + $0xeb0] sm:$0xff]
  %v488 = vld [vmem:[%s0 + $0xeb8] sm:$0xff]
  %v489 = vld [vmem:[%s0 + $0xec0] sm:$0xff]
  %v490 = vld [vmem:[%s0 + $0xec8] sm:$0xff]
  %v491 = vld [vmem:[%s0 + $0xed0] sm:$0xff]
  %v492 = vld [vmem:[%s0 + $0xed8] sm:$0xff]
  %v493 = vld [vmem:[%s0 + $0xee0] sm:$0xff]
  %v494 = vld [vmem:[%s0 + $0xee8] sm:$0xff]
  %v495 = vld [vmem:[%s0 + $0xef0] sm:$0xff]
  %v496 = vld [vmem:[%s0 + $0xef8] sm:$0xff]
  %v497 = vld [vmem:[%s0 + $0xf00] sm:$0xff]
  %v498 = vld [vmem:[%s0 + $0xf08] sm:$0xff]
  %v499 = vld [vmem:[%s0 + $0xf10] sm:$0xff]
  %v500 = vld [vmem:[%s0 + $0xf18] sm:$0xff]
  %v501 = vld [vmem:[%s0 + $0xf20] sm:$0xff]
  %v502 = vld [vmem:[%s0 + $0xf28] sm:$0xff]
  %v503 = vld [vmem:[%s0 + $0xf30] sm:$0xff]
  %v504 = vld [vmem:[%s0 + $0xf38] sm:$0xff]
  %v505 = vld [vmem:[%s0 + $0xf40] sm:$0xff]
  %v506 = vld [vmem:[%s0 + $0xf48] sm:$0xff]
  %v507 = vld [vmem:[%s0 + $0xf50] sm:$0xff]
  %v508 = vld [vmem:[%s0 + $0xf58] sm:$0xff]
  %v509 = vld [vmem:[%s0 + $0xf60] sm:$0xff]
  %v510 = vld [vmem:[%s0 + $0xf68] sm:$0xff]
  %v511 = vld [vmem:[%s0 + $0xf70] sm:$0xff]
  %v512 = vld [vmem:[%s0 + $0xf78] sm:$0xff]
  %v513 = vld [vmem:[%s0 + $0xf80] sm:$0xff]
  %v514 = vld [vmem:[%s0 + $0xf88] sm:$0xff]
  %v515 = vld [vmem:[%s0 + $0xf90] sm:$0xff]
  %v516 = vld [vmem:[%s0 + $0xf98] sm:$0xff]
  %v517 = vld [vmem:[%s0 + $0xfa0] sm:$0xff]
  %v518 = vld [vmem:[%s0 + $0xfa8] sm:$0xff]
  %v519 = vld [vmem:[%s0 + $0xfb0] sm:$0xff]
  %v520 = vld [vmem:[%s0 + $0xfb8] sm:$0xff]
  %v521 = vld [vmem:[%s0 + $0xfc0] sm:$0xff]
  %v522 = vld [vmem:[%s0 + $0xfc8] sm:$0xff]
  %v523 = vld [vmem:[%s0 + $0xfd0] sm:$0xff]
  %v524 = vld [vmem:[%s0 + $0xfd8] sm:$0xff]
  %v525 = vld [vmem:[%s0 + $0xfe0] sm:$0xff]
  %v526 = vld [vmem:[%s0 + $0xfe8] sm:$0xff]
  %v527 = vld [vmem:[%s0 + $0xff0] sm:$0xff]
  %v528 = vld [vmem:[%s0 + $0xff8] sm:$0xff]
  %v529 = vld [vmem:[%s1] sm:$0xff]
  %v530 = vld [vmem:[%s1 + $0x8] sm:$0xff]
  %v531 = vld [vmem:[%s1 + $0x10] sm:$0xff]
  %v532 = vld [vmem:[%s1 + $0x18] sm:$0xff]
  %v533 = vld [vmem:[%s1 + $0x20] sm:$0xff]
  %v534 = vld [vmem:[%s1 + $0x28] sm:$0xff]
  %v535 = vld [vmem:[%s1 + $0x30] sm:$0xff]
  %v536 = vld [vmem:[%s1 + $0x38] sm:$0xff]
  %v537 = vld [vmem:[%s1 + $0x40] sm:$0xff]
  %v538 = vld [vmem:[%s1 + $0x48] sm:$0xff]
  %v539 = vld [vmem:[%s1 + $0x50] sm:$0xff]
  %v540 = vld [vmem:[%s1 + $0x58] sm:$0xff]
  %v541 = vld [vmem:[%s1 + $0x60] sm:$0xff]
  %v542 = vld [vmem:[%s1 + $0x68] sm:$0xff]
  %v543 = vld [vmem:[%s1 + $0x70] sm:$0xff]
  %v544 = vld [vmem:[%s1 + $0x78] sm:$0xff]
  %v545 = vld [vmem:[%s1 + $0x80] sm:$0xff]
  %v546 = vld [vmem:[%s1 + $0x88] sm:$0xff]
  %v547 = vld [vmem:[%s1 + $0x90] sm:$0xff]
  %v548 = vld [vmem:[%s1 + $0x98] sm:$0xff]
  %v549 = vld [vmem:[%s1 + $0xa0] sm:$0xff]
  %v550 = vld [vmem:[%s1 + $0xa8] sm:$0xff]
  %v551 = vld [vmem:[%s1 + $0xb0] sm:$0xff]
  %v552 = vld [vmem:[%s1 + $0xb8] sm:$0xff]
  %v553 = vld [vmem:[%s1 + $0xc0] sm:$0xff]
  %v554 = vld [vmem:[%s1 + $0xc8] sm:$0xff]
  %v555 = vld [vmem:[%s1 + $0xd0] sm:$0xff]
  %v556 = vld [vmem:[%s1 + $0xd8] sm:$0xff]
  %v557 = vld [vmem:[%s1 + $0xe0] sm:$0xff]
  %v558 = vld [vmem:[%s1 + $0xe8] sm:$0xff]
  %v559 = vld [vmem:[%s1 + $0xf0] sm:$0xff]
  %v560 = vld [vmem:[%s1 + $0xf8] sm:$0xff]
  %561 = vmatpush.msra.mxu0 %v544
  %562 = vmatpush.msra.mxu0 %v543
  %563 = vmatpush.msra.mxu0 %v542
  %564 = vmatpush.msra.mxu0 %v541
  %565 = vmatpush.msra.mxu0 %v540
  %566 = vmatpush.msra.mxu0 %v539
  %567 = vmatpush.msra.mxu0 %v538
  %568 = vmatpush.msra.mxu0 %v537
  %569 = vmatpush.msra.mxu0 %v536
  %570 = vmatpush.msra.mxu0 %v535
  %571 = vmatpush.msra.mxu0 %v534
  %572 = vmatpush.msra.mxu0 %v533
  %573 = vmatpush.msra.mxu0 %v532
  %574 = vmatpush.msra.mxu0 %v531
  %575 = vmatpush.msra.mxu0 %v530
  %576 = vmatpush.msra.mxu0 %v529
  %577 = vmatmul.f32.gmra.mxu0 %v17
  %v578 = vpop.f32.mrf.mxu0
  %v579 = vadd.f32 0.0, %v578
  %580 = vmatmul.f32.gmra.mxu0 %v19
  %v581 = vpop.f32.mrf.mxu0
  %v582 = vadd.f32 0.0, %v581
  %583 = vmatmul.f32.gmra.mxu0 %v21
  %v584 = vpop.f32.mrf.mxu0
  %v585 = vadd.f32 0.0, %v584
  %586 = vmatmul.f32.gmra.mxu0 %v23
  %v587 = vpop.f32.mrf.mxu0
  %v588 = vadd.f32 0.0, %v587
  %589 = vmatmul.f32.gmra.mxu0 %v25
  %v590 = vpop.f32.mrf.mxu0
  %v591 = vadd.f32 0.0, %v590
  %592 = vmatmul.f32.gmra.mxu0 %v27
  %v593 = vpop.f32.mrf.mxu0
  %v594 = vadd.f32 0.0, %v593
  %595 = vmatmul.f32.gmra.mxu0 %v29
  %v596 = vpop.f32.mrf.mxu0
  %v597 = vadd.f32 0.0, %v596
  %598 = vmatmul.f32.gmra.mxu0 %v31
  %v599 = vpop.f32.mrf.mxu0
  %v600 = vadd.f32 0.0, %v599
  %601 = vmatmul.f32.gmra.mxu0 %v33
  %v602 = vpop.f32.mrf.mxu0
  %v603 = vadd.f32 0.0, %v602
  %604 = vmatmul.f32.gmra.mxu0 %v35
  %v605 = vpop.f32.mrf.mxu0
  %v606 = vadd.f32 0.0, %v605
  %607 = vmatmul.f32.gmra.mxu0 %v37
  %v608 = vpop.f32.mrf.mxu0
  %v609 = vadd.f32 0.0, %v608
  %610 = vmatmul.f32.gmra.mxu0 %v39
  %v611 = vpop.f32.mrf.mxu0
  %v612 = vadd.f32 0.0, %v611
  %613 = vmatmul.f32.gmra.mxu0 %v41
  %v614 = vpop.f32.mrf.mxu0
  %v615 = vadd.f32 0.0, %v614
  %616 = vmatmul.f32.gmra.mxu0 %v43
  %v617 = vpop.f32.mrf.mxu0
  %v618 = vadd.f32 0.0, %v617
  %619 = vmatmul.f32.gmra.mxu0 %v45
  %v620 = vpop.f32.mrf.mxu0
  %v621 = vadd.f32 0.0, %v620
  %622 = vmatmul.f32.gmra.mxu0 %v47
  %v623 = vpop.f32.mrf.mxu0
  %v624 = vadd.f32 0.0, %v623
  %625 = vmatmul.f32.gmra.mxu0 %v49
  %v626 = vpop.f32.mrf.mxu0
  %v627 = vadd.f32 0.0, %v626
  %628 = vmatmul.f32.gmra.mxu0 %v51
  %v629 = vpop.f32.mrf.mxu0
  %v630 = vadd.f32 0.0, %v629
  %631 = vmatmul.f32.gmra.mxu0 %v53
  %v632 = vpop.f32.mrf.mxu0
  %v633 = vadd.f32 0.0, %v632
  %634 = vmatmul.f32.gmra.mxu0 %v55
  %v635 = vpop.f32.mrf.mxu0
  %v636 = vadd.f32 0.0, %v635
  %637 = vmatmul.f32.gmra.mxu0 %v57
  %v638 = vpop.f32.mrf.mxu0
  %v639 = vadd.f32 0.0, %v638
  %640 = vmatmul.f32.gmra.mxu0 %v59
  %v641 = vpop.f32.mrf.mxu0
  %v642 = vadd.f32 0.0, %v641
  %643 = vmatmul.f32.gmra.mxu0 %v61
  %v644 = vpop.f32.mrf.mxu0
  %v645 = vadd.f32 0.0, %v644
  %646 = vmatmul.f32.gmra.mxu0 %v63
  %v647 = vpop.f32.mrf.mxu0
  %v648 = vadd.f32 0.0, %v647
  %649 = vmatmul.f32.gmra.mxu0 %v65
  %v650 = vpop.f32.mrf.mxu0
  %v651 = vadd.f32 0.0, %v650
  %652 = vmatmul.f32.gmra.mxu0 %v67
  %v653 = vpop.f32.mrf.mxu0
  %v654 = vadd.f32 0.0, %v653
  %655 = vmatmul.f32.gmra.mxu0 %v69
  %v656 = vpop.f32.mrf.mxu0
  %v657 = vadd.f32 0.0, %v656
  %658 = vmatmul.f32.gmra.mxu0 %v71
  %v659 = vpop.f32.mrf.mxu0
  %v660 = vadd.f32 0.0, %v659
  %661 = vmatmul.f32.gmra.mxu0 %v73
  %v662 = vpop.f32.mrf.mxu0
  %v663 = vadd.f32 0.0, %v662
  %664 = vmatmul.f32.gmra.mxu0 %v75
  %v665 = vpop.f32.mrf.mxu0
  %v666 = vadd.f32 0.0, %v665
  %667 = vmatmul.f32.gmra.mxu0 %v77
  %v668 = vpop.f32.mrf.mxu0
  %v669 = vadd.f32 0.0, %v668
  %670 = vmatmul.f32.gmra.mxu0 %v79
  %v671 = vpop.f32.mrf.mxu0
  %v672 = vadd.f32 0.0, %v671
  %673 = vmatmul.f32.gmra.mxu0 %v81
  %v674 = vpop.f32.mrf.mxu0
  %v675 = vadd.f32 0.0, %v674
  %676 = vmatmul.f32.gmra.mxu0 %v83
  %v677 = vpop.f32.mrf.mxu0
  %v678 = vadd.f32 0.0, %v677
  %679 = vmatmul.f32.gmra.mxu0 %v85
  %v680 = vpop.f32.mrf.mxu0
  %v681 = vadd.f32 0.0, %v680
  %682 = vmatmul.f32.gmra.mxu0 %v87
  %v683 = vpop.f32.mrf.mxu0
  %v684 = vadd.f32 0.0, %v683
  %685 = vmatmul.f32.gmra.mxu0 %v89
  %v686 = vpop.f32.mrf.mxu0
  %v687 = vadd.f32 0.0, %v686
  %688 = vmatmul.f32.gmra.mxu0 %v91
  %v689 = vpop.f32.mrf.mxu0
  %v690 = vadd.f32 0.0, %v689
  %691 = vmatmul.f32.gmra.mxu0 %v93
  %v692 = vpop.f32.mrf.mxu0
  %v693 = vadd.f32 0.0, %v692
  %694 = vmatmul.f32.gmra.mxu0 %v95
  %v695 = vpop.f32.mrf.mxu0
  %v696 = vadd.f32 0.0, %v695
  %697 = vmatmul.f32.gmra.mxu0 %v97
  %v698 = vpop.f32.mrf.mxu0
  %v699 = vadd.f32 0.0, %v698
  %700 = vmatmul.f32.gmra.mxu0 %v99
  %v701 = vpop.f32.mrf.mxu0
  %v702 = vadd.f32 0.0, %v701
  %703 = vmatmul.f32.gmra.mxu0 %v101
  %v704 = vpop.f32.mrf.mxu0
  %v705 = vadd.f32 0.0, %v704
  %706 = vmatmul.f32.gmra.mxu0 %v103
  %v707 = vpop.f32.mrf.mxu0
  %v708 = vadd.f32 0.0, %v707
  %709 = vmatmul.f32.gmra.mxu0 %v105
  %v710 = vpop.f32.mrf.mxu0
  %v711 = vadd.f32 0.0, %v710
  %712 = vmatmul.f32.gmra.mxu0 %v107
  %v713 = vpop.f32.mrf.mxu0
  %v714 = vadd.f32 0.0, %v713
  %715 = vmatmul.f32.gmra.mxu0 %v109
  %v716 = vpop.f32.mrf.mxu0
  %v717 = vadd.f32 0.0, %v716
  %718 = vmatmul.f32.gmra.mxu0 %v111
  %v719 = vpop.f32.mrf.mxu0
  %v720 = vadd.f32 0.0, %v719
  %721 = vmatmul.f32.gmra.mxu0 %v113
  %v722 = vpop.f32.mrf.mxu0
  %v723 = vadd.f32 0.0, %v722
  %724 = vmatmul.f32.gmra.mxu0 %v115
  %v725 = vpop.f32.mrf.mxu0
  %v726 = vadd.f32 0.0, %v725
  %727 = vmatmul.f32.gmra.mxu0 %v117
  %v728 = vpop.f32.mrf.mxu0
  %v729 = vadd.f32 0.0, %v728
  %730 = vmatmul.f32.gmra.mxu0 %v119
  %v731 = vpop.f32.mrf.mxu0
  %v732 = vadd.f32 0.0, %v731
  %733 = vmatmul.f32.gmra.mxu0 %v121
  %v734 = vpop.f32.mrf.mxu0
  %v735 = vadd.f32 0.0, %v734
  %736 = vmatmul.f32.gmra.mxu0 %v123
  %v737 = vpop.f32.mrf.mxu0
  %v738 = vadd.f32 0.0, %v737
  %739 = vmatmul.f32.gmra.mxu0 %v125
  %v740 = vpop.f32.mrf.mxu0
  %v741 = vadd.f32 0.0, %v740
  %742 = vmatmul.f32.gmra.mxu0 %v127
  %v743 = vpop.f32.mrf.mxu0
  %v744 = vadd.f32 0.0, %v743
  %745 = vmatmul.f32.gmra.mxu0 %v129
  %v746 = vpop.f32.mrf.mxu0
  %v747 = vadd.f32 0.0, %v746
  %748 = vmatmul.f32.gmra.mxu0 %v131
  %v749 = vpop.f32.mrf.mxu0
  %v750 = vadd.f32 0.0, %v749
  %751 = vmatmul.f32.gmra.mxu0 %v133
  %v752 = vpop.f32.mrf.mxu0
  %v753 = vadd.f32 0.0, %v752
  %754 = vmatmul.f32.gmra.mxu0 %v135
  %v755 = vpop.f32.mrf.mxu0
  %v756 = vadd.f32 0.0, %v755
  %757 = vmatmul.f32.gmra.mxu0 %v137
  %v758 = vpop.f32.mrf.mxu0
  %v759 = vadd.f32 0.0, %v758
  %760 = vmatmul.f32.gmra.mxu0 %v139
  %v761 = vpop.f32.mrf.mxu0
  %v762 = vadd.f32 0.0, %v761
  %763 = vmatmul.f32.gmra.mxu0 %v141
  %v764 = vpop.f32.mrf.mxu0
  %v765 = vadd.f32 0.0, %v764
  %766 = vmatmul.f32.gmra.mxu0 %v143
  %v767 = vpop.f32.mrf.mxu0
  %v768 = vadd.f32 0.0, %v767
  %769 = vmatmul.f32.gmra.mxu0 %v145
  %v770 = vpop.f32.mrf.mxu0
  %v771 = vadd.f32 0.0, %v770
  %772 = vmatmul.f32.gmra.mxu0 %v147
  %v773 = vpop.f32.mrf.mxu0
  %v774 = vadd.f32 0.0, %v773
  %775 = vmatmul.f32.gmra.mxu0 %v149
  %v776 = vpop.f32.mrf.mxu0
  %v777 = vadd.f32 0.0, %v776
  %778 = vmatmul.f32.gmra.mxu0 %v151
  %v779 = vpop.f32.mrf.mxu0
  %v780 = vadd.f32 0.0, %v779
  %781 = vmatmul.f32.gmra.mxu0 %v153
  %v782 = vpop.f32.mrf.mxu0
  %v783 = vadd.f32 0.0, %v782
  %784 = vmatmul.f32.gmra.mxu0 %v155
  %v785 = vpop.f32.mrf.mxu0
  %v786 = vadd.f32 0.0, %v785
  %787 = vmatmul.f32.gmra.mxu0 %v157
  %v788 = vpop.f32.mrf.mxu0
  %v789 = vadd.f32 0.0, %v788
  %790 = vmatmul.f32.gmra.mxu0 %v159
  %v791 = vpop.f32.mrf.mxu0
  %v792 = vadd.f32 0.0, %v791
  %793 = vmatmul.f32.gmra.mxu0 %v161
  %v794 = vpop.f32.mrf.mxu0
  %v795 = vadd.f32 0.0, %v794
  %796 = vmatmul.f32.gmra.mxu0 %v163
  %v797 = vpop.f32.mrf.mxu0
  %v798 = vadd.f32 0.0, %v797
  %799 = vmatmul.f32.gmra.mxu0 %v165
  %v800 = vpop.f32.mrf.mxu0
  %v801 = vadd.f32 0.0, %v800
  %802 = vmatmul.f32.gmra.mxu0 %v167
  %v803 = vpop.f32.mrf.mxu0
  %v804 = vadd.f32 0.0, %v803
  %805 = vmatmul.f32.gmra.mxu0 %v169
  %v806 = vpop.f32.mrf.mxu0
  %v807 = vadd.f32 0.0, %v806
  %808 = vmatmul.f32.gmra.mxu0 %v171
  %v809 = vpop.f32.mrf.mxu0
  %v810 = vadd.f32 0.0, %v809
  %811 = vmatmul.f32.gmra.mxu0 %v173
  %v812 = vpop.f32.mrf.mxu0
  %v813 = vadd.f32 0.0, %v812
  %814 = vmatmul.f32.gmra.mxu0 %v175
  %v815 = vpop.f32.mrf.mxu0
  %v816 = vadd.f32 0.0, %v815
  %817 = vmatmul.f32.gmra.mxu0 %v177
  %v818 = vpop.f32.mrf.mxu0
  %v819 = vadd.f32 0.0, %v818
  %820 = vmatmul.f32.gmra.mxu0 %v179
  %v821 = vpop.f32.mrf.mxu0
  %v822 = vadd.f32 0.0, %v821
  %823 = vmatmul.f32.gmra.mxu0 %v181
  %v824 = vpop.f32.mrf.mxu0
  %v825 = vadd.f32 0.0, %v824
  %826 = vmatmul.f32.gmra.mxu0 %v183
  %v827 = vpop.f32.mrf.mxu0
  %v828 = vadd.f32 0.0, %v827
  %829 = vmatmul.f32.gmra.mxu0 %v185
  %v830 = vpop.f32.mrf.mxu0
  %v831 = vadd.f32 0.0, %v830
  %832 = vmatmul.f32.gmra.mxu0 %v187
  %v833 = vpop.f32.mrf.mxu0
  %v834 = vadd.f32 0.0, %v833
  %835 = vmatmul.f32.gmra.mxu0 %v189
  %v836 = vpop.f32.mrf.mxu0
  %v837 = vadd.f32 0.0, %v836
  %838 = vmatmul.f32.gmra.mxu0 %v191
  %v839 = vpop.f32.mrf.mxu0
  %v840 = vadd.f32 0.0, %v839
  %841 = vmatmul.f32.gmra.mxu0 %v193
  %v842 = vpop.f32.mrf.mxu0
  %v843 = vadd.f32 0.0, %v842
  %844 = vmatmul.f32.gmra.mxu0 %v195
  %v845 = vpop.f32.mrf.mxu0
  %v846 = vadd.f32 0.0, %v845
  %847 = vmatmul.f32.gmra.mxu0 %v197
  %v848 = vpop.f32.mrf.mxu0
  %v849 = vadd.f32 0.0, %v848
  %850 = vmatmul.f32.gmra.mxu0 %v199
  %v851 = vpop.f32.mrf.mxu0
  %v852 = vadd.f32 0.0, %v851
  %853 = vmatmul.f32.gmra.mxu0 %v201
  %v854 = vpop.f32.mrf.mxu0
  %v855 = vadd.f32 0.0, %v854
  %856 = vmatmul.f32.gmra.mxu0 %v203
  %v857 = vpop.f32.mrf.mxu0
  %v858 = vadd.f32 0.0, %v857
  %859 = vmatmul.f32.gmra.mxu0 %v205
  %v860 = vpop.f32.mrf.mxu0
  %v861 = vadd.f32 0.0, %v860
  %862 = vmatmul.f32.gmra.mxu0 %v207
  %v863 = vpop.f32.mrf.mxu0
  %v864 = vadd.f32 0.0, %v863
  %865 = vmatmul.f32.gmra.mxu0 %v209
  %v866 = vpop.f32.mrf.mxu0
  %v867 = vadd.f32 0.0, %v866
  %868 = vmatmul.f32.gmra.mxu0 %v211
  %v869 = vpop.f32.mrf.mxu0
  %v870 = vadd.f32 0.0, %v869
  %871 = vmatmul.f32.gmra.mxu0 %v213
  %v872 = vpop.f32.mrf.mxu0
  %v873 = vadd.f32 0.0, %v872
  %874 = vmatmul.f32.gmra.mxu0 %v215
  %v875 = vpop.f32.mrf.mxu0
  %v876 = vadd.f32 0.0, %v875
  %877 = vmatmul.f32.gmra.mxu0 %v217
  %v878 = vpop.f32.mrf.mxu0
  %v879 = vadd.f32 0.0, %v878
  %880 = vmatmul.f32.gmra.mxu0 %v219
  %v881 = vpop.f32.mrf.mxu0
  %v882 = vadd.f32 0.0, %v881
  %883 = vmatmul.f32.gmra.mxu0 %v221
  %v884 = vpop.f32.mrf.mxu0
  %v885 = vadd.f32 0.0, %v884
  %886 = vmatmul.f32.gmra.mxu0 %v223
  %v887 = vpop.f32.mrf.mxu0
  %v888 = vadd.f32 0.0, %v887
  %889 = vmatmul.f32.gmra.mxu0 %v225
  %v890 = vpop.f32.mrf.mxu0
  %v891 = vadd.f32 0.0, %v890
  %892 = vmatmul.f32.gmra.mxu0 %v227
  %v893 = vpop.f32.mrf.mxu0
  %v894 = vadd.f32 0.0, %v893
  %895 = vmatmul.f32.gmra.mxu0 %v229
  %v896 = vpop.f32.mrf.mxu0
  %v897 = vadd.f32 0.0, %v896
  %898 = vmatmul.f32.gmra.mxu0 %v231
  %v899 = vpop.f32.mrf.mxu0
  %v900 = vadd.f32 0.0, %v899
  %901 = vmatmul.f32.gmra.mxu0 %v233
  %v902 = vpop.f32.mrf.mxu0
  %v903 = vadd.f32 0.0, %v902
  %904 = vmatmul.f32.gmra.mxu0 %v235
  %v905 = vpop.f32.mrf.mxu0
  %v906 = vadd.f32 0.0, %v905
  %907 = vmatmul.f32.gmra.mxu0 %v237
  %v908 = vpop.f32.mrf.mxu0
  %v909 = vadd.f32 0.0, %v908
  %910 = vmatmul.f32.gmra.mxu0 %v239
  %v911 = vpop.f32.mrf.mxu0
  %v912 = vadd.f32 0.0, %v911
  %913 = vmatmul.f32.gmra.mxu0 %v241
  %v914 = vpop.f32.mrf.mxu0
  %v915 = vadd.f32 0.0, %v914
  %916 = vmatmul.f32.gmra.mxu0 %v243
  %v917 = vpop.f32.mrf.mxu0
  %v918 = vadd.f32 0.0, %v917
  %919 = vmatmul.f32.gmra.mxu0 %v245
  %v920 = vpop.f32.mrf.mxu0
  %v921 = vadd.f32 0.0, %v920
  %922 = vmatmul.f32.gmra.mxu0 %v247
  %v923 = vpop.f32.mrf.mxu0
  %v924 = vadd.f32 0.0, %v923
  %925 = vmatmul.f32.gmra.mxu0 %v249
  %v926 = vpop.f32.mrf.mxu0
  %v927 = vadd.f32 0.0, %v926
  %928 = vmatmul.f32.gmra.mxu0 %v251
  %v929 = vpop.f32.mrf.mxu0
  %v930 = vadd.f32 0.0, %v929
  %931 = vmatmul.f32.gmra.mxu0 %v253
  %v932 = vpop.f32.mrf.mxu0
  %v933 = vadd.f32 0.0, %v932
  %934 = vmatmul.f32.gmra.mxu0 %v255
  %v935 = vpop.f32.mrf.mxu0
  %v936 = vadd.f32 0.0, %v935
  %937 = vmatmul.f32.gmra.mxu0 %v257
  %v938 = vpop.f32.mrf.mxu0
  %v939 = vadd.f32 0.0, %v938
  %940 = vmatmul.f32.gmra.mxu0 %v259
  %v941 = vpop.f32.mrf.mxu0
  %v942 = vadd.f32 0.0, %v941
  %943 = vmatmul.f32.gmra.mxu0 %v261
  %v944 = vpop.f32.mrf.mxu0
  %v945 = vadd.f32 0.0, %v944
  %946 = vmatmul.f32.gmra.mxu0 %v263
  %v947 = vpop.f32.mrf.mxu0
  %v948 = vadd.f32 0.0, %v947
  %949 = vmatmul.f32.gmra.mxu0 %v265
  %v950 = vpop.f32.mrf.mxu0
  %v951 = vadd.f32 0.0, %v950
  %952 = vmatmul.f32.gmra.mxu0 %v267
  %v953 = vpop.f32.mrf.mxu0
  %v954 = vadd.f32 0.0, %v953
  %955 = vmatmul.f32.gmra.mxu0 %v269
  %v956 = vpop.f32.mrf.mxu0
  %v957 = vadd.f32 0.0, %v956
  %958 = vmatmul.f32.gmra.mxu0 %v271
  %v959 = vpop.f32.mrf.mxu0
  %v960 = vadd.f32 0.0, %v959
  %961 = vmatmul.f32.gmra.mxu0 %v273
  %v962 = vpop.f32.mrf.mxu0
  %v963 = vadd.f32 0.0, %v962
  %964 = vmatmul.f32.gmra.mxu0 %v275
  %v965 = vpop.f32.mrf.mxu0
  %v966 = vadd.f32 0.0, %v965
  %967 = vmatmul.f32.gmra.mxu0 %v277
  %v968 = vpop.f32.mrf.mxu0
  %v969 = vadd.f32 0.0, %v968
  %970 = vmatmul.f32.gmra.mxu0 %v279
  %v971 = vpop.f32.mrf.mxu0
  %v972 = vadd.f32 0.0, %v971
  %973 = vmatmul.f32.gmra.mxu0 %v281
  %v974 = vpop.f32.mrf.mxu0
  %v975 = vadd.f32 0.0, %v974
  %976 = vmatmul.f32.gmra.mxu0 %v283
  %v977 = vpop.f32.mrf.mxu0
  %v978 = vadd.f32 0.0, %v977
  %979 = vmatmul.f32.gmra.mxu0 %v285
  %v980 = vpop.f32.mrf.mxu0
  %v981 = vadd.f32 0.0, %v980
  %982 = vmatmul.f32.gmra.mxu0 %v287
  %v983 = vpop.f32.mrf.mxu0
  %v984 = vadd.f32 0.0, %v983
  %985 = vmatmul.f32.gmra.mxu0 %v289
  %v986 = vpop.f32.mrf.mxu0
  %v987 = vadd.f32 0.0, %v986
  %988 = vmatmul.f32.gmra.mxu0 %v291
  %v989 = vpop.f32.mrf.mxu0
  %v990 = vadd.f32 0.0, %v989
  %991 = vmatmul.f32.gmra.mxu0 %v293
  %v992 = vpop.f32.mrf.mxu0
  %v993 = vadd.f32 0.0, %v992
  %994 = vmatmul.f32.gmra.mxu0 %v295
  %v995 = vpop.f32.mrf.mxu0
  %v996 = vadd.f32 0.0, %v995
  %997 = vmatmul.f32.gmra.mxu0 %v297
  %v998 = vpop.f32.mrf.mxu0
  %v999 = vadd.f32 0.0, %v998
  %1000 = vmatmul.f32.gmra.mxu0 %v299
  %v1001 = vpop.f32.mrf.mxu0
  %v1002 = vadd.f32 0.0, %v1001
  %1003 = vmatmul.f32.gmra.mxu0 %v301
  %v1004 = vpop.f32.mrf.mxu0
  %v1005 = vadd.f32 0.0, %v1004
  %1006 = vmatmul.f32.gmra.mxu0 %v303
  %v1007 = vpop.f32.mrf.mxu0
  %v1008 = vadd.f32 0.0, %v1007
  %1009 = vmatmul.f32.gmra.mxu0 %v305
  %v1010 = vpop.f32.mrf.mxu0
  %v1011 = vadd.f32 0.0, %v1010
  %1012 = vmatmul.f32.gmra.mxu0 %v307
  %v1013 = vpop.f32.mrf.mxu0
  %v1014 = vadd.f32 0.0, %v1013
  %1015 = vmatmul.f32.gmra.mxu0 %v309
  %v1016 = vpop.f32.mrf.mxu0
  %v1017 = vadd.f32 0.0, %v1016
  %1018 = vmatmul.f32.gmra.mxu0 %v311
  %v1019 = vpop.f32.mrf.mxu0
  %v1020 = vadd.f32 0.0, %v1019
  %1021 = vmatmul.f32.gmra.mxu0 %v313
  %v1022 = vpop.f32.mrf.mxu0
  %v1023 = vadd.f32 0.0, %v1022
  %1024 = vmatmul.f32.gmra.mxu0 %v315
  %v1025 = vpop.f32.mrf.mxu0
  %v1026 = vadd.f32 0.0, %v1025
  %1027 = vmatmul.f32.gmra.mxu0 %v317
  %v1028 = vpop.f32.mrf.mxu0
  %v1029 = vadd.f32 0.0, %v1028
  %1030 = vmatmul.f32.gmra.mxu0 %v319
  %v1031 = vpop.f32.mrf.mxu0
  %v1032 = vadd.f32 0.0, %v1031
  %1033 = vmatmul.f32.gmra.mxu0 %v321
  %v1034 = vpop.f32.mrf.mxu0
  %v1035 = vadd.f32 0.0, %v1034
  %1036 = vmatmul.f32.gmra.mxu0 %v323
  %v1037 = vpop.f32.mrf.mxu0
  %v1038 = vadd.f32 0.0, %v1037
  %1039 = vmatmul.f32.gmra.mxu0 %v325
  %v1040 = vpop.f32.mrf.mxu0
  %v1041 = vadd.f32 0.0, %v1040
  %1042 = vmatmul.f32.gmra.mxu0 %v327
  %v1043 = vpop.f32.mrf.mxu0
  %v1044 = vadd.f32 0.0, %v1043
  %1045 = vmatmul.f32.gmra.mxu0 %v329
  %v1046 = vpop.f32.mrf.mxu0
  %v1047 = vadd.f32 0.0, %v1046
  %1048 = vmatmul.f32.gmra.mxu0 %v331
  %v1049 = vpop.f32.mrf.mxu0
  %v1050 = vadd.f32 0.0, %v1049
  %1051 = vmatmul.f32.gmra.mxu0 %v333
  %v1052 = vpop.f32.mrf.mxu0
  %v1053 = vadd.f32 0.0, %v1052
  %1054 = vmatmul.f32.gmra.mxu0 %v335
  %v1055 = vpop.f32.mrf.mxu0
  %v1056 = vadd.f32 0.0, %v1055
  %1057 = vmatmul.f32.gmra.mxu0 %v337
  %v1058 = vpop.f32.mrf.mxu0
  %v1059 = vadd.f32 0.0, %v1058
  %1060 = vmatmul.f32.gmra.mxu0 %v339
  %v1061 = vpop.f32.mrf.mxu0
  %v1062 = vadd.f32 0.0, %v1061
  %1063 = vmatmul.f32.gmra.mxu0 %v341
  %v1064 = vpop.f32.mrf.mxu0
  %v1065 = vadd.f32 0.0, %v1064
  %1066 = vmatmul.f32.gmra.mxu0 %v343
  %v1067 = vpop.f32.mrf.mxu0
  %v1068 = vadd.f32 0.0, %v1067
  %1069 = vmatmul.f32.gmra.mxu0 %v345
  %v1070 = vpop.f32.mrf.mxu0
  %v1071 = vadd.f32 0.0, %v1070
  %1072 = vmatmul.f32.gmra.mxu0 %v347
  %v1073 = vpop.f32.mrf.mxu0
  %v1074 = vadd.f32 0.0, %v1073
  %1075 = vmatmul.f32.gmra.mxu0 %v349
  %v1076 = vpop.f32.mrf.mxu0
  %v1077 = vadd.f32 0.0, %v1076
  %1078 = vmatmul.f32.gmra.mxu0 %v351
  %v1079 = vpop.f32.mrf.mxu0
  %v1080 = vadd.f32 0.0, %v1079
  %1081 = vmatmul.f32.gmra.mxu0 %v353
  %v1082 = vpop.f32.mrf.mxu0
  %v1083 = vadd.f32 0.0, %v1082
  %1084 = vmatmul.f32.gmra.mxu0 %v355
  %v1085 = vpop.f32.mrf.mxu0
  %v1086 = vadd.f32 0.0, %v1085
  %1087 = vmatmul.f32.gmra.mxu0 %v357
  %v1088 = vpop.f32.mrf.mxu0
  %v1089 = vadd.f32 0.0, %v1088
  %1090 = vmatmul.f32.gmra.mxu0 %v359
  %v1091 = vpop.f32.mrf.mxu0
  %v1092 = vadd.f32 0.0, %v1091
  %1093 = vmatmul.f32.gmra.mxu0 %v361
  %v1094 = vpop.f32.mrf.mxu0
  %v1095 = vadd.f32 0.0, %v1094
  %1096 = vmatmul.f32.gmra.mxu0 %v363
  %v1097 = vpop.f32.mrf.mxu0
  %v1098 = vadd.f32 0.0, %v1097
  %1099 = vmatmul.f32.gmra.mxu0 %v365
  %v1100 = vpop.f32.mrf.mxu0
  %v1101 = vadd.f32 0.0, %v1100
  %1102 = vmatmul.f32.gmra.mxu0 %v367
  %v1103 = vpop.f32.mrf.mxu0
  %v1104 = vadd.f32 0.0, %v1103
  %1105 = vmatmul.f32.gmra.mxu0 %v369
  %v1106 = vpop.f32.mrf.mxu0
  %v1107 = vadd.f32 0.0, %v1106
  %1108 = vmatmul.f32.gmra.mxu0 %v371
  %v1109 = vpop.f32.mrf.mxu0
  %v1110 = vadd.f32 0.0, %v1109
  %1111 = vmatmul.f32.gmra.mxu0 %v373
  %v1112 = vpop.f32.mrf.mxu0
  %v1113 = vadd.f32 0.0, %v1112
  %1114 = vmatmul.f32.gmra.mxu0 %v375
  %v1115 = vpop.f32.mrf.mxu0
  %v1116 = vadd.f32 0.0, %v1115
  %1117 = vmatmul.f32.gmra.mxu0 %v377
  %v1118 = vpop.f32.mrf.mxu0
  %v1119 = vadd.f32 0.0, %v1118
  %1120 = vmatmul.f32.gmra.mxu0 %v379
  %v1121 = vpop.f32.mrf.mxu0
  %v1122 = vadd.f32 0.0, %v1121
  %1123 = vmatmul.f32.gmra.mxu0 %v381
  %v1124 = vpop.f32.mrf.mxu0
  %v1125 = vadd.f32 0.0, %v1124
  %1126 = vmatmul.f32.gmra.mxu0 %v383
  %v1127 = vpop.f32.mrf.mxu0
  %v1128 = vadd.f32 0.0, %v1127
  %1129 = vmatmul.f32.gmra.mxu0 %v385
  %v1130 = vpop.f32.mrf.mxu0
  %v1131 = vadd.f32 0.0, %v1130
  %1132 = vmatmul.f32.gmra.mxu0 %v387
  %v1133 = vpop.f32.mrf.mxu0
  %v1134 = vadd.f32 0.0, %v1133
  %1135 = vmatmul.f32.gmra.mxu0 %v389
  %v1136 = vpop.f32.mrf.mxu0
  %v1137 = vadd.f32 0.0, %v1136
  %1138 = vmatmul.f32.gmra.mxu0 %v391
  %v1139 = vpop.f32.mrf.mxu0
  %v1140 = vadd.f32 0.0, %v1139
  %1141 = vmatmul.f32.gmra.mxu0 %v393
  %v1142 = vpop.f32.mrf.mxu0
  %v1143 = vadd.f32 0.0, %v1142
  %1144 = vmatmul.f32.gmra.mxu0 %v395
  %v1145 = vpop.f32.mrf.mxu0
  %v1146 = vadd.f32 0.0, %v1145
  %1147 = vmatmul.f32.gmra.mxu0 %v397
  %v1148 = vpop.f32.mrf.mxu0
  %v1149 = vadd.f32 0.0, %v1148
  %1150 = vmatmul.f32.gmra.mxu0 %v399
  %v1151 = vpop.f32.mrf.mxu0
  %v1152 = vadd.f32 0.0, %v1151
  %1153 = vmatmul.f32.gmra.mxu0 %v401
  %v1154 = vpop.f32.mrf.mxu0
  %v1155 = vadd.f32 0.0, %v1154
  %1156 = vmatmul.f32.gmra.mxu0 %v403
  %v1157 = vpop.f32.mrf.mxu0
  %v1158 = vadd.f32 0.0, %v1157
  %1159 = vmatmul.f32.gmra.mxu0 %v405
  %v1160 = vpop.f32.mrf.mxu0
  %v1161 = vadd.f32 0.0, %v1160
  %1162 = vmatmul.f32.gmra.mxu0 %v407
  %v1163 = vpop.f32.mrf.mxu0
  %v1164 = vadd.f32 0.0, %v1163
  %1165 = vmatmul.f32.gmra.mxu0 %v409
  %v1166 = vpop.f32.mrf.mxu0
  %v1167 = vadd.f32 0.0, %v1166
  %1168 = vmatmul.f32.gmra.mxu0 %v411
  %v1169 = vpop.f32.mrf.mxu0
  %v1170 = vadd.f32 0.0, %v1169
  %1171 = vmatmul.f32.gmra.mxu0 %v413
  %v1172 = vpop.f32.mrf.mxu0
  %v1173 = vadd.f32 0.0, %v1172
  %1174 = vmatmul.f32.gmra.mxu0 %v415
  %v1175 = vpop.f32.mrf.mxu0
  %v1176 = vadd.f32 0.0, %v1175
  %1177 = vmatmul.f32.gmra.mxu0 %v417
  %v1178 = vpop.f32.mrf.mxu0
  %v1179 = vadd.f32 0.0, %v1178
  %1180 = vmatmul.f32.gmra.mxu0 %v419
  %v1181 = vpop.f32.mrf.mxu0
  %v1182 = vadd.f32 0.0, %v1181
  %1183 = vmatmul.f32.gmra.mxu0 %v421
  %v1184 = vpop.f32.mrf.mxu0
  %v1185 = vadd.f32 0.0, %v1184
  %1186 = vmatmul.f32.gmra.mxu0 %v423
  %v1187 = vpop.f32.mrf.mxu0
  %v1188 = vadd.f32 0.0, %v1187
  %1189 = vmatmul.f32.gmra.mxu0 %v425
  %v1190 = vpop.f32.mrf.mxu0
  %v1191 = vadd.f32 0.0, %v1190
  %1192 = vmatmul.f32.gmra.mxu0 %v427
  %v1193 = vpop.f32.mrf.mxu0
  %v1194 = vadd.f32 0.0, %v1193
  %1195 = vmatmul.f32.gmra.mxu0 %v429
  %v1196 = vpop.f32.mrf.mxu0
  %v1197 = vadd.f32 0.0, %v1196
  %1198 = vmatmul.f32.gmra.mxu0 %v431
  %v1199 = vpop.f32.mrf.mxu0
  %v1200 = vadd.f32 0.0, %v1199
  %1201 = vmatmul.f32.gmra.mxu0 %v433
  %v1202 = vpop.f32.mrf.mxu0
  %v1203 = vadd.f32 0.0, %v1202
  %1204 = vmatmul.f32.gmra.mxu0 %v435
  %v1205 = vpop.f32.mrf.mxu0
  %v1206 = vadd.f32 0.0, %v1205
  %1207 = vmatmul.f32.gmra.mxu0 %v437
  %v1208 = vpop.f32.mrf.mxu0
  %v1209 = vadd.f32 0.0, %v1208
  %1210 = vmatmul.f32.gmra.mxu0 %v439
  %v1211 = vpop.f32.mrf.mxu0
  %v1212 = vadd.f32 0.0, %v1211
  %1213 = vmatmul.f32.gmra.mxu0 %v441
  %v1214 = vpop.f32.mrf.mxu0
  %v1215 = vadd.f32 0.0, %v1214
  %1216 = vmatmul.f32.gmra.mxu0 %v443
  %v1217 = vpop.f32.mrf.mxu0
  %v1218 = vadd.f32 0.0, %v1217
  %1219 = vmatmul.f32.gmra.mxu0 %v445
  %v1220 = vpop.f32.mrf.mxu0
  %v1221 = vadd.f32 0.0, %v1220
  %1222 = vmatmul.f32.gmra.mxu0 %v447
  %v1223 = vpop.f32.mrf.mxu0
  %v1224 = vadd.f32 0.0, %v1223
  %1225 = vmatmul.f32.gmra.mxu0 %v449
  %v1226 = vpop.f32.mrf.mxu0
  %v1227 = vadd.f32 0.0, %v1226
  %1228 = vmatmul.f32.gmra.mxu0 %v451
  %v1229 = vpop.f32.mrf.mxu0
  %v1230 = vadd.f32 0.0, %v1229
  %1231 = vmatmul.f32.gmra.mxu0 %v453
  %v1232 = vpop.f32.mrf.mxu0
  %v1233 = vadd.f32 0.0, %v1232
  %1234 = vmatmul.f32.gmra.mxu0 %v455
  %v1235 = vpop.f32.mrf.mxu0
  %v1236 = vadd.f32 0.0, %v1235
  %1237 = vmatmul.f32.gmra.mxu0 %v457
  %v1238 = vpop.f32.mrf.mxu0
  %v1239 = vadd.f32 0.0, %v1238
  %1240 = vmatmul.f32.gmra.mxu0 %v459
  %v1241 = vpop.f32.mrf.mxu0
  %v1242 = vadd.f32 0.0, %v1241
  %1243 = vmatmul.f32.gmra.mxu0 %v461
  %v1244 = vpop.f32.mrf.mxu0
  %v1245 = vadd.f32 0.0, %v1244
  %1246 = vmatmul.f32.gmra.mxu0 %v463
  %v1247 = vpop.f32.mrf.mxu0
  %v1248 = vadd.f32 0.0, %v1247
  %1249 = vmatmul.f32.gmra.mxu0 %v465
  %v1250 = vpop.f32.mrf.mxu0
  %v1251 = vadd.f32 0.0, %v1250
  %1252 = vmatmul.f32.gmra.mxu0 %v467
  %v1253 = vpop.f32.mrf.mxu0
  %v1254 = vadd.f32 0.0, %v1253
  %1255 = vmatmul.f32.gmra.mxu0 %v469
  %v1256 = vpop.f32.mrf.mxu0
  %v1257 = vadd.f32 0.0, %v1256
  %1258 = vmatmul.f32.gmra.mxu0 %v471
  %v1259 = vpop.f32.mrf.mxu0
  %v1260 = vadd.f32 0.0, %v1259
  %1261 = vmatmul.f32.gmra.mxu0 %v473
  %v1262 = vpop.f32.mrf.mxu0
  %v1263 = vadd.f32 0.0, %v1262
  %1264 = vmatmul.f32.gmra.mxu0 %v475
  %v1265 = vpop.f32.mrf.mxu0
  %v1266 = vadd.f32 0.0, %v1265
  %1267 = vmatmul.f32.gmra.mxu0 %v477
  %v1268 = vpop.f32.mrf.mxu0
  %v1269 = vadd.f32 0.0, %v1268
  %1270 = vmatmul.f32.gmra.mxu0 %v479
  %v1271 = vpop.f32.mrf.mxu0
  %v1272 = vadd.f32 0.0, %v1271
  %1273 = vmatmul.f32.gmra.mxu0 %v481
  %v1274 = vpop.f32.mrf.mxu0
  %v1275 = vadd.f32 0.0, %v1274
  %1276 = vmatmul.f32.gmra.mxu0 %v483
  %v1277 = vpop.f32.mrf.mxu0
  %v1278 = vadd.f32 0.0, %v1277
  %1279 = vmatmul.f32.gmra.mxu0 %v485
  %v1280 = vpop.f32.mrf.mxu0
  %v1281 = vadd.f32 0.0, %v1280
  %1282 = vmatmul.f32.gmra.mxu0 %v487
  %v1283 = vpop.f32.mrf.mxu0
  %v1284 = vadd.f32 0.0, %v1283
  %1285 = vmatmul.f32.gmra.mxu0 %v489
  %v1286 = vpop.f32.mrf.mxu0
  %v1287 = vadd.f32 0.0, %v1286
  %1288 = vmatmul.f32.gmra.mxu0 %v491
  %v1289 = vpop.f32.mrf.mxu0
  %v1290 = vadd.f32 0.0, %v1289
  %1291 = vmatmul.f32.gmra.mxu0 %v493
  %v1292 = vpop.f32.mrf.mxu0
  %v1293 = vadd.f32 0.0, %v1292
  %1294 = vmatmul.f32.gmra.mxu0 %v495
  %v1295 = vpop.f32.mrf.mxu0
  %v1296 = vadd.f32 0.0, %v1295
  %1297 = vmatmul.f32.gmra.mxu0 %v497
  %v1298 = vpop.f32.mrf.mxu0
  %v1299 = vadd.f32 0.0, %v1298
  %1300 = vmatmul.f32.gmra.mxu0 %v499
  %v1301 = vpop.f32.mrf.mxu0
  %v1302 = vadd.f32 0.0, %v1301
  %1303 = vmatmul.f32.gmra.mxu0 %v501
  %v1304 = vpop.f32.mrf.mxu0
  %v1305 = vadd.f32 0.0, %v1304
  %1306 = vmatmul.f32.gmra.mxu0 %v503
  %v1307 = vpop.f32.mrf.mxu0
  %v1308 = vadd.f32 0.0, %v1307
  %1309 = vmatmul.f32.gmra.mxu0 %v505
  %v1310 = vpop.f32.mrf.mxu0
  %v1311 = vadd.f32 0.0, %v1310
  %1312 = vmatmul.f32.gmra.mxu0 %v507
  %v1313 = vpop.f32.mrf.mxu0
  %v1314 = vadd.f32 0.0, %v1313
  %1315 = vmatmul.f32.gmra.mxu0 %v509
  %v1316 = vpop.f32.mrf.mxu0
  %v1317 = vadd.f32 0.0, %v1316
  %1318 = vmatmul.f32.gmra.mxu0 %v511
  %v1319 = vpop.f32.mrf.mxu0
  %v1320 = vadd.f32 0.0, %v1319
  %1321 = vmatmul.f32.gmra.mxu0 %v513
  %v1322 = vpop.f32.mrf.mxu0
  %v1323 = vadd.f32 0.0, %v1322
  %1324 = vmatmul.f32.gmra.mxu0 %v515
  %v1325 = vpop.f32.mrf.mxu0
  %v1326 = vadd.f32 0.0, %v1325
  %1327 = vmatmul.f32.gmra.mxu0 %v517
  %v1328 = vpop.f32.mrf.mxu0
  %v1329 = vadd.f32 0.0, %v1328
  %1330 = vmatmul.f32.gmra.mxu0 %v519
  %v1331 = vpop.f32.mrf.mxu0
  %v1332 = vadd.f32 0.0, %v1331
  %1333 = vmatmul.f32.gmra.mxu0 %v521
  %v1334 = vpop.f32.mrf.mxu0
  %v1335 = vadd.f32 0.0, %v1334
  %1336 = vmatmul.f32.gmra.mxu0 %v523
  %v1337 = vpop.f32.mrf.mxu0
  %v1338 = vadd.f32 0.0, %v1337
  %1339 = vmatmul.f32.gmra.mxu0 %v525
  %v1340 = vpop.f32.mrf.mxu0
  %v1341 = vadd.f32 0.0, %v1340
  %1342 = vmatmul.f32.gmra.mxu0 %v527
  %v1343 = vpop.f32.mrf.mxu0
  %v1344 = vadd.f32 0.0, %v1343
  %1345 = vdwg.mxu0
  %1346 = vmatpush.msra.mxu0 %v560
  %1347 = vmatpush.msra.mxu0 %v559
  %1348 = vmatpush.msra.mxu0 %v558
  %1349 = vmatpush.msra.mxu0 %v557
  %1350 = vmatpush.msra.mxu0 %v556
  %1351 = vmatpush.msra.mxu0 %v555
  %1352 = vmatpush.msra.mxu0 %v554
  %1353 = vmatpush.msra.mxu0 %v553
  %1354 = vmatpush.msra.mxu0 %v552
  %1355 = vmatpush.msra.mxu0 %v551
  %1356 = vmatpush.msra.mxu0 %v550
  %1357 = vmatpush.msra.mxu0 %v549
  %1358 = vmatpush.msra.mxu0 %v548
  %1359 = vmatpush.msra.mxu0 %v547
  %1360 = vmatpush.msra.mxu0 %v546
  %1361 = vmatpush.msra.mxu0 %v545
  %1362 = vmatmul.f32.gmra.mxu0 %v18
  %v1363 = vpop.f32.mrf.mxu0
  %v1364 = vadd.f32 %v579, %v1363
  %1365 = vmatmul.f32.gmra.mxu0 %v20
  %v1366 = vpop.f32.mrf.mxu0
  %v1367 = vadd.f32 %v582, %v1366
  %1368 = vmatmul.f32.gmra.mxu0 %v22
  %v1369 = vpop.f32.mrf.mxu0
  %v1370 = vadd.f32 %v585, %v1369
  %1371 = vmatmul.f32.gmra.mxu0 %v24
  %v1372 = vpop.f32.mrf.mxu0
  %v1373 = vadd.f32 %v588, %v1372
  %1374 = vmatmul.f32.gmra.mxu0 %v26
  %v1375 = vpop.f32.mrf.mxu0
  %v1376 = vadd.f32 %v591, %v1375
  %1377 = vmatmul.f32.gmra.mxu0 %v28
  %v1378 = vpop.f32.mrf.mxu0
  %v1379 = vadd.f32 %v594, %v1378
  %1380 = vmatmul.f32.gmra.mxu0 %v30
  %v1381 = vpop.f32.mrf.mxu0
  %v1382 = vadd.f32 %v597, %v1381
  %1383 = vmatmul.f32.gmra.mxu0 %v32
  %v1384 = vpop.f32.mrf.mxu0
  %v1385 = vadd.f32 %v600, %v1384
  %1386 = vmatmul.f32.gmra.mxu0 %v34
  %v1387 = vpop.f32.mrf.mxu0
  %v1388 = vadd.f32 %v603, %v1387
  %1389 = vmatmul.f32.gmra.mxu0 %v36
  %v1390 = vpop.f32.mrf.mxu0
  %v1391 = vadd.f32 %v606, %v1390
  %1392 = vmatmul.f32.gmra.mxu0 %v38
  %v1393 = vpop.f32.mrf.mxu0
  %v1394 = vadd.f32 %v609, %v1393
  %1395 = vmatmul.f32.gmra.mxu0 %v40
  %v1396 = vpop.f32.mrf.mxu0
  %v1397 = vadd.f32 %v612, %v1396
  %1398 = vmatmul.f32.gmra.mxu0 %v42
  %v1399 = vpop.f32.mrf.mxu0
  %v1400 = vadd.f32 %v615, %v1399
  %1401 = vmatmul.f32.gmra.mxu0 %v44
  %v1402 = vpop.f32.mrf.mxu0
  %v1403 = vadd.f32 %v618, %v1402
  %1404 = vmatmul.f32.gmra.mxu0 %v46
  %v1405 = vpop.f32.mrf.mxu0
  %v1406 = vadd.f32 %v621, %v1405
  %1407 = vmatmul.f32.gmra.mxu0 %v48
  %v1408 = vpop.f32.mrf.mxu0
  %v1409 = vadd.f32 %v624, %v1408
  %1410 = vmatmul.f32.gmra.mxu0 %v50
  %v1411 = vpop.f32.mrf.mxu0
  %v1412 = vadd.f32 %v627, %v1411
  %1413 = vmatmul.f32.gmra.mxu0 %v52
  %v1414 = vpop.f32.mrf.mxu0
  %v1415 = vadd.f32 %v630, %v1414
  %1416 = vmatmul.f32.gmra.mxu0 %v54
  %v1417 = vpop.f32.mrf.mxu0
  %v1418 = vadd.f32 %v633, %v1417
  %1419 = vmatmul.f32.gmra.mxu0 %v56
  %v1420 = vpop.f32.mrf.mxu0
  %v1421 = vadd.f32 %v636, %v1420
  %1422 = vmatmul.f32.gmra.mxu0 %v58
  %v1423 = vpop.f32.mrf.mxu0
  %v1424 = vadd.f32 %v639, %v1423
  %1425 = vmatmul.f32.gmra.mxu0 %v60
  %v1426 = vpop.f32.mrf.mxu0
  %v1427 = vadd.f32 %v642, %v1426
  %1428 = vmatmul.f32.gmra.mxu0 %v62
  %v1429 = vpop.f32.mrf.mxu0
  %v1430 = vadd.f32 %v645, %v1429
  %1431 = vmatmul.f32.gmra.mxu0 %v64
  %v1432 = vpop.f32.mrf.mxu0
  %v1433 = vadd.f32 %v648, %v1432
  %1434 = vmatmul.f32.gmra.mxu0 %v66
  %v1435 = vpop.f32.mrf.mxu0
  %v1436 = vadd.f32 %v651, %v1435
  %1437 = vmatmul.f32.gmra.mxu0 %v68
  %v1438 = vpop.f32.mrf.mxu0
  %v1439 = vadd.f32 %v654, %v1438
  %1440 = vmatmul.f32.gmra.mxu0 %v70
  %v1441 = vpop.f32.mrf.mxu0
  %v1442 = vadd.f32 %v657, %v1441
  %1443 = vmatmul.f32.gmra.mxu0 %v72
  %v1444 = vpop.f32.mrf.mxu0
  %v1445 = vadd.f32 %v660, %v1444
  %1446 = vmatmul.f32.gmra.mxu0 %v74
  %v1447 = vpop.f32.mrf.mxu0
  %v1448 = vadd.f32 %v663, %v1447
  %1449 = vmatmul.f32.gmra.mxu0 %v76
  %v1450 = vpop.f32.mrf.mxu0
  %v1451 = vadd.f32 %v666, %v1450
  %1452 = vmatmul.f32.gmra.mxu0 %v78
  %v1453 = vpop.f32.mrf.mxu0
  %v1454 = vadd.f32 %v669, %v1453
  %1455 = vmatmul.f32.gmra.mxu0 %v80
  %v1456 = vpop.f32.mrf.mxu0
  %v1457 = vadd.f32 %v672, %v1456
  %1458 = vmatmul.f32.gmra.mxu0 %v82
  %v1459 = vpop.f32.mrf.mxu0
  %v1460 = vadd.f32 %v675, %v1459
  %1461 = vmatmul.f32.gmra.mxu0 %v84
  %v1462 = vpop.f32.mrf.mxu0
  %v1463 = vadd.f32 %v678, %v1462
  %1464 = vmatmul.f32.gmra.mxu0 %v86
  %v1465 = vpop.f32.mrf.mxu0
  %v1466 = vadd.f32 %v681, %v1465
  %1467 = vmatmul.f32.gmra.mxu0 %v88
  %v1468 = vpop.f32.mrf.mxu0
  %v1469 = vadd.f32 %v684, %v1468
  %1470 = vmatmul.f32.gmra.mxu0 %v90
  %v1471 = vpop.f32.mrf.mxu0
  %v1472 = vadd.f32 %v687, %v1471
  %1473 = vmatmul.f32.gmra.mxu0 %v92
  %v1474 = vpop.f32.mrf.mxu0
  %v1475 = vadd.f32 %v690, %v1474
  %1476 = vmatmul.f32.gmra.mxu0 %v94
  %v1477 = vpop.f32.mrf.mxu0
  %v1478 = vadd.f32 %v693, %v1477
  %1479 = vmatmul.f32.gmra.mxu0 %v96
  %v1480 = vpop.f32.mrf.mxu0
  %v1481 = vadd.f32 %v696, %v1480
  %1482 = vmatmul.f32.gmra.mxu0 %v98
  %v1483 = vpop.f32.mrf.mxu0
  %v1484 = vadd.f32 %v699, %v1483
  %1485 = vmatmul.f32.gmra.mxu0 %v100
  %v1486 = vpop.f32.mrf.mxu0
  %v1487 = vadd.f32 %v702, %v1486
  %1488 = vmatmul.f32.gmra.mxu0 %v102
  %v1489 = vpop.f32.mrf.mxu0
  %v1490 = vadd.f32 %v705, %v1489
  %1491 = vmatmul.f32.gmra.mxu0 %v104
  %v1492 = vpop.f32.mrf.mxu0
  %v1493 = vadd.f32 %v708, %v1492
  %1494 = vmatmul.f32.gmra.mxu0 %v106
  %v1495 = vpop.f32.mrf.mxu0
  %v1496 = vadd.f32 %v711, %v1495
  %1497 = vmatmul.f32.gmra.mxu0 %v108
  %v1498 = vpop.f32.mrf.mxu0
  %v1499 = vadd.f32 %v714, %v1498
  %1500 = vmatmul.f32.gmra.mxu0 %v110
  %v1501 = vpop.f32.mrf.mxu0
  %v1502 = vadd.f32 %v717, %v1501
  %1503 = vmatmul.f32.gmra.mxu0 %v112
  %v1504 = vpop.f32.mrf.mxu0
  %v1505 = vadd.f32 %v720, %v1504
  %1506 = vmatmul.f32.gmra.mxu0 %v114
  %v1507 = vpop.f32.mrf.mxu0
  %v1508 = vadd.f32 %v723, %v1507
  %1509 = vmatmul.f32.gmra.mxu0 %v116
  %v1510 = vpop.f32.mrf.mxu0
  %v1511 = vadd.f32 %v726, %v1510
  %1512 = vmatmul.f32.gmra.mxu0 %v118
  %v1513 = vpop.f32.mrf.mxu0
  %v1514 = vadd.f32 %v729, %v1513
  %1515 = vmatmul.f32.gmra.mxu0 %v120
  %v1516 = vpop.f32.mrf.mxu0
  %v1517 = vadd.f32 %v732, %v1516
  %1518 = vmatmul.f32.gmra.mxu0 %v122
  %v1519 = vpop.f32.mrf.mxu0
  %v1520 = vadd.f32 %v735, %v1519
  %1521 = vmatmul.f32.gmra.mxu0 %v124
  %v1522 = vpop.f32.mrf.mxu0
  %v1523 = vadd.f32 %v738, %v1522
  %1524 = vmatmul.f32.gmra.mxu0 %v126
  %v1525 = vpop.f32.mrf.mxu0
  %v1526 = vadd.f32 %v741, %v1525
  %1527 = vmatmul.f32.gmra.mxu0 %v128
  %v1528 = vpop.f32.mrf.mxu0
  %v1529 = vadd.f32 %v744, %v1528
  %1530 = vmatmul.f32.gmra.mxu0 %v130
  %v1531 = vpop.f32.mrf.mxu0
  %v1532 = vadd.f32 %v747, %v1531
  %1533 = vmatmul.f32.gmra.mxu0 %v132
  %v1534 = vpop.f32.mrf.mxu0
  %v1535 = vadd.f32 %v750, %v1534
  %1536 = vmatmul.f32.gmra.mxu0 %v134
  %v1537 = vpop.f32.mrf.mxu0
  %v1538 = vadd.f32 %v753, %v1537
  %1539 = vmatmul.f32.gmra.mxu0 %v136
  %v1540 = vpop.f32.mrf.mxu0
  %v1541 = vadd.f32 %v756, %v1540
  %1542 = vmatmul.f32.gmra.mxu0 %v138
  %v1543 = vpop.f32.mrf.mxu0
  %v1544 = vadd.f32 %v759, %v1543
  %1545 = vmatmul.f32.gmra.mxu0 %v140
  %v1546 = vpop.f32.mrf.mxu0
  %v1547 = vadd.f32 %v762, %v1546
  %1548 = vmatmul.f32.gmra.mxu0 %v142
  %v1549 = vpop.f32.mrf.mxu0
  %v1550 = vadd.f32 %v765, %v1549
  %1551 = vmatmul.f32.gmra.mxu0 %v144
  %v1552 = vpop.f32.mrf.mxu0
  %v1553 = vadd.f32 %v768, %v1552
  %1554 = vmatmul.f32.gmra.mxu0 %v146
  %v1555 = vpop.f32.mrf.mxu0
  %v1556 = vadd.f32 %v771, %v1555
  %1557 = vmatmul.f32.gmra.mxu0 %v148
  %v1558 = vpop.f32.mrf.mxu0
  %v1559 = vadd.f32 %v774, %v1558
  %1560 = vmatmul.f32.gmra.mxu0 %v150
  %v1561 = vpop.f32.mrf.mxu0
  %v1562 = vadd.f32 %v777, %v1561
  %1563 = vmatmul.f32.gmra.mxu0 %v152
  %v1564 = vpop.f32.mrf.mxu0
  %v1565 = vadd.f32 %v780, %v1564
  %1566 = vmatmul.f32.gmra.mxu0 %v154
  %v1567 = vpop.f32.mrf.mxu0
  %v1568 = vadd.f32 %v783, %v1567
  %1569 = vmatmul.f32.gmra.mxu0 %v156
  %v1570 = vpop.f32.mrf.mxu0
  %v1571 = vadd.f32 %v786, %v1570
  %1572 = vmatmul.f32.gmra.mxu0 %v158
  %v1573 = vpop.f32.mrf.mxu0
  %v1574 = vadd.f32 %v789, %v1573
  %1575 = vmatmul.f32.gmra.mxu0 %v160
  %v1576 = vpop.f32.mrf.mxu0
  %v1577 = vadd.f32 %v792, %v1576
  %1578 = vmatmul.f32.gmra.mxu0 %v162
  %v1579 = vpop.f32.mrf.mxu0
  %v1580 = vadd.f32 %v795, %v1579
  %1581 = vmatmul.f32.gmra.mxu0 %v164
  %v1582 = vpop.f32.mrf.mxu0
  %v1583 = vadd.f32 %v798, %v1582
  %1584 = vmatmul.f32.gmra.mxu0 %v166
  %v1585 = vpop.f32.mrf.mxu0
  %v1586 = vadd.f32 %v801, %v1585
  %1587 = vmatmul.f32.gmra.mxu0 %v168
  %v1588 = vpop.f32.mrf.mxu0
  %v1589 = vadd.f32 %v804, %v1588
  %1590 = vmatmul.f32.gmra.mxu0 %v170
  %v1591 = vpop.f32.mrf.mxu0
  %v1592 = vadd.f32 %v807, %v1591
  %1593 = vmatmul.f32.gmra.mxu0 %v172
  %v1594 = vpop.f32.mrf.mxu0
  %v1595 = vadd.f32 %v810, %v1594
  %1596 = vmatmul.f32.gmra.mxu0 %v174
  %v1597 = vpop.f32.mrf.mxu0
  %v1598 = vadd.f32 %v813, %v1597
  %1599 = vmatmul.f32.gmra.mxu0 %v176
  %v1600 = vpop.f32.mrf.mxu0
  %v1601 = vadd.f32 %v816, %v1600
  %1602 = vmatmul.f32.gmra.mxu0 %v178
  %v1603 = vpop.f32.mrf.mxu0
  %v1604 = vadd.f32 %v819, %v1603
  %1605 = vmatmul.f32.gmra.mxu0 %v180
  %v1606 = vpop.f32.mrf.mxu0
  %v1607 = vadd.f32 %v822, %v1606
  %1608 = vmatmul.f32.gmra.mxu0 %v182
  %v1609 = vpop.f32.mrf.mxu0
  %v1610 = vadd.f32 %v825, %v1609
  %1611 = vmatmul.f32.gmra.mxu0 %v184
  %v1612 = vpop.f32.mrf.mxu0
  %v1613 = vadd.f32 %v828, %v1612
  %1614 = vmatmul.f32.gmra.mxu0 %v186
  %v1615 = vpop.f32.mrf.mxu0
  %v1616 = vadd.f32 %v831, %v1615
  %1617 = vmatmul.f32.gmra.mxu0 %v188
  %v1618 = vpop.f32.mrf.mxu0
  %v1619 = vadd.f32 %v834, %v1618
  %1620 = vmatmul.f32.gmra.mxu0 %v190
  %v1621 = vpop.f32.mrf.mxu0
  %v1622 = vadd.f32 %v837, %v1621
  %1623 = vmatmul.f32.gmra.mxu0 %v192
  %v1624 = vpop.f32.mrf.mxu0
  %v1625 = vadd.f32 %v840, %v1624
  %1626 = vmatmul.f32.gmra.mxu0 %v194
  %v1627 = vpop.f32.mrf.mxu0
  %v1628 = vadd.f32 %v843, %v1627
  %1629 = vmatmul.f32.gmra.mxu0 %v196
  %v1630 = vpop.f32.mrf.mxu0
  %v1631 = vadd.f32 %v846, %v1630
  %1632 = vmatmul.f32.gmra.mxu0 %v198
  %v1633 = vpop.f32.mrf.mxu0
  %v1634 = vadd.f32 %v849, %v1633
  %1635 = vmatmul.f32.gmra.mxu0 %v200
  %v1636 = vpop.f32.mrf.mxu0
  %v1637 = vadd.f32 %v852, %v1636
  %1638 = vmatmul.f32.gmra.mxu0 %v202
  %v1639 = vpop.f32.mrf.mxu0
  %v1640 = vadd.f32 %v855, %v1639
  %1641 = vmatmul.f32.gmra.mxu0 %v204
  %v1642 = vpop.f32.mrf.mxu0
  %v1643 = vadd.f32 %v858, %v1642
  %1644 = vmatmul.f32.gmra.mxu0 %v206
  %v1645 = vpop.f32.mrf.mxu0
  %v1646 = vadd.f32 %v861, %v1645
  %1647 = vmatmul.f32.gmra.mxu0 %v208
  %v1648 = vpop.f32.mrf.mxu0
  %v1649 = vadd.f32 %v864, %v1648
  %1650 = vmatmul.f32.gmra.mxu0 %v210
  %v1651 = vpop.f32.mrf.mxu0
  %v1652 = vadd.f32 %v867, %v1651
  %1653 = vmatmul.f32.gmra.mxu0 %v212
  %v1654 = vpop.f32.mrf.mxu0
  %v1655 = vadd.f32 %v870, %v1654
  %1656 = vmatmul.f32.gmra.mxu0 %v214
  %v1657 = vpop.f32.mrf.mxu0
  %v1658 = vadd.f32 %v873, %v1657
  %1659 = vmatmul.f32.gmra.mxu0 %v216
  %v1660 = vpop.f32.mrf.mxu0
  %v1661 = vadd.f32 %v876, %v1660
  %1662 = vmatmul.f32.gmra.mxu0 %v218
  %v1663 = vpop.f32.mrf.mxu0
  %v1664 = vadd.f32 %v879, %v1663
  %1665 = vmatmul.f32.gmra.mxu0 %v220
  %v1666 = vpop.f32.mrf.mxu0
  %v1667 = vadd.f32 %v882, %v1666
  %1668 = vmatmul.f32.gmra.mxu0 %v222
  %v1669 = vpop.f32.mrf.mxu0
  %v1670 = vadd.f32 %v885, %v1669
  %1671 = vmatmul.f32.gmra.mxu0 %v224
  %v1672 = vpop.f32.mrf.mxu0
  %v1673 = vadd.f32 %v888, %v1672
  %1674 = vmatmul.f32.gmra.mxu0 %v226
  %v1675 = vpop.f32.mrf.mxu0
  %v1676 = vadd.f32 %v891, %v1675
  %1677 = vmatmul.f32.gmra.mxu0 %v228
  %v1678 = vpop.f32.mrf.mxu0
  %v1679 = vadd.f32 %v894, %v1678
  %1680 = vmatmul.f32.gmra.mxu0 %v230
  %v1681 = vpop.f32.mrf.mxu0
  %v1682 = vadd.f32 %v897, %v1681
  %1683 = vmatmul.f32.gmra.mxu0 %v232
  %v1684 = vpop.f32.mrf.mxu0
  %v1685 = vadd.f32 %v900, %v1684
  %1686 = vmatmul.f32.gmra.mxu0 %v234
  %v1687 = vpop.f32.mrf.mxu0
  %v1688 = vadd.f32 %v903, %v1687
  %1689 = vmatmul.f32.gmra.mxu0 %v236
  %v1690 = vpop.f32.mrf.mxu0
  %v1691 = vadd.f32 %v906, %v1690
  %1692 = vmatmul.f32.gmra.mxu0 %v238
  %v1693 = vpop.f32.mrf.mxu0
  %v1694 = vadd.f32 %v909, %v1693
  %1695 = vmatmul.f32.gmra.mxu0 %v240
  %v1696 = vpop.f32.mrf.mxu0
  %v1697 = vadd.f32 %v912, %v1696
  %1698 = vmatmul.f32.gmra.mxu0 %v242
  %v1699 = vpop.f32.mrf.mxu0
  %v1700 = vadd.f32 %v915, %v1699
  %1701 = vmatmul.f32.gmra.mxu0 %v244
  %v1702 = vpop.f32.mrf.mxu0
  %v1703 = vadd.f32 %v918, %v1702
  %1704 = vmatmul.f32.gmra.mxu0 %v246
  %v1705 = vpop.f32.mrf.mxu0
  %v1706 = vadd.f32 %v921, %v1705
  %1707 = vmatmul.f32.gmra.mxu0 %v248
  %v1708 = vpop.f32.mrf.mxu0
  %v1709 = vadd.f32 %v924, %v1708
  %1710 = vmatmul.f32.gmra.mxu0 %v250
  %v1711 = vpop.f32.mrf.mxu0
  %v1712 = vadd.f32 %v927, %v1711
  %1713 = vmatmul.f32.gmra.mxu0 %v252
  %v1714 = vpop.f32.mrf.mxu0
  %v1715 = vadd.f32 %v930, %v1714
  %1716 = vmatmul.f32.gmra.mxu0 %v254
  %v1717 = vpop.f32.mrf.mxu0
  %v1718 = vadd.f32 %v933, %v1717
  %1719 = vmatmul.f32.gmra.mxu0 %v256
  %v1720 = vpop.f32.mrf.mxu0
  %v1721 = vadd.f32 %v936, %v1720
  %1722 = vmatmul.f32.gmra.mxu0 %v258
  %v1723 = vpop.f32.mrf.mxu0
  %v1724 = vadd.f32 %v939, %v1723
  %1725 = vmatmul.f32.gmra.mxu0 %v260
  %v1726 = vpop.f32.mrf.mxu0
  %v1727 = vadd.f32 %v942, %v1726
  %1728 = vmatmul.f32.gmra.mxu0 %v262
  %v1729 = vpop.f32.mrf.mxu0
  %v1730 = vadd.f32 %v945, %v1729
  %1731 = vmatmul.f32.gmra.mxu0 %v264
  %v1732 = vpop.f32.mrf.mxu0
  %v1733 = vadd.f32 %v948, %v1732
  %1734 = vmatmul.f32.gmra.mxu0 %v266
  %v1735 = vpop.f32.mrf.mxu0
  %v1736 = vadd.f32 %v951, %v1735
  %1737 = vmatmul.f32.gmra.mxu0 %v268
  %v1738 = vpop.f32.mrf.mxu0
  %v1739 = vadd.f32 %v954, %v1738
  %1740 = vmatmul.f32.gmra.mxu0 %v270
  %v1741 = vpop.f32.mrf.mxu0
  %v1742 = vadd.f32 %v957, %v1741
  %1743 = vmatmul.f32.gmra.mxu0 %v272
  %v1744 = vpop.f32.mrf.mxu0
  %v1745 = vadd.f32 %v960, %v1744
  %1746 = vmatmul.f32.gmra.mxu0 %v274
  %v1747 = vpop.f32.mrf.mxu0
  %v1748 = vadd.f32 %v963, %v1747
  %1749 = vmatmul.f32.gmra.mxu0 %v276
  %v1750 = vpop.f32.mrf.mxu0
  %v1751 = vadd.f32 %v966, %v1750
  %1752 = vmatmul.f32.gmra.mxu0 %v278
  %v1753 = vpop.f32.mrf.mxu0
  %v1754 = vadd.f32 %v969, %v1753
  %1755 = vmatmul.f32.gmra.mxu0 %v280
  %v1756 = vpop.f32.mrf.mxu0
  %v1757 = vadd.f32 %v972, %v1756
  %1758 = vmatmul.f32.gmra.mxu0 %v282
  %v1759 = vpop.f32.mrf.mxu0
  %v1760 = vadd.f32 %v975, %v1759
  %1761 = vmatmul.f32.gmra.mxu0 %v284
  %v1762 = vpop.f32.mrf.mxu0
  %v1763 = vadd.f32 %v978, %v1762
  %1764 = vmatmul.f32.gmra.mxu0 %v286
  %v1765 = vpop.f32.mrf.mxu0
  %v1766 = vadd.f32 %v981, %v1765
  %1767 = vmatmul.f32.gmra.mxu0 %v288
  %v1768 = vpop.f32.mrf.mxu0
  %v1769 = vadd.f32 %v984, %v1768
  %1770 = vmatmul.f32.gmra.mxu0 %v290
  %v1771 = vpop.f32.mrf.mxu0
  %v1772 = vadd.f32 %v987, %v1771
  %1773 = vmatmul.f32.gmra.mxu0 %v292
  %v1774 = vpop.f32.mrf.mxu0
  %v1775 = vadd.f32 %v990, %v1774
  %1776 = vmatmul.f32.gmra.mxu0 %v294
  %v1777 = vpop.f32.mrf.mxu0
  %v1778 = vadd.f32 %v993, %v1777
  %1779 = vmatmul.f32.gmra.mxu0 %v296
  %v1780 = vpop.f32.mrf.mxu0
  %v1781 = vadd.f32 %v996, %v1780
  %1782 = vmatmul.f32.gmra.mxu0 %v298
  %v1783 = vpop.f32.mrf.mxu0
  %v1784 = vadd.f32 %v999, %v1783
  %1785 = vmatmul.f32.gmra.mxu0 %v300
  %v1786 = vpop.f32.mrf.mxu0
  %v1787 = vadd.f32 %v1002, %v1786
  %1788 = vmatmul.f32.gmra.mxu0 %v302
  %v1789 = vpop.f32.mrf.mxu0
  %v1790 = vadd.f32 %v1005, %v1789
  %1791 = vmatmul.f32.gmra.mxu0 %v304
  %v1792 = vpop.f32.mrf.mxu0
  %v1793 = vadd.f32 %v1008, %v1792
  %1794 = vmatmul.f32.gmra.mxu0 %v306
  %v1795 = vpop.f32.mrf.mxu0
  %v1796 = vadd.f32 %v1011, %v1795
  %1797 = vmatmul.f32.gmra.mxu0 %v308
  %v1798 = vpop.f32.mrf.mxu0
  %v1799 = vadd.f32 %v1014, %v1798
  %1800 = vmatmul.f32.gmra.mxu0 %v310
  %v1801 = vpop.f32.mrf.mxu0
  %v1802 = vadd.f32 %v1017, %v1801
  %1803 = vmatmul.f32.gmra.mxu0 %v312
  %v1804 = vpop.f32.mrf.mxu0
  %v1805 = vadd.f32 %v1020, %v1804
  %1806 = vmatmul.f32.gmra.mxu0 %v314
  %v1807 = vpop.f32.mrf.mxu0
  %v1808 = vadd.f32 %v1023, %v1807
  %1809 = vmatmul.f32.gmra.mxu0 %v316
  %v1810 = vpop.f32.mrf.mxu0
  %v1811 = vadd.f32 %v1026, %v1810
  %1812 = vmatmul.f32.gmra.mxu0 %v318
  %v1813 = vpop.f32.mrf.mxu0
  %v1814 = vadd.f32 %v1029, %v1813
  %1815 = vmatmul.f32.gmra.mxu0 %v320
  %v1816 = vpop.f32.mrf.mxu0
  %v1817 = vadd.f32 %v1032, %v1816
  %1818 = vmatmul.f32.gmra.mxu0 %v322
  %v1819 = vpop.f32.mrf.mxu0
  %v1820 = vadd.f32 %v1035, %v1819
  %1821 = vmatmul.f32.gmra.mxu0 %v324
  %v1822 = vpop.f32.mrf.mxu0
  %v1823 = vadd.f32 %v1038, %v1822
  %1824 = vmatmul.f32.gmra.mxu0 %v326
  %v1825 = vpop.f32.mrf.mxu0
  %v1826 = vadd.f32 %v1041, %v1825
  %1827 = vmatmul.f32.gmra.mxu0 %v328
  %v1828 = vpop.f32.mrf.mxu0
  %v1829 = vadd.f32 %v1044, %v1828
  %1830 = vmatmul.f32.gmra.mxu0 %v330
  %v1831 = vpop.f32.mrf.mxu0
  %v1832 = vadd.f32 %v1047, %v1831
  %1833 = vmatmul.f32.gmra.mxu0 %v332
  %v1834 = vpop.f32.mrf.mxu0
  %v1835 = vadd.f32 %v1050, %v1834
  %1836 = vmatmul.f32.gmra.mxu0 %v334
  %v1837 = vpop.f32.mrf.mxu0
  %v1838 = vadd.f32 %v1053, %v1837
  %1839 = vmatmul.f32.gmra.mxu0 %v336
  %v1840 = vpop.f32.mrf.mxu0
  %v1841 = vadd.f32 %v1056, %v1840
  %1842 = vmatmul.f32.gmra.mxu0 %v338
  %v1843 = vpop.f32.mrf.mxu0
  %v1844 = vadd.f32 %v1059, %v1843
  %1845 = vmatmul.f32.gmra.mxu0 %v340
  %v1846 = vpop.f32.mrf.mxu0
  %v1847 = vadd.f32 %v1062, %v1846
  %1848 = vmatmul.f32.gmra.mxu0 %v342
  %v1849 = vpop.f32.mrf.mxu0
  %v1850 = vadd.f32 %v1065, %v1849
  %1851 = vmatmul.f32.gmra.mxu0 %v344
  %v1852 = vpop.f32.mrf.mxu0
  %v1853 = vadd.f32 %v1068, %v1852
  %1854 = vmatmul.f32.gmra.mxu0 %v346
  %v1855 = vpop.f32.mrf.mxu0
  %v1856 = vadd.f32 %v1071, %v1855
  %1857 = vmatmul.f32.gmra.mxu0 %v348
  %v1858 = vpop.f32.mrf.mxu0
  %v1859 = vadd.f32 %v1074, %v1858
  %1860 = vmatmul.f32.gmra.mxu0 %v350
  %v1861 = vpop.f32.mrf.mxu0
  %v1862 = vadd.f32 %v1077, %v1861
  %1863 = vmatmul.f32.gmra.mxu0 %v352
  %v1864 = vpop.f32.mrf.mxu0
  %v1865 = vadd.f32 %v1080, %v1864
  %1866 = vmatmul.f32.gmra.mxu0 %v354
  %v1867 = vpop.f32.mrf.mxu0
  %v1868 = vadd.f32 %v1083, %v1867
  %1869 = vmatmul.f32.gmra.mxu0 %v356
  %v1870 = vpop.f32.mrf.mxu0
  %v1871 = vadd.f32 %v1086, %v1870
  %1872 = vmatmul.f32.gmra.mxu0 %v358
  %v1873 = vpop.f32.mrf.mxu0
  %v1874 = vadd.f32 %v1089, %v1873
  %1875 = vmatmul.f32.gmra.mxu0 %v360
  %v1876 = vpop.f32.mrf.mxu0
  %v1877 = vadd.f32 %v1092, %v1876
  %1878 = vmatmul.f32.gmra.mxu0 %v362
  %v1879 = vpop.f32.mrf.mxu0
  %v1880 = vadd.f32 %v1095, %v1879
  %1881 = vmatmul.f32.gmra.mxu0 %v364
  %v1882 = vpop.f32.mrf.mxu0
  %v1883 = vadd.f32 %v1098, %v1882
  %1884 = vmatmul.f32.gmra.mxu0 %v366
  %v1885 = vpop.f32.mrf.mxu0
  %v1886 = vadd.f32 %v1101, %v1885
  %1887 = vmatmul.f32.gmra.mxu0 %v368
  %v1888 = vpop.f32.mrf.mxu0
  %v1889 = vadd.f32 %v1104, %v1888
  %1890 = vmatmul.f32.gmra.mxu0 %v370
  %v1891 = vpop.f32.mrf.mxu0
  %v1892 = vadd.f32 %v1107, %v1891
  %1893 = vmatmul.f32.gmra.mxu0 %v372
  %v1894 = vpop.f32.mrf.mxu0
  %v1895 = vadd.f32 %v1110, %v1894
  %1896 = vmatmul.f32.gmra.mxu0 %v374
  %v1897 = vpop.f32.mrf.mxu0
  %v1898 = vadd.f32 %v1113, %v1897
  %1899 = vmatmul.f32.gmra.mxu0 %v376
  %v1900 = vpop.f32.mrf.mxu0
  %v1901 = vadd.f32 %v1116, %v1900
  %1902 = vmatmul.f32.gmra.mxu0 %v378
  %v1903 = vpop.f32.mrf.mxu0
  %v1904 = vadd.f32 %v1119, %v1903
  %1905 = vmatmul.f32.gmra.mxu0 %v380
  %v1906 = vpop.f32.mrf.mxu0
  %v1907 = vadd.f32 %v1122, %v1906
  %1908 = vmatmul.f32.gmra.mxu0 %v382
  %v1909 = vpop.f32.mrf.mxu0
  %v1910 = vadd.f32 %v1125, %v1909
  %1911 = vmatmul.f32.gmra.mxu0 %v384
  %v1912 = vpop.f32.mrf.mxu0
  %v1913 = vadd.f32 %v1128, %v1912
  %1914 = vmatmul.f32.gmra.mxu0 %v386
  %v1915 = vpop.f32.mrf.mxu0
  %v1916 = vadd.f32 %v1131, %v1915
  %1917 = vmatmul.f32.gmra.mxu0 %v388
  %v1918 = vpop.f32.mrf.mxu0
  %v1919 = vadd.f32 %v1134, %v1918
  %1920 = vmatmul.f32.gmra.mxu0 %v390
  %v1921 = vpop.f32.mrf.mxu0
  %v1922 = vadd.f32 %v1137, %v1921
  %1923 = vmatmul.f32.gmra.mxu0 %v392
  %v1924 = vpop.f32.mrf.mxu0
  %v1925 = vadd.f32 %v1140, %v1924
  %1926 = vmatmul.f32.gmra.mxu0 %v394
  %v1927 = vpop.f32.mrf.mxu0
  %v1928 = vadd.f32 %v1143, %v1927
  %1929 = vmatmul.f32.gmra.mxu0 %v396
  %v1930 = vpop.f32.mrf.mxu0
  %v1931 = vadd.f32 %v1146, %v1930
  %1932 = vmatmul.f32.gmra.mxu0 %v398
  %v1933 = vpop.f32.mrf.mxu0
  %v1934 = vadd.f32 %v1149, %v1933
  %1935 = vmatmul.f32.gmra.mxu0 %v400
  %v1936 = vpop.f32.mrf.mxu0
  %v1937 = vadd.f32 %v1152, %v1936
  %1938 = vmatmul.f32.gmra.mxu0 %v402
  %v1939 = vpop.f32.mrf.mxu0
  %v1940 = vadd.f32 %v1155, %v1939
  %1941 = vmatmul.f32.gmra.mxu0 %v404
  %v1942 = vpop.f32.mrf.mxu0
  %v1943 = vadd.f32 %v1158, %v1942
  %1944 = vmatmul.f32.gmra.mxu0 %v406
  %v1945 = vpop.f32.mrf.mxu0
  %v1946 = vadd.f32 %v1161, %v1945
  %1947 = vmatmul.f32.gmra.mxu0 %v408
  %v1948 = vpop.f32.mrf.mxu0
  %v1949 = vadd.f32 %v1164, %v1948
  %1950 = vmatmul.f32.gmra.mxu0 %v410
  %v1951 = vpop.f32.mrf.mxu0
  %v1952 = vadd.f32 %v1167, %v1951
  %1953 = vmatmul.f32.gmra.mxu0 %v412
  %v1954 = vpop.f32.mrf.mxu0
  %v1955 = vadd.f32 %v1170, %v1954
  %1956 = vmatmul.f32.gmra.mxu0 %v414
  %v1957 = vpop.f32.mrf.mxu0
  %v1958 = vadd.f32 %v1173, %v1957
  %1959 = vmatmul.f32.gmra.mxu0 %v416
  %v1960 = vpop.f32.mrf.mxu0
  %v1961 = vadd.f32 %v1176, %v1960
  %1962 = vmatmul.f32.gmra.mxu0 %v418
  %v1963 = vpop.f32.mrf.mxu0
  %v1964 = vadd.f32 %v1179, %v1963
  %1965 = vmatmul.f32.gmra.mxu0 %v420
  %v1966 = vpop.f32.mrf.mxu0
  %v1967 = vadd.f32 %v1182, %v1966
  %1968 = vmatmul.f32.gmra.mxu0 %v422
  %v1969 = vpop.f32.mrf.mxu0
  %v1970 = vadd.f32 %v1185, %v1969
  %1971 = vmatmul.f32.gmra.mxu0 %v424
  %v1972 = vpop.f32.mrf.mxu0
  %v1973 = vadd.f32 %v1188, %v1972
  %1974 = vmatmul.f32.gmra.mxu0 %v426
  %v1975 = vpop.f32.mrf.mxu0
  %v1976 = vadd.f32 %v1191, %v1975
  %1977 = vmatmul.f32.gmra.mxu0 %v428
  %v1978 = vpop.f32.mrf.mxu0
  %v1979 = vadd.f32 %v1194, %v1978
  %1980 = vmatmul.f32.gmra.mxu0 %v430
  %v1981 = vpop.f32.mrf.mxu0
  %v1982 = vadd.f32 %v1197, %v1981
  %1983 = vmatmul.f32.gmra.mxu0 %v432
  %v1984 = vpop.f32.mrf.mxu0
  %v1985 = vadd.f32 %v1200, %v1984
  %1986 = vmatmul.f32.gmra.mxu0 %v434
  %v1987 = vpop.f32.mrf.mxu0
  %v1988 = vadd.f32 %v1203, %v1987
  %1989 = vmatmul.f32.gmra.mxu0 %v436
  %v1990 = vpop.f32.mrf.mxu0
  %v1991 = vadd.f32 %v1206, %v1990
  %1992 = vmatmul.f32.gmra.mxu0 %v438
  %v1993 = vpop.f32.mrf.mxu0
  %v1994 = vadd.f32 %v1209, %v1993
  %1995 = vmatmul.f32.gmra.mxu0 %v440
  %v1996 = vpop.f32.mrf.mxu0
  %v1997 = vadd.f32 %v1212, %v1996
  %1998 = vmatmul.f32.gmra.mxu0 %v442
  %v1999 = vpop.f32.mrf.mxu0
  %v2000 = vadd.f32 %v1215, %v1999
  %2001 = vmatmul.f32.gmra.mxu0 %v444
  %v2002 = vpop.f32.mrf.mxu0
  %v2003 = vadd.f32 %v1218, %v2002
  %2004 = vmatmul.f32.gmra.mxu0 %v446
  %v2005 = vpop.f32.mrf.mxu0
  %v2006 = vadd.f32 %v1221, %v2005
  %2007 = vmatmul.f32.gmra.mxu0 %v448
  %v2008 = vpop.f32.mrf.mxu0
  %v2009 = vadd.f32 %v1224, %v2008
  %2010 = vmatmul.f32.gmra.mxu0 %v450
  %v2011 = vpop.f32.mrf.mxu0
  %v2012 = vadd.f32 %v1227, %v2011
  %2013 = vmatmul.f32.gmra.mxu0 %v452
  %v2014 = vpop.f32.mrf.mxu0
  %v2015 = vadd.f32 %v1230, %v2014
  %2016 = vmatmul.f32.gmra.mxu0 %v454
  %v2017 = vpop.f32.mrf.mxu0
  %v2018 = vadd.f32 %v1233, %v2017
  %2019 = vmatmul.f32.gmra.mxu0 %v456
  %v2020 = vpop.f32.mrf.mxu0
  %v2021 = vadd.f32 %v1236, %v2020
  %2022 = vmatmul.f32.gmra.mxu0 %v458
  %v2023 = vpop.f32.mrf.mxu0
  %v2024 = vadd.f32 %v1239, %v2023
  %2025 = vmatmul.f32.gmra.mxu0 %v460
  %v2026 = vpop.f32.mrf.mxu0
  %v2027 = vadd.f32 %v1242, %v2026
  %2028 = vmatmul.f32.gmra.mxu0 %v462
  %v2029 = vpop.f32.mrf.mxu0
  %v2030 = vadd.f32 %v1245, %v2029
  %2031 = vmatmul.f32.gmra.mxu0 %v464
  %v2032 = vpop.f32.mrf.mxu0
  %v2033 = vadd.f32 %v1248, %v2032
  %2034 = vmatmul.f32.gmra.mxu0 %v466
  %v2035 = vpop.f32.mrf.mxu0
  %v2036 = vadd.f32 %v1251, %v2035
  %2037 = vmatmul.f32.gmra.mxu0 %v468
  %v2038 = vpop.f32.mrf.mxu0
  %v2039 = vadd.f32 %v1254, %v2038
  %2040 = vmatmul.f32.gmra.mxu0 %v470
  %v2041 = vpop.f32.mrf.mxu0
  %v2042 = vadd.f32 %v1257, %v2041
  %2043 = vmatmul.f32.gmra.mxu0 %v472
  %v2044 = vpop.f32.mrf.mxu0
  %v2045 = vadd.f32 %v1260, %v2044
  %2046 = vmatmul.f32.gmra.mxu0 %v474
  %v2047 = vpop.f32.mrf.mxu0
  %v2048 = vadd.f32 %v1263, %v2047
  %2049 = vmatmul.f32.gmra.mxu0 %v476
  %v2050 = vpop.f32.mrf.mxu0
  %v2051 = vadd.f32 %v1266, %v2050
  %2052 = vmatmul.f32.gmra.mxu0 %v478
  %v2053 = vpop.f32.mrf.mxu0
  %v2054 = vadd.f32 %v1269, %v2053
  %2055 = vmatmul.f32.gmra.mxu0 %v480
  %v2056 = vpop.f32.mrf.mxu0
  %v2057 = vadd.f32 %v1272, %v2056
  %2058 = vmatmul.f32.gmra.mxu0 %v482
  %v2059 = vpop.f32.mrf.mxu0
  %v2060 = vadd.f32 %v1275, %v2059
  %2061 = vmatmul.f32.gmra.mxu0 %v484
  %v2062 = vpop.f32.mrf.mxu0
  %v2063 = vadd.f32 %v1278, %v2062
  %2064 = vmatmul.f32.gmra.mxu0 %v486
  %v2065 = vpop.f32.mrf.mxu0
  %v2066 = vadd.f32 %v1281, %v2065
  %2067 = vmatmul.f32.gmra.mxu0 %v488
  %v2068 = vpop.f32.mrf.mxu0
  %v2069 = vadd.f32 %v1284, %v2068
  %2070 = vmatmul.f32.gmra.mxu0 %v490
  %v2071 = vpop.f32.mrf.mxu0
  %v2072 = vadd.f32 %v1287, %v2071
  %2073 = vmatmul.f32.gmra.mxu0 %v492
  %v2074 = vpop.f32.mrf.mxu0
  %v2075 = vadd.f32 %v1290, %v2074
  %2076 = vmatmul.f32.gmra.mxu0 %v494
  %v2077 = vpop.f32.mrf.mxu0
  %v2078 = vadd.f32 %v1293, %v2077
  %2079 = vmatmul.f32.gmra.mxu0 %v496
  %v2080 = vpop.f32.mrf.mxu0
  %v2081 = vadd.f32 %v1296, %v2080
  %2082 = vmatmul.f32.gmra.mxu0 %v498
  %v2083 = vpop.f32.mrf.mxu0
  %v2084 = vadd.f32 %v1299, %v2083
  %2085 = vmatmul.f32.gmra.mxu0 %v500
  %v2086 = vpop.f32.mrf.mxu0
  %v2087 = vadd.f32 %v1302, %v2086
  %2088 = vmatmul.f32.gmra.mxu0 %v502
  %v2089 = vpop.f32.mrf.mxu0
  %v2090 = vadd.f32 %v1305, %v2089
  %2091 = vmatmul.f32.gmra.mxu0 %v504
  %v2092 = vpop.f32.mrf.mxu0
  %v2093 = vadd.f32 %v1308, %v2092
  %2094 = vmatmul.f32.gmra.mxu0 %v506
  %v2095 = vpop.f32.mrf.mxu0
  %v2096 = vadd.f32 %v1311, %v2095
  %2097 = vmatmul.f32.gmra.mxu0 %v508
  %v2098 = vpop.f32.mrf.mxu0
  %v2099 = vadd.f32 %v1314, %v2098
  %2100 = vmatmul.f32.gmra.mxu0 %v510
  %v2101 = vpop.f32.mrf.mxu0
  %v2102 = vadd.f32 %v1317, %v2101
  %2103 = vmatmul.f32.gmra.mxu0 %v512
  %v2104 = vpop.f32.mrf.mxu0
  %v2105 = vadd.f32 %v1320, %v2104
  %2106 = vmatmul.f32.gmra.mxu0 %v514
  %v2107 = vpop.f32.mrf.mxu0
  %v2108 = vadd.f32 %v1323, %v2107
  %2109 = vmatmul.f32.gmra.mxu0 %v516
  %v2110 = vpop.f32.mrf.mxu0
  %v2111 = vadd.f32 %v1326, %v2110
  %2112 = vmatmul.f32.gmra.mxu0 %v518
  %v2113 = vpop.f32.mrf.mxu0
  %v2114 = vadd.f32 %v1329, %v2113
  %2115 = vmatmul.f32.gmra.mxu0 %v520
  %v2116 = vpop.f32.mrf.mxu0
  %v2117 = vadd.f32 %v1332, %v2116
  %2118 = vmatmul.f32.gmra.mxu0 %v522
  %v2119 = vpop.f32.mrf.mxu0
  %v2120 = vadd.f32 %v1335, %v2119
  %2121 = vmatmul.f32.gmra.mxu0 %v524
  %v2122 = vpop.f32.mrf.mxu0
  %v2123 = vadd.f32 %v1338, %v2122
  %2124 = vmatmul.f32.gmra.mxu0 %v526
  %v2125 = vpop.f32.mrf.mxu0
  %v2126 = vadd.f32 %v1341, %v2125
  %2127 = vmatmul.f32.gmra.mxu0 %v528
  %v2128 = vpop.f32.mrf.mxu0
  %v2129 = vadd.f32 %v1344, %v2128
  %2130 = vdwg.mxu0
  %v2131 = vadd.f32 %v1364, %v1367
  %v2132 = vadd.f32 %v2131, %v1370
  %v2133 = vadd.f32 %v2132, %v1373
  %v2134 = vadd.f32 %v2133, %v1376
  %v2135 = vadd.f32 %v2134, %v1379
  %v2136 = vadd.f32 %v2135, %v1382
  %v2137 = vadd.f32 %v2136, %v1385
  %v2138 = vadd.f32 %v2137, %v1388
  %v2139 = vadd.f32 %v2138, %v1391
  %v2140 = vadd.f32 %v2139, %v1394
  %v2141 = vadd.f32 %v2140, %v1397
  %v2142 = vadd.f32 %v2141, %v1400
  %v2143 = vadd.f32 %v2142, %v1403
  %v2144 = vadd.f32 %v2143, %v1406
  %v2145 = vadd.f32 %v2144, %v1409
  %v2146 = vadd.f32 %v2145, %v1412
  %v2147 = vadd.f32 %v2146, %v1415
  %v2148 = vadd.f32 %v2147, %v1418
  %v2149 = vadd.f32 %v2148, %v1421
  %v2150 = vadd.f32 %v2149, %v1424
  %v2151 = vadd.f32 %v2150, %v1427
  %v2152 = vadd.f32 %v2151, %v1430
  %v2153 = vadd.f32 %v2152, %v1433
  %v2154 = vadd.f32 %v2153, %v1436
  %v2155 = vadd.f32 %v2154, %v1439
  %v2156 = vadd.f32 %v2155, %v1442
  %v2157 = vadd.f32 %v2156, %v1445
  %v2158 = vadd.f32 %v2157, %v1448
  %v2159 = vadd.f32 %v2158, %v1451
  %v2160 = vadd.f32 %v2159, %v1454
  %v2161 = vadd.f32 %v2160, %v1457
  %v2162 = vadd.f32 %v2161, %v1460
  %v2163 = vadd.f32 %v2162, %v1463
  %v2164 = vadd.f32 %v2163, %v1466
  %v2165 = vadd.f32 %v2164, %v1469
  %v2166 = vadd.f32 %v2165, %v1472
  %v2167 = vadd.f32 %v2166, %v1475
  %v2168 = vadd.f32 %v2167, %v1478
  %v2169 = vadd.f32 %v2168, %v1481
  %v2170 = vadd.f32 %v2169, %v1484
  %v2171 = vadd.f32 %v2170, %v1487
  %v2172 = vadd.f32 %v2171, %v1490
  %v2173 = vadd.f32 %v2172, %v1493
  %v2174 = vadd.f32 %v2173, %v1496
  %v2175 = vadd.f32 %v2174, %v1499
  %v2176 = vadd.f32 %v2175, %v1502
  %v2177 = vadd.f32 %v2176, %v1505
  %v2178 = vadd.f32 %v2177, %v1508
  %v2179 = vadd.f32 %v2178, %v1511
  %v2180 = vadd.f32 %v2179, %v1514
  %v2181 = vadd.f32 %v2180, %v1517
  %v2182 = vadd.f32 %v2181, %v1520
  %v2183 = vadd.f32 %v2182, %v1523
  %v2184 = vadd.f32 %v2183, %v1526
  %v2185 = vadd.f32 %v2184, %v1529
  %v2186 = vadd.f32 %v2185, %v1532
  %v2187 = vadd.f32 %v2186, %v1535
  %v2188 = vadd.f32 %v2187, %v1538
  %v2189 = vadd.f32 %v2188, %v1541
  %v2190 = vadd.f32 %v2189, %v1544
  %v2191 = vadd.f32 %v2190, %v1547
  %v2192 = vadd.f32 %v2191, %v1550
  %v2193 = vadd.f32 %v2192, %v1553
  %v2194 = vadd.f32 %v2193, %v1556
  %v2195 = vadd.f32 %v2194, %v1559
  %v2196 = vadd.f32 %v2195, %v1562
  %v2197 = vadd.f32 %v2196, %v1565
  %v2198 = vadd.f32 %v2197, %v1568
  %v2199 = vadd.f32 %v2198, %v1571
  %v2200 = vadd.f32 %v2199, %v1574
  %v2201 = vadd.f32 %v2200, %v1577
  %v2202 = vadd.f32 %v2201, %v1580
  %v2203 = vadd.f32 %v2202, %v1583
  %v2204 = vadd.f32 %v2203, %v1586
  %v2205 = vadd.f32 %v2204, %v1589
  %v2206 = vadd.f32 %v2205, %v1592
  %v2207 = vadd.f32 %v2206, %v1595
  %v2208 = vadd.f32 %v2207, %v1598
  %v2209 = vadd.f32 %v2208, %v1601
  %v2210 = vadd.f32 %v2209, %v1604
  %v2211 = vadd.f32 %v2210, %v1607
  %v2212 = vadd.f32 %v2211, %v1610
  %v2213 = vadd.f32 %v2212, %v1613
  %v2214 = vadd.f32 %v2213, %v1616
  %v2215 = vadd.f32 %v2214, %v1619
  %v2216 = vadd.f32 %v2215, %v1622
  %v2217 = vadd.f32 %v2216, %v1625
  %v2218 = vadd.f32 %v2217, %v1628
  %v2219 = vadd.f32 %v2218, %v1631
  %v2220 = vadd.f32 %v2219, %v1634
  %v2221 = vadd.f32 %v2220, %v1637
  %v2222 = vadd.f32 %v2221, %v1640
  %v2223 = vadd.f32 %v2222, %v1643
  %v2224 = vadd.f32 %v2223, %v1646
  %v2225 = vadd.f32 %v2224, %v1649
  %v2226 = vadd.f32 %v2225, %v1652
  %v2227 = vadd.f32 %v2226, %v1655
  %v2228 = vadd.f32 %v2227, %v1658
  %v2229 = vadd.f32 %v2228, %v1661
  %v2230 = vadd.f32 %v2229, %v1664
  %v2231 = vadd.f32 %v2230, %v1667
  %v2232 = vadd.f32 %v2231, %v1670
  %v2233 = vadd.f32 %v2232, %v1673
  %v2234 = vadd.f32 %v2233, %v1676
  %v2235 = vadd.f32 %v2234, %v1679
  %v2236 = vadd.f32 %v2235, %v1682
  %v2237 = vadd.f32 %v2236, %v1685
  %v2238 = vadd.f32 %v2237, %v1688
  %v2239 = vadd.f32 %v2238, %v1691
  %v2240 = vadd.f32 %v2239, %v1694
  %v2241 = vadd.f32 %v2240, %v1697
  %v2242 = vadd.f32 %v2241, %v1700
  %v2243 = vadd.f32 %v2242, %v1703
  %v2244 = vadd.f32 %v2243, %v1706
  %v2245 = vadd.f32 %v2244, %v1709
  %v2246 = vadd.f32 %v2245, %v1712
  %v2247 = vadd.f32 %v2246, %v1715
  %v2248 = vadd.f32 %v2247, %v1718
  %v2249 = vadd.f32 %v2248, %v1721
  %v2250 = vadd.f32 %v2249, %v1724
  %v2251 = vadd.f32 %v2250, %v1727
  %v2252 = vadd.f32 %v2251, %v1730
  %v2253 = vadd.f32 %v2252, %v1733
  %v2254 = vadd.f32 %v2253, %v1736
  %v2255 = vadd.f32 %v2254, %v1739
  %v2256 = vadd.f32 %v2255, %v1742
  %v2257 = vadd.f32 %v2256, %v1745
  %v2258 = vadd.f32 %v2257, %v1748
  %v2259 = vadd.f32 %v2258, %v1751
  %v2260 = vadd.f32 %v2259, %v1754
  %v2261 = vadd.f32 %v2260, %v1757
  %v2262 = vadd.f32 %v2261, %v1760
  %v2263 = vadd.f32 %v2262, %v1763
  %v2264 = vadd.f32 %v2263, %v1766
  %v2265 = vadd.f32 %v2264, %v1769
  %v2266 = vadd.f32 %v2265, %v1772
  %v2267 = vadd.f32 %v2266, %v1775
  %v2268 = vadd.f32 %v2267, %v1778
  %v2269 = vadd.f32 %v2268, %v1781
  %v2270 = vadd.f32 %v2269, %v1784
  %v2271 = vadd.f32 %v2270, %v1787
  %v2272 = vadd.f32 %v2271, %v1790
  %v2273 = vadd.f32 %v2272, %v1793
  %v2274 = vadd.f32 %v2273, %v1796
  %v2275 = vadd.f32 %v2274, %v1799
  %v2276 = vadd.f32 %v2275, %v1802
  %v2277 = vadd.f32 %v2276, %v1805
  %v2278 = vadd.f32 %v2277, %v1808
  %v2279 = vadd.f32 %v2278, %v1811
  %v2280 = vadd.f32 %v2279, %v1814
  %v2281 = vadd.f32 %v2280, %v1817
  %v2282 = vadd.f32 %v2281, %v1820
  %v2283 = vadd.f32 %v2282, %v1823
  %v2284 = vadd.f32 %v2283, %v1826
  %v2285 = vadd.f32 %v2284, %v1829
  %v2286 = vadd.f32 %v2285, %v1832
  %v2287 = vadd.f32 %v2286, %v1835
  %v2288 = vadd.f32 %v2287, %v1838
  %v2289 = vadd.f32 %v2288, %v1841
  %v2290 = vadd.f32 %v2289, %v1844
  %v2291 = vadd.f32 %v2290, %v1847
  %v2292 = vadd.f32 %v2291, %v1850
  %v2293 = vadd.f32 %v2292, %v1853
  %v2294 = vadd.f32 %v2293, %v1856
  %v2295 = vadd.f32 %v2294, %v1859
  %v2296 = vadd.f32 %v2295, %v1862
  %v2297 = vadd.f32 %v2296, %v1865
  %v2298 = vadd.f32 %v2297, %v1868
  %v2299 = vadd.f32 %v2298, %v1871
  %v2300 = vadd.f32 %v2299, %v1874
  %v2301 = vadd.f32 %v2300, %v1877
  %v2302 = vadd.f32 %v2301, %v1880
  %v2303 = vadd.f32 %v2302, %v1883
  %v2304 = vadd.f32 %v2303, %v1886
  %v2305 = vadd.f32 %v2304, %v1889
  %v2306 = vadd.f32 %v2305, %v1892
  %v2307 = vadd.f32 %v2306, %v1895
  %v2308 = vadd.f32 %v2307, %v1898
  %v2309 = vadd.f32 %v2308, %v1901
  %v2310 = vadd.f32 %v2309, %v1904
  %v2311 = vadd.f32 %v2310, %v1907
  %v2312 = vadd.f32 %v2311, %v1910
  %v2313 = vadd.f32 %v2312, %v1913
  %v2314 = vadd.f32 %v2313, %v1916
  %v2315 = vadd.f32 %v2314, %v1919
  %v2316 = vadd.f32 %v2315, %v1922
  %v2317 = vadd.f32 %v2316, %v1925
  %v2318 = vadd.f32 %v2317, %v1928
  %v2319 = vadd.f32 %v2318, %v1931
  %v2320 = vadd.f32 %v2319, %v1934
  %v2321 = vadd.f32 %v2320, %v1937
  %v2322 = vadd.f32 %v2321, %v1940
  %v2323 = vadd.f32 %v2322, %v1943
  %v2324 = vadd.f32 %v2323, %v1946
  %v2325 = vadd.f32 %v2324, %v1949
  %v2326 = vadd.f32 %v2325, %v1952
  %v2327 = vadd.f32 %v2326, %v1955
  %v2328 = vadd.f32 %v2327, %v1958
  %v2329 = vadd.f32 %v2328, %v1961
  %v2330 = vadd.f32 %v2329, %v1964
  %v2331 = vadd.f32 %v2330, %v1967
  %v2332 = vadd.f32 %v2331, %v1970
  %v2333 = vadd.f32 %v2332, %v1973
  %v2334 = vadd.f32 %v2333, %v1976
  %v2335 = vadd.f32 %v2334, %v1979
  %v2336 = vadd.f32 %v2335, %v1982
  %v2337 = vadd.f32 %v2336, %v1985
  %v2338 = vadd.f32 %v2337, %v1988
  %v2339 = vadd.f32 %v2338, %v1991
  %v2340 = vadd.f32 %v2339, %v1994
  %v2341 = vadd.f32 %v2340, %v1997
  %v2342 = vadd.f32 %v2341, %v2000
  %v2343 = vadd.f32 %v2342, %v2003
  %v2344 = vadd.f32 %v2343, %v2006
  %v2345 = vadd.f32 %v2344, %v2009
  %v2346 = vadd.f32 %v2345, %v2012
  %v2347 = vadd.f32 %v2346, %v2015
  %v2348 = vadd.f32 %v2347, %v2018
  %v2349 = vadd.f32 %v2348, %v2021
  %v2350 = vadd.f32 %v2349, %v2024
  %v2351 = vadd.f32 %v2350, %v2027
  %v2352 = vadd.f32 %v2351, %v2030
  %v2353 = vadd.f32 %v2352, %v2033
  %v2354 = vadd.f32 %v2353, %v2036
  %v2355 = vadd.f32 %v2354, %v2039
  %v2356 = vadd.f32 %v2355, %v2042
  %v2357 = vadd.f32 %v2356, %v2045
  %v2358 = vadd.f32 %v2357, %v2048
  %v2359 = vadd.f32 %v2358, %v2051
  %v2360 = vadd.f32 %v2359, %v2054
  %v2361 = vadd.f32 %v2360, %v2057
  %v2362 = vadd.f32 %v2361, %v2060
  %v2363 = vadd.f32 %v2362, %v2063
  %v2364 = vadd.f32 %v2363, %v2066
  %v2365 = vadd.f32 %v2364, %v2069
  %v2366 = vadd.f32 %v2365, %v2072
  %v2367 = vadd.f32 %v2366, %v2075
  %v2368 = vadd.f32 %v2367, %v2078
  %v2369 = vadd.f32 %v2368, %v2081
  %v2370 = vadd.f32 %v2369, %v2084
  %v2371 = vadd.f32 %v2370, %v2087
  %v2372 = vadd.f32 %v2371, %v2090
  %v2373 = vadd.f32 %v2372, %v2093
  %v2374 = vadd.f32 %v2373, %v2096
  %v2375 = vadd.f32 %v2374, %v2099
  %v2376 = vadd.f32 %v2375, %v2102
  %v2377 = vadd.f32 %v2376, %v2105
  %v2378 = vadd.f32 %v2377, %v2108
  %v2379 = vadd.f32 %v2378, %v2111
  %v2380 = vadd.f32 %v2379, %v2114
  %v2381 = vadd.f32 %v2380, %v2117
  %v2382 = vadd.f32 %v2381, %v2120
  %v2383 = vadd.f32 %v2382, %v2123
  %v2384 = vadd.f32 %v2383, %v2126
  %v2385 = vadd.f32 %v2384, %v2129
  %v2386 = vrot.slane %v2385, 4
  %v2387 = vadd.f32 %v2385, %v2386
  %v2388 = vrot.slane %v2387, 2
  %v2389 = vadd.f32 %v2387, %v2388
  %v2390 = vrot.slane %v2389, 1
  %v2391 = vadd.f32 %v2389, %v2390
  %v2392 = vrcp.pop 2048.0
  %v2393 = vmul.f32 2048.0, %v2392
  %v2394 = vsub.f32 1.0, %v2393
  %v2395 = vmul.f32 %v2392, %v2394
  %v2396 = vadd.f32 %v2392, %v2395
  %vm2397 = vweird.f32 %v2392
  %v2398 = vsel %vm2397, %v2392, %v2396
  %v2399 = vmul.f32 %v2391, %v2398
  %v2400 = vsub.f32 %v1364, %v2399
  %v2401 = vsub.f32 %v1367, %v2399
  %v2402 = vsub.f32 %v1370, %v2399
  %v2403 = vsub.f32 %v1373, %v2399
  %v2404 = vsub.f32 %v1376, %v2399
  %v2405 = vsub.f32 %v1379, %v2399
  %v2406 = vsub.f32 %v1382, %v2399
  %v2407 = vsub.f32 %v1385, %v2399
  %v2408 = vsub.f32 %v1388, %v2399
  %v2409 = vsub.f32 %v1391, %v2399
  %v2410 = vsub.f32 %v1394, %v2399
  %v2411 = vsub.f32 %v1397, %v2399
  %v2412 = vsub.f32 %v1400, %v2399
  %v2413 = vsub.f32 %v1403, %v2399
  %v2414 = vsub.f32 %v1406, %v2399
  %v2415 = vsub.f32 %v1409, %v2399
  %v2416 = vsub.f32 %v1412, %v2399
  %v2417 = vsub.f32 %v1415, %v2399
  %v2418 = vsub.f32 %v1418, %v2399
  %v2419 = vsub.f32 %v1421, %v2399
  %v2420 = vsub.f32 %v1424, %v2399
  %v2421 = vsub.f32 %v1427, %v2399
  %v2422 = vsub.f32 %v1430, %v2399
  %v2423 = vsub.f32 %v1433, %v2399
  %v2424 = vsub.f32 %v1436, %v2399
  %v2425 = vsub.f32 %v1439, %v2399
  %v2426 = vsub.f32 %v1442, %v2399
  %v2427 = vsub.f32 %v1445, %v2399
  %v2428 = vsub.f32 %v1448, %v2399
  %v2429 = vsub.f32 %v1451, %v2399
  %v2430 = vsub.f32 %v1454, %v2399
  %v2431 = vsub.f32 %v1457, %v2399
  %v2432 = vsub.f32 %v1460, %v2399
  %v2433 = vsub.f32 %v1463, %v2399
  %v2434 = vsub.f32 %v1466, %v2399
  %v2435 = vsub.f32 %v1469, %v2399
  %v2436 = vsub.f32 %v1472, %v2399
  %v2437 = vsub.f32 %v1475, %v2399
  %v2438 = vsub.f32 %v1478, %v2399
  %v2439 = vsub.f32 %v1481, %v2399
  %v2440 = vsub.f32 %v1484, %v2399
  %v2441 = vsub.f32 %v1487, %v2399
  %v2442 = vsub.f32 %v1490, %v2399
  %v2443 = vsub.f32 %v1493, %v2399
  %v2444 = vsub.f32 %v1496, %v2399
  %v2445 = vsub.f32 %v1499, %v2399
  %v2446 = vsub.f32 %v1502, %v2399
  %v2447 = vsub.f32 %v1505, %v2399
  %v2448 = vsub.f32 %v1508, %v2399
  %v2449 = vsub.f32 %v1511, %v2399
  %v2450 = vsub.f32 %v1514, %v2399
  %v2451 = vsub.f32 %v1517, %v2399
  %v2452 = vsub.f32 %v1520, %v2399
  %v2453 = vsub.f32 %v1523, %v2399
  %v2454 = vsub.f32 %v1526, %v2399
  %v2455 = vsub.f32 %v1529, %v2399
  %v2456 = vsub.f32 %v1532, %v2399
  %v2457 = vsub.f32 %v1535, %v2399
  %v2458 = vsub.f32 %v1538, %v2399
  %v2459 = vsub.f32 %v1541, %v2399
  %v2460 = vsub.f32 %v1544, %v2399
  %v2461 = vsub.f32 %v1547, %v2399
  %v2462 = vsub.f32 %v1550, %v2399
  %v2463 = vsub.f32 %v1553, %v2399
  %v2464 = vsub.f32 %v1556, %v2399
  %v2465 = vsub.f32 %v1559, %v2399
  %v2466 = vsub.f32 %v1562, %v2399
  %v2467 = vsub.f32 %v1565, %v2399
  %v2468 = vsub.f32 %v1568, %v2399
  %v2469 = vsub.f32 %v1571, %v2399
  %v2470 = vsub.f32 %v1574, %v2399
  %v2471 = vsub.f32 %v1577, %v2399
  %v2472 = vsub.f32 %v1580, %v2399
  %v2473 = vsub.f32 %v1583, %v2399
  %v2474 = vsub.f32 %v1586, %v2399
  %v2475 = vsub.f32 %v1589, %v2399
  %v2476 = vsub.f32 %v1592, %v2399
  %v2477 = vsub.f32 %v1595, %v2399
  %v2478 = vsub.f32 %v1598, %v2399
  %v2479 = vsub.f32 %v1601, %v2399
  %v2480 = vsub.f32 %v1604, %v2399
  %v2481 = vsub.f32 %v1607, %v2399
  %v2482 = vsub.f32 %v1610, %v2399
  %v2483 = vsub.f32 %v1613, %v2399
  %v2484 = vsub.f32 %v1616, %v2399
  %v2485 = vsub.f32 %v1619, %v2399
  %v2486 = vsub.f32 %v1622, %v2399
  %v2487 = vsub.f32 %v1625, %v2399
  %v2488 = vsub.f32 %v1628, %v2399
  %v2489 = vsub.f32 %v1631, %v2399
  %v2490 = vsub.f32 %v1634, %v2399
  %v2491 = vsub.f32 %v1637, %v2399
  %v2492 = vsub.f32 %v1640, %v2399
  %v2493 = vsub.f32 %v1643, %v2399
  %v2494 = vsub.f32 %v1646, %v2399
  %v2495 = vsub.f32 %v1649, %v2399
  %v2496 = vsub.f32 %v1652, %v2399
  %v2497 = vsub.f32 %v1655, %v2399
  %v2498 = vsub.f32 %v1658, %v2399
  %v2499 = vsub.f32 %v1661, %v2399
  %v2500 = vsub.f32 %v1664, %v2399
  %v2501 = vsub.f32 %v1667, %v2399
  %v2502 = vsub.f32 %v1670, %v2399
  %v2503 = vsub.f32 %v1673, %v2399
  %v2504 = vsub.f32 %v1676, %v2399
  %v2505 = vsub.f32 %v1679, %v2399
  %v2506 = vsub.f32 %v1682, %v2399
  %v2507 = vsub.f32 %v1685, %v2399
  %v2508 = vsub.f32 %v1688, %v2399
  %v2509 = vsub.f32 %v1691, %v2399
  %v2510 = vsub.f32 %v1694, %v2399
  %v2511 = vsub.f32 %v1697, %v2399
  %v2512 = vsub.f32 %v1700, %v2399
  %v2513 = vsub.f32 %v1703, %v2399
  %v2514 = vsub.f32 %v1706, %v2399
  %v2515 = vsub.f32 %v1709, %v2399
  %v2516 = vsub.f32 %v1712, %v2399
  %v2517 = vsub.f32 %v1715, %v2399
  %v2518 = vsub.f32 %v1718, %v2399
  %v2519 = vsub.f32 %v1721, %v2399
  %v2520 = vsub.f32 %v1724, %v2399
  %v2521 = vsub.f32 %v1727, %v2399
  %v2522 = vsub.f32 %v1730, %v2399
  %v2523 = vsub.f32 %v1733, %v2399
  %v2524 = vsub.f32 %v1736, %v2399
  %v2525 = vsub.f32 %v1739, %v2399
  %v2526 = vsub.f32 %v1742, %v2399
  %v2527 = vsub.f32 %v1745, %v2399
  %v2528 = vsub.f32 %v1748, %v2399
  %v2529 = vsub.f32 %v1751, %v2399
  %v2530 = vsub.f32 %v1754, %v2399
  %v2531 = vsub.f32 %v1757, %v2399
  %v2532 = vsub.f32 %v1760, %v2399
  %v2533 = vsub.f32 %v1763, %v2399
  %v2534 = vsub.f32 %v1766, %v2399
  %v2535 = vsub.f32 %v1769, %v2399
  %v2536 = vsub.f32 %v1772, %v2399
  %v2537 = vsub.f32 %v1775, %v2399
  %v2538 = vsub.f32 %v1778, %v2399
  %v2539 = vsub.f32 %v1781, %v2399
  %v2540 = vsub.f32 %v1784, %v2399
  %v2541 = vsub.f32 %v1787, %v2399
  %v2542 = vsub.f32 %v1790, %v2399
  %v2543 = vsub.f32 %v1793, %v2399
  %v2544 = vsub.f32 %v1796, %v2399
  %v2545 = vsub.f32 %v1799, %v2399
  %v2546 = vsub.f32 %v1802, %v2399
  %v2547 = vsub.f32 %v1805, %v2399
  %v2548 = vsub.f32 %v1808, %v2399
  %v2549 = vsub.f32 %v1811, %v2399
  %v2550 = vsub.f32 %v1814, %v2399
  %v2551 = vsub.f32 %v1817, %v2399
  %v2552 = vsub.f32 %v1820, %v2399
  %v2553 = vsub.f32 %v1823, %v2399
  %v2554 = vsub.f32 %v1826, %v2399
  %v2555 = vsub.f32 %v1829, %v2399
  %v2556 = vsub.f32 %v1832, %v2399
  %v2557 = vsub.f32 %v1835, %v2399
  %v2558 = vsub.f32 %v1838, %v2399
  %v2559 = vsub.f32 %v1841, %v2399
  %v2560 = vsub.f32 %v1844, %v2399
  %v2561 = vsub.f32 %v1847, %v2399
  %v2562 = vsub.f32 %v1850, %v2399
  %v2563 = vsub.f32 %v1853, %v2399
  %v2564 = vsub.f32 %v1856, %v2399
  %v2565 = vsub.f32 %v1859, %v2399
  %v2566 = vsub.f32 %v1862, %v2399
  %v2567 = vsub.f32 %v1865, %v2399
  %v2568 = vsub.f32 %v1868, %v2399
  %v2569 = vsub.f32 %v1871, %v2399
  %v2570 = vsub.f32 %v1874, %v2399
  %v2571 = vsub.f32 %v1877, %v2399
  %v2572 = vsub.f32 %v1880, %v2399
  %v2573 = vsub.f32 %v1883, %v2399
  %v2574 = vsub.f32 %v1886, %v2399
  %v2575 = vsub.f32 %v1889, %v2399
  %v2576 = vsub.f32 %v1892, %v2399
  %v2577 = vsub.f32 %v1895, %v2399
  %v2578 = vsub.f32 %v1898, %v2399
  %v2579 = vsub.f32 %v1901, %v2399
  %v2580 = vsub.f32 %v1904, %v2399
  %v2581 = vsub.f32 %v1907, %v2399
  %v2582 = vsub.f32 %v1910, %v2399
  %v2583 = vsub.f32 %v1913, %v2399
  %v2584 = vsub.f32 %v1916, %v2399
  %v2585 = vsub.f32 %v1919, %v2399
  %v2586 = vsub.f32 %v1922, %v2399
  %v2587 = vsub.f32 %v1925, %v2399
  %v2588 = vsub.f32 %v1928, %v2399
  %v2589 = vsub.f32 %v1931, %v2399
  %v2590 = vsub.f32 %v1934, %v2399
  %v2591 = vsub.f32 %v1937, %v2399
  %v2592 = vsub.f32 %v1940, %v2399
  %v2593 = vsub.f32 %v1943, %v2399
  %v2594 = vsub.f32 %v1946, %v2399
  %v2595 = vsub.f32 %v1949, %v2399
  %v2596 = vsub.f32 %v1952, %v2399
  %v2597 = vsub.f32 %v1955, %v2399
  %v2598 = vsub.f32 %v1958, %v2399
  %v2599 = vsub.f32 %v1961, %v2399
  %v2600 = vsub.f32 %v1964, %v2399
  %v2601 = vsub.f32 %v1967, %v2399
  %v2602 = vsub.f32 %v1970, %v2399
  %v2603 = vsub.f32 %v1973, %v2399
  %v2604 = vsub.f32 %v1976, %v2399
  %v2605 = vsub.f32 %v1979, %v2399
  %v2606 = vsub.f32 %v1982, %v2399
  %v2607 = vsub.f32 %v1985, %v2399
  %v2608 = vsub.f32 %v1988, %v2399
  %v2609 = vsub.f32 %v1991, %v2399
  %v2610 = vsub.f32 %v1994, %v2399
  %v2611 = vsub.f32 %v1997, %v2399
  %v2612 = vsub.f32 %v2000, %v2399
  %v2613 = vsub.f32 %v2003, %v2399
  %v2614 = vsub.f32 %v2006, %v2399
  %v2615 = vsub.f32 %v2009, %v2399
  %v2616 = vsub.f32 %v2012, %v2399
  %v2617 = vsub.f32 %v2015, %v2399
  %v2618 = vsub.f32 %v2018, %v2399
  %v2619 = vsub.f32 %v2021, %v2399
  %v2620 = vsub.f32 %v2024, %v2399
  %v2621 = vsub.f32 %v2027, %v2399
  %v2622 = vsub.f32 %v2030, %v2399
  %v2623 = vsub.f32 %v2033, %v2399
  %v2624 = vsub.f32 %v2036, %v2399
  %v2625 = vsub.f32 %v2039, %v2399
  %v2626 = vsub.f32 %v2042, %v2399
  %v2627 = vsub.f32 %v2045, %v2399
  %v2628 = vsub.f32 %v2048, %v2399
  %v2629 = vsub.f32 %v2051, %v2399
  %v2630 = vsub.f32 %v2054, %v2399
  %v2631 = vsub.f32 %v2057, %v2399
  %v2632 = vsub.f32 %v2060, %v2399
  %v2633 = vsub.f32 %v2063, %v2399
  %v2634 = vsub.f32 %v2066, %v2399
  %v2635 = vsub.f32 %v2069, %v2399
  %v2636 = vsub.f32 %v2072, %v2399
  %v2637 = vsub.f32 %v2075, %v2399
  %v2638 = vsub.f32 %v2078, %v2399
  %v2639 = vsub.f32 %v2081, %v2399
  %v2640 = vsub.f32 %v2084, %v2399
  %v2641 = vsub.f32 %v2087, %v2399
  %v2642 = vsub.f32 %v2090, %v2399
  %v2643 = vsub.f32 %v2093, %v2399
  %v2644 = vsub.f32 %v2096, %v2399
  %v2645 = vsub.f32 %v2099, %v2399
  %v2646 = vsub.f32 %v2102, %v2399
  %v2647 = vsub.f32 %v2105, %v2399
  %v2648 = vsub.f32 %v2108, %v2399
  %v2649 = vsub.f32 %v2111, %v2399
  %v2650 = vsub.f32 %v2114, %v2399
  %v2651 = vsub.f32 %v2117, %v2399
  %v2652 = vsub.f32 %v2120, %v2399
  %v2653 = vsub.f32 %v2123, %v2399
  %v2654 = vsub.f32 %v2126, %v2399
  %v2655 = vsub.f32 %v2129, %v2399
  %v2656 = vmul.f32 %v2400, %v2400
  %v2657 = vmul.f32 %v2401, %v2401
  %v2658 = vmul.f32 %v2402, %v2402
  %v2659 = vmul.f32 %v2403, %v2403
  %v2660 = vmul.f32 %v2404, %v2404
  %v2661 = vmul.f32 %v2405, %v2405
  %v2662 = vmul.f32 %v2406, %v2406
  %v2663 = vmul.f32 %v2407, %v2407
  %v2664 = vmul.f32 %v2408, %v2408
  %v2665 = vmul.f32 %v2409, %v2409
  %v2666 = vmul.f32 %v2410, %v2410
  %v2667 = vmul.f32 %v2411, %v2411
  %v2668 = vmul.f32 %v2412, %v2412
  %v2669 = vmul.f32 %v2413, %v2413
  %v2670 = vmul.f32 %v2414, %v2414
  %v2671 = vmul.f32 %v2415, %v2415
  %v2672 = vmul.f32 %v2416, %v2416
  %v2673 = vmul.f32 %v2417, %v2417
  %v2674 = vmul.f32 %v2418, %v2418
  %v2675 = vmul.f32 %v2419, %v2419
  %v2676 = vmul.f32 %v2420, %v2420
  %v2677 = vmul.f32 %v2421, %v2421
  %v2678 = vmul.f32 %v2422, %v2422
  %v2679 = vmul.f32 %v2423, %v2423
  %v2680 = vmul.f32 %v2424, %v2424
  %v2681 = vmul.f32 %v2425, %v2425
  %v2682 = vmul.f32 %v2426, %v2426
  %v2683 = vmul.f32 %v2427, %v2427
  %v2684 = vmul.f32 %v2428, %v2428
  %v2685 = vmul.f32 %v2429, %v2429
  %v2686 = vmul.f32 %v2430, %v2430
  %v2687 = vmul.f32 %v2431, %v2431
  %v2688 = vmul.f32 %v2432, %v2432
  %v2689 = vmul.f32 %v2433, %v2433
  %v2690 = vmul.f32 %v2434, %v2434
  %v2691 = vmul.f32 %v2435, %v2435
  %v2692 = vmul.f32 %v2436, %v2436
  %v2693 = vmul.f32 %v2437, %v2437
  %v2694 = vmul.f32 %v2438, %v2438
  %v2695 = vmul.f32 %v2439, %v2439
  %v2696 = vmul.f32 %v2440, %v2440
  %v2697 = vmul.f32 %v2441, %v2441
  %v2698 = vmul.f32 %v2442, %v2442
  %v2699 = vmul.f32 %v2443, %v2443
  %v2700 = vmul.f32 %v2444, %v2444
  %v2701 = vmul.f32 %v2445, %v2445
  %v2702 = vmul.f32 %v2446, %v2446
  %v2703 = vmul.f32 %v2447, %v2447
  %v2704 = vmul.f32 %v2448, %v2448
  %v2705 = vmul.f32 %v2449, %v2449
  %v2706 = vmul.f32 %v2450, %v2450
  %v2707 = vmul.f32 %v2451, %v2451
  %v2708 = vmul.f32 %v2452, %v2452
  %v2709 = vmul.f32 %v2453, %v2453
  %v2710 = vmul.f32 %v2454, %v2454
  %v2711 = vmul.f32 %v2455, %v2455
  %v2712 = vmul.f32 %v2456, %v2456
  %v2713 = vmul.f32 %v2457, %v2457
  %v2714 = vmul.f32 %v2458, %v2458
  %v2715 = vmul.f32 %v2459, %v2459
  %v2716 = vmul.f32 %v2460, %v2460
  %v2717 = vmul.f32 %v2461, %v2461
  %v2718 = vmul.f32 %v2462, %v2462
  %v2719 = vmul.f32 %v2463, %v2463
  %v2720 = vmul.f32 %v2464, %v2464
  %v2721 = vmul.f32 %v2465, %v2465
  %v2722 = vmul.f32 %v2466, %v2466
  %v2723 = vmul.f32 %v2467, %v2467
  %v2724 = vmul.f32 %v2468, %v2468
  %v2725 = vmul.f32 %v2469, %v2469
  %v2726 = vmul.f32 %v2470, %v2470
  %v2727 = vmul.f32 %v2471, %v2471
  %v2728 = vmul.f32 %v2472, %v2472
  %v2729 = vmul.f32 %v2473, %v2473
  %v2730 = vmul.f32 %v2474, %v2474
  %v2731 = vmul.f32 %v2475, %v2475
  %v2732 = vmul.f32 %v2476, %v2476
  %v2733 = vmul.f32 %v2477, %v2477
  %v2734 = vmul.f32 %v2478, %v2478
  %v2735 = vmul.f32 %v2479, %v2479
  %v2736 = vmul.f32 %v2480, %v2480
  %v2737 = vmul.f32 %v2481, %v2481
  %v2738 = vmul.f32 %v2482, %v2482
  %v2739 = vmul.f32 %v2483, %v2483
  %v2740 = vmul.f32 %v2484, %v2484
  %v2741 = vmul.f32 %v2485, %v2485
  %v2742 = vmul.f32 %v2486, %v2486
  %v2743 = vmul.f32 %v2487, %v2487
  %v2744 = vmul.f32 %v2488, %v2488
  %v2745 = vmul.f32 %v2489, %v2489
  %v2746 = vmul.f32 %v2490, %v2490
  %v2747 = vmul.f32 %v2491, %v2491
  %v2748 = vmul.f32 %v2492, %v2492
  %v2749 = vmul.f32 %v2493, %v2493
  %v2750 = vmul.f32 %v2494, %v2494
  %v2751 = vmul.f32 %v2495, %v2495
  %v2752 = vmul.f32 %v2496, %v2496
  %v2753 = vmul.f32 %v2497, %v2497
  %v2754 = vmul.f32 %v2498, %v2498
  %v2755 = vmul.f32 %v2499, %v2499
  %v2756 = vmul.f32 %v2500, %v2500
  %v2757 = vmul.f32 %v2501, %v2501
  %v2758 = vmul.f32 %v2502, %v2502
  %v2759 = vmul.f32 %v2503, %v2503
  %v2760 = vmul.f32 %v2504, %v2504
  %v2761 = vmul.f32 %v2505, %v2505
  %v2762 = vmul.f32 %v2506, %v2506
  %v2763 = vmul.f32 %v2507, %v2507
  %v2764 = vmul.f32 %v2508, %v2508
  %v2765 = vmul.f32 %v2509, %v2509
  %v2766 = vmul.f32 %v2510, %v2510
  %v2767 = vmul.f32 %v2511, %v2511
  %v2768 = vmul.f32 %v2512, %v2512
  %v2769 = vmul.f32 %v2513, %v2513
  %v2770 = vmul.f32 %v2514, %v2514
  %v2771 = vmul.f32 %v2515, %v2515
  %v2772 = vmul.f32 %v2516, %v2516
  %v2773 = vmul.f32 %v2517, %v2517
  %v2774 = vmul.f32 %v2518, %v2518
  %v2775 = vmul.f32 %v2519, %v2519
  %v2776 = vmul.f32 %v2520, %v2520
  %v2777 = vmul.f32 %v2521, %v2521
  %v2778 = vmul.f32 %v2522, %v2522
  %v2779 = vmul.f32 %v2523, %v2523
  %v2780 = vmul.f32 %v2524, %v2524
  %v2781 = vmul.f32 %v2525, %v2525
  %v2782 = vmul.f32 %v2526, %v2526
  %v2783 = vmul.f32 %v2527, %v2527
  %v2784 = vmul.f32 %v2528, %v2528
  %v2785 = vmul.f32 %v2529, %v2529
  %v2786 = vmul.f32 %v2530, %v2530
  %v2787 = vmul.f32 %v2531, %v2531
  %v2788 = vmul.f32 %v2532, %v2532
  %v2789 = vmul.f32 %v2533, %v2533
  %v2790 = vmul.f32 %v2534, %v2534
  %v2791 = vmul.f32 %v2535, %v2535
  %v2792 = vmul.f32 %v2536, %v2536
  %v2793 = vmul.f32 %v2537, %v2537
  %v2794 = vmul.f32 %v2538, %v2538
  %v2795 = vmul.f32 %v2539, %v2539
  %v2796 = vmul.f32 %v2540, %v2540
  %v2797 = vmul.f32 %v2541, %v2541
  %v2798 = vmul.f32 %v2542, %v2542
  %v2799 = vmul.f32 %v2543, %v2543
  %v2800 = vmul.f32 %v2544, %v2544
  %v2801 = vmul.f32 %v2545, %v2545
  %v2802 = vmul.f32 %v2546, %v2546
  %v2803 = vmul.f32 %v2547, %v2547
  %v2804 = vmul.f32 %v2548, %v2548
  %v2805 = vmul.f32 %v2549, %v2549
  %v2806 = vmul.f32 %v2550, %v2550
  %v2807 = vmul.f32 %v2551, %v2551
  %v2808 = vmul.f32 %v2552, %v2552
  %v2809 = vmul.f32 %v2553, %v2553
  %v2810 = vmul.f32 %v2554, %v2554
  %v2811 = vmul.f32 %v2555, %v2555
  %v2812 = vmul.f32 %v2556, %v2556
  %v2813 = vmul.f32 %v2557, %v2557
  %v2814 = vmul.f32 %v2558, %v2558
  %v2815 = vmul.f32 %v2559, %v2559
  %v2816 = vmul.f32 %v2560, %v2560
  %v2817 = vmul.f32 %v2561, %v2561
  %v2818 = vmul.f32 %v2562, %v2562
  %v2819 = vmul.f32 %v2563, %v2563
  %v2820 = vmul.f32 %v2564, %v2564
  %v2821 = vmul.f32 %v2565, %v2565
  %v2822 = vmul.f32 %v2566, %v2566
  %v2823 = vmul.f32 %v2567, %v2567
  %v2824 = vmul.f32 %v2568, %v2568
  %v2825 = vmul.f32 %v2569, %v2569
  %v2826 = vmul.f32 %v2570, %v2570
  %v2827 = vmul.f32 %v2571, %v2571
  %v2828 = vmul.f32 %v2572, %v2572
  %v2829 = vmul.f32 %v2573, %v2573
  %v2830 = vmul.f32 %v2574, %v2574
  %v2831 = vmul.f32 %v2575, %v2575
  %v2832 = vmul.f32 %v2576, %v2576
  %v2833 = vmul.f32 %v2577, %v2577
  %v2834 = vmul.f32 %v2578, %v2578
  %v2835 = vmul.f32 %v2579, %v2579
  %v2836 = vmul.f32 %v2580, %v2580
  %v2837 = vmul.f32 %v2581, %v2581
  %v2838 = vmul.f32 %v2582, %v2582
  %v2839 = vmul.f32 %v2583, %v2583
  %v2840 = vmul.f32 %v2584, %v2584
  %v2841 = vmul.f32 %v2585, %v2585
  %v2842 = vmul.f32 %v2586, %v2586
  %v2843 = vmul.f32 %v2587, %v2587
  %v2844 = vmul.f32 %v2588, %v2588
  %v2845 = vmul.f32 %v2589, %v2589
  %v2846 = vmul.f32 %v2590, %v2590
  %v2847 = vmul.f32 %v2591, %v2591
  %v2848 = vmul.f32 %v2592, %v2592
  %v2849 = vmul.f32 %v2593, %v2593
  %v2850 = vmul.f32 %v2594, %v2594
  %v2851 = vmul.f32 %v2595, %v2595
  %v2852 = vmul.f32 %v2596, %v2596
  %v2853 = vmul.f32 %v2597, %v2597
  %v2854 = vmul.f32 %v2598, %v2598
  %v2855 = vmul.f32 %v2599, %v2599
  %v2856 = vmul.f32 %v2600, %v2600
  %v2857 = vmul.f32 %v2601, %v2601
  %v2858 = vmul.f32 %v2602, %v2602
  %v2859 = vmul.f32 %v2603, %v2603
  %v2860 = vmul.f32 %v2604, %v2604
  %v2861 = vmul.f32 %v2605, %v2605
  %v2862 = vmul.f32 %v2606, %v2606
  %v2863 = vmul.f32 %v2607, %v2607
  %v2864 = vmul.f32 %v2608, %v2608
  %v2865 = vmul.f32 %v2609, %v2609
  %v2866 = vmul.f32 %v2610, %v2610
  %v2867 = vmul.f32 %v2611, %v2611
  %v2868 = vmul.f32 %v2612, %v2612
  %v2869 = vmul.f32 %v2613, %v2613
  %v2870 = vmul.f32 %v2614, %v2614
  %v2871 = vmul.f32 %v2615, %v2615
  %v2872 = vmul.f32 %v2616, %v2616
  %v2873 = vmul.f32 %v2617, %v2617
  %v2874 = vmul.f32 %v2618, %v2618
  %v2875 = vmul.f32 %v2619, %v2619
  %v2876 = vmul.f32 %v2620, %v2620
  %v2877 = vmul.f32 %v2621, %v2621
  %v2878 = vmul.f32 %v2622, %v2622
  %v2879 = vmul.f32 %v2623, %v2623
  %v2880 = vmul.f32 %v2624, %v2624
  %v2881 = vmul.f32 %v2625, %v2625
  %v2882 = vmul.f32 %v2626, %v2626
  %v2883 = vmul.f32 %v2627, %v2627
  %v2884 = vmul.f32 %v2628, %v2628
  %v2885 = vmul.f32 %v2629, %v2629
  %v2886 = vmul.f32 %v2630, %v2630
  %v2887 = vmul.f32 %v2631, %v2631
  %v2888 = vmul.f32 %v2632, %v2632
  %v2889 = vmul.f32 %v2633, %v2633
  %v2890 = vmul.f32 %v2634, %v2634
  %v2891 = vmul.f32 %v2635, %v2635
  %v2892 = vmul.f32 %v2636, %v2636
  %v2893 = vmul.f32 %v2637, %v2637
  %v2894 = vmul.f32 %v2638, %v2638
  %v2895 = vmul.f32 %v2639, %v2639
  %v2896 = vmul.f32 %v2640, %v2640
  %v2897 = vmul.f32 %v2641, %v2641
  %v2898 = vmul.f32 %v2642, %v2642
  %v2899 = vmul.f32 %v2643, %v2643
  %v2900 = vmul.f32 %v2644, %v2644
  %v2901 = vmul.f32 %v2645, %v2645
  %v2902 = vmul.f32 %v2646, %v2646
  %v2903 = vmul.f32 %v2647, %v2647
  %v2904 = vmul.f32 %v2648, %v2648
  %v2905 = vmul.f32 %v2649, %v2649
  %v2906 = vmul.f32 %v2650, %v2650
  %v2907 = vmul.f32 %v2651, %v2651
  %v2908 = vmul.f32 %v2652, %v2652
  %v2909 = vmul.f32 %v2653, %v2653
  %v2910 = vmul.f32 %v2654, %v2654
  %v2911 = vmul.f32 %v2655, %v2655
  %v2912 = vadd.f32 %v2656, %v2657
  %v2913 = vadd.f32 %v2912, %v2658
  %v2914 = vadd.f32 %v2913, %v2659
  %v2915 = vadd.f32 %v2914, %v2660
  %v2916 = vadd.f32 %v2915, %v2661
  %v2917 = vadd.f32 %v2916, %v2662
  %v2918 = vadd.f32 %v2917, %v2663
  %v2919 = vadd.f32 %v2918, %v2664
  %v2920 = vadd.f32 %v2919, %v2665
  %v2921 = vadd.f32 %v2920, %v2666
  %v2922 = vadd.f32 %v2921, %v2667
  %v2923 = vadd.f32 %v2922, %v2668
  %v2924 = vadd.f32 %v2923, %v2669
  %v2925 = vadd.f32 %v2924, %v2670
  %v2926 = vadd.f32 %v2925, %v2671
  %v2927 = vadd.f32 %v2926, %v2672
  %v2928 = vadd.f32 %v2927, %v2673
  %v2929 = vadd.f32 %v2928, %v2674
  %v2930 = vadd.f32 %v2929, %v2675
  %v2931 = vadd.f32 %v2930, %v2676
  %v2932 = vadd.f32 %v2931, %v2677
  %v2933 = vadd.f32 %v2932, %v2678
  %v2934 = vadd.f32 %v2933, %v2679
  %v2935 = vadd.f32 %v2934, %v2680
  %v2936 = vadd.f32 %v2935, %v2681
  %v2937 = vadd.f32 %v2936, %v2682
  %v2938 = vadd.f32 %v2937, %v2683
  %v2939 = vadd.f32 %v2938, %v2684
  %v2940 = vadd.f32 %v2939, %v2685
  %v2941 = vadd.f32 %v2940, %v2686
  %v2942 = vadd.f32 %v2941, %v2687
  %v2943 = vadd.f32 %v2942, %v2688
  %v2944 = vadd.f32 %v2943, %v2689
  %v2945 = vadd.f32 %v2944, %v2690
  %v2946 = vadd.f32 %v2945, %v2691
  %v2947 = vadd.f32 %v2946, %v2692
  %v2948 = vadd.f32 %v2947, %v2693
  %v2949 = vadd.f32 %v2948, %v2694
  %v2950 = vadd.f32 %v2949, %v2695
  %v2951 = vadd.f32 %v2950, %v2696
  %v2952 = vadd.f32 %v2951, %v2697
  %v2953 = vadd.f32 %v2952, %v2698
  %v2954 = vadd.f32 %v2953, %v2699
  %v2955 = vadd.f32 %v2954, %v2700
  %v2956 = vadd.f32 %v2955, %v2701
  %v2957 = vadd.f32 %v2956, %v2702
  %v2958 = vadd.f32 %v2957, %v2703
  %v2959 = vadd.f32 %v2958, %v2704
  %v2960 = vadd.f32 %v2959, %v2705
  %v2961 = vadd.f32 %v2960, %v2706
  %v2962 = vadd.f32 %v2961, %v2707
  %v2963 = vadd.f32 %v2962, %v2708
  %v2964 = vadd.f32 %v2963, %v2709
  %v2965 = vadd.f32 %v2964, %v2710
  %v2966 = vadd.f32 %v2965, %v2711
  %v2967 = vadd.f32 %v2966, %v2712
  %v2968 = vadd.f32 %v2967, %v2713
  %v2969 = vadd.f32 %v2968, %v2714
  %v2970 = vadd.f32 %v2969, %v2715
  %v2971 = vadd.f32 %v2970, %v2716
  %v2972 = vadd.f32 %v2971, %v2717
  %v2973 = vadd.f32 %v2972, %v2718
  %v2974 = vadd.f32 %v2973, %v2719
  %v2975 = vadd.f32 %v2974, %v2720
  %v2976 = vadd.f32 %v2975, %v2721
  %v2977 = vadd.f32 %v2976, %v2722
  %v2978 = vadd.f32 %v2977, %v2723
  %v2979 = vadd.f32 %v2978, %v2724
  %v2980 = vadd.f32 %v2979, %v2725
  %v2981 = vadd.f32 %v2980, %v2726
  %v2982 = vadd.f32 %v2981, %v2727
  %v2983 = vadd.f32 %v2982, %v2728
  %v2984 = vadd.f32 %v2983, %v2729
  %v2985 = vadd.f32 %v2984, %v2730
  %v2986 = vadd.f32 %v2985, %v2731
  %v2987 = vadd.f32 %v2986, %v2732
  %v2988 = vadd.f32 %v2987, %v2733
  %v2989 = vadd.f32 %v2988, %v2734
  %v2990 = vadd.f32 %v2989, %v2735
  %v2991 = vadd.f32 %v2990, %v2736
  %v2992 = vadd.f32 %v2991, %v2737
  %v2993 = vadd.f32 %v2992, %v2738
  %v2994 = vadd.f32 %v2993, %v2739
  %v2995 = vadd.f32 %v2994, %v2740
  %v2996 = vadd.f32 %v2995, %v2741
  %v2997 = vadd.f32 %v2996, %v2742
  %v2998 = vadd.f32 %v2997, %v2743
  %v2999 = vadd.f32 %v2998, %v2744
  %v3000 = vadd.f32 %v2999, %v2745
  %v3001 = vadd.f32 %v3000, %v2746
  %v3002 = vadd.f32 %v3001, %v2747
  %v3003 = vadd.f32 %v3002, %v2748
  %v3004 = vadd.f32 %v3003, %v2749
  %v3005 = vadd.f32 %v3004, %v2750
  %v3006 = vadd.f32 %v3005, %v2751
  %v3007 = vadd.f32 %v3006, %v2752
  %v3008 = vadd.f32 %v3007, %v2753
  %v3009 = vadd.f32 %v3008, %v2754
  %v3010 = vadd.f32 %v3009, %v2755
  %v3011 = vadd.f32 %v3010, %v2756
  %v3012 = vadd.f32 %v3011, %v2757
  %v3013 = vadd.f32 %v3012, %v2758
  %v3014 = vadd.f32 %v3013, %v2759
  %v3015 = vadd.f32 %v3014, %v2760
  %v3016 = vadd.f32 %v3015, %v2761
  %v3017 = vadd.f32 %v3016, %v2762
  %v3018 = vadd.f32 %v3017, %v2763
  %v3019 = vadd.f32 %v3018, %v2764
  %v3020 = vadd.f32 %v3019, %v2765
  %v3021 = vadd.f32 %v3020, %v2766
  %v3022 = vadd.f32 %v3021, %v2767
  %v3023 = vadd.f32 %v3022, %v2768
  %v3024 = vadd.f32 %v3023, %v2769
  %v3025 = vadd.f32 %v3024, %v2770
  %v3026 = vadd.f32 %v3025, %v2771
  %v3027 = vadd.f32 %v3026, %v2772
  %v3028 = vadd.f32 %v3027, %v2773
  %v3029 = vadd.f32 %v3028, %v2774
  %v3030 = vadd.f32 %v3029, %v2775
  %v3031 = vadd.f32 %v3030, %v2776
  %v3032 = vadd.f32 %v3031, %v2777
  %v3033 = vadd.f32 %v3032, %v2778
  %v3034 = vadd.f32 %v3033, %v2779
  %v3035 = vadd.f32 %v3034, %v2780
  %v3036 = vadd.f32 %v3035, %v2781
  %v3037 = vadd.f32 %v3036, %v2782
  %v3038 = vadd.f32 %v3037, %v2783
  %v3039 = vadd.f32 %v3038, %v2784
  %v3040 = vadd.f32 %v3039, %v2785
  %v3041 = vadd.f32 %v3040, %v2786
  %v3042 = vadd.f32 %v3041, %v2787
  %v3043 = vadd.f32 %v3042, %v2788
  %v3044 = vadd.f32 %v3043, %v2789
  %v3045 = vadd.f32 %v3044, %v2790
  %v3046 = vadd.f32 %v3045, %v2791
  %v3047 = vadd.f32 %v3046, %v2792
  %v3048 = vadd.f32 %v3047, %v2793
  %v3049 = vadd.f32 %v3048, %v2794
  %v3050 = vadd.f32 %v3049, %v2795
  %v3051 = vadd.f32 %v3050, %v2796
  %v3052 = vadd.f32 %v3051, %v2797
  %v3053 = vadd.f32 %v3052, %v2798
  %v3054 = vadd.f32 %v3053, %v2799
  %v3055 = vadd.f32 %v3054, %v2800
  %v3056 = vadd.f32 %v3055, %v2801
  %v3057 = vadd.f32 %v3056, %v2802
  %v3058 = vadd.f32 %v3057, %v2803
  %v3059 = vadd.f32 %v3058, %v2804
  %v3060 = vadd.f32 %v3059, %v2805
  %v3061 = vadd.f32 %v3060, %v2806
  %v3062 = vadd.f32 %v3061, %v2807
  %v3063 = vadd.f32 %v3062, %v2808
  %v3064 = vadd.f32 %v3063, %v2809
  %v3065 = vadd.f32 %v3064, %v2810
  %v3066 = vadd.f32 %v3065, %v2811
  %v3067 = vadd.f32 %v3066, %v2812
  %v3068 = vadd.f32 %v3067, %v2813
  %v3069 = vadd.f32 %v3068, %v2814
  %v3070 = vadd.f32 %v3069, %v2815
  %v3071 = vadd.f32 %v3070, %v2816
  %v3072 = vadd.f32 %v3071, %v2817
  %v3073 = vadd.f32 %v3072, %v2818
  %v3074 = vadd.f32 %v3073, %v2819
  %v3075 = vadd.f32 %v3074, %v2820
  %v3076 = vadd.f32 %v3075, %v2821
  %v3077 = vadd.f32 %v3076, %v2822
  %v3078 = vadd.f32 %v3077, %v2823
  %v3079 = vadd.f32 %v3078, %v2824
  %v3080 = vadd.f32 %v3079, %v2825
  %v3081 = vadd.f32 %v3080, %v2826
  %v3082 = vadd.f32 %v3081, %v2827
  %v3083 = vadd.f32 %v3082, %v2828
  %v3084 = vadd.f32 %v3083, %v2829
  %v3085 = vadd.f32 %v3084, %v2830
  %v3086 = vadd.f32 %v3085, %v2831
  %v3087 = vadd.f32 %v3086, %v2832
  %v3088 = vadd.f32 %v3087, %v2833
  %v3089 = vadd.f32 %v3088, %v2834
  %v3090 = vadd.f32 %v3089, %v2835
  %v3091 = vadd.f32 %v3090, %v2836
  %v3092 = vadd.f32 %v3091, %v2837
  %v3093 = vadd.f32 %v3092, %v2838
  %v3094 = vadd.f32 %v3093, %v2839
  %v3095 = vadd.f32 %v3094, %v2840
  %v3096 = vadd.f32 %v3095, %v2841
  %v3097 = vadd.f32 %v3096, %v2842
  %v3098 = vadd.f32 %v3097, %v2843
  %v3099 = vadd.f32 %v3098, %v2844
  %v3100 = vadd.f32 %v3099, %v2845
  %v3101 = vadd.f32 %v3100, %v2846
  %v3102 = vadd.f32 %v3101, %v2847
  %v3103 = vadd.f32 %v3102, %v2848
  %v3104 = vadd.f32 %v3103, %v2849
  %v3105 = vadd.f32 %v3104, %v2850
  %v3106 = vadd.f32 %v3105, %v2851
  %v3107 = vadd.f32 %v3106, %v2852
  %v3108 = vadd.f32 %v3107, %v2853
  %v3109 = vadd.f32 %v3108, %v2854
  %v3110 = vadd.f32 %v3109, %v2855
  %v3111 = vadd.f32 %v3110, %v2856
  %v3112 = vadd.f32 %v3111, %v2857
  %v3113 = vadd.f32 %v3112, %v2858
  %v3114 = vadd.f32 %v3113, %v2859
  %v3115 = vadd.f32 %v3114, %v2860
  %v3116 = vadd.f32 %v3115, %v2861
  %v3117 = vadd.f32 %v3116, %v2862
  %v3118 = vadd.f32 %v3117, %v2863
  %v3119 = vadd.f32 %v3118, %v2864
  %v3120 = vadd.f32 %v3119, %v2865
  %v3121 = vadd.f32 %v3120, %v2866
  %v3122 = vadd.f32 %v3121, %v2867
  %v3123 = vadd.f32 %v3122, %v2868
  %v3124 = vadd.f32 %v3123, %v2869
  %v3125 = vadd.f32 %v3124, %v2870
  %v3126 = vadd.f32 %v3125, %v2871
  %v3127 = vadd.f32 %v3126, %v2872
  %v3128 = vadd.f32 %v3127, %v2873
  %v3129 = vadd.f32 %v3128, %v2874
  %v3130 = vadd.f32 %v3129, %v2875
  %v3131 = vadd.f32 %v3130, %v2876
  %v3132 = vadd.f32 %v3131, %v2877
  %v3133 = vadd.f32 %v3132, %v2878
  %v3134 = vadd.f32 %v3133, %v2879
  %v3135 = vadd.f32 %v3134, %v2880
  %v3136 = vadd.f32 %v3135, %v2881
  %v3137 = vadd.f32 %v3136, %v2882
  %v3138 = vadd.f32 %v3137, %v2883
  %v3139 = vadd.f32 %v3138, %v2884
  %v3140 = vadd.f32 %v3139, %v2885
  %v3141 = vadd.f32 %v3140, %v2886
  %v3142 = vadd.f32 %v3141, %v2887
  %v3143 = vadd.f32 %v3142, %v2888
  %v3144 = vadd.f32 %v3143, %v2889
  %v3145 = vadd.f32 %v3144, %v2890
  %v3146 = vadd.f32 %v3145, %v2891
  %v3147 = vadd.f32 %v3146, %v2892
  %v3148 = vadd.f32 %v3147, %v2893
  %v3149 = vadd.f32 %v3148, %v2894
  %v3150 = vadd.f32 %v3149, %v2895
  %v3151 = vadd.f32 %v3150, %v2896
  %v3152 = vadd.f32 %v3151, %v2897
  %v3153 = vadd.f32 %v3152, %v2898
  %v3154 = vadd.f32 %v3153, %v2899
  %v3155 = vadd.f32 %v3154, %v2900
  %v3156 = vadd.f32 %v3155, %v2901
  %v3157 = vadd.f32 %v3156, %v2902
  %v3158 = vadd.f32 %v3157, %v2903
  %v3159 = vadd.f32 %v3158, %v2904
  %v3160 = vadd.f32 %v3159, %v2905
  %v3161 = vadd.f32 %v3160, %v2906
  %v3162 = vadd.f32 %v3161, %v2907
  %v3163 = vadd.f32 %v3162, %v2908
  %v3164 = vadd.f32 %v3163, %v2909
  %v3165 = vadd.f32 %v3164, %v2910
  %v3166 = vadd.f32 %v3165, %v2911
  %v3167 = vrot.slane %v3166, 4
  %v3168 = vadd.f32 %v3166, %v3167
  %v3169 = vrot.slane %v3168, 2
  %v3170 = vadd.f32 %v3168, %v3169
  %v3171 = vrot.slane %v3170, 1
  %v3172 = vadd.f32 %v3170, %v3171
  %v3173 = vmul.f32 %v3172, %v2398
  %v3174 = vadd.f32 %v3173, 1e-05
  %v3175 = vrsqrt.pop %v3174
  %v3176 = vmul.f32 %v3175, %v3174
  %v3177 = vmul.f32 %v3176, %v3175
  %v3178 = vmul.f32 0.5, %v3177
  %v3179 = vsub.f32 1.5, %v3178
  %v3180 = vmul.f32 %v3175, %v3179
  %vm3181 = vweird.f32 %v3174
  %vm3182 = vweird.f32 %v3175
  %vm3183 = vmor %vm3181, %vm3182
  %v3184 = vsel %vm3183, %v3175, %v3180
  %v3185 = vmul.f32 %v2400, %v3184
  %v3186 = vmul.f32 %v2401, %v3184
  %v3187 = vmul.f32 %v2402, %v3184
  %v3188 = vmul.f32 %v2403, %v3184
  %v3189 = vmul.f32 %v2404, %v3184
  %v3190 = vmul.f32 %v2405, %v3184
  %v3191 = vmul.f32 %v2406, %v3184
  %v3192 = vmul.f32 %v2407, %v3184
  %v3193 = vmul.f32 %v2408, %v3184
  %v3194 = vmul.f32 %v2409, %v3184
  %v3195 = vmul.f32 %v2410, %v3184
  %v3196 = vmul.f32 %v2411, %v3184
  %v3197 = vmul.f32 %v2412, %v3184
  %v3198 = vmul.f32 %v2413, %v3184
  %v3199 = vmul.f32 %v2414, %v3184
  %v3200 = vmul.f32 %v2415, %v3184
  %v3201 = vmul.f32 %v2416, %v3184
  %v3202 = vmul.f32 %v2417, %v3184
  %v3203 = vmul.f32 %v2418, %v3184
  %v3204 = vmul.f32 %v2419, %v3184
  %v3205 = vmul.f32 %v2420, %v3184
  %v3206 = vmul.f32 %v2421, %v3184
  %v3207 = vmul.f32 %v2422, %v3184
  %v3208 = vmul.f32 %v2423, %v3184
  %v3209 = vmul.f32 %v2424, %v3184
  %v3210 = vmul.f32 %v2425, %v3184
  %v3211 = vmul.f32 %v2426, %v3184
  %v3212 = vmul.f32 %v2427, %v3184
  %v3213 = vmul.f32 %v2428, %v3184
  %v3214 = vmul.f32 %v2429, %v3184
  %v3215 = vmul.f32 %v2430, %v3184
  %v3216 = vmul.f32 %v2431, %v3184
  %v3217 = vmul.f32 %v2432, %v3184
  %v3218 = vmul.f32 %v2433, %v3184
  %v3219 = vmul.f32 %v2434, %v3184
  %v3220 = vmul.f32 %v2435, %v3184
  %v3221 = vmul.f32 %v2436, %v3184
  %v3222 = vmul.f32 %v2437, %v3184
  %v3223 = vmul.f32 %v2438, %v3184
  %v3224 = vmul.f32 %v2439, %v3184
  %v3225 = vmul.f32 %v2440, %v3184
  %v3226 = vmul.f32 %v2441, %v3184
  %v3227 = vmul.f32 %v2442, %v3184
  %v3228 = vmul.f32 %v2443, %v3184
  %v3229 = vmul.f32 %v2444, %v3184
  %v3230 = vmul.f32 %v2445, %v3184
  %v3231 = vmul.f32 %v2446, %v3184
  %v3232 = vmul.f32 %v2447, %v3184
  %v3233 = vmul.f32 %v2448, %v3184
  %v3234 = vmul.f32 %v2449, %v3184
  %v3235 = vmul.f32 %v2450, %v3184
  %v3236 = vmul.f32 %v2451, %v3184
  %v3237 = vmul.f32 %v2452, %v3184
  %v3238 = vmul.f32 %v2453, %v3184
  %v3239 = vmul.f32 %v2454, %v3184
  %v3240 = vmul.f32 %v2455, %v3184
  %v3241 = vmul.f32 %v2456, %v3184
  %v3242 = vmul.f32 %v2457, %v3184
  %v3243 = vmul.f32 %v2458, %v3184
  %v3244 = vmul.f32 %v2459, %v3184
  %v3245 = vmul.f32 %v2460, %v3184
  %v3246 = vmul.f32 %v2461, %v3184
  %v3247 = vmul.f32 %v2462, %v3184
  %v3248 = vmul.f32 %v2463, %v3184
  %v3249 = vmul.f32 %v2464, %v3184
  %v3250 = vmul.f32 %v2465, %v3184
  %v3251 = vmul.f32 %v2466, %v3184
  %v3252 = vmul.f32 %v2467, %v3184
  %v3253 = vmul.f32 %v2468, %v3184
  %v3254 = vmul.f32 %v2469, %v3184
  %v3255 = vmul.f32 %v2470, %v3184
  %v3256 = vmul.f32 %v2471, %v3184
  %v3257 = vmul.f32 %v2472, %v3184
  %v3258 = vmul.f32 %v2473, %v3184
  %v3259 = vmul.f32 %v2474, %v3184
  %v3260 = vmul.f32 %v2475, %v3184
  %v3261 = vmul.f32 %v2476, %v3184
  %v3262 = vmul.f32 %v2477, %v3184
  %v3263 = vmul.f32 %v2478, %v3184
  %v3264 = vmul.f32 %v2479, %v3184
  %v3265 = vmul.f32 %v2480, %v3184
  %v3266 = vmul.f32 %v2481, %v3184
  %v3267 = vmul.f32 %v2482, %v3184
  %v3268 = vmul.f32 %v2483, %v3184
  %v3269 = vmul.f32 %v2484, %v3184
  %v3270 = vmul.f32 %v2485, %v3184
  %v3271 = vmul.f32 %v2486, %v3184
  %v3272 = vmul.f32 %v2487, %v3184
  %v3273 = vmul.f32 %v2488, %v3184
  %v3274 = vmul.f32 %v2489, %v3184
  %v3275 = vmul.f32 %v2490, %v3184
  %v3276 = vmul.f32 %v2491, %v3184
  %v3277 = vmul.f32 %v2492, %v3184
  %v3278 = vmul.f32 %v2493, %v3184
  %v3279 = vmul.f32 %v2494, %v3184
  %v3280 = vmul.f32 %v2495, %v3184
  %v3281 = vmul.f32 %v2496, %v3184
  %v3282 = vmul.f32 %v2497, %v3184
  %v3283 = vmul.f32 %v2498, %v3184
  %v3284 = vmul.f32 %v2499, %v3184
  %v3285 = vmul.f32 %v2500, %v3184
  %v3286 = vmul.f32 %v2501, %v3184
  %v3287 = vmul.f32 %v2502, %v3184
  %v3288 = vmul.f32 %v2503, %v3184
  %v3289 = vmul.f32 %v2504, %v3184
  %v3290 = vmul.f32 %v2505, %v3184
  %v3291 = vmul.f32 %v2506, %v3184
  %v3292 = vmul.f32 %v2507, %v3184
  %v3293 = vmul.f32 %v2508, %v3184
  %v3294 = vmul.f32 %v2509, %v3184
  %v3295 = vmul.f32 %v2510, %v3184
  %v3296 = vmul.f32 %v2511, %v3184
  %v3297 = vmul.f32 %v2512, %v3184
  %v3298 = vmul.f32 %v2513, %v3184
  %v3299 = vmul.f32 %v2514, %v3184
  %v3300 = vmul.f32 %v2515, %v3184
  %v3301 = vmul.f32 %v2516, %v3184
  %v3302 = vmul.f32 %v2517, %v3184
  %v3303 = vmul.f32 %v2518, %v3184
  %v3304 = vmul.f32 %v2519, %v3184
  %v3305 = vmul.f32 %v2520, %v3184
  %v3306 = vmul.f32 %v2521, %v3184
  %v3307 = vmul.f32 %v2522, %v3184
  %v3308 = vmul.f32 %v2523, %v3184
  %v3309 = vmul.f32 %v2524, %v3184
  %v3310 = vmul.f32 %v2525, %v3184
  %v3311 = vmul.f32 %v2526, %v3184
  %v3312 = vmul.f32 %v2527, %v3184
  %v3313 = vmul.f32 %v2528, %v3184
  %v3314 = vmul.f32 %v2529, %v3184
  %v3315 = vmul.f32 %v2530, %v3184
  %v3316 = vmul.f32 %v2531, %v3184
  %v3317 = vmul.f32 %v2532, %v3184
  %v3318 = vmul.f32 %v2533, %v3184
  %v3319 = vmul.f32 %v2534, %v3184
  %v3320 = vmul.f32 %v2535, %v3184
  %v3321 = vmul.f32 %v2536, %v3184
  %v3322 = vmul.f32 %v2537, %v3184
  %v3323 = vmul.f32 %v2538, %v3184
  %v3324 = vmul.f32 %v2539, %v3184
  %v3325 = vmul.f32 %v2540, %v3184
  %v3326 = vmul.f32 %v2541, %v3184
  %v3327 = vmul.f32 %v2542, %v3184
  %v3328 = vmul.f32 %v2543, %v3184
  %v3329 = vmul.f32 %v2544, %v3184
  %v3330 = vmul.f32 %v2545, %v3184
  %v3331 = vmul.f32 %v2546, %v3184
  %v3332 = vmul.f32 %v2547, %v3184
  %v3333 = vmul.f32 %v2548, %v3184
  %v3334 = vmul.f32 %v2549, %v3184
  %v3335 = vmul.f32 %v2550, %v3184
  %v3336 = vmul.f32 %v2551, %v3184
  %v3337 = vmul.f32 %v2552, %v3184
  %v3338 = vmul.f32 %v2553, %v3184
  %v3339 = vmul.f32 %v2554, %v3184
  %v3340 = vmul.f32 %v2555, %v3184
  %v3341 = vmul.f32 %v2556, %v3184
  %v3342 = vmul.f32 %v2557, %v3184
  %v3343 = vmul.f32 %v2558, %v3184
  %v3344 = vmul.f32 %v2559, %v3184
  %v3345 = vmul.f32 %v2560, %v3184
  %v3346 = vmul.f32 %v2561, %v3184
  %v3347 = vmul.f32 %v2562, %v3184
  %v3348 = vmul.f32 %v2563, %v3184
  %v3349 = vmul.f32 %v2564, %v3184
  %v3350 = vmul.f32 %v2565, %v3184
  %v3351 = vmul.f32 %v2566, %v3184
  %v3352 = vmul.f32 %v2567, %v3184
  %v3353 = vmul.f32 %v2568, %v3184
  %v3354 = vmul.f32 %v2569, %v3184
  %v3355 = vmul.f32 %v2570, %v3184
  %v3356 = vmul.f32 %v2571, %v3184
  %v3357 = vmul.f32 %v2572, %v3184
  %v3358 = vmul.f32 %v2573, %v3184
  %v3359 = vmul.f32 %v2574, %v3184
  %v3360 = vmul.f32 %v2575, %v3184
  %v3361 = vmul.f32 %v2576, %v3184
  %v3362 = vmul.f32 %v2577, %v3184
  %v3363 = vmul.f32 %v2578, %v3184
  %v3364 = vmul.f32 %v2579, %v3184
  %v3365 = vmul.f32 %v2580, %v3184
  %v3366 = vmul.f32 %v2581, %v3184
  %v3367 = vmul.f32 %v2582, %v3184
  %v3368 = vmul.f32 %v2583, %v3184
  %v3369 = vmul.f32 %v2584, %v3184
  %v3370 = vmul.f32 %v2585, %v3184
  %v3371 = vmul.f32 %v2586, %v3184
  %v3372 = vmul.f32 %v2587, %v3184
  %v3373 = vmul.f32 %v2588, %v3184
  %v3374 = vmul.f32 %v2589, %v3184
  %v3375 = vmul.f32 %v2590, %v3184
  %v3376 = vmul.f32 %v2591, %v3184
  %v3377 = vmul.f32 %v2592, %v3184
  %v3378 = vmul.f32 %v2593, %v3184
  %v3379 = vmul.f32 %v2594, %v3184
  %v3380 = vmul.f32 %v2595, %v3184
  %v3381 = vmul.f32 %v2596, %v3184
  %v3382 = vmul.f32 %v2597, %v3184
  %v3383 = vmul.f32 %v2598, %v3184
  %v3384 = vmul.f32 %v2599, %v3184
  %v3385 = vmul.f32 %v2600, %v3184
  %v3386 = vmul.f32 %v2601, %v3184
  %v3387 = vmul.f32 %v2602, %v3184
  %v3388 = vmul.f32 %v2603, %v3184
  %v3389 = vmul.f32 %v2604, %v3184
  %v3390 = vmul.f32 %v2605, %v3184
  %v3391 = vmul.f32 %v2606, %v3184
  %v3392 = vmul.f32 %v2607, %v3184
  %v3393 = vmul.f32 %v2608, %v3184
  %v3394 = vmul.f32 %v2609, %v3184
  %v3395 = vmul.f32 %v2610, %v3184
  %v3396 = vmul.f32 %v2611, %v3184
  %v3397 = vmul.f32 %v2612, %v3184
  %v3398 = vmul.f32 %v2613, %v3184
  %v3399 = vmul.f32 %v2614, %v3184
  %v3400 = vmul.f32 %v2615, %v3184
  %v3401 = vmul.f32 %v2616, %v3184
  %v3402 = vmul.f32 %v2617, %v3184
  %v3403 = vmul.f32 %v2618, %v3184
  %v3404 = vmul.f32 %v2619, %v3184
  %v3405 = vmul.f32 %v2620, %v3184
  %v3406 = vmul.f32 %v2621, %v3184
  %v3407 = vmul.f32 %v2622, %v3184
  %v3408 = vmul.f32 %v2623, %v3184
  %v3409 = vmul.f32 %v2624, %v3184
  %v3410 = vmul.f32 %v2625, %v3184
  %v3411 = vmul.f32 %v2626, %v3184
  %v3412 = vmul.f32 %v2627, %v3184
  %v3413 = vmul.f32 %v2628, %v3184
  %v3414 = vmul.f32 %v2629, %v3184
  %v3415 = vmul.f32 %v2630, %v3184
  %v3416 = vmul.f32 %v2631, %v3184
  %v3417 = vmul.f32 %v2632, %v3184
  %v3418 = vmul.f32 %v2633, %v3184
  %v3419 = vmul.f32 %v2634, %v3184
  %v3420 = vmul.f32 %v2635, %v3184
  %v3421 = vmul.f32 %v2636, %v3184
  %v3422 = vmul.f32 %v2637, %v3184
  %v3423 = vmul.f32 %v2638, %v3184
  %v3424 = vmul.f32 %v2639, %v3184
  %v3425 = vmul.f32 %v2640, %v3184
  %v3426 = vmul.f32 %v2641, %v3184
  %v3427 = vmul.f32 %v2642, %v3184
  %v3428 = vmul.f32 %v2643, %v3184
  %v3429 = vmul.f32 %v2644, %v3184
  %v3430 = vmul.f32 %v2645, %v3184
  %v3431 = vmul.f32 %v2646, %v3184
  %v3432 = vmul.f32 %v2647, %v3184
  %v3433 = vmul.f32 %v2648, %v3184
  %v3434 = vmul.f32 %v2649, %v3184
  %v3435 = vmul.f32 %v2650, %v3184
  %v3436 = vmul.f32 %v2651, %v3184
  %v3437 = vmul.f32 %v2652, %v3184
  %v3438 = vmul.f32 %v2653, %v3184
  %v3439 = vmul.f32 %v2654, %v3184
  %v3440 = vmul.f32 %v2655, %v3184
  %v3441 = vld [vmem:[%s2] sm:$0x1]
  %v3443 = vperm.slane %v3441, 0
  %v3445 = vmul.f32 %v3185, %v3443
  %v3446 = vmul.f32 %v3186, %v3443
  %v3447 = vmul.f32 %v3187, %v3443
  %v3448 = vmul.f32 %v3188, %v3443
  %v3449 = vmul.f32 %v3189, %v3443
  %v3450 = vmul.f32 %v3190, %v3443
  %v3451 = vmul.f32 %v3191, %v3443
  %v3452 = vmul.f32 %v3192, %v3443
  %v3453 = vmul.f32 %v3193, %v3443
  %v3454 = vmul.f32 %v3194, %v3443
  %v3455 = vmul.f32 %v3195, %v3443
  %v3456 = vmul.f32 %v3196, %v3443
  %v3457 = vmul.f32 %v3197, %v3443
  %v3458 = vmul.f32 %v3198, %v3443
  %v3459 = vmul.f32 %v3199, %v3443
  %v3460 = vmul.f32 %v3200, %v3443
  %v3461 = vmul.f32 %v3201, %v3443
  %v3462 = vmul.f32 %v3202, %v3443
  %v3463 = vmul.f32 %v3203, %v3443
  %v3464 = vmul.f32 %v3204, %v3443
  %v3465 = vmul.f32 %v3205, %v3443
  %v3466 = vmul.f32 %v3206, %v3443
  %v3467 = vmul.f32 %v3207, %v3443
  %v3468 = vmul.f32 %v3208, %v3443
  %v3469 = vmul.f32 %v3209, %v3443
  %v3470 = vmul.f32 %v3210, %v3443
  %v3471 = vmul.f32 %v3211, %v3443
  %v3472 = vmul.f32 %v3212, %v3443
  %v3473 = vmul.f32 %v3213, %v3443
  %v3474 = vmul.f32 %v3214, %v3443
  %v3475 = vmul.f32 %v3215, %v3443
  %v3476 = vmul.f32 %v3216, %v3443
  %v3477 = vmul.f32 %v3217, %v3443
  %v3478 = vmul.f32 %v3218, %v3443
  %v3479 = vmul.f32 %v3219, %v3443
  %v3480 = vmul.f32 %v3220, %v3443
  %v3481 = vmul.f32 %v3221, %v3443
  %v3482 = vmul.f32 %v3222, %v3443
  %v3483 = vmul.f32 %v3223, %v3443
  %v3484 = vmul.f32 %v3224, %v3443
  %v3485 = vmul.f32 %v3225, %v3443
  %v3486 = vmul.f32 %v3226, %v3443
  %v3487 = vmul.f32 %v3227, %v3443
  %v3488 = vmul.f32 %v3228, %v3443
  %v3489 = vmul.f32 %v3229, %v3443
  %v3490 = vmul.f32 %v3230, %v3443
  %v3491 = vmul.f32 %v3231, %v3443
  %v3492 = vmul.f32 %v3232, %v3443
  %v3493 = vmul.f32 %v3233, %v3443
  %v3494 = vmul.f32 %v3234, %v3443
  %v3495 = vmul.f32 %v3235, %v3443
  %v3496 = vmul.f32 %v3236, %v3443
  %v3497 = vmul.f32 %v3237, %v3443
  %v3498 = vmul.f32 %v3238, %v3443
  %v3499 = vmul.f32 %v3239, %v3443
  %v3500 = vmul.f32 %v3240, %v3443
  %v3501 = vmul.f32 %v3241, %v3443
  %v3502 = vmul.f32 %v3242, %v3443
  %v3503 = vmul.f32 %v3243, %v3443
  %v3504 = vmul.f32 %v3244, %v3443
  %v3505 = vmul.f32 %v3245, %v3443
  %v3506 = vmul.f32 %v3246, %v3443
  %v3507 = vmul.f32 %v3247, %v3443
  %v3508 = vmul.f32 %v3248, %v3443
  %v3509 = vmul.f32 %v3249, %v3443
  %v3510 = vmul.f32 %v3250, %v3443
  %v3511 = vmul.f32 %v3251, %v3443
  %v3512 = vmul.f32 %v3252, %v3443
  %v3513 = vmul.f32 %v3253, %v3443
  %v3514 = vmul.f32 %v3254, %v3443
  %v3515 = vmul.f32 %v3255, %v3443
  %v3516 = vmul.f32 %v3256, %v3443
  %v3517 = vmul.f32 %v3257, %v3443
  %v3518 = vmul.f32 %v3258, %v3443
  %v3519 = vmul.f32 %v3259, %v3443
  %v3520 = vmul.f32 %v3260, %v3443
  %v3521 = vmul.f32 %v3261, %v3443
  %v3522 = vmul.f32 %v3262, %v3443
  %v3523 = vmul.f32 %v3263, %v3443
  %v3524 = vmul.f32 %v3264, %v3443
  %v3525 = vmul.f32 %v3265, %v3443
  %v3526 = vmul.f32 %v3266, %v3443
  %v3527 = vmul.f32 %v3267, %v3443
  %v3528 = vmul.f32 %v3268, %v3443
  %v3529 = vmul.f32 %v3269, %v3443
  %v3530 = vmul.f32 %v3270, %v3443
  %v3531 = vmul.f32 %v3271, %v3443
  %v3532 = vmul.f32 %v3272, %v3443
  %v3533 = vmul.f32 %v3273, %v3443
  %v3534 = vmul.f32 %v3274, %v3443
  %v3535 = vmul.f32 %v3275, %v3443
  %v3536 = vmul.f32 %v3276, %v3443
  %v3537 = vmul.f32 %v3277, %v3443
  %v3538 = vmul.f32 %v3278, %v3443
  %v3539 = vmul.f32 %v3279, %v3443
  %v3540 = vmul.f32 %v3280, %v3443
  %v3541 = vmul.f32 %v3281, %v3443
  %v3542 = vmul.f32 %v3282, %v3443
  %v3543 = vmul.f32 %v3283, %v3443
  %v3544 = vmul.f32 %v3284, %v3443
  %v3545 = vmul.f32 %v3285, %v3443
  %v3546 = vmul.f32 %v3286, %v3443
  %v3547 = vmul.f32 %v3287, %v3443
  %v3548 = vmul.f32 %v3288, %v3443
  %v3549 = vmul.f32 %v3289, %v3443
  %v3550 = vmul.f32 %v3290, %v3443
  %v3551 = vmul.f32 %v3291, %v3443
  %v3552 = vmul.f32 %v3292, %v3443
  %v3553 = vmul.f32 %v3293, %v3443
  %v3554 = vmul.f32 %v3294, %v3443
  %v3555 = vmul.f32 %v3295, %v3443
  %v3556 = vmul.f32 %v3296, %v3443
  %v3557 = vmul.f32 %v3297, %v3443
  %v3558 = vmul.f32 %v3298, %v3443
  %v3559 = vmul.f32 %v3299, %v3443
  %v3560 = vmul.f32 %v3300, %v3443
  %v3561 = vmul.f32 %v3301, %v3443
  %v3562 = vmul.f32 %v3302, %v3443
  %v3563 = vmul.f32 %v3303, %v3443
  %v3564 = vmul.f32 %v3304, %v3443
  %v3565 = vmul.f32 %v3305, %v3443
  %v3566 = vmul.f32 %v3306, %v3443
  %v3567 = vmul.f32 %v3307, %v3443
  %v3568 = vmul.f32 %v3308, %v3443
  %v3569 = vmul.f32 %v3309, %v3443
  %v3570 = vmul.f32 %v3310, %v3443
  %v3571 = vmul.f32 %v3311, %v3443
  %v3572 = vmul.f32 %v3312, %v3443
  %v3573 = vmul.f32 %v3313, %v3443
  %v3574 = vmul.f32 %v3314, %v3443
  %v3575 = vmul.f32 %v3315, %v3443
  %v3576 = vmul.f32 %v3316, %v3443
  %v3577 = vmul.f32 %v3317, %v3443
  %v3578 = vmul.f32 %v3318, %v3443
  %v3579 = vmul.f32 %v3319, %v3443
  %v3580 = vmul.f32 %v3320, %v3443
  %v3581 = vmul.f32 %v3321, %v3443
  %v3582 = vmul.f32 %v3322, %v3443
  %v3583 = vmul.f32 %v3323, %v3443
  %v3584 = vmul.f32 %v3324, %v3443
  %v3585 = vmul.f32 %v3325, %v3443
  %v3586 = vmul.f32 %v3326, %v3443
  %v3587 = vmul.f32 %v3327, %v3443
  %v3588 = vmul.f32 %v3328, %v3443
  %v3589 = vmul.f32 %v3329, %v3443
  %v3590 = vmul.f32 %v3330, %v3443
  %v3591 = vmul.f32 %v3331, %v3443
  %v3592 = vmul.f32 %v3332, %v3443
  %v3593 = vmul.f32 %v3333, %v3443
  %v3594 = vmul.f32 %v3334, %v3443
  %v3595 = vmul.f32 %v3335, %v3443
  %v3596 = vmul.f32 %v3336, %v3443
  %v3597 = vmul.f32 %v3337, %v3443
  %v3598 = vmul.f32 %v3338, %v3443
  %v3599 = vmul.f32 %v3339, %v3443
  %v3600 = vmul.f32 %v3340, %v3443
  %v3601 = vmul.f32 %v3341, %v3443
  %v3602 = vmul.f32 %v3342, %v3443
  %v3603 = vmul.f32 %v3343, %v3443
  %v3604 = vmul.f32 %v3344, %v3443
  %v3605 = vmul.f32 %v3345, %v3443
  %v3606 = vmul.f32 %v3346, %v3443
  %v3607 = vmul.f32 %v3347, %v3443
  %v3608 = vmul.f32 %v3348, %v3443
  %v3609 = vmul.f32 %v3349, %v3443
  %v3610 = vmul.f32 %v3350, %v3443
  %v3611 = vmul.f32 %v3351, %v3443
  %v3612 = vmul.f32 %v3352, %v3443
  %v3613 = vmul.f32 %v3353, %v3443
  %v3614 = vmul.f32 %v3354, %v3443
  %v3615 = vmul.f32 %v3355, %v3443
  %v3616 = vmul.f32 %v3356, %v3443
  %v3617 = vmul.f32 %v3357, %v3443
  %v3618 = vmul.f32 %v3358, %v3443
  %v3619 = vmul.f32 %v3359, %v3443
  %v3620 = vmul.f32 %v3360, %v3443
  %v3621 = vmul.f32 %v3361, %v3443
  %v3622 = vmul.f32 %v3362, %v3443
  %v3623 = vmul.f32 %v3363, %v3443
  %v3624 = vmul.f32 %v3364, %v3443
  %v3625 = vmul.f32 %v3365, %v3443
  %v3626 = vmul.f32 %v3366, %v3443
  %v3627 = vmul.f32 %v3367, %v3443
  %v3628 = vmul.f32 %v3368, %v3443
  %v3629 = vmul.f32 %v3369, %v3443
  %v3630 = vmul.f32 %v3370, %v3443
  %v3631 = vmul.f32 %v3371, %v3443
  %v3632 = vmul.f32 %v3372, %v3443
  %v3633 = vmul.f32 %v3373, %v3443
  %v3634 = vmul.f32 %v3374, %v3443
  %v3635 = vmul.f32 %v3375, %v3443
  %v3636 = vmul.f32 %v3376, %v3443
  %v3637 = vmul.f32 %v3377, %v3443
  %v3638 = vmul.f32 %v3378, %v3443
  %v3639 = vmul.f32 %v3379, %v3443
  %v3640 = vmul.f32 %v3380, %v3443
  %v3641 = vmul.f32 %v3381, %v3443
  %v3642 = vmul.f32 %v3382, %v3443
  %v3643 = vmul.f32 %v3383, %v3443
  %v3644 = vmul.f32 %v3384, %v3443
  %v3645 = vmul.f32 %v3385, %v3443
  %v3646 = vmul.f32 %v3386, %v3443
  %v3647 = vmul.f32 %v3387, %v3443
  %v3648 = vmul.f32 %v3388, %v3443
  %v3649 = vmul.f32 %v3389, %v3443
  %v3650 = vmul.f32 %v3390, %v3443
  %v3651 = vmul.f32 %v3391, %v3443
  %v3652 = vmul.f32 %v3392, %v3443
  %v3653 = vmul.f32 %v3393, %v3443
  %v3654 = vmul.f32 %v3394, %v3443
  %v3655 = vmul.f32 %v3395, %v3443
  %v3656 = vmul.f32 %v3396, %v3443
  %v3657 = vmul.f32 %v3397, %v3443
  %v3658 = vmul.f32 %v3398, %v3443
  %v3659 = vmul.f32 %v3399, %v3443
  %v3660 = vmul.f32 %v3400, %v3443
  %v3661 = vmul.f32 %v3401, %v3443
  %v3662 = vmul.f32 %v3402, %v3443
  %v3663 = vmul.f32 %v3403, %v3443
  %v3664 = vmul.f32 %v3404, %v3443
  %v3665 = vmul.f32 %v3405, %v3443
  %v3666 = vmul.f32 %v3406, %v3443
  %v3667 = vmul.f32 %v3407, %v3443
  %v3668 = vmul.f32 %v3408, %v3443
  %v3669 = vmul.f32 %v3409, %v3443
  %v3670 = vmul.f32 %v3410, %v3443
  %v3671 = vmul.f32 %v3411, %v3443
  %v3672 = vmul.f32 %v3412, %v3443
  %v3673 = vmul.f32 %v3413, %v3443
  %v3674 = vmul.f32 %v3414, %v3443
  %v3675 = vmul.f32 %v3415, %v3443
  %v3676 = vmul.f32 %v3416, %v3443
  %v3677 = vmul.f32 %v3417, %v3443
  %v3678 = vmul.f32 %v3418, %v3443
  %v3679 = vmul.f32 %v3419, %v3443
  %v3680 = vmul.f32 %v3420, %v3443
  %v3681 = vmul.f32 %v3421, %v3443
  %v3682 = vmul.f32 %v3422, %v3443
  %v3683 = vmul.f32 %v3423, %v3443
  %v3684 = vmul.f32 %v3424, %v3443
  %v3685 = vmul.f32 %v3425, %v3443
  %v3686 = vmul.f32 %v3426, %v3443
  %v3687 = vmul.f32 %v3427, %v3443
  %v3688 = vmul.f32 %v3428, %v3443
  %v3689 = vmul.f32 %v3429, %v3443
  %v3690 = vmul.f32 %v3430, %v3443
  %v3691 = vmul.f32 %v3431, %v3443
  %v3692 = vmul.f32 %v3432, %v3443
  %v3693 = vmul.f32 %v3433, %v3443
  %v3694 = vmul.f32 %v3434, %v3443
  %v3695 = vmul.f32 %v3435, %v3443
  %v3696 = vmul.f32 %v3436, %v3443
  %v3697 = vmul.f32 %v3437, %v3443
  %v3698 = vmul.f32 %v3438, %v3443
  %v3699 = vmul.f32 %v3439, %v3443
  %v3700 = vmul.f32 %v3440, %v3443
  %v3701 = vld [vmem:[%s3] sm:$0x1]
  %v3703 = vperm.slane %v3701, 0
  %v3705 = vadd.f32 %v3445, %v3703
  %v3706 = vadd.f32 %v3446, %v3703
  %v3707 = vadd.f32 %v3447, %v3703
  %v3708 = vadd.f32 %v3448, %v3703
  %v3709 = vadd.f32 %v3449, %v3703
  %v3710 = vadd.f32 %v3450, %v3703
  %v3711 = vadd.f32 %v3451, %v3703
  %v3712 = vadd.f32 %v3452, %v3703
  %v3713 = vadd.f32 %v3453, %v3703
  %v3714 = vadd.f32 %v3454, %v3703
  %v3715 = vadd.f32 %v3455, %v3703
  %v3716 = vadd.f32 %v3456, %v3703
  %v3717 = vadd.f32 %v3457, %v3703
  %v3718 = vadd.f32 %v3458, %v3703
  %v3719 = vadd.f32 %v3459, %v3703
  %v3720 = vadd.f32 %v3460, %v3703
  %v3721 = vadd.f32 %v3461, %v3703
  %v3722 = vadd.f32 %v3462, %v3703
  %v3723 = vadd.f32 %v3463, %v3703
  %v3724 = vadd.f32 %v3464, %v3703
  %v3725 = vadd.f32 %v3465, %v3703
  %v3726 = vadd.f32 %v3466, %v3703
  %v3727 = vadd.f32 %v3467, %v3703
  %v3728 = vadd.f32 %v3468, %v3703
  %v3729 = vadd.f32 %v3469, %v3703
  %v3730 = vadd.f32 %v3470, %v3703
  %v3731 = vadd.f32 %v3471, %v3703
  %v3732 = vadd.f32 %v3472, %v3703
  %v3733 = vadd.f32 %v3473, %v3703
  %v3734 = vadd.f32 %v3474, %v3703
  %v3735 = vadd.f32 %v3475, %v3703
  %v3736 = vadd.f32 %v3476, %v3703
  %v3737 = vadd.f32 %v3477, %v3703
  %v3738 = vadd.f32 %v3478, %v3703
  %v3739 = vadd.f32 %v3479, %v3703
  %v3740 = vadd.f32 %v3480, %v3703
  %v3741 = vadd.f32 %v3481, %v3703
  %v3742 = vadd.f32 %v3482, %v3703
  %v3743 = vadd.f32 %v3483, %v3703
  %v3744 = vadd.f32 %v3484, %v3703
  %v3745 = vadd.f32 %v3485, %v3703
  %v3746 = vadd.f32 %v3486, %v3703
  %v3747 = vadd.f32 %v3487, %v3703
  %v3748 = vadd.f32 %v3488, %v3703
  %v3749 = vadd.f32 %v3489, %v3703
  %v3750 = vadd.f32 %v3490, %v3703
  %v3751 = vadd.f32 %v3491, %v3703
  %v3752 = vadd.f32 %v3492, %v3703
  %v3753 = vadd.f32 %v3493, %v3703
  %v3754 = vadd.f32 %v3494, %v3703
  %v3755 = vadd.f32 %v3495, %v3703
  %v3756 = vadd.f32 %v3496, %v3703
  %v3757 = vadd.f32 %v3497, %v3703
  %v3758 = vadd.f32 %v3498, %v3703
  %v3759 = vadd.f32 %v3499, %v3703
  %v3760 = vadd.f32 %v3500, %v3703
  %v3761 = vadd.f32 %v3501, %v3703
  %v3762 = vadd.f32 %v3502, %v3703
  %v3763 = vadd.f32 %v3503, %v3703
  %v3764 = vadd.f32 %v3504, %v3703
  %v3765 = vadd.f32 %v3505, %v3703
  %v3766 = vadd.f32 %v3506, %v3703
  %v3767 = vadd.f32 %v3507, %v3703
  %v3768 = vadd.f32 %v3508, %v3703
  %v3769 = vadd.f32 %v3509, %v3703
  %v3770 = vadd.f32 %v3510, %v3703
  %v3771 = vadd.f32 %v3511, %v3703
  %v3772 = vadd.f32 %v3512, %v3703
  %v3773 = vadd.f32 %v3513, %v3703
  %v3774 = vadd.f32 %v3514, %v3703
  %v3775 = vadd.f32 %v3515, %v3703
  %v3776 = vadd.f32 %v3516, %v3703
  %v3777 = vadd.f32 %v3517, %v3703
  %v3778 = vadd.f32 %v3518, %v3703
  %v3779 = vadd.f32 %v3519, %v3703
  %v3780 = vadd.f32 %v3520, %v3703
  %v3781 = vadd.f32 %v3521, %v3703
  %v3782 = vadd.f32 %v3522, %v3703
  %v3783 = vadd.f32 %v3523, %v3703
  %v3784 = vadd.f32 %v3524, %v3703
  %v3785 = vadd.f32 %v3525, %v3703
  %v3786 = vadd.f32 %v3526, %v3703
  %v3787 = vadd.f32 %v3527, %v3703
  %v3788 = vadd.f32 %v3528, %v3703
  %v3789 = vadd.f32 %v3529, %v3703
  %v3790 = vadd.f32 %v3530, %v3703
  %v3791 = vadd.f32 %v3531, %v3703
  %v3792 = vadd.f32 %v3532, %v3703
  %v3793 = vadd.f32 %v3533, %v3703
  %v3794 = vadd.f32 %v3534, %v3703
  %v3795 = vadd.f32 %v3535, %v3703
  %v3796 = vadd.f32 %v3536, %v3703
  %v3797 = vadd.f32 %v3537, %v3703
  %v3798 = vadd.f32 %v3538, %v3703
  %v3799 = vadd.f32 %v3539, %v3703
  %v3800 = vadd.f32 %v3540, %v3703
  %v3801 = vadd.f32 %v3541, %v3703
  %v3802 = vadd.f32 %v3542, %v3703
  %v3803 = vadd.f32 %v3543, %v3703
  %v3804 = vadd.f32 %v3544, %v3703
  %v3805 = vadd.f32 %v3545, %v3703
  %v3806 = vadd.f32 %v3546, %v3703
  %v3807 = vadd.f32 %v3547, %v3703
  %v3808 = vadd.f32 %v3548, %v3703
  %v3809 = vadd.f32 %v3549, %v3703
  %v3810 = vadd.f32 %v3550, %v3703
  %v3811 = vadd.f32 %v3551, %v3703
  %v3812 = vadd.f32 %v3552, %v3703
  %v3813 = vadd.f32 %v3553, %v3703
  %v3814 = vadd.f32 %v3554, %v3703
  %v3815 = vadd.f32 %v3555, %v3703
  %v3816 = vadd.f32 %v3556, %v3703
  %v3817 = vadd.f32 %v3557, %v3703
  %v3818 = vadd.f32 %v3558, %v3703
  %v3819 = vadd.f32 %v3559, %v3703
  %v3820 = vadd.f32 %v3560, %v3703
  %v3821 = vadd.f32 %v3561, %v3703
  %v3822 = vadd.f32 %v3562, %v3703
  %v3823 = vadd.f32 %v3563, %v3703
  %v3824 = vadd.f32 %v3564, %v3703
  %v3825 = vadd.f32 %v3565, %v3703
  %v3826 = vadd.f32 %v3566, %v3703
  %v3827 = vadd.f32 %v3567, %v3703
  %v3828 = vadd.f32 %v3568, %v3703
  %v3829 = vadd.f32 %v3569, %v3703
  %v3830 = vadd.f32 %v3570, %v3703
  %v3831 = vadd.f32 %v3571, %v3703
  %v3832 = vadd.f32 %v3572, %v3703
  %v3833 = vadd.f32 %v3573, %v3703
  %v3834 = vadd.f32 %v3574, %v3703
  %v3835 = vadd.f32 %v3575, %v3703
  %v3836 = vadd.f32 %v3576, %v3703
  %v3837 = vadd.f32 %v3577, %v3703
  %v3838 = vadd.f32 %v3578, %v3703
  %v3839 = vadd.f32 %v3579, %v3703
  %v3840 = vadd.f32 %v3580, %v3703
  %v3841 = vadd.f32 %v3581, %v3703
  %v3842 = vadd.f32 %v3582, %v3703
  %v3843 = vadd.f32 %v3583, %v3703
  %v3844 = vadd.f32 %v3584, %v3703
  %v3845 = vadd.f32 %v3585, %v3703
  %v3846 = vadd.f32 %v3586, %v3703
  %v3847 = vadd.f32 %v3587, %v3703
  %v3848 = vadd.f32 %v3588, %v3703
  %v3849 = vadd.f32 %v3589, %v3703
  %v3850 = vadd.f32 %v3590, %v3703
  %v3851 = vadd.f32 %v3591, %v3703
  %v3852 = vadd.f32 %v3592, %v3703
  %v3853 = vadd.f32 %v3593, %v3703
  %v3854 = vadd.f32 %v3594, %v3703
  %v3855 = vadd.f32 %v3595, %v3703
  %v3856 = vadd.f32 %v3596, %v3703
  %v3857 = vadd.f32 %v3597, %v3703
  %v3858 = vadd.f32 %v3598, %v3703
  %v3859 = vadd.f32 %v3599, %v3703
  %v3860 = vadd.f32 %v3600, %v3703
  %v3861 = vadd.f32 %v3601, %v3703
  %v3862 = vadd.f32 %v3602, %v3703
  %v3863 = vadd.f32 %v3603, %v3703
  %v3864 = vadd.f32 %v3604, %v3703
  %v3865 = vadd.f32 %v3605, %v3703
  %v3866 = vadd.f32 %v3606, %v3703
  %v3867 = vadd.f32 %v3607, %v3703
  %v3868 = vadd.f32 %v3608, %v3703
  %v3869 = vadd.f32 %v3609, %v3703
  %v3870 = vadd.f32 %v3610, %v3703
  %v3871 = vadd.f32 %v3611, %v3703
  %v3872 = vadd.f32 %v3612, %v3703
  %v3873 = vadd.f32 %v3613, %v3703
  %v3874 = vadd.f32 %v3614, %v3703
  %v3875 = vadd.f32 %v3615, %v3703
  %v3876 = vadd.f32 %v3616, %v3703
  %v3877 = vadd.f32 %v3617, %v3703
  %v3878 = vadd.f32 %v3618, %v3703
  %v3879 = vadd.f32 %v3619, %v3703
  %v3880 = vadd.f32 %v3620, %v3703
  %v3881 = vadd.f32 %v3621, %v3703
  %v3882 = vadd.f32 %v3622, %v3703
  %v3883 = vadd.f32 %v3623, %v3703
  %v3884 = vadd.f32 %v3624, %v3703
  %v3885 = vadd.f32 %v3625, %v3703
  %v3886 = vadd.f32 %v3626, %v3703
  %v3887 = vadd.f32 %v3627, %v3703
  %v3888 = vadd.f32 %v3628, %v3703
  %v3889 = vadd.f32 %v3629, %v3703
  %v3890 = vadd.f32 %v3630, %v3703
  %v3891 = vadd.f32 %v3631, %v3703
  %v3892 = vadd.f32 %v3632, %v3703
  %v3893 = vadd.f32 %v3633, %v3703
  %v3894 = vadd.f32 %v3634, %v3703
  %v3895 = vadd.f32 %v3635, %v3703
  %v3896 = vadd.f32 %v3636, %v3703
  %v3897 = vadd.f32 %v3637, %v3703
  %v3898 = vadd.f32 %v3638, %v3703
  %v3899 = vadd.f32 %v3639, %v3703
  %v3900 = vadd.f32 %v3640, %v3703
  %v3901 = vadd.f32 %v3641, %v3703
  %v3902 = vadd.f32 %v3642, %v3703
  %v3903 = vadd.f32 %v3643, %v3703
  %v3904 = vadd.f32 %v3644, %v3703
  %v3905 = vadd.f32 %v3645, %v3703
  %v3906 = vadd.f32 %v3646, %v3703
  %v3907 = vadd.f32 %v3647, %v3703
  %v3908 = vadd.f32 %v3648, %v3703
  %v3909 = vadd.f32 %v3649, %v3703
  %v3910 = vadd.f32 %v3650, %v3703
  %v3911 = vadd.f32 %v3651, %v3703
  %v3912 = vadd.f32 %v3652, %v3703
  %v3913 = vadd.f32 %v3653, %v3703
  %v3914 = vadd.f32 %v3654, %v3703
  %v3915 = vadd.f32 %v3655, %v3703
  %v3916 = vadd.f32 %v3656, %v3703
  %v3917 = vadd.f32 %v3657, %v3703
  %v3918 = vadd.f32 %v3658, %v3703
  %v3919 = vadd.f32 %v3659, %v3703
  %v3920 = vadd.f32 %v3660, %v3703
  %v3921 = vadd.f32 %v3661, %v3703
  %v3922 = vadd.f32 %v3662, %v3703
  %v3923 = vadd.f32 %v3663, %v3703
  %v3924 = vadd.f32 %v3664, %v3703
  %v3925 = vadd.f32 %v3665, %v3703
  %v3926 = vadd.f32 %v3666, %v3703
  %v3927 = vadd.f32 %v3667, %v3703
  %v3928 = vadd.f32 %v3668, %v3703
  %v3929 = vadd.f32 %v3669, %v3703
  %v3930 = vadd.f32 %v3670, %v3703
  %v3931 = vadd.f32 %v3671, %v3703
  %v3932 = vadd.f32 %v3672, %v3703
  %v3933 = vadd.f32 %v3673, %v3703
  %v3934 = vadd.f32 %v3674, %v3703
  %v3935 = vadd.f32 %v3675, %v3703
  %v3936 = vadd.f32 %v3676, %v3703
  %v3937 = vadd.f32 %v3677, %v3703
  %v3938 = vadd.f32 %v3678, %v3703
  %v3939 = vadd.f32 %v3679, %v3703
  %v3940 = vadd.f32 %v3680, %v3703
  %v3941 = vadd.f32 %v3681, %v3703
  %v3942 = vadd.f32 %v3682, %v3703
  %v3943 = vadd.f32 %v3683, %v3703
  %v3944 = vadd.f32 %v3684, %v3703
  %v3945 = vadd.f32 %v3685, %v3703
  %v3946 = vadd.f32 %v3686, %v3703
  %v3947 = vadd.f32 %v3687, %v3703
  %v3948 = vadd.f32 %v3688, %v3703
  %v3949 = vadd.f32 %v3689, %v3703
  %v3950 = vadd.f32 %v3690, %v3703
  %v3951 = vadd.f32 %v3691, %v3703
  %v3952 = vadd.f32 %v3692, %v3703
  %v3953 = vadd.f32 %v3693, %v3703
  %v3954 = vadd.f32 %v3694, %v3703
  %v3955 = vadd.f32 %v3695, %v3703
  %v3956 = vadd.f32 %v3696, %v3703
  %v3957 = vadd.f32 %v3697, %v3703
  %v3958 = vadd.f32 %v3698, %v3703
  %v3959 = vadd.f32 %v3699, %v3703
  %v3960 = vadd.f32 %v3700, %v3703
  %vm3961 = vcmp.gt.f32.partialorder %v3705, 0.0
  %vm3962 = vcmp.gt.f32.partialorder %v3706, 0.0
  %vm3963 = vcmp.gt.f32.partialorder %v3707, 0.0
  %vm3964 = vcmp.gt.f32.partialorder %v3708, 0.0
  %vm3965 = vcmp.gt.f32.partialorder %v3709, 0.0
  %vm3966 = vcmp.gt.f32.partialorder %v3710, 0.0
  %vm3967 = vcmp.gt.f32.partialorder %v3711, 0.0
  %vm3968 = vcmp.gt.f32.partialorder %v3712, 0.0
  %vm3969 = vcmp.gt.f32.partialorder %v3713, 0.0
  %vm3970 = vcmp.gt.f32.partialorder %v3714, 0.0
  %vm3971 = vcmp.gt.f32.partialorder %v3715, 0.0
  %vm3972 = vcmp.gt.f32.partialorder %v3716, 0.0
  %vm3973 = vcmp.gt.f32.partialorder %v3717, 0.0
  %vm3974 = vcmp.gt.f32.partialorder %v3718, 0.0
  %vm3975 = vcmp.gt.f32.partialorder %v3719, 0.0
  %vm3976 = vcmp.gt.f32.partialorder %v3720, 0.0
  %vm3977 = vcmp.gt.f32.partialorder %v3721, 0.0
  %vm3978 = vcmp.gt.f32.partialorder %v3722, 0.0
  %vm3979 = vcmp.gt.f32.partialorder %v3723, 0.0
  %vm3980 = vcmp.gt.f32.partialorder %v3724, 0.0
  %vm3981 = vcmp.gt.f32.partialorder %v3725, 0.0
  %vm3982 = vcmp.gt.f32.partialorder %v3726, 0.0
  %vm3983 = vcmp.gt.f32.partialorder %v3727, 0.0
  %vm3984 = vcmp.gt.f32.partialorder %v3728, 0.0
  %vm3985 = vcmp.gt.f32.partialorder %v3729, 0.0
  %vm3986 = vcmp.gt.f32.partialorder %v3730, 0.0
  %vm3987 = vcmp.gt.f32.partialorder %v3731, 0.0
  %vm3988 = vcmp.gt.f32.partialorder %v3732, 0.0
  %vm3989 = vcmp.gt.f32.partialorder %v3733, 0.0
  %vm3990 = vcmp.gt.f32.partialorder %v3734, 0.0
  %vm3991 = vcmp.gt.f32.partialorder %v3735, 0.0
  %vm3992 = vcmp.gt.f32.partialorder %v3736, 0.0
  %vm3993 = vcmp.gt.f32.partialorder %v3737, 0.0
  %vm3994 = vcmp.gt.f32.partialorder %v3738, 0.0
  %vm3995 = vcmp.gt.f32.partialorder %v3739, 0.0
  %vm3996 = vcmp.gt.f32.partialorder %v3740, 0.0
  %vm3997 = vcmp.gt.f32.partialorder %v3741, 0.0
  %vm3998 = vcmp.gt.f32.partialorder %v3742, 0.0
  %vm3999 = vcmp.gt.f32.partialorder %v3743, 0.0
  %vm4000 = vcmp.gt.f32.partialorder %v3744, 0.0
  %vm4001 = vcmp.gt.f32.partialorder %v3745, 0.0
  %vm4002 = vcmp.gt.f32.partialorder %v3746, 0.0
  %vm4003 = vcmp.gt.f32.partialorder %v3747, 0.0
  %vm4004 = vcmp.gt.f32.partialorder %v3748, 0.0
  %vm4005 = vcmp.gt.f32.partialorder %v3749, 0.0
  %vm4006 = vcmp.gt.f32.partialorder %v3750, 0.0
  %vm4007 = vcmp.gt.f32.partialorder %v3751, 0.0
  %vm4008 = vcmp.gt.f32.partialorder %v3752, 0.0
  %vm4009 = vcmp.gt.f32.partialorder %v3753, 0.0
  %vm4010 = vcmp.gt.f32.partialorder %v3754, 0.0
  %vm4011 = vcmp.gt.f32.partialorder %v3755, 0.0
  %vm4012 = vcmp.gt.f32.partialorder %v3756, 0.0
  %vm4013 = vcmp.gt.f32.partialorder %v3757, 0.0
  %vm4014 = vcmp.gt.f32.partialorder %v3758, 0.0
  %vm4015 = vcmp.gt.f32.partialorder %v3759, 0.0
  %vm4016 = vcmp.gt.f32.partialorder %v3760, 0.0
  %vm4017 = vcmp.gt.f32.partialorder %v3761, 0.0
  %vm4018 = vcmp.gt.f32.partialorder %v3762, 0.0
  %vm4019 = vcmp.gt.f32.partialorder %v3763, 0.0
  %vm4020 = vcmp.gt.f32.partialorder %v3764, 0.0
  %vm4021 = vcmp.gt.f32.partialorder %v3765, 0.0
  %vm4022 = vcmp.gt.f32.partialorder %v3766, 0.0
  %vm4023 = vcmp.gt.f32.partialorder %v3767, 0.0
  %vm4024 = vcmp.gt.f32.partialorder %v3768, 0.0
  %vm4025 = vcmp.gt.f32.partialorder %v3769, 0.0
  %vm4026 = vcmp.gt.f32.partialorder %v3770, 0.0
  %vm4027 = vcmp.gt.f32.partialorder %v3771, 0.0
  %vm4028 = vcmp.gt.f32.partialorder %v3772, 0.0
  %vm4029 = vcmp.gt.f32.partialorder %v3773, 0.0
  %vm4030 = vcmp.gt.f32.partialorder %v3774, 0.0
  %vm4031 = vcmp.gt.f32.partialorder %v3775, 0.0
  %vm4032 = vcmp.gt.f32.partialorder %v3776, 0.0
  %vm4033 = vcmp.gt.f32.partialorder %v3777, 0.0
  %vm4034 = vcmp.gt.f32.partialorder %v3778, 0.0
  %vm4035 = vcmp.gt.f32.partialorder %v3779, 0.0
  %vm4036 = vcmp.gt.f32.partialorder %v3780, 0.0
  %vm4037 = vcmp.gt.f32.partialorder %v3781, 0.0
  %vm4038 = vcmp.gt.f32.partialorder %v3782, 0.0
  %vm4039 = vcmp.gt.f32.partialorder %v3783, 0.0
  %vm4040 = vcmp.gt.f32.partialorder %v3784, 0.0
  %vm4041 = vcmp.gt.f32.partialorder %v3785, 0.0
  %vm4042 = vcmp.gt.f32.partialorder %v3786, 0.0
  %vm4043 = vcmp.gt.f32.partialorder %v3787, 0.0
  %vm4044 = vcmp.gt.f32.partialorder %v3788, 0.0
  %vm4045 = vcmp.gt.f32.partialorder %v3789, 0.0
  %vm4046 = vcmp.gt.f32.partialorder %v3790, 0.0
  %vm4047 = vcmp.gt.f32.partialorder %v3791, 0.0
  %vm4048 = vcmp.gt.f32.partialorder %v3792, 0.0
  %vm4049 = vcmp.gt.f32.partialorder %v3793, 0.0
  %vm4050 = vcmp.gt.f32.partialorder %v3794, 0.0
  %vm4051 = vcmp.gt.f32.partialorder %v3795, 0.0
  %vm4052 = vcmp.gt.f32.partialorder %v3796, 0.0
  %vm4053 = vcmp.gt.f32.partialorder %v3797, 0.0
  %vm4054 = vcmp.gt.f32.partialorder %v3798, 0.0
  %vm4055 = vcmp.gt.f32.partialorder %v3799, 0.0
  %vm4056 = vcmp.gt.f32.partialorder %v3800, 0.0
  %vm4057 = vcmp.gt.f32.partialorder %v3801, 0.0
  %vm4058 = vcmp.gt.f32.partialorder %v3802, 0.0
  %vm4059 = vcmp.gt.f32.partialorder %v3803, 0.0
  %vm4060 = vcmp.gt.f32.partialorder %v3804, 0.0
  %vm4061 = vcmp.gt.f32.partialorder %v3805, 0.0
  %vm4062 = vcmp.gt.f32.partialorder %v3806, 0.0
  %vm4063 = vcmp.gt.f32.partialorder %v3807, 0.0
  %vm4064 = vcmp.gt.f32.partialorder %v3808, 0.0
  %vm4065 = vcmp.gt.f32.partialorder %v3809, 0.0
  %vm4066 = vcmp.gt.f32.partialorder %v3810, 0.0
  %vm4067 = vcmp.gt.f32.partialorder %v3811, 0.0
  %vm4068 = vcmp.gt.f32.partialorder %v3812, 0.0
  %vm4069 = vcmp.gt.f32.partialorder %v3813, 0.0
  %vm4070 = vcmp.gt.f32.partialorder %v3814, 0.0
  %vm4071 = vcmp.gt.f32.partialorder %v3815, 0.0
  %vm4072 = vcmp.gt.f32.partialorder %v3816, 0.0
  %vm4073 = vcmp.gt.f32.partialorder %v3817, 0.0
  %vm4074 = vcmp.gt.f32.partialorder %v3818, 0.0
  %vm4075 = vcmp.gt.f32.partialorder %v3819, 0.0
  %vm4076 = vcmp.gt.f32.partialorder %v3820, 0.0
  %vm4077 = vcmp.gt.f32.partialorder %v3821, 0.0
  %vm4078 = vcmp.gt.f32.partialorder %v3822, 0.0
  %vm4079 = vcmp.gt.f32.partialorder %v3823, 0.0
  %vm4080 = vcmp.gt.f32.partialorder %v3824, 0.0
  %vm4081 = vcmp.gt.f32.partialorder %v3825, 0.0
  %vm4082 = vcmp.gt.f32.partialorder %v3826, 0.0
  %vm4083 = vcmp.gt.f32.partialorder %v3827, 0.0
  %vm4084 = vcmp.gt.f32.partialorder %v3828, 0.0
  %vm4085 = vcmp.gt.f32.partialorder %v3829, 0.0
  %vm4086 = vcmp.gt.f32.partialorder %v3830, 0.0
  %vm4087 = vcmp.gt.f32.partialorder %v3831, 0.0
  %vm4088 = vcmp.gt.f32.partialorder %v3832, 0.0
  %vm4089 = vcmp.gt.f32.partialorder %v3833, 0.0
  %vm4090 = vcmp.gt.f32.partialorder %v3834, 0.0
  %vm4091 = vcmp.gt.f32.partialorder %v3835, 0.0
  %vm4092 = vcmp.gt.f32.partialorder %v3836, 0.0
  %vm4093 = vcmp.gt.f32.partialorder %v3837, 0.0
  %vm4094 = vcmp.gt.f32.partialorder %v3838, 0.0
  %vm4095 = vcmp.gt.f32.partialorder %v3839, 0.0
  %vm4096 = vcmp.gt.f32.partialorder %v3840, 0.0
  %vm4097 = vcmp.gt.f32.partialorder %v3841, 0.0
  %vm4098 = vcmp.gt.f32.partialorder %v3842, 0.0
  %vm4099 = vcmp.gt.f32.partialorder %v3843, 0.0
  %vm4100 = vcmp.gt.f32.partialorder %v3844, 0.0
  %vm4101 = vcmp.gt.f32.partialorder %v3845, 0.0
  %vm4102 = vcmp.gt.f32.partialorder %v3846, 0.0
  %vm4103 = vcmp.gt.f32.partialorder %v3847, 0.0
  %vm4104 = vcmp.gt.f32.partialorder %v3848, 0.0
  %vm4105 = vcmp.gt.f32.partialorder %v3849, 0.0
  %vm4106 = vcmp.gt.f32.partialorder %v3850, 0.0
  %vm4107 = vcmp.gt.f32.partialorder %v3851, 0.0
  %vm4108 = vcmp.gt.f32.partialorder %v3852, 0.0
  %vm4109 = vcmp.gt.f32.partialorder %v3853, 0.0
  %vm4110 = vcmp.gt.f32.partialorder %v3854, 0.0
  %vm4111 = vcmp.gt.f32.partialorder %v3855, 0.0
  %vm4112 = vcmp.gt.f32.partialorder %v3856, 0.0
  %vm4113 = vcmp.gt.f32.partialorder %v3857, 0.0
  %vm4114 = vcmp.gt.f32.partialorder %v3858, 0.0
  %vm4115 = vcmp.gt.f32.partialorder %v3859, 0.0
  %vm4116 = vcmp.gt.f32.partialorder %v3860, 0.0
  %vm4117 = vcmp.gt.f32.partialorder %v3861, 0.0
  %vm4118 = vcmp.gt.f32.partialorder %v3862, 0.0
  %vm4119 = vcmp.gt.f32.partialorder %v3863, 0.0
  %vm4120 = vcmp.gt.f32.partialorder %v3864, 0.0
  %vm4121 = vcmp.gt.f32.partialorder %v3865, 0.0
  %vm4122 = vcmp.gt.f32.partialorder %v3866, 0.0
  %vm4123 = vcmp.gt.f32.partialorder %v3867, 0.0
  %vm4124 = vcmp.gt.f32.partialorder %v3868, 0.0
  %vm4125 = vcmp.gt.f32.partialorder %v3869, 0.0
  %vm4126 = vcmp.gt.f32.partialorder %v3870, 0.0
  %vm4127 = vcmp.gt.f32.partialorder %v3871, 0.0
  %vm4128 = vcmp.gt.f32.partialorder %v3872, 0.0
  %vm4129 = vcmp.gt.f32.partialorder %v3873, 0.0
  %vm4130 = vcmp.gt.f32.partialorder %v3874, 0.0
  %vm4131 = vcmp.gt.f32.partialorder %v3875, 0.0
  %vm4132 = vcmp.gt.f32.partialorder %v3876, 0.0
  %vm4133 = vcmp.gt.f32.partialorder %v3877, 0.0
  %vm4134 = vcmp.gt.f32.partialorder %v3878, 0.0
  %vm4135 = vcmp.gt.f32.partialorder %v3879, 0.0
  %vm4136 = vcmp.gt.f32.partialorder %v3880, 0.0
  %vm4137 = vcmp.gt.f32.partialorder %v3881, 0.0
  %vm4138 = vcmp.gt.f32.partialorder %v3882, 0.0
  %vm4139 = vcmp.gt.f32.partialorder %v3883, 0.0
  %vm4140 = vcmp.gt.f32.partialorder %v3884, 0.0
  %vm4141 = vcmp.gt.f32.partialorder %v3885, 0.0
  %vm4142 = vcmp.gt.f32.partialorder %v3886, 0.0
  %vm4143 = vcmp.gt.f32.partialorder %v3887, 0.0
  %vm4144 = vcmp.gt.f32.partialorder %v3888, 0.0
  %vm4145 = vcmp.gt.f32.partialorder %v3889, 0.0
  %vm4146 = vcmp.gt.f32.partialorder %v3890, 0.0
  %vm4147 = vcmp.gt.f32.partialorder %v3891, 0.0
  %vm4148 = vcmp.gt.f32.partialorder %v3892, 0.0
  %vm4149 = vcmp.gt.f32.partialorder %v3893, 0.0
  %vm4150 = vcmp.gt.f32.partialorder %v3894, 0.0
  %vm4151 = vcmp.gt.f32.partialorder %v3895, 0.0
  %vm4152 = vcmp.gt.f32.partialorder %v3896, 0.0
  %vm4153 = vcmp.gt.f32.partialorder %v3897, 0.0
  %vm4154 = vcmp.gt.f32.partialorder %v3898, 0.0
  %vm4155 = vcmp.gt.f32.partialorder %v3899, 0.0
  %vm4156 = vcmp.gt.f32.partialorder %v3900, 0.0
  %vm4157 = vcmp.gt.f32.partialorder %v3901, 0.0
  %vm4158 = vcmp.gt.f32.partialorder %v3902, 0.0
  %vm4159 = vcmp.gt.f32.partialorder %v3903, 0.0
  %vm4160 = vcmp.gt.f32.partialorder %v3904, 0.0
  %vm4161 = vcmp.gt.f32.partialorder %v3905, 0.0
  %vm4162 = vcmp.gt.f32.partialorder %v3906, 0.0
  %vm4163 = vcmp.gt.f32.partialorder %v3907, 0.0
  %vm4164 = vcmp.gt.f32.partialorder %v3908, 0.0
  %vm4165 = vcmp.gt.f32.partialorder %v3909, 0.0
  %vm4166 = vcmp.gt.f32.partialorder %v3910, 0.0
  %vm4167 = vcmp.gt.f32.partialorder %v3911, 0.0
  %vm4168 = vcmp.gt.f32.partialorder %v3912, 0.0
  %vm4169 = vcmp.gt.f32.partialorder %v3913, 0.0
  %vm4170 = vcmp.gt.f32.partialorder %v3914, 0.0
  %vm4171 = vcmp.gt.f32.partialorder %v3915, 0.0
  %vm4172 = vcmp.gt.f32.partialorder %v3916, 0.0
  %vm4173 = vcmp.gt.f32.partialorder %v3917, 0.0
  %vm4174 = vcmp.gt.f32.partialorder %v3918, 0.0
  %vm4175 = vcmp.gt.f32.partialorder %v3919, 0.0
  %vm4176 = vcmp.gt.f32.partialorder %v3920, 0.0
  %vm4177 = vcmp.gt.f32.partialorder %v3921, 0.0
  %vm4178 = vcmp.gt.f32.partialorder %v3922, 0.0
  %vm4179 = vcmp.gt.f32.partialorder %v3923, 0.0
  %vm4180 = vcmp.gt.f32.partialorder %v3924, 0.0
  %vm4181 = vcmp.gt.f32.partialorder %v3925, 0.0
  %vm4182 = vcmp.gt.f32.partialorder %v3926, 0.0
  %vm4183 = vcmp.gt.f32.partialorder %v3927, 0.0
  %vm4184 = vcmp.gt.f32.partialorder %v3928, 0.0
  %vm4185 = vcmp.gt.f32.partialorder %v3929, 0.0
  %vm4186 = vcmp.gt.f32.partialorder %v3930, 0.0
  %vm4187 = vcmp.gt.f32.partialorder %v3931, 0.0
  %vm4188 = vcmp.gt.f32.partialorder %v3932, 0.0
  %vm4189 = vcmp.gt.f32.partialorder %v3933, 0.0
  %vm4190 = vcmp.gt.f32.partialorder %v3934, 0.0
  %vm4191 = vcmp.gt.f32.partialorder %v3935, 0.0
  %vm4192 = vcmp.gt.f32.partialorder %v3936, 0.0
  %vm4193 = vcmp.gt.f32.partialorder %v3937, 0.0
  %vm4194 = vcmp.gt.f32.partialorder %v3938, 0.0
  %vm4195 = vcmp.gt.f32.partialorder %v3939, 0.0
  %vm4196 = vcmp.gt.f32.partialorder %v3940, 0.0
  %vm4197 = vcmp.gt.f32.partialorder %v3941, 0.0
  %vm4198 = vcmp.gt.f32.partialorder %v3942, 0.0
  %vm4199 = vcmp.gt.f32.partialorder %v3943, 0.0
  %vm4200 = vcmp.gt.f32.partialorder %v3944, 0.0
  %vm4201 = vcmp.gt.f32.partialorder %v3945, 0.0
  %vm4202 = vcmp.gt.f32.partialorder %v3946, 0.0
  %vm4203 = vcmp.gt.f32.partialorder %v3947, 0.0
  %vm4204 = vcmp.gt.f32.partialorder %v3948, 0.0
  %vm4205 = vcmp.gt.f32.partialorder %v3949, 0.0
  %vm4206 = vcmp.gt.f32.partialorder %v3950, 0.0
  %vm4207 = vcmp.gt.f32.partialorder %v3951, 0.0
  %vm4208 = vcmp.gt.f32.partialorder %v3952, 0.0
  %vm4209 = vcmp.gt.f32.partialorder %v3953, 0.0
  %vm4210 = vcmp.gt.f32.partialorder %v3954, 0.0
  %vm4211 = vcmp.gt.f32.partialorder %v3955, 0.0
  %vm4212 = vcmp.gt.f32.partialorder %v3956, 0.0
  %vm4213 = vcmp.gt.f32.partialorder %v3957, 0.0
  %vm4214 = vcmp.gt.f32.partialorder %v3958, 0.0
  %vm4215 = vcmp.gt.f32.partialorder %v3959, 0.0
  %vm4216 = vcmp.gt.f32.partialorder %v3960, 0.0
  %v4217 = vmul.f32 %v3705, 0.2
  %v4218 = vmul.f32 %v3706, 0.2
  %v4219 = vmul.f32 %v3707, 0.2
  %v4220 = vmul.f32 %v3708, 0.2
  %v4221 = vmul.f32 %v3709, 0.2
  %v4222 = vmul.f32 %v3710, 0.2
  %v4223 = vmul.f32 %v3711, 0.2
  %v4224 = vmul.f32 %v3712, 0.2
  %v4225 = vmul.f32 %v3713, 0.2
  %v4226 = vmul.f32 %v3714, 0.2
  %v4227 = vmul.f32 %v3715, 0.2
  %v4228 = vmul.f32 %v3716, 0.2
  %v4229 = vmul.f32 %v3717, 0.2
  %v4230 = vmul.f32 %v3718, 0.2
  %v4231 = vmul.f32 %v3719, 0.2
  %v4232 = vmul.f32 %v3720, 0.2
  %v4233 = vmul.f32 %v3721, 0.2
  %v4234 = vmul.f32 %v3722, 0.2
  %v4235 = vmul.f32 %v3723, 0.2
  %v4236 = vmul.f32 %v3724, 0.2
  %v4237 = vmul.f32 %v3725, 0.2
  %v4238 = vmul.f32 %v3726, 0.2
  %v4239 = vmul.f32 %v3727, 0.2
  %v4240 = vmul.f32 %v3728, 0.2
  %v4241 = vmul.f32 %v3729, 0.2
  %v4242 = vmul.f32 %v3730, 0.2
  %v4243 = vmul.f32 %v3731, 0.2
  %v4244 = vmul.f32 %v3732, 0.2
  %v4245 = vmul.f32 %v3733, 0.2
  %v4246 = vmul.f32 %v3734, 0.2
  %v4247 = vmul.f32 %v3735, 0.2
  %v4248 = vmul.f32 %v3736, 0.2
  %v4249 = vmul.f32 %v3737, 0.2
  %v4250 = vmul.f32 %v3738, 0.2
  %v4251 = vmul.f32 %v3739, 0.2
  %v4252 = vmul.f32 %v3740, 0.2
  %v4253 = vmul.f32 %v3741, 0.2
  %v4254 = vmul.f32 %v3742, 0.2
  %v4255 = vmul.f32 %v3743, 0.2
  %v4256 = vmul.f32 %v3744, 0.2
  %v4257 = vmul.f32 %v3745, 0.2
  %v4258 = vmul.f32 %v3746, 0.2
  %v4259 = vmul.f32 %v3747, 0.2
  %v4260 = vmul.f32 %v3748, 0.2
  %v4261 = vmul.f32 %v3749, 0.2
  %v4262 = vmul.f32 %v3750, 0.2
  %v4263 = vmul.f32 %v3751, 0.2
  %v4264 = vmul.f32 %v3752, 0.2
  %v4265 = vmul.f32 %v3753, 0.2
  %v4266 = vmul.f32 %v3754, 0.2
  %v4267 = vmul.f32 %v3755, 0.2
  %v4268 = vmul.f32 %v3756, 0.2
  %v4269 = vmul.f32 %v3757, 0.2
  %v4270 = vmul.f32 %v3758, 0.2
  %v4271 = vmul.f32 %v3759, 0.2
  %v4272 = vmul.f32 %v3760, 0.2
  %v4273 = vmul.f32 %v3761, 0.2
  %v4274 = vmul.f32 %v3762, 0.2
  %v4275 = vmul.f32 %v3763, 0.2
  %v4276 = vmul.f32 %v3764, 0.2
  %v4277 = vmul.f32 %v3765, 0.2
  %v4278 = vmul.f32 %v3766, 0.2
  %v4279 = vmul.f32 %v3767, 0.2
  %v4280 = vmul.f32 %v3768, 0.2
  %v4281 = vmul.f32 %v3769, 0.2
  %v4282 = vmul.f32 %v3770, 0.2
  %v4283 = vmul.f32 %v3771, 0.2
  %v4284 = vmul.f32 %v3772, 0.2
  %v4285 = vmul.f32 %v3773, 0.2
  %v4286 = vmul.f32 %v3774, 0.2
  %v4287 = vmul.f32 %v3775, 0.2
  %v4288 = vmul.f32 %v3776, 0.2
  %v4289 = vmul.f32 %v3777, 0.2
  %v4290 = vmul.f32 %v3778, 0.2
  %v4291 = vmul.f32 %v3779, 0.2
  %v4292 = vmul.f32 %v3780, 0.2
  %v4293 = vmul.f32 %v3781, 0.2
  %v4294 = vmul.f32 %v3782, 0.2
  %v4295 = vmul.f32 %v3783, 0.2
  %v4296 = vmul.f32 %v3784, 0.2
  %v4297 = vmul.f32 %v3785, 0.2
  %v4298 = vmul.f32 %v3786, 0.2
  %v4299 = vmul.f32 %v3787, 0.2
  %v4300 = vmul.f32 %v3788, 0.2
  %v4301 = vmul.f32 %v3789, 0.2
  %v4302 = vmul.f32 %v3790, 0.2
  %v4303 = vmul.f32 %v3791, 0.2
  %v4304 = vmul.f32 %v3792, 0.2
  %v4305 = vmul.f32 %v3793, 0.2
  %v4306 = vmul.f32 %v3794, 0.2
  %v4307 = vmul.f32 %v3795, 0.2
  %v4308 = vmul.f32 %v3796, 0.2
  %v4309 = vmul.f32 %v3797, 0.2
  %v4310 = vmul.f32 %v3798, 0.2
  %v4311 = vmul.f32 %v3799, 0.2
  %v4312 = vmul.f32 %v3800, 0.2
  %v4313 = vmul.f32 %v3801, 0.2
  %v4314 = vmul.f32 %v3802, 0.2
  %v4315 = vmul.f32 %v3803, 0.2
  %v4316 = vmul.f32 %v3804, 0.2
  %v4317 = vmul.f32 %v3805, 0.2
  %v4318 = vmul.f32 %v3806, 0.2
  %v4319 = vmul.f32 %v3807, 0.2
  %v4320 = vmul.f32 %v3808, 0.2
  %v4321 = vmul.f32 %v3809, 0.2
  %v4322 = vmul.f32 %v3810, 0.2
  %v4323 = vmul.f32 %v3811, 0.2
  %v4324 = vmul.f32 %v3812, 0.2
  %v4325 = vmul.f32 %v3813, 0.2
  %v4326 = vmul.f32 %v3814, 0.2
  %v4327 = vmul.f32 %v3815, 0.2
  %v4328 = vmul.f32 %v3816, 0.2
  %v4329 = vmul.f32 %v3817, 0.2
  %v4330 = vmul.f32 %v3818, 0.2
  %v4331 = vmul.f32 %v3819, 0.2
  %v4332 = vmul.f32 %v3820, 0.2
  %v4333 = vmul.f32 %v3821, 0.2
  %v4334 = vmul.f32 %v3822, 0.2
  %v4335 = vmul.f32 %v3823, 0.2
  %v4336 = vmul.f32 %v3824, 0.2
  %v4337 = vmul.f32 %v3825, 0.2
  %v4338 = vmul.f32 %v3826, 0.2
  %v4339 = vmul.f32 %v3827, 0.2
  %v4340 = vmul.f32 %v3828, 0.2
  %v4341 = vmul.f32 %v3829, 0.2
  %v4342 = vmul.f32 %v3830, 0.2
  %v4343 = vmul.f32 %v3831, 0.2
  %v4344 = vmul.f32 %v3832, 0.2
  %v4345 = vmul.f32 %v3833, 0.2
  %v4346 = vmul.f32 %v3834, 0.2
  %v4347 = vmul.f32 %v3835, 0.2
  %v4348 = vmul.f32 %v3836, 0.2
  %v4349 = vmul.f32 %v3837, 0.2
  %v4350 = vmul.f32 %v3838, 0.2
  %v4351 = vmul.f32 %v3839, 0.2
  %v4352 = vmul.f32 %v3840, 0.2
  %v4353 = vmul.f32 %v3841, 0.2
  %v4354 = vmul.f32 %v3842, 0.2
  %v4355 = vmul.f32 %v3843, 0.2
  %v4356 = vmul.f32 %v3844, 0.2
  %v4357 = vmul.f32 %v3845, 0.2
  %v4358 = vmul.f32 %v3846, 0.2
  %v4359 = vmul.f32 %v3847, 0.2
  %v4360 = vmul.f32 %v3848, 0.2
  %v4361 = vmul.f32 %v3849, 0.2
  %v4362 = vmul.f32 %v3850, 0.2
  %v4363 = vmul.f32 %v3851, 0.2
  %v4364 = vmul.f32 %v3852, 0.2
  %v4365 = vmul.f32 %v3853, 0.2
  %v4366 = vmul.f32 %v3854, 0.2
  %v4367 = vmul.f32 %v3855, 0.2
  %v4368 = vmul.f32 %v3856, 0.2
  %v4369 = vmul.f32 %v3857, 0.2
  %v4370 = vmul.f32 %v3858, 0.2
  %v4371 = vmul.f32 %v3859, 0.2
  %v4372 = vmul.f32 %v3860, 0.2
  %v4373 = vmul.f32 %v3861, 0.2
  %v4374 = vmul.f32 %v3862, 0.2
  %v4375 = vmul.f32 %v3863, 0.2
  %v4376 = vmul.f32 %v3864, 0.2
  %v4377 = vmul.f32 %v3865, 0.2
  %v4378 = vmul.f32 %v3866, 0.2
  %v4379 = vmul.f32 %v3867, 0.2
  %v4380 = vmul.f32 %v3868, 0.2
  %v4381 = vmul.f32 %v3869, 0.2
  %v4382 = vmul.f32 %v3870, 0.2
  %v4383 = vmul.f32 %v3871, 0.2
  %v4384 = vmul.f32 %v3872, 0.2
  %v4385 = vmul.f32 %v3873, 0.2
  %v4386 = vmul.f32 %v3874, 0.2
  %v4387 = vmul.f32 %v3875, 0.2
  %v4388 = vmul.f32 %v3876, 0.2
  %v4389 = vmul.f32 %v3877, 0.2
  %v4390 = vmul.f32 %v3878, 0.2
  %v4391 = vmul.f32 %v3879, 0.2
  %v4392 = vmul.f32 %v3880, 0.2
  %v4393 = vmul.f32 %v3881, 0.2
  %v4394 = vmul.f32 %v3882, 0.2
  %v4395 = vmul.f32 %v3883, 0.2
  %v4396 = vmul.f32 %v3884, 0.2
  %v4397 = vmul.f32 %v3885, 0.2
  %v4398 = vmul.f32 %v3886, 0.2
  %v4399 = vmul.f32 %v3887, 0.2
  %v4400 = vmul.f32 %v3888, 0.2
  %v4401 = vmul.f32 %v3889, 0.2
  %v4402 = vmul.f32 %v3890, 0.2
  %v4403 = vmul.f32 %v3891, 0.2
  %v4404 = vmul.f32 %v3892, 0.2
  %v4405 = vmul.f32 %v3893, 0.2
  %v4406 = vmul.f32 %v3894, 0.2
  %v4407 = vmul.f32 %v3895, 0.2
  %v4408 = vmul.f32 %v3896, 0.2
  %v4409 = vmul.f32 %v3897, 0.2
  %v4410 = vmul.f32 %v3898, 0.2
  %v4411 = vmul.f32 %v3899, 0.2
  %v4412 = vmul.f32 %v3900, 0.2
  %v4413 = vmul.f32 %v3901, 0.2
  %v4414 = vmul.f32 %v3902, 0.2
  %v4415 = vmul.f32 %v3903, 0.2
  %v4416 = vmul.f32 %v3904, 0.2
  %v4417 = vmul.f32 %v3905, 0.2
  %v4418 = vmul.f32 %v3906, 0.2
  %v4419 = vmul.f32 %v3907, 0.2
  %v4420 = vmul.f32 %v3908, 0.2
  %v4421 = vmul.f32 %v3909, 0.2
  %v4422 = vmul.f32 %v3910, 0.2
  %v4423 = vmul.f32 %v3911, 0.2
  %v4424 = vmul.f32 %v3912, 0.2
  %v4425 = vmul.f32 %v3913, 0.2
  %v4426 = vmul.f32 %v3914, 0.2
  %v4427 = vmul.f32 %v3915, 0.2
  %v4428 = vmul.f32 %v3916, 0.2
  %v4429 = vmul.f32 %v3917, 0.2
  %v4430 = vmul.f32 %v3918, 0.2
  %v4431 = vmul.f32 %v3919, 0.2
  %v4432 = vmul.f32 %v3920, 0.2
  %v4433 = vmul.f32 %v3921, 0.2
  %v4434 = vmul.f32 %v3922, 0.2
  %v4435 = vmul.f32 %v3923, 0.2
  %v4436 = vmul.f32 %v3924, 0.2
  %v4437 = vmul.f32 %v3925, 0.2
  %v4438 = vmul.f32 %v3926, 0.2
  %v4439 = vmul.f32 %v3927, 0.2
  %v4440 = vmul.f32 %v3928, 0.2
  %v4441 = vmul.f32 %v3929, 0.2
  %v4442 = vmul.f32 %v3930, 0.2
  %v4443 = vmul.f32 %v3931, 0.2
  %v4444 = vmul.f32 %v3932, 0.2
  %v4445 = vmul.f32 %v3933, 0.2
  %v4446 = vmul.f32 %v3934, 0.2
  %v4447 = vmul.f32 %v3935, 0.2
  %v4448 = vmul.f32 %v3936, 0.2
  %v4449 = vmul.f32 %v3937, 0.2
  %v4450 = vmul.f32 %v3938, 0.2
  %v4451 = vmul.f32 %v3939, 0.2
  %v4452 = vmul.f32 %v3940, 0.2
  %v4453 = vmul.f32 %v3941, 0.2
  %v4454 = vmul.f32 %v3942, 0.2
  %v4455 = vmul.f32 %v3943, 0.2
  %v4456 = vmul.f32 %v3944, 0.2
  %v4457 = vmul.f32 %v3945, 0.2
  %v4458 = vmul.f32 %v3946, 0.2
  %v4459 = vmul.f32 %v3947, 0.2
  %v4460 = vmul.f32 %v3948, 0.2
  %v4461 = vmul.f32 %v3949, 0.2
  %v4462 = vmul.f32 %v3950, 0.2
  %v4463 = vmul.f32 %v3951, 0.2
  %v4464 = vmul.f32 %v3952, 0.2
  %v4465 = vmul.f32 %v3953, 0.2
  %v4466 = vmul.f32 %v3954, 0.2
  %v4467 = vmul.f32 %v3955, 0.2
  %v4468 = vmul.f32 %v3956, 0.2
  %v4469 = vmul.f32 %v3957, 0.2
  %v4470 = vmul.f32 %v3958, 0.2
  %v4471 = vmul.f32 %v3959, 0.2
  %v4472 = vmul.f32 %v3960, 0.2
  %v4473 = vsel %vm3961, %v3705, %v4217
  %v4474 = vsel %vm3962, %v3706, %v4218
  %v4475 = vsel %vm3963, %v3707, %v4219
  %v4476 = vsel %vm3964, %v3708, %v4220
  %v4477 = vsel %vm3965, %v3709, %v4221
  %v4478 = vsel %vm3966, %v3710, %v4222
  %v4479 = vsel %vm3967, %v3711, %v4223
  %v4480 = vsel %vm3968, %v3712, %v4224
  %v4481 = vsel %vm3969, %v3713, %v4225
  %v4482 = vsel %vm3970, %v3714, %v4226
  %v4483 = vsel %vm3971, %v3715, %v4227
  %v4484 = vsel %vm3972, %v3716, %v4228
  %v4485 = vsel %vm3973, %v3717, %v4229
  %v4486 = vsel %vm3974, %v3718, %v4230
  %v4487 = vsel %vm3975, %v3719, %v4231
  %v4488 = vsel %vm3976, %v3720, %v4232
  %v4489 = vsel %vm3977, %v3721, %v4233
  %v4490 = vsel %vm3978, %v3722, %v4234
  %v4491 = vsel %vm3979, %v3723, %v4235
  %v4492 = vsel %vm3980, %v3724, %v4236
  %v4493 = vsel %vm3981, %v3725, %v4237
  %v4494 = vsel %vm3982, %v3726, %v4238
  %v4495 = vsel %vm3983, %v3727, %v4239
  %v4496 = vsel %vm3984, %v3728, %v4240
  %v4497 = vsel %vm3985, %v3729, %v4241
  %v4498 = vsel %vm3986, %v3730, %v4242
  %v4499 = vsel %vm3987, %v3731, %v4243
  %v4500 = vsel %vm3988, %v3732, %v4244
  %v4501 = vsel %vm3989, %v3733, %v4245
  %v4502 = vsel %vm3990, %v3734, %v4246
  %v4503 = vsel %vm3991, %v3735, %v4247
  %v4504 = vsel %vm3992, %v3736, %v4248
  %v4505 = vsel %vm3993, %v3737, %v4249
  %v4506 = vsel %vm3994, %v3738, %v4250
  %v4507 = vsel %vm3995, %v3739, %v4251
  %v4508 = vsel %vm3996, %v3740, %v4252
  %v4509 = vsel %vm3997, %v3741, %v4253
  %v4510 = vsel %vm3998, %v3742, %v4254
  %v4511 = vsel %vm3999, %v3743, %v4255
  %v4512 = vsel %vm4000, %v3744, %v4256
  %v4513 = vsel %vm4001, %v3745, %v4257
  %v4514 = vsel %vm4002, %v3746, %v4258
  %v4515 = vsel %vm4003, %v3747, %v4259
  %v4516 = vsel %vm4004, %v3748, %v4260
  %v4517 = vsel %vm4005, %v3749, %v4261
  %v4518 = vsel %vm4006, %v3750, %v4262
  %v4519 = vsel %vm4007, %v3751, %v4263
  %v4520 = vsel %vm4008, %v3752, %v4264
  %v4521 = vsel %vm4009, %v3753, %v4265
  %v4522 = vsel %vm4010, %v3754, %v4266
  %v4523 = vsel %vm4011, %v3755, %v4267
  %v4524 = vsel %vm4012, %v3756, %v4268
  %v4525 = vsel %vm4013, %v3757, %v4269
  %v4526 = vsel %vm4014, %v3758, %v4270
  %v4527 = vsel %vm4015, %v3759, %v4271
  %v4528 = vsel %vm4016, %v3760, %v4272
  %v4529 = vsel %vm4017, %v3761, %v4273
  %v4530 = vsel %vm4018, %v3762, %v4274
  %v4531 = vsel %vm4019, %v3763, %v4275
  %v4532 = vsel %vm4020, %v3764, %v4276
  %v4533 = vsel %vm4021, %v3765, %v4277
  %v4534 = vsel %vm4022, %v3766, %v4278
  %v4535 = vsel %vm4023, %v3767, %v4279
  %v4536 = vsel %vm4024, %v3768, %v4280
  %v4537 = vsel %vm4025, %v3769, %v4281
  %v4538 = vsel %vm4026, %v3770, %v4282
  %v4539 = vsel %vm4027, %v3771, %v4283
  %v4540 = vsel %vm4028, %v3772, %v4284
  %v4541 = vsel %vm4029, %v3773, %v4285
  %v4542 = vsel %vm4030, %v3774, %v4286
  %v4543 = vsel %vm4031, %v3775, %v4287
  %v4544 = vsel %vm4032, %v3776, %v4288
  %v4545 = vsel %vm4033, %v3777, %v4289
  %v4546 = vsel %vm4034, %v3778, %v4290
  %v4547 = vsel %vm4035, %v3779, %v4291
  %v4548 = vsel %vm4036, %v3780, %v4292
  %v4549 = vsel %vm4037, %v3781, %v4293
  %v4550 = vsel %vm4038, %v3782, %v4294
  %v4551 = vsel %vm4039, %v3783, %v4295
  %v4552 = vsel %vm4040, %v3784, %v4296
  %v4553 = vsel %vm4041, %v3785, %v4297
  %v4554 = vsel %vm4042, %v3786, %v4298
  %v4555 = vsel %vm4043, %v3787, %v4299
  %v4556 = vsel %vm4044, %v3788, %v4300
  %v4557 = vsel %vm4045, %v3789, %v4301
  %v4558 = vsel %vm4046, %v3790, %v4302
  %v4559 = vsel %vm4047, %v3791, %v4303
  %v4560 = vsel %vm4048, %v3792, %v4304
  %v4561 = vsel %vm4049, %v3793, %v4305
  %v4562 = vsel %vm4050, %v3794, %v4306
  %v4563 = vsel %vm4051, %v3795, %v4307
  %v4564 = vsel %vm4052, %v3796, %v4308
  %v4565 = vsel %vm4053, %v3797, %v4309
  %v4566 = vsel %vm4054, %v3798, %v4310
  %v4567 = vsel %vm4055, %v3799, %v4311
  %v4568 = vsel %vm4056, %v3800, %v4312
  %v4569 = vsel %vm4057, %v3801, %v4313
  %v4570 = vsel %vm4058, %v3802, %v4314
  %v4571 = vsel %vm4059, %v3803, %v4315
  %v4572 = vsel %vm4060, %v3804, %v4316
  %v4573 = vsel %vm4061, %v3805, %v4317
  %v4574 = vsel %vm4062, %v3806, %v4318
  %v4575 = vsel %vm4063, %v3807, %v4319
  %v4576 = vsel %vm4064, %v3808, %v4320
  %v4577 = vsel %vm4065, %v3809, %v4321
  %v4578 = vsel %vm4066, %v3810, %v4322
  %v4579 = vsel %vm4067, %v3811, %v4323
  %v4580 = vsel %vm4068, %v3812, %v4324
  %v4581 = vsel %vm4069, %v3813, %v4325
  %v4582 = vsel %vm4070, %v3814, %v4326
  %v4583 = vsel %vm4071, %v3815, %v4327
  %v4584 = vsel %vm4072, %v3816, %v4328
  %v4585 = vsel %vm4073, %v3817, %v4329
  %v4586 = vsel %vm4074, %v3818, %v4330
  %v4587 = vsel %vm4075, %v3819, %v4331
  %v4588 = vsel %vm4076, %v3820, %v4332
  %v4589 = vsel %vm4077, %v3821, %v4333
  %v4590 = vsel %vm4078, %v3822, %v4334
  %v4591 = vsel %vm4079, %v3823, %v4335
  %v4592 = vsel %vm4080, %v3824, %v4336
  %v4593 = vsel %vm4081, %v3825, %v4337
  %v4594 = vsel %vm4082, %v3826, %v4338
  %v4595 = vsel %vm4083, %v3827, %v4339
  %v4596 = vsel %vm4084, %v3828, %v4340
  %v4597 = vsel %vm4085, %v3829, %v4341
  %v4598 = vsel %vm4086, %v3830, %v4342
  %v4599 = vsel %vm4087, %v3831, %v4343
  %v4600 = vsel %vm4088, %v3832, %v4344
  %v4601 = vsel %vm4089, %v3833, %v4345
  %v4602 = vsel %vm4090, %v3834, %v4346
  %v4603 = vsel %vm4091, %v3835, %v4347
  %v4604 = vsel %vm4092, %v3836, %v4348
  %v4605 = vsel %vm4093, %v3837, %v4349
  %v4606 = vsel %vm4094, %v3838, %v4350
  %v4607 = vsel %vm4095, %v3839, %v4351
  %v4608 = vsel %vm4096, %v3840, %v4352
  %v4609 = vsel %vm4097, %v3841, %v4353
  %v4610 = vsel %vm4098, %v3842, %v4354
  %v4611 = vsel %vm4099, %v3843, %v4355
  %v4612 = vsel %vm4100, %v3844, %v4356
  %v4613 = vsel %vm4101, %v3845, %v4357
  %v4614 = vsel %vm4102, %v3846, %v4358
  %v4615 = vsel %vm4103, %v3847, %v4359
  %v4616 = vsel %vm4104, %v3848, %v4360
  %v4617 = vsel %vm4105, %v3849, %v4361
  %v4618 = vsel %vm4106, %v3850, %v4362
  %v4619 = vsel %vm4107, %v3851, %v4363
  %v4620 = vsel %vm4108, %v3852, %v4364
  %v4621 = vsel %vm4109, %v3853, %v4365
  %v4622 = vsel %vm4110, %v3854, %v4366
  %v4623 = vsel %vm4111, %v3855, %v4367
  %v4624 = vsel %vm4112, %v3856, %v4368
  %v4625 = vsel %vm4113, %v3857, %v4369
  %v4626 = vsel %vm4114, %v3858, %v4370
  %v4627 = vsel %vm4115, %v3859, %v4371
  %v4628 = vsel %vm4116, %v3860, %v4372
  %v4629 = vsel %vm4117, %v3861, %v4373
  %v4630 = vsel %vm4118, %v3862, %v4374
  %v4631 = vsel %vm4119, %v3863, %v4375
  %v4632 = vsel %vm4120, %v3864, %v4376
  %v4633 = vsel %vm4121, %v3865, %v4377
  %v4634 = vsel %vm4122, %v3866, %v4378
  %v4635 = vsel %vm4123, %v3867, %v4379
  %v4636 = vsel %vm4124, %v3868, %v4380
  %v4637 = vsel %vm4125, %v3869, %v4381
  %v4638 = vsel %vm4126, %v3870, %v4382
  %v4639 = vsel %vm4127, %v3871, %v4383
  %v4640 = vsel %vm4128, %v3872, %v4384
  %v4641 = vsel %vm4129, %v3873, %v4385
  %v4642 = vsel %vm4130, %v3874, %v4386
  %v4643 = vsel %vm4131, %v3875, %v4387
  %v4644 = vsel %vm4132, %v3876, %v4388
  %v4645 = vsel %vm4133, %v3877, %v4389
  %v4646 = vsel %vm4134, %v3878, %v4390
  %v4647 = vsel %vm4135, %v3879, %v4391
  %v4648 = vsel %vm4136, %v3880, %v4392
  %v4649 = vsel %vm4137, %v3881, %v4393
  %v4650 = vsel %vm4138, %v3882, %v4394
  %v4651 = vsel %vm4139, %v3883, %v4395
  %v4652 = vsel %vm4140, %v3884, %v4396
  %v4653 = vsel %vm4141, %v3885, %v4397
  %v4654 = vsel %vm4142, %v3886, %v4398
  %v4655 = vsel %vm4143, %v3887, %v4399
  %v4656 = vsel %vm4144, %v3888, %v4400
  %v4657 = vsel %vm4145, %v3889, %v4401
  %v4658 = vsel %vm4146, %v3890, %v4402
  %v4659 = vsel %vm4147, %v3891, %v4403
  %v4660 = vsel %vm4148, %v3892, %v4404
  %v4661 = vsel %vm4149, %v3893, %v4405
  %v4662 = vsel %vm4150, %v3894, %v4406
  %v4663 = vsel %vm4151, %v3895, %v4407
  %v4664 = vsel %vm4152, %v3896, %v4408
  %v4665 = vsel %vm4153, %v3897, %v4409
  %v4666 = vsel %vm4154, %v3898, %v4410
  %v4667 = vsel %vm4155, %v3899, %v4411
  %v4668 = vsel %vm4156, %v3900, %v4412
  %v4669 = vsel %vm4157, %v3901, %v4413
  %v4670 = vsel %vm4158, %v3902, %v4414
  %v4671 = vsel %vm4159, %v3903, %v4415
  %v4672 = vsel %vm4160, %v3904, %v4416
  %v4673 = vsel %vm4161, %v3905, %v4417
  %v4674 = vsel %vm4162, %v3906, %v4418
  %v4675 = vsel %vm4163, %v3907, %v4419
  %v4676 = vsel %vm4164, %v3908, %v4420
  %v4677 = vsel %vm4165, %v3909, %v4421
  %v4678 = vsel %vm4166, %v3910, %v4422
  %v4679 = vsel %vm4167, %v3911, %v4423
  %v4680 = vsel %vm4168, %v3912, %v4424
  %v4681 = vsel %vm4169, %v3913, %v4425
  %v4682 = vsel %vm4170, %v3914, %v4426
  %v4683 = vsel %vm4171, %v3915, %v4427
  %v4684 = vsel %vm4172, %v3916, %v4428
  %v4685 = vsel %vm4173, %v3917, %v4429
  %v4686 = vsel %vm4174, %v3918, %v4430
  %v4687 = vsel %vm4175, %v3919, %v4431
  %v4688 = vsel %vm4176, %v3920, %v4432
  %v4689 = vsel %vm4177, %v3921, %v4433
  %v4690 = vsel %vm4178, %v3922, %v4434
  %v4691 = vsel %vm4179, %v3923, %v4435
  %v4692 = vsel %vm4180, %v3924, %v4436
  %v4693 = vsel %vm4181, %v3925, %v4437
  %v4694 = vsel %vm4182, %v3926, %v4438
  %v4695 = vsel %vm4183, %v3927, %v4439
  %v4696 = vsel %vm4184, %v3928, %v4440
  %v4697 = vsel %vm4185, %v3929, %v4441
  %v4698 = vsel %vm4186, %v3930, %v4442
  %v4699 = vsel %vm4187, %v3931, %v4443
  %v4700 = vsel %vm4188, %v3932, %v4444
  %v4701 = vsel %vm4189, %v3933, %v4445
  %v4702 = vsel %vm4190, %v3934, %v4446
  %v4703 = vsel %vm4191, %v3935, %v4447
  %v4704 = vsel %vm4192, %v3936, %v4448
  %v4705 = vsel %vm4193, %v3937, %v4449
  %v4706 = vsel %vm4194, %v3938, %v4450
  %v4707 = vsel %vm4195, %v3939, %v4451
  %v4708 = vsel %vm4196, %v3940, %v4452
  %v4709 = vsel %vm4197, %v3941, %v4453
  %v4710 = vsel %vm4198, %v3942, %v4454
  %v4711 = vsel %vm4199, %v3943, %v4455
  %v4712 = vsel %vm4200, %v3944, %v4456
  %v4713 = vsel %vm4201, %v3945, %v4457
  %v4714 = vsel %vm4202, %v3946, %v4458
  %v4715 = vsel %vm4203, %v3947, %v4459
  %v4716 = vsel %vm4204, %v3948, %v4460
  %v4717 = vsel %vm4205, %v3949, %v4461
  %v4718 = vsel %vm4206, %v3950, %v4462
  %v4719 = vsel %vm4207, %v3951, %v4463
  %v4720 = vsel %vm4208, %v3952, %v4464
  %v4721 = vsel %vm4209, %v3953, %v4465
  %v4722 = vsel %vm4210, %v3954, %v4466
  %v4723 = vsel %vm4211, %v3955, %v4467
  %v4724 = vsel %vm4212, %v3956, %v4468
  %v4725 = vsel %vm4213, %v3957, %v4469
  %v4726 = vsel %vm4214, %v3958, %v4470
  %v4727 = vsel %vm4215, %v3959, %v4471
  %v4728 = vsel %vm4216, %v3960, %v4472
  %4729 = vst [vmem:[%s4] sm:$0xff] %v4473
  %4730 = vst [vmem:[%s4 + $0x8] sm:$0xff] %v4474
  %4731 = vst [vmem:[%s4 + $0x10] sm:$0xff] %v4475
  %4732 = vst [vmem:[%s4 + $0x18] sm:$0xff] %v4476
  %4733 = vst [vmem:[%s4 + $0x20] sm:$0xff] %v4477
  %4734 = vst [vmem:[%s4 + $0x28] sm:$0xff] %v4478
  %4735 = vst [vmem:[%s4 + $0x30] sm:$0xff] %v4479
  %4736 = vst [vmem:[%s4 + $0x38] sm:$0xff] %v4480
  %4737 = vst [vmem:[%s4 + $0x40] sm:$0xff] %v4481
  %4738 = vst [vmem:[%s4 + $0x48] sm:$0xff] %v4482
  %4739 = vst [vmem:[%s4 + $0x50] sm:$0xff] %v4483
  %4740 = vst [vmem:[%s4 + $0x58] sm:$0xff] %v4484
  %4741 = vst [vmem:[%s4 + $0x60] sm:$0xff] %v4485
  %4742 = vst [vmem:[%s4 + $0x68] sm:$0xff] %v4486
  %4743 = vst [vmem:[%s4 + $0x70] sm:$0xff] %v4487
  %4744 = vst [vmem:[%s4 + $0x78] sm:$0xff] %v4488
  %4745 = vst [vmem:[%s4 + $0x80] sm:$0xff] %v4489
  %4746 = vst [vmem:[%s4 + $0x88] sm:$0xff] %v4490
  %4747 = vst [vmem:[%s4 + $0x90] sm:$0xff] %v4491
  %4748 = vst [vmem:[%s4 + $0x98] sm:$0xff] %v4492
  %4749 = vst [vmem:[%s4 + $0xa0] sm:$0xff] %v4493
  %4750 = vst [vmem:[%s4 + $0xa8] sm:$0xff] %v4494
  %4751 = vst [vmem:[%s4 + $0xb0] sm:$0xff] %v4495
  %4752 = vst [vmem:[%s4 + $0xb8] sm:$0xff] %v4496
  %4753 = vst [vmem:[%s4 + $0xc0] sm:$0xff] %v4497
  %4754 = vst [vmem:[%s4 + $0xc8] sm:$0xff] %v4498
  %4755 = vst [vmem:[%s4 + $0xd0] sm:$0xff] %v4499
  %4756 = vst [vmem:[%s4 + $0xd8] sm:$0xff] %v4500
  %4757 = vst [vmem:[%s4 + $0xe0] sm:$0xff] %v4501
  %4758 = vst [vmem:[%s4 + $0xe8] sm:$0xff] %v4502
  %4759 = vst [vmem:[%s4 + $0xf0] sm:$0xff] %v4503
  %4760 = vst [vmem:[%s4 + $0xf8] sm:$0xff] %v4504
  %4761 = vst [vmem:[%s4 + $0x100] sm:$0xff] %v4505
  %4762 = vst [vmem:[%s4 + $0x108] sm:$0xff] %v4506
  %4763 = vst [vmem:[%s4 + $0x110] sm:$0xff] %v4507
  %4764 = vst [vmem:[%s4 + $0x118] sm:$0xff] %v4508
  %4765 = vst [vmem:[%s4 + $0x120] sm:$0xff] %v4509
  %4766 = vst [vmem:[%s4 + $0x128] sm:$0xff] %v4510
  %4767 = vst [vmem:[%s4 + $0x130] sm:$0xff] %v4511
  %4768 = vst [vmem:[%s4 + $0x138] sm:$0xff] %v4512
  %4769 = vst [vmem:[%s4 + $0x140] sm:$0xff] %v4513
  %4770 = vst [vmem:[%s4 + $0x148] sm:$0xff] %v4514
  %4771 = vst [vmem:[%s4 + $0x150] sm:$0xff] %v4515
  %4772 = vst [vmem:[%s4 + $0x158] sm:$0xff] %v4516
  %4773 = vst [vmem:[%s4 + $0x160] sm:$0xff] %v4517
  %4774 = vst [vmem:[%s4 + $0x168] sm:$0xff] %v4518
  %4775 = vst [vmem:[%s4 + $0x170] sm:$0xff] %v4519
  %4776 = vst [vmem:[%s4 + $0x178] sm:$0xff] %v4520
  %4777 = vst [vmem:[%s4 + $0x180] sm:$0xff] %v4521
  %4778 = vst [vmem:[%s4 + $0x188] sm:$0xff] %v4522
  %4779 = vst [vmem:[%s4 + $0x190] sm:$0xff] %v4523
  %4780 = vst [vmem:[%s4 + $0x198] sm:$0xff] %v4524
  %4781 = vst [vmem:[%s4 + $0x1a0] sm:$0xff] %v4525
  %4782 = vst [vmem:[%s4 + $0x1a8] sm:$0xff] %v4526
  %4783 = vst [vmem:[%s4 + $0x1b0] sm:$0xff] %v4527
  %4784 = vst [vmem:[%s4 + $0x1b8] sm:$0xff] %v4528
  %4785 = vst [vmem:[%s4 + $0x1c0] sm:$0xff] %v4529
  %4786 = vst [vmem:[%s4 + $0x1c8] sm:$0xff] %v4530
  %4787 = vst [vmem:[%s4 + $0x1d0] sm:$0xff] %v4531
  %4788 = vst [vmem:[%s4 + $0x1d8] sm:$0xff] %v4532
  %4789 = vst [vmem:[%s4 + $0x1e0] sm:$0xff] %v4533
  %4790 = vst [vmem:[%s4 + $0x1e8] sm:$0xff] %v4534
  %4791 = vst [vmem:[%s4 + $0x1f0] sm:$0xff] %v4535
  %4792 = vst [vmem:[%s4 + $0x1f8] sm:$0xff] %v4536
  %4793 = vst [vmem:[%s4 + $0x200] sm:$0xff] %v4537
  %4794 = vst [vmem:[%s4 + $0x208] sm:$0xff] %v4538
  %4795 = vst [vmem:[%s4 + $0x210] sm:$0xff] %v4539
  %4796 = vst [vmem:[%s4 + $0x218] sm:$0xff] %v4540
  %4797 = vst [vmem:[%s4 + $0x220] sm:$0xff] %v4541
  %4798 = vst [vmem:[%s4 + $0x228] sm:$0xff] %v4542
  %4799 = vst [vmem:[%s4 + $0x230] sm:$0xff] %v4543
  %4800 = vst [vmem:[%s4 + $0x238] sm:$0xff] %v4544
  %4801 = vst [vmem:[%s4 + $0x240] sm:$0xff] %v4545
  %4802 = vst [vmem:[%s4 + $0x248] sm:$0xff] %v4546
  %4803 = vst [vmem:[%s4 + $0x250] sm:$0xff] %v4547
  %4804 = vst [vmem:[%s4 + $0x258] sm:$0xff] %v4548
  %4805 = vst [vmem:[%s4 + $0x260] sm:$0xff] %v4549
  %4806 = vst [vmem:[%s4 + $0x268] sm:$0xff] %v4550
  %4807 = vst [vmem:[%s4 + $0x270] sm:$0xff] %v4551
  %4808 = vst [vmem:[%s4 + $0x278] sm:$0xff] %v4552
  %4809 = vst [vmem:[%s4 + $0x280] sm:$0xff] %v4553
  %4810 = vst [vmem:[%s4 + $0x288] sm:$0xff] %v4554
  %4811 = vst [vmem:[%s4 + $0x290] sm:$0xff] %v4555
  %4812 = vst [vmem:[%s4 + $0x298] sm:$0xff] %v4556
  %4813 = vst [vmem:[%s4 + $0x2a0] sm:$0xff] %v4557
  %4814 = vst [vmem:[%s4 + $0x2a8] sm:$0xff] %v4558
  %4815 = vst [vmem:[%s4 + $0x2b0] sm:$0xff] %v4559
  %4816 = vst [vmem:[%s4 + $0x2b8] sm:$0xff] %v4560
  %4817 = vst [vmem:[%s4 + $0x2c0] sm:$0xff] %v4561
  %4818 = vst [vmem:[%s4 + $0x2c8] sm:$0xff] %v4562
  %4819 = vst [vmem:[%s4 + $0x2d0] sm:$0xff] %v4563
  %4820 = vst [vmem:[%s4 + $0x2d8] sm:$0xff] %v4564
  %4821 = vst [vmem:[%s4 + $0x2e0] sm:$0xff] %v4565
  %4822 = vst [vmem:[%s4 + $0x2e8] sm:$0xff] %v4566
  %4823 = vst [vmem:[%s4 + $0x2f0] sm:$0xff] %v4567
  %4824 = vst [vmem:[%s4 + $0x2f8] sm:$0xff] %v4568
  %4825 = vst [vmem:[%s4 + $0x300] sm:$0xff] %v4569
  %4826 = vst [vmem:[%s4 + $0x308] sm:$0xff] %v4570
  %4827 = vst [vmem:[%s4 + $0x310] sm:$0xff] %v4571
  %4828 = vst [vmem:[%s4 + $0x318] sm:$0xff] %v4572
  %4829 = vst [vmem:[%s4 + $0x320] sm:$0xff] %v4573
  %4830 = vst [vmem:[%s4 + $0x328] sm:$0xff] %v4574
  %4831 = vst [vmem:[%s4 + $0x330] sm:$0xff] %v4575
  %4832 = vst [vmem:[%s4 + $0x338] sm:$0xff] %v4576
  %4833 = vst [vmem:[%s4 + $0x340] sm:$0xff] %v4577
  %4834 = vst [vmem:[%s4 + $0x348] sm:$0xff] %v4578
  %4835 = vst [vmem:[%s4 + $0x350] sm:$0xff] %v4579
  %4836 = vst [vmem:[%s4 + $0x358] sm:$0xff] %v4580
  %4837 = vst [vmem:[%s4 + $0x360] sm:$0xff] %v4581
  %4838 = vst [vmem:[%s4 + $0x368] sm:$0xff] %v4582
  %4839 = vst [vmem:[%s4 + $0x370] sm:$0xff] %v4583
  %4840 = vst [vmem:[%s4 + $0x378] sm:$0xff] %v4584
  %4841 = vst [vmem:[%s4 + $0x380] sm:$0xff] %v4585
  %4842 = vst [vmem:[%s4 + $0x388] sm:$0xff] %v4586
  %4843 = vst [vmem:[%s4 + $0x390] sm:$0xff] %v4587
  %4844 = vst [vmem:[%s4 + $0x398] sm:$0xff] %v4588
  %4845 = vst [vmem:[%s4 + $0x3a0] sm:$0xff] %v4589
  %4846 = vst [vmem:[%s4 + $0x3a8] sm:$0xff] %v4590
  %4847 = vst [vmem:[%s4 + $0x3b0] sm:$0xff] %v4591
  %4848 = vst [vmem:[%s4 + $0x3b8] sm:$0xff] %v4592
  %4849 = vst [vmem:[%s4 + $0x3c0] sm:$0xff] %v4593
  %4850 = vst [vmem:[%s4 + $0x3c8] sm:$0xff] %v4594
  %4851 = vst [vmem:[%s4 + $0x3d0] sm:$0xff] %v4595
  %4852 = vst [vmem:[%s4 + $0x3d8] sm:$0xff] %v4596
  %4853 = vst [vmem:[%s4 + $0x3e0] sm:$0xff] %v4597
  %4854 = vst [vmem:[%s4 + $0x3e8] sm:$0xff] %v4598
  %4855 = vst [vmem:[%s4 + $0x3f0] sm:$0xff] %v4599
  %4856 = vst [vmem:[%s4 + $0x3f8] sm:$0xff] %v4600
  %4857 = vst [vmem:[%s4 + $0x400] sm:$0xff] %v4601
  %4858 = vst [vmem:[%s4 + $0x408] sm:$0xff] %v4602
  %4859 = vst [vmem:[%s4 + $0x410] sm:$0xff] %v4603
  %4860 = vst [vmem:[%s4 + $0x418] sm:$0xff] %v4604
  %4861 = vst [vmem:[%s4 + $0x420] sm:$0xff] %v4605
  %4862 = vst [vmem:[%s4 + $0x428] sm:$0xff] %v4606
  %4863 = vst [vmem:[%s4 + $0x430] sm:$0xff] %v4607
  %4864 = vst [vmem:[%s4 + $0x438] sm:$0xff] %v4608
  %4865 = vst [vmem:[%s4 + $0x440] sm:$0xff] %v4609
  %4866 = vst [vmem:[%s4 + $0x448] sm:$0xff] %v4610
  %4867 = vst [vmem:[%s4 + $0x450] sm:$0xff] %v4611
  %4868 = vst [vmem:[%s4 + $0x458] sm:$0xff] %v4612
  %4869 = vst [vmem:[%s4 + $0x460] sm:$0xff] %v4613
  %4870 = vst [vmem:[%s4 + $0x468] sm:$0xff] %v4614
  %4871 = vst [vmem:[%s4 + $0x470] sm:$0xff] %v4615
  %4872 = vst [vmem:[%s4 + $0x478] sm:$0xff] %v4616
  %4873 = vst [vmem:[%s4 + $0x480] sm:$0xff] %v4617
  %4874 = vst [vmem:[%s4 + $0x488] sm:$0xff] %v4618
  %4875 = vst [vmem:[%s4 + $0x490] sm:$0xff] %v4619
  %4876 = vst [vmem:[%s4 + $0x498] sm:$0xff] %v4620
  %4877 = vst [vmem:[%s4 + $0x4a0] sm:$0xff] %v4621
  %4878 = vst [vmem:[%s4 + $0x4a8] sm:$0xff] %v4622
  %4879 = vst [vmem:[%s4 + $0x4b0] sm:$0xff] %v4623
  %4880 = vst [vmem:[%s4 + $0x4b8] sm:$0xff] %v4624
  %4881 = vst [vmem:[%s4 + $0x4c0] sm:$0xff] %v4625
  %4882 = vst [vmem:[%s4 + $0x4c8] sm:$0xff] %v4626
  %4883 = vst [vmem:[%s4 + $0x4d0] sm:$0xff] %v4627
  %4884 = vst [vmem:[%s4 + $0x4d8] sm:$0xff] %v4628
  %4885 = vst [vmem:[%s4 + $0x4e0] sm:$0xff] %v4629
  %4886 = vst [vmem:[%s4 + $0x4e8] sm:$0xff] %v4630
  %4887 = vst [vmem:[%s4 + $0x4f0] sm:$0xff] %v4631
  %4888 = vst [vmem:[%s4 + $0x4f8] sm:$0xff] %v4632
  %4889 = vst [vmem:[%s4 + $0x500] sm:$0xff] %v4633
  %4890 = vst [vmem:[%s4 + $0x508] sm:$0xff] %v4634
  %4891 = vst [vmem:[%s4 + $0x510] sm:$0xff] %v4635
  %4892 = vst [vmem:[%s4 + $0x518] sm:$0xff] %v4636
  %4893 = vst [vmem:[%s4 + $0x520] sm:$0xff] %v4637
  %4894 = vst [vmem:[%s4 + $0x528] sm:$0xff] %v4638
  %4895 = vst [vmem:[%s4 + $0x530] sm:$0xff] %v4639
  %4896 = vst [vmem:[%s4 + $0x538] sm:$0xff] %v4640
  %4897 = vst [vmem:[%s4 + $0x540] sm:$0xff] %v4641
  %4898 = vst [vmem:[%s4 + $0x548] sm:$0xff] %v4642
  %4899 = vst [vmem:[%s4 + $0x550] sm:$0xff] %v4643
  %4900 = vst [vmem:[%s4 + $0x558] sm:$0xff] %v4644
  %4901 = vst [vmem:[%s4 + $0x560] sm:$0xff] %v4645
  %4902 = vst [vmem:[%s4 + $0x568] sm:$0xff] %v4646
  %4903 = vst [vmem:[%s4 + $0x570] sm:$0xff] %v4647
  %4904 = vst [vmem:[%s4 + $0x578] sm:$0xff] %v4648
  %4905 = vst [vmem:[%s4 + $0x580] sm:$0xff] %v4649
  %4906 = vst [vmem:[%s4 + $0x588] sm:$0xff] %v4650
  %4907 = vst [vmem:[%s4 + $0x590] sm:$0xff] %v4651
  %4908 = vst [vmem:[%s4 + $0x598] sm:$0xff] %v4652
  %4909 = vst [vmem:[%s4 + $0x5a0] sm:$0xff] %v4653
  %4910 = vst [vmem:[%s4 + $0x5a8] sm:$0xff] %v4654
  %4911 = vst [vmem:[%s4 + $0x5b0] sm:$0xff] %v4655
  %4912 = vst [vmem:[%s4 + $0x5b8] sm:$0xff] %v4656
  %4913 = vst [vmem:[%s4 + $0x5c0] sm:$0xff] %v4657
  %4914 = vst [vmem:[%s4 + $0x5c8] sm:$0xff] %v4658
  %4915 = vst [vmem:[%s4 + $0x5d0] sm:$0xff] %v4659
  %4916 = vst [vmem:[%s4 + $0x5d8] sm:$0xff] %v4660
  %4917 = vst [vmem:[%s4 + $0x5e0] sm:$0xff] %v4661
  %4918 = vst [vmem:[%s4 + $0x5e8] sm:$0xff] %v4662
  %4919 = vst [vmem:[%s4 + $0x5f0] sm:$0xff] %v4663
  %4920 = vst [vmem:[%s4 + $0x5f8] sm:$0xff] %v4664
  %4921 = vst [vmem:[%s4 + $0x600] sm:$0xff] %v4665
  %4922 = vst [vmem:[%s4 + $0x608] sm:$0xff] %v4666
  %4923 = vst [vmem:[%s4 + $0x610] sm:$0xff] %v4667
  %4924 = vst [vmem:[%s4 + $0x618] sm:$0xff] %v4668
  %4925 = vst [vmem:[%s4 + $0x620] sm:$0xff] %v4669
  %4926 = vst [vmem:[%s4 + $0x628] sm:$0xff] %v4670
  %4927 = vst [vmem:[%s4 + $0x630] sm:$0xff] %v4671
  %4928 = vst [vmem:[%s4 + $0x638] sm:$0xff] %v4672
  %4929 = vst [vmem:[%s4 + $0x640] sm:$0xff] %v4673
  %4930 = vst [vmem:[%s4 + $0x648] sm:$0xff] %v4674
  %4931 = vst [vmem:[%s4 + $0x650] sm:$0xff] %v4675
  %4932 = vst [vmem:[%s4 + $0x658] sm:$0xff] %v4676
  %4933 = vst [vmem:[%s4 + $0x660] sm:$0xff] %v4677
  %4934 = vst [vmem:[%s4 + $0x668] sm:$0xff] %v4678
  %4935 = vst [vmem:[%s4 + $0x670] sm:$0xff] %v4679
  %4936 = vst [vmem:[%s4 + $0x678] sm:$0xff] %v4680
  %4937 = vst [vmem:[%s4 + $0x680] sm:$0xff] %v4681
  %4938 = vst [vmem:[%s4 + $0x688] sm:$0xff] %v4682
  %4939 = vst [vmem:[%s4 + $0x690] sm:$0xff] %v4683
  %4940 = vst [vmem:[%s4 + $0x698] sm:$0xff] %v4684
  %4941 = vst [vmem:[%s4 + $0x6a0] sm:$0xff] %v4685
  %4942 = vst [vmem:[%s4 + $0x6a8] sm:$0xff] %v4686
  %4943 = vst [vmem:[%s4 + $0x6b0] sm:$0xff] %v4687
  %4944 = vst [vmem:[%s4 + $0x6b8] sm:$0xff] %v4688
  %4945 = vst [vmem:[%s4 + $0x6c0] sm:$0xff] %v4689
  %4946 = vst [vmem:[%s4 + $0x6c8] sm:$0xff] %v4690
  %4947 = vst [vmem:[%s4 + $0x6d0] sm:$0xff] %v4691
  %4948 = vst [vmem:[%s4 + $0x6d8] sm:$0xff] %v4692
  %4949 = vst [vmem:[%s4 + $0x6e0] sm:$0xff] %v4693
  %4950 = vst [vmem:[%s4 + $0x6e8] sm:$0xff] %v4694
  %4951 = vst [vmem:[%s4 + $0x6f0] sm:$0xff] %v4695
  %4952 = vst [vmem:[%s4 + $0x6f8] sm:$0xff] %v4696
  %4953 = vst [vmem:[%s4 + $0x700] sm:$0xff] %v4697
  %4954 = vst [vmem:[%s4 + $0x708] sm:$0xff] %v4698
  %4955 = vst [vmem:[%s4 + $0x710] sm:$0xff] %v4699
  %4956 = vst [vmem:[%s4 + $0x718] sm:$0xff] %v4700
  %4957 = vst [vmem:[%s4 + $0x720] sm:$0xff] %v4701
  %4958 = vst [vmem:[%s4 + $0x728] sm:$0xff] %v4702
  %4959 = vst [vmem:[%s4 + $0x730] sm:$0xff] %v4703
  %4960 = vst [vmem:[%s4 + $0x738] sm:$0xff] %v4704
  %4961 = vst [vmem:[%s4 + $0x740] sm:$0xff] %v4705
  %4962 = vst [vmem:[%s4 + $0x748] sm:$0xff] %v4706
  %4963 = vst [vmem:[%s4 + $0x750] sm:$0xff] %v4707
  %4964 = vst [vmem:[%s4 + $0x758] sm:$0xff] %v4708
  %4965 = vst [vmem:[%s4 + $0x760] sm:$0xff] %v4709
  %4966 = vst [vmem:[%s4 + $0x768] sm:$0xff] %v4710
  %4967 = vst [vmem:[%s4 + $0x770] sm:$0xff] %v4711
  %4968 = vst [vmem:[%s4 + $0x778] sm:$0xff] %v4712
  %4969 = vst [vmem:[%s4 + $0x780] sm:$0xff] %v4713
  %4970 = vst [vmem:[%s4 + $0x788] sm:$0xff] %v4714
  %4971 = vst [vmem:[%s4 + $0x790] sm:$0xff] %v4715
  %4972 = vst [vmem:[%s4 + $0x798] sm:$0xff] %v4716
  %4973 = vst [vmem:[%s4 + $0x7a0] sm:$0xff] %v4717
  %4974 = vst [vmem:[%s4 + $0x7a8] sm:$0xff] %v4718
  %4975 = vst [vmem:[%s4 + $0x7b0] sm:$0xff] %v4719
  %4976 = vst [vmem:[%s4 + $0x7b8] sm:$0xff] %v4720
  %4977 = vst [vmem:[%s4 + $0x7c0] sm:$0xff] %v4721
  %4978 = vst [vmem:[%s4 + $0x7c8] sm:$0xff] %v4722
  %4979 = vst [vmem:[%s4 + $0x7d0] sm:$0xff] %v4723
  %4980 = vst [vmem:[%s4 + $0x7d8] sm:$0xff] %v4724
  %4981 = vst [vmem:[%s4 + $0x7e0] sm:$0xff] %v4725
  %4982 = vst [vmem:[%s4 + $0x7e8] sm:$0xff] %v4726
  %4983 = vst [vmem:[%s4 + $0x7f0] sm:$0xff] %v4727
  %4984 = vst [vmem:[%s4 + $0x7f8] sm:$0xff] %v4728
  // Predicated region
  $region18: #{_apply.8} parent=0 // pred_check
    _
  $region19: #{_apply.8} parent=0 // pred_check_branch
    %4986 = sbr.rel (0) target = $region21
  $region20: #{_apply.8} parent=0 // pred_region
    _
  $region21: #{_apply.8} parent=0 // pred_fallthru
    _
  // Predicated region
  $region22: #{_apply.8} parent=0 // pred_check
    _
  $region23: #{_apply.8} parent=0 // pred_check_branch
    %4988 = sbr.rel (0) target = $region25
  $region24: #{_apply.8} parent=0 // pred_region
    _
  $region25: #{_apply.8} parent=0 // pred_fallthru
    _

// kernel: _apply.9
$region0: #{_apply.9}
  #allocation0 [shape = 'u32[]', space=smem, size = 0x4, offset = 0x4, fixed_abs, tag = 'smem constant byte address 0x4 - core index']
  #allocation1 [shape = 'u32[72,128]{1,0:T(1,128)}', space=vmem, size = 0x9000, scoped, tag = 'internal scratch']
  %s0 = inlined_call_operand.vmem [shape: f32[8192,128], index: 0, kind: input, shape index: {}]
  %s1 = inlined_call_operand.vmem [shape: f32[128,128], index: 1, kind: input, shape index: {}]
  %s2 = inlined_call_operand.vmem [shape: f32[8192,128], index: 2, kind: output, shape index: {}]
  %s3 = sld [smem:[#allocation0]]
  $region41: #{_apply.9} parent=0
    _
  %s5 = ssub.s32 1, %s3
  %s6 = scalar_select 0, %s5, %s3
  loop: start=0, step=1, limit=18
  $region2: #{_apply.9} parent=0 // loop_pre_header
    _
  $region3: #{_apply.9} parent=0 // loop_header
    %s8 = sphi 0, %s12
    %p9 = scmp.ge.s32.totalorder %s8, 18
    %s18 = sphi 0, %s20
    %s21 = sphi 0, %s18
    %s22 = sphi 0, %s21
    %s38 = sphi 0, %s22
    %s42 = sphi 0, %s42
    %s44 = sphi 0, %s42
    %s45 = sphi 0, %s44
    %s59 = sphi 0, %s45
    %s65 = sphi 0, %s67
    %s68 = sphi 0, %s65
    %s69 = sphi 0, %s68
    %s85 = sphi 0, %s69
  $region4: #{_apply.9} parent=0 // loop_header_branch
    %11 = sbr.rel (%p9) target = $region8
  $region5: #{_apply.9} parent=0 // loop_body
    %s13 = ssub.s32 %s8, 1
    %s14 = ssub.s32 %s8, 2
    %s15 = sadd.s32 %s8, 1
    %s16 = ssub.s32 %s8, %s15
    %p17 = scmp.eq.s32.totalorder %s16, 0
    %s19 = sadd.s32 %s18, 1
    %s20 = scalar_select %p17, %s18, %s19
    %p23 = pneg %p17
    %p24 = scmp.eq.s32.totalorder %s8, 15
    %p25 = por %p23, %p24
    %p26 = scmp.ne.s32.totalorder %s18, %s21
    %p27 = scmp.eq.s32.totalorder %s8, 0
    %p28 = por %p26, %p27
    %p29 = scmp.ne.s32.totalorder %s18, %s21
    %p30 = scmp.eq.s32.totalorder %s13, 15
    %p31 = por %p29, %p30
    %p32 = scmp.ne.s32.totalorder %s21, %s22
    %p33 = scmp.eq.s32.totalorder %s13, 0
    %p34 = por %p32, %p33
    %p35 = scmp.ne.s32.totalorder %s21, %s22
    %p36 = scmp.eq.s32.totalorder %s14, 15
    %p37 = por %p35, %p36
    %p39 = scmp.ne.s32.totalorder %s22, %s38
    %p40 = scmp.eq.s32.totalorder %s14, 0
    %p41 = por %p39, %p40
    %s43 = sadd.s32 %s42, 1
    %p46 = scmp.eq.s32.totalorder %s8, 15
    %p47 = scmp.ne.s32.totalorder %s42, %s44
    %p48 = scmp.eq.s32.totalorder %s8, 0
    %p49 = por %p47, %p48
    %p50 = scmp.ne.s32.totalorder %s42, %s44
    %p51 = scmp.eq.s32.totalorder %s13, 15
    %p52 = por %p50, %p51
    %p53 = scmp.ne.s32.totalorder %s44, %s45
    %p54 = scmp.eq.s32.totalorder %s13, 0
    %p55 = por %p53, %p54
    %p56 = scmp.ne.s32.totalorder %s44, %s45
    %p57 = scmp.eq.s32.totalorder %s14, 15
    %p58 = por %p56, %p57
    %p60 = scmp.ne.s32.totalorder %s45, %s59
    %p61 = scmp.eq.s32.totalorder %s14, 0
    %p62 = por %p60, %p61
    %s63 = ssub.s32 %s8, %s15
    %p64 = scmp.eq.s32.totalorder %s63, 0
    %s66 = sadd.s32 %s65, 1
    %s67 = scalar_select %p64, %s65, %s66
    %p70 = pneg %p64
    %p71 = scmp.eq.s32.totalorder %s8, 15
    %p72 = por %p70, %p71
    %p73 = scmp.ne.s32.totalorder %s65, %s68
    %p74 = scmp.eq.s32.totalorder %s8, 0
    %p75 = por %p73, %p74
    %p76 = scmp.ne.s32.totalorder %s65, %s68
    %p77 = scmp.eq.s32.totalorder %s13, 15
    %p78 = por %p76, %p77
    %p79 = scmp.ne.s32.totalorder %s68, %s69
    %p80 = scmp.eq.s32.totalorder %s13, 0
    %p81 = por %p79, %p80
    %p82 = scmp.ne.s32.totalorder %s68, %s69
    %p83 = scmp.eq.s32.totalorder %s14, 15
    %p84 = por %p82, %p83
    %p86 = scmp.ne.s32.totalorder %s69, %s85
    %p87 = scmp.eq.s32.totalorder %s14, 0
    %p88 = por %p86, %p87
    %p89 = scmp.le.s32.totalorder 1, %s8
    %p90 = scmp.lt.s32.totalorder %s8, 17
    %p91 = pnand %p89, %p90
    %p92 = pneg %p91
    // Predicated region
    $region9: #{_apply.9} parent=5 // pred_check
      _
    $region10: #{_apply.9} parent=5 // pred_check_branch
      %94 = sbr.rel (%p91) target = $region12
    $region11: #{_apply.9} parent=5 // pred_region
      %s95 = ssub.s32 %s8, 1
      // Predicated region
      $region13: #{_apply.9} parent=11 // pred_check
        %p96 = pneg %p55
      $region14: #{_apply.9} parent=11 // pred_check_branch
        %98 = sbr.rel (%p96) target = $region16
      $region15: #{_apply.9} parent=11 // pred_region
        _
      $region16: #{_apply.9} parent=11 // pred_fallthru
        _
    $region12: #{_apply.9} parent=5 // pred_fallthru
      _
    %p99 = scmp.lt.s32.totalorder %s8, 16
    // Predicated region
    $region17: #{_apply.9} parent=5 // pred_check
      %p100 = pneg %p99
    $region18: #{_apply.9} parent=5 // pred_check_branch
      %102 = sbr.rel (%p100) target = $region20
    $region19: #{_apply.9} parent=5 // pred_region
      // Predicated region
      $region21: #{_apply.9} parent=19 // pred_check
        %p103 = pneg %p28
      $region22: #{_apply.9} parent=19 // pred_check_branch
        %105 = sbr.rel (%p103) target = $region24
      $region23: #{_apply.9} parent=19 // pred_region
        %s106 = smul.u32 64, %s8
        %p107 = scmp.lt.s32.totalorder %s106, 1023
        %s108 = scalar_select %p107, %s106, 1023
        %s109 = smul.addr %s108, 8
        %s110 = scalar_lea.vmem %s0, %s109
        %s111 = smul.u32 64, %s8
      $region24: #{_apply.9} parent=19 // pred_fallthru
        _
    $region20: #{_apply.9} parent=5 // pred_fallthru
      _
    %p112 = scmp.le.s32.totalorder 1, %s8
    %p113 = scmp.lt.s32.totalorder %s8, 17
    %p114 = pnand %p112, %p113
    %p115 = pneg %p114
    // Predicated region
    $region25: #{_apply.9} parent=5 // pred_check
      _
    $region26: #{_apply.9} parent=5 // pred_check_branch
      %117 = sbr.rel (%p114) target = $region28
    $region27: #{_apply.9} parent=5 // pred_region
      %s118 = ssub.s32 %s8, 1
      %s119 = smul.u32 64, %s13
      %p120 = scmp.lt.s32.totalorder %s119, 1023
      %s121 = scalar_select %p120, %s119, 1023
      %s122 = smul.addr %s121, 8
      %s123 = scalar_lea.vmem %s0, %s122
      %p124 = pneg %p34
      %p125 = pneg %p31
      %p126 = pneg %p55
      %p127 = pneg %p52
      %p128 = pneg %p81
      %p129 = pneg %p78
      %s130 = smul.u32 64, %s13
      %p131 = scmp.lt.s32.totalorder %s130, 1023
      %s132 = scalar_select %p131, %s130, 1023
      %s133 = smul.addr %s132, 8
      %s134 = scalar_lea.vmem %s2, %s133
      %s135 = smul.u32 64, %s13
      %p136 = scmp.lt.s32.totalorder %s135, 1023
      %s137 = scalar_select %p136, %s135, 1023
      %s138 = smul.addr %s137, 8
      %s139 = scalar_lea.vmem %s0, %s138
      %s140 = smul.u32 64, %s13
      %s141 = smul.u32 64, %s13
      %p142 = scmp.lt.s32.totalorder %s141, 1023
      %s143 = scalar_select %p142, %s141, 1023
      %s144 = smul.addr %s143, 8
      %s145 = scalar_lea.vmem %s2, %s144
      %s146 = smul.u32 64, %s13
      %v147 = vld [vmem:[%s139] sm:$0xff]
      %v148 = vld [vmem:[%s139 + $0x8] sm:$0xff]
      %v149 = vld [vmem:[%s139 + $0x10] sm:$0xff]
      %v150 = vld [vmem:[%s139 + $0x18] sm:$0xff]
      %v151 = vld [vmem:[%s139 + $0x20] sm:$0xff]
      %v152 = vld [vmem:[%s139 + $0x28] sm:$0xff]
      %v153 = vld [vmem:[%s139 + $0x30] sm:$0xff]
      %v154 = vld [vmem:[%s139 + $0x38] sm:$0xff]
      %v155 = vld [vmem:[%s139 + $0x40] sm:$0xff]
      %v156 = vld [vmem:[%s139 + $0x48] sm:$0xff]
      %v157 = vld [vmem:[%s139 + $0x50] sm:$0xff]
      %v158 = vld [vmem:[%s139 + $0x58] sm:$0xff]
      %v159 = vld [vmem:[%s139 + $0x60] sm:$0xff]
      %v160 = vld [vmem:[%s139 + $0x68] sm:$0xff]
      %v161 = vld [vmem:[%s139 + $0x70] sm:$0xff]
      %v162 = vld [vmem:[%s139 + $0x78] sm:$0xff]
      %v163 = vld [vmem:[%s139 + $0x80] sm:$0xff]
      %v164 = vld [vmem:[%s139 + $0x88] sm:$0xff]
      %v165 = vld [vmem:[%s139 + $0x90] sm:$0xff]
      %v166 = vld [vmem:[%s139 + $0x98] sm:$0xff]
      %v167 = vld [vmem:[%s139 + $0xa0] sm:$0xff]
      %v168 = vld [vmem:[%s139 + $0xa8] sm:$0xff]
      %v169 = vld [vmem:[%s139 + $0xb0] sm:$0xff]
      %v170 = vld [vmem:[%s139 + $0xb8] sm:$0xff]
      %v171 = vld [vmem:[%s139 + $0xc0] sm:$0xff]
      %v172 = vld [vmem:[%s139 + $0xc8] sm:$0xff]
      %v173 = vld [vmem:[%s139 + $0xd0] sm:$0xff]
      %v174 = vld [vmem:[%s139 + $0xd8] sm:$0xff]
      %v175 = vld [vmem:[%s139 + $0xe0] sm:$0xff]
      %v176 = vld [vmem:[%s139 + $0xe8] sm:$0xff]
      %v177 = vld [vmem:[%s139 + $0xf0] sm:$0xff]
      %v178 = vld [vmem:[%s139 + $0xf8] sm:$0xff]
      %v179 = vld [vmem:[%s139 + $0x100] sm:$0xff]
      %v180 = vld [vmem:[%s139 + $0x108] sm:$0xff]
      %v181 = vld [vmem:[%s139 + $0x110] sm:$0xff]
      %v182 = vld [vmem:[%s139 + $0x118] sm:$0xff]
      %v183 = vld [vmem:[%s139 + $0x120] sm:$0xff]
      %v184 = vld [vmem:[%s139 + $0x128] sm:$0xff]
      %v185 = vld [vmem:[%s139 + $0x130] sm:$0xff]
      %v186 = vld [vmem:[%s139 + $0x138] sm:$0xff]
      %v187 = vld [vmem:[%s139 + $0x140] sm:$0xff]
      %v188 = vld [vmem:[%s139 + $0x148] sm:$0xff]
      %v189 = vld [vmem:[%s139 + $0x150] sm:$0xff]
      %v190 = vld [vmem:[%s139 + $0x158] sm:$0xff]
      %v191 = vld [vmem:[%s139 + $0x160] sm:$0xff]
      %v192 = vld [vmem:[%s139 + $0x168] sm:$0xff]
      %v193 = vld [vmem:[%s139 + $0x170] sm:$0xff]
      %v194 = vld [vmem:[%s139 + $0x178] sm:$0xff]
      %v195 = vld [vmem:[%s139 + $0x180] sm:$0xff]
      %v196 = vld [vmem:[%s139 + $0x188] sm:$0xff]
      %v197 = vld [vmem:[%s139 + $0x190] sm:$0xff]
      %v198 = vld [vmem:[%s139 + $0x198] sm:$0xff]
      %v199 = vld [vmem:[%s139 + $0x1a0] sm:$0xff]
      %v200 = vld [vmem:[%s139 + $0x1a8] sm:$0xff]
      %v201 = vld [vmem:[%s139 + $0x1b0] sm:$0xff]
      %v202 = vld [vmem:[%s139 + $0x1b8] sm:$0xff]
      %v203 = vld [vmem:[%s139 + $0x1c0] sm:$0xff]
      %v204 = vld [vmem:[%s139 + $0x1c8] sm:$0xff]
      %v205 = vld [vmem:[%s139 + $0x1d0] sm:$0xff]
      %v206 = vld [vmem:[%s139 + $0x1d8] sm:$0xff]
      %v207 = vld [vmem:[%s139 + $0x1e0] sm:$0xff]
      %v208 = vld [vmem:[%s139 + $0x1e8] sm:$0xff]
      %v209 = vld [vmem:[%s139 + $0x1f0] sm:$0xff]
      %v210 = vld [vmem:[%s139 + $0x1f8] sm:$0xff]
      %v211 = vld [vmem:[%s1] sm:$0xff]
      %v212 = vld [vmem:[%s1 + $0x8] sm:$0xff]
      %v213 = vld [vmem:[%s1 + $0x10] sm:$0xff]
      %v214 = vld [vmem:[%s1 + $0x18] sm:$0xff]
      %v215 = vld [vmem:[%s1 + $0x20] sm:$0xff]
      %v216 = vld [vmem:[%s1 + $0x28] sm:$0xff]
      %v217 = vld [vmem:[%s1 + $0x30] sm:$0xff]
      %v218 = vld [vmem:[%s1 + $0x38] sm:$0xff]
      %v219 = vld [vmem:[%s1 + $0x40] sm:$0xff]
      %v220 = vld [vmem:[%s1 + $0x48] sm:$0xff]
      %v221 = vld [vmem:[%s1 + $0x50] sm:$0xff]
      %v222 = vld [vmem:[%s1 + $0x58] sm:$0xff]
      %v223 = vld [vmem:[%s1 + $0x60] sm:$0xff]
      %v224 = vld [vmem:[%s1 + $0x68] sm:$0xff]
      %v225 = vld [vmem:[%s1 + $0x70] sm:$0xff]
      %v226 = vld [vmem:[%s1 + $0x78] sm:$0xff]
      %227 = vmatpush.msra.mxu0 %v226
      %228 = vmatpush.msra.mxu0 %v225
      %229 = vmatpush.msra.mxu0 %v224
      %230 = vmatpush.msra.mxu0 %v223
      %231 = vmatpush.msra.mxu0 %v222
      %232 = vmatpush.msra.mxu0 %v221
      %233 = vmatpush.msra.mxu0 %v220
      %234 = vmatpush.msra.mxu0 %v219
      %235 = vmatpush.msra.mxu0 %v218
      %236 = vmatpush.msra.mxu0 %v217
      %237 = vmatpush.msra.mxu0 %v216
      %238 = vmatpush.msra.mxu0 %v215
      %239 = vmatpush.msra.mxu0 %v214
      %240 = vmatpush.msra.mxu0 %v213
      %241 = vmatpush.msra.mxu0 %v212
      %242 = vmatpush.msra.mxu0 %v211
      %243 = vmatmul.f32.gmra.mxu0 %v147
      %v244 = vpop.f32.mrf.mxu0
      %v245 = vadd.f32 0.0, %v244
      %246 = vmatmul.f32.gmra.mxu0 %v148
      %v247 = vpop.f32.mrf.mxu0
      %v248 = vadd.f32 0.0, %v247
      %249 = vmatmul.f32.gmra.mxu0 %v149
      %v250 = vpop.f32.mrf.mxu0
      %v251 = vadd.f32 0.0, %v250
      %252 = vmatmul.f32.gmra.mxu0 %v150
      %v253 = vpop.f32.mrf.mxu0
      %v254 = vadd.f32 0.0, %v253
      %255 = vmatmul.f32.gmra.mxu0 %v151
      %v256 = vpop.f32.mrf.mxu0
      %v257 = vadd.f32 0.0, %v256
      %258 = vmatmul.f32.gmra.mxu0 %v152
      %v259 = vpop.f32.mrf.mxu0
      %v260 = vadd.f32 0.0, %v259
      %261 = vmatmul.f32.gmra.mxu0 %v153
      %v262 = vpop.f32.mrf.mxu0
      %v263 = vadd.f32 0.0, %v262
      %264 = vmatmul.f32.gmra.mxu0 %v154
      %v265 = vpop.f32.mrf.mxu0
      %v266 = vadd.f32 0.0, %v265
      %267 = vmatmul.f32.gmra.mxu0 %v155
      %v268 = vpop.f32.mrf.mxu0
      %v269 = vadd.f32 0.0, %v268
      %270 = vmatmul.f32.gmra.mxu0 %v156
      %v271 = vpop.f32.mrf.mxu0
      %v272 = vadd.f32 0.0, %v271
      %273 = vmatmul.f32.gmra.mxu0 %v157
      %v274 = vpop.f32.mrf.mxu0
      %v275 = vadd.f32 0.0, %v274
      %276 = vmatmul.f32.gmra.mxu0 %v158
      %v277 = vpop.f32.mrf.mxu0
      %v278 = vadd.f32 0.0, %v277
      %279 = vmatmul.f32.gmra.mxu0 %v159
      %v280 = vpop.f32.mrf.mxu0
      %v281 = vadd.f32 0.0, %v280
      %282 = vmatmul.f32.gmra.mxu0 %v160
      %v283 = vpop.f32.mrf.mxu0
      %v284 = vadd.f32 0.0, %v283
      %285 = vmatmul.f32.gmra.mxu0 %v161
      %v286 = vpop.f32.mrf.mxu0
      %v287 = vadd.f32 0.0, %v286
      %288 = vmatmul.f32.gmra.mxu0 %v162
      %v289 = vpop.f32.mrf.mxu0
      %v290 = vadd.f32 0.0, %v289
      %291 = vmatmul.f32.gmra.mxu0 %v163
      %v292 = vpop.f32.mrf.mxu0
      %v293 = vadd.f32 0.0, %v292
      %294 = vmatmul.f32.gmra.mxu0 %v164
      %v295 = vpop.f32.mrf.mxu0
      %v296 = vadd.f32 0.0, %v295
      %297 = vmatmul.f32.gmra.mxu0 %v165
      %v298 = vpop.f32.mrf.mxu0
      %v299 = vadd.f32 0.0, %v298
      %300 = vmatmul.f32.gmra.mxu0 %v166
      %v301 = vpop.f32.mrf.mxu0
      %v302 = vadd.f32 0.0, %v301
      %303 = vmatmul.f32.gmra.mxu0 %v167
      %v304 = vpop.f32.mrf.mxu0
      %v305 = vadd.f32 0.0, %v304
      %306 = vmatmul.f32.gmra.mxu0 %v168
      %v307 = vpop.f32.mrf.mxu0
      %v308 = vadd.f32 0.0, %v307
      %309 = vmatmul.f32.gmra.mxu0 %v169
      %v310 = vpop.f32.mrf.mxu0
      %v311 = vadd.f32 0.0, %v310
      %312 = vmatmul.f32.gmra.mxu0 %v170
      %v313 = vpop.f32.mrf.mxu0
      %v314 = vadd.f32 0.0, %v313
      %315 = vmatmul.f32.gmra.mxu0 %v171
      %v316 = vpop.f32.mrf.mxu0
      %v317 = vadd.f32 0.0, %v316
      %318 = vmatmul.f32.gmra.mxu0 %v172
      %v319 = vpop.f32.mrf.mxu0
      %v320 = vadd.f32 0.0, %v319
      %321 = vmatmul.f32.gmra.mxu0 %v173
      %v322 = vpop.f32.mrf.mxu0
      %v323 = vadd.f32 0.0, %v322
      %324 = vmatmul.f32.gmra.mxu0 %v174
      %v325 = vpop.f32.mrf.mxu0
      %v326 = vadd.f32 0.0, %v325
      %327 = vmatmul.f32.gmra.mxu0 %v175
      %v328 = vpop.f32.mrf.mxu0
      %v329 = vadd.f32 0.0, %v328
      %330 = vmatmul.f32.gmra.mxu0 %v176
      %v331 = vpop.f32.mrf.mxu0
      %v332 = vadd.f32 0.0, %v331
      %333 = vmatmul.f32.gmra.mxu0 %v177
      %v334 = vpop.f32.mrf.mxu0
      %v335 = vadd.f32 0.0, %v334
      %336 = vmatmul.f32.gmra.mxu0 %v178
      %v337 = vpop.f32.mrf.mxu0
      %v338 = vadd.f32 0.0, %v337
      %339 = vmatmul.f32.gmra.mxu0 %v179
      %v340 = vpop.f32.mrf.mxu0
      %v341 = vadd.f32 0.0, %v340
      %342 = vmatmul.f32.gmra.mxu0 %v180
      %v343 = vpop.f32.mrf.mxu0
      %v344 = vadd.f32 0.0, %v343
      %345 = vmatmul.f32.gmra.mxu0 %v181
      %v346 = vpop.f32.mrf.mxu0
      %v347 = vadd.f32 0.0, %v346
      %348 = vmatmul.f32.gmra.mxu0 %v182
      %v349 = vpop.f32.mrf.mxu0
      %v350 = vadd.f32 0.0, %v349
      %351 = vmatmul.f32.gmra.mxu0 %v183
      %v352 = vpop.f32.mrf.mxu0
      %v353 = vadd.f32 0.0, %v352
      %354 = vmatmul.f32.gmra.mxu0 %v184
      %v355 = vpop.f32.mrf.mxu0
      %v356 = vadd.f32 0.0, %v355
      %357 = vmatmul.f32.gmra.mxu0 %v185
      %v358 = vpop.f32.mrf.mxu0
      %v359 = vadd.f32 0.0, %v358
      %360 = vmatmul.f32.gmra.mxu0 %v186
      %v361 = vpop.f32.mrf.mxu0
      %v362 = vadd.f32 0.0, %v361
      %363 = vmatmul.f32.gmra.mxu0 %v187
      %v364 = vpop.f32.mrf.mxu0
      %v365 = vadd.f32 0.0, %v364
      %366 = vmatmul.f32.gmra.mxu0 %v188
      %v367 = vpop.f32.mrf.mxu0
      %v368 = vadd.f32 0.0, %v367
      %369 = vmatmul.f32.gmra.mxu0 %v189
      %v370 = vpop.f32.mrf.mxu0
      %v371 = vadd.f32 0.0, %v370
      %372 = vmatmul.f32.gmra.mxu0 %v190
      %v373 = vpop.f32.mrf.mxu0
      %v374 = vadd.f32 0.0, %v373
      %375 = vmatmul.f32.gmra.mxu0 %v191
      %v376 = vpop.f32.mrf.mxu0
      %v377 = vadd.f32 0.0, %v376
      %378 = vmatmul.f32.gmra.mxu0 %v192
      %v379 = vpop.f32.mrf.mxu0
      %v380 = vadd.f32 0.0, %v379
      %381 = vmatmul.f32.gmra.mxu0 %v193
      %v382 = vpop.f32.mrf.mxu0
      %v383 = vadd.f32 0.0, %v382
      %384 = vmatmul.f32.gmra.mxu0 %v194
      %v385 = vpop.f32.mrf.mxu0
      %v386 = vadd.f32 0.0, %v385
      %387 = vmatmul.f32.gmra.mxu0 %v195
      %v388 = vpop.f32.mrf.mxu0
      %v389 = vadd.f32 0.0, %v388
      %390 = vmatmul.f32.gmra.mxu0 %v196
      %v391 = vpop.f32.mrf.mxu0
      %v392 = vadd.f32 0.0, %v391
      %393 = vmatmul.f32.gmra.mxu0 %v197
      %v394 = vpop.f32.mrf.mxu0
      %v395 = vadd.f32 0.0, %v394
      %396 = vmatmul.f32.gmra.mxu0 %v198
      %v397 = vpop.f32.mrf.mxu0
      %v398 = vadd.f32 0.0, %v397
      %399 = vmatmul.f32.gmra.mxu0 %v199
      %v400 = vpop.f32.mrf.mxu0
      %v401 = vadd.f32 0.0, %v400
      %402 = vmatmul.f32.gmra.mxu0 %v200
      %v403 = vpop.f32.mrf.mxu0
      %v404 = vadd.f32 0.0, %v403
      %405 = vmatmul.f32.gmra.mxu0 %v201
      %v406 = vpop.f32.mrf.mxu0
      %v407 = vadd.f32 0.0, %v406
      %408 = vmatmul.f32.gmra.mxu0 %v202
      %v409 = vpop.f32.mrf.mxu0
      %v410 = vadd.f32 0.0, %v409
      %411 = vmatmul.f32.gmra.mxu0 %v203
      %v412 = vpop.f32.mrf.mxu0
      %v413 = vadd.f32 0.0, %v412
      %414 = vmatmul.f32.gmra.mxu0 %v204
      %v415 = vpop.f32.mrf.mxu0
      %v416 = vadd.f32 0.0, %v415
      %417 = vmatmul.f32.gmra.mxu0 %v205
      %v418 = vpop.f32.mrf.mxu0
      %v419 = vadd.f32 0.0, %v418
      %420 = vmatmul.f32.gmra.mxu0 %v206
      %v421 = vpop.f32.mrf.mxu0
      %v422 = vadd.f32 0.0, %v421
      %423 = vmatmul.f32.gmra.mxu0 %v207
      %v424 = vpop.f32.mrf.mxu0
      %v425 = vadd.f32 0.0, %v424
      %426 = vmatmul.f32.gmra.mxu0 %v208
      %v427 = vpop.f32.mrf.mxu0
      %v428 = vadd.f32 0.0, %v427
      %429 = vmatmul.f32.gmra.mxu0 %v209
      %v430 = vpop.f32.mrf.mxu0
      %v431 = vadd.f32 0.0, %v430
      %432 = vmatmul.f32.gmra.mxu0 %v210
      %v433 = vpop.f32.mrf.mxu0
      %v434 = vadd.f32 0.0, %v433
      %435 = vdwg.mxu0
      %v436 = vtanh.pop %v245
      %v437 = vtanh.pop %v248
      %v438 = vtanh.pop %v251
      %v439 = vtanh.pop %v254
      %v440 = vtanh.pop %v257
      %v441 = vtanh.pop %v260
      %v442 = vtanh.pop %v263
      %v443 = vtanh.pop %v266
      %v444 = vtanh.pop %v269
      %v445 = vtanh.pop %v272
      %v446 = vtanh.pop %v275
      %v447 = vtanh.pop %v278
      %v448 = vtanh.pop %v281
      %v449 = vtanh.pop %v284
      %v450 = vtanh.pop %v287
      %v451 = vtanh.pop %v290
      %v452 = vtanh.pop %v293
      %v453 = vtanh.pop %v296
      %v454 = vtanh.pop %v299
      %v455 = vtanh.pop %v302
      %v456 = vtanh.pop %v305
      %v457 = vtanh.pop %v308
      %v458 = vtanh.pop %v311
      %v459 = vtanh.pop %v314
      %v460 = vtanh.pop %v317
      %v461 = vtanh.pop %v320
      %v462 = vtanh.pop %v323
      %v463 = vtanh.pop %v326
      %v464 = vtanh.pop %v329
      %v465 = vtanh.pop %v332
      %v466 = vtanh.pop %v335
      %v467 = vtanh.pop %v338
      %v468 = vtanh.pop %v341
      %v469 = vtanh.pop %v344
      %v470 = vtanh.pop %v347
      %v471 = vtanh.pop %v350
      %v472 = vtanh.pop %v353
      %v473 = vtanh.pop %v356
      %v474 = vtanh.pop %v359
      %v475 = vtanh.pop %v362
      %v476 = vtanh.pop %v365
      %v477 = vtanh.pop %v368
      %v478 = vtanh.pop %v371
      %v479 = vtanh.pop %v374
      %v480 = vtanh.pop %v377
      %v481 = vtanh.pop %v380
      %v482 = vtanh.pop %v383
      %v483 = vtanh.pop %v386
      %v484 = vtanh.pop %v389
      %v485 = vtanh.pop %v392
      %v486 = vtanh.pop %v395
      %v487 = vtanh.pop %v398
      %v488 = vtanh.pop %v401
      %v489 = vtanh.pop %v404
      %v490 = vtanh.pop %v407
      %v491 = vtanh.pop %v410
      %v492 = vtanh.pop %v413
      %v493 = vtanh.pop %v416
      %v494 = vtanh.pop %v419
      %v495 = vtanh.pop %v422
      %v496 = vtanh.pop %v425
      %v497 = vtanh.pop %v428
      %v498 = vtanh.pop %v431
      %v499 = vtanh.pop %v434
      %500 = vst [vmem:[%s145] sm:$0xff] %v436
      %501 = vst [vmem:[%s145 + $0x8] sm:$0xff] %v437
      %502 = vst [vmem:[%s145 + $0x10] sm:$0xff] %v438
      %503 = vst [vmem:[%s145 + $0x18] sm:$0xff] %v439
      %504 = vst [vmem:[%s145 + $0x20] sm:$0xff] %v440
      %505 = vst [vmem:[%s145 + $0x28] sm:$0xff] %v441
      %506 = vst [vmem:[%s145 + $0x30] sm:$0xff] %v442
      %507 = vst [vmem:[%s145 + $0x38] sm:$0xff] %v443
      %508 = vst [vmem:[%s145 + $0x40] sm:$0xff] %v444
      %509 = vst [vmem:[%s145 + $0x48] sm:$0xff] %v445
      %510 = vst [vmem:[%s145 + $0x50] sm:$0xff] %v446
      %511 = vst [vmem:[%s145 + $0x58] sm:$0xff] %v447
      %512 = vst [vmem:[%s145 + $0x60] sm:$0xff] %v448
      %513 = vst [vmem:[%s145 + $0x68] sm:$0xff] %v449
      %514 = vst [vmem:[%s145 + $0x70] sm:$0xff] %v450
      %515 = vst [vmem:[%s145 + $0x78] sm:$0xff] %v451
      %516 = vst [vmem:[%s145 + $0x80] sm:$0xff] %v452
      %517 = vst [vmem:[%s145 + $0x88] sm:$0xff] %v453
      %518 = vst [vmem:[%s145 + $0x90] sm:$0xff] %v454
      %519 = vst [vmem:[%s145 + $0x98] sm:$0xff] %v455
      %520 = vst [vmem:[%s145 + $0xa0] sm:$0xff] %v456
      %521 = vst [vmem:[%s145 + $0xa8] sm:$0xff] %v457
      %522 = vst [vmem:[%s145 + $0xb0] sm:$0xff] %v458
      %523 = vst [vmem:[%s145 + $0xb8] sm:$0xff] %v459
      %524 = vst [vmem:[%s145 + $0xc0] sm:$0xff] %v460
      %525 = vst [vmem:[%s145 + $0xc8] sm:$0xff] %v461
      %526 = vst [vmem:[%s145 + $0xd0] sm:$0xff] %v462
      %527 = vst [vmem:[%s145 + $0xd8] sm:$0xff] %v463
      %528 = vst [vmem:[%s145 + $0xe0] sm:$0xff] %v464
      %529 = vst [vmem:[%s145 + $0xe8] sm:$0xff] %v465
      %530 = vst [vmem:[%s145 + $0xf0] sm:$0xff] %v466
      %531 = vst [vmem:[%s145 + $0xf8] sm:$0xff] %v467
      %532 = vst [vmem:[%s145 + $0x100] sm:$0xff] %v468
      %533 = vst [vmem:[%s145 + $0x108] sm:$0xff] %v469
      %534 = vst [vmem:[%s145 + $0x110] sm:$0xff] %v470
      %535 = vst [vmem:[%s145 + $0x118] sm:$0xff] %v471
      %536 = vst [vmem:[%s145 + $0x120] sm:$0xff] %v472
      %537 = vst [vmem:[%s145 + $0x128] sm:$0xff] %v473
      %538 = vst [vmem:[%s145 + $0x130] sm:$0xff] %v474
      %539 = vst [vmem:[%s145 + $0x138] sm:$0xff] %v475
      %540 = vst [vmem:[%s145 + $0x140] sm:$0xff] %v476
      %541 = vst [vmem:[%s145 + $0x148] sm:$0xff] %v477
      %542 = vst [vmem:[%s145 + $0x150] sm:$0xff] %v478
      %543 = vst [vmem:[%s145 + $0x158] sm:$0xff] %v479
      %544 = vst [vmem:[%s145 + $0x160] sm:$0xff] %v480
      %545 = vst [vmem:[%s145 + $0x168] sm:$0xff] %v481
      %546 = vst [vmem:[%s145 + $0x170] sm:$0xff] %v482
      %547 = vst [vmem:[%s145 + $0x178] sm:$0xff] %v483
      %548 = vst [vmem:[%s145 + $0x180] sm:$0xff] %v484
      %549 = vst [vmem:[%s145 + $0x188] sm:$0xff] %v485
      %550 = vst [vmem:[%s145 + $0x190] sm:$0xff] %v486
      %551 = vst [vmem:[%s145 + $0x198] sm:$0xff] %v487
      %552 = vst [vmem:[%s145 + $0x1a0] sm:$0xff] %v488
      %553 = vst [vmem:[%s145 + $0x1a8] sm:$0xff] %v489
      %554 = vst [vmem:[%s145 + $0x1b0] sm:$0xff] %v490
      %555 = vst [vmem:[%s145 + $0x1b8] sm:$0xff] %v491
      %556 = vst [vmem:[%s145 + $0x1c0] sm:$0xff] %v492
      %557 = vst [vmem:[%s145 + $0x1c8] sm:$0xff] %v493
      %558 = vst [vmem:[%s145 + $0x1d0] sm:$0xff] %v494
      %559 = vst [vmem:[%s145 + $0x1d8] sm:$0xff] %v495
      %560 = vst [vmem:[%s145 + $0x1e0] sm:$0xff] %v496
      %561 = vst [vmem:[%s145 + $0x1e8] sm:$0xff] %v497
      %562 = vst [vmem:[%s145 + $0x1f0] sm:$0xff] %v498
      %563 = vst [vmem:[%s145 + $0x1f8] sm:$0xff] %v499
      %s564 = smul.u32 64, %s13
      %p565 = scmp.lt.s32.totalorder %s564, 1023
      %s566 = scalar_select %p565, %s564, 1023
      %s567 = smul.addr %s566, 8
      %s568 = scalar_lea.vmem %s2, %s567
      // Predicated region
      $region29: #{_apply.9} parent=27 // pred_check
        %p569 = pneg %p78
      $region30: #{_apply.9} parent=27 // pred_check_branch
        %571 = sbr.rel (%p569) target = $region32
      $region31: #{_apply.9} parent=27 // pred_region
        %s572 = smul.u32 64, %s13
      $region32: #{_apply.9} parent=27 // pred_fallthru
        _
    $region28: #{_apply.9} parent=5 // pred_fallthru
      _
    %p573 = scmp.le.s32.totalorder 2, %s8
    // Predicated region
    $region33: #{_apply.9} parent=5 // pred_check
      %p574 = pneg %p573
    $region34: #{_apply.9} parent=5 // pred_check_branch
      %576 = sbr.rel (%p574) target = $region36
    $region35: #{_apply.9} parent=5 // pred_region
      %s577 = ssub.s32 %s8, 2
      // Predicated region
      $region37: #{_apply.9} parent=35 // pred_check
        %p578 = pneg %p84
      $region38: #{_apply.9} parent=35 // pred_check_branch
        %580 = sbr.rel (%p578) target = $region40
      $region39: #{_apply.9} parent=35 // pred_region
        %s581 = smul.u32 64, %s14
        %p582 = scmp.lt.s32.totalorder %s581, 1023
        %s583 = scalar_select %p582, %s581, 1023
        %s584 = smul.addr %s583, 8
        %s585 = scalar_lea.vmem %s2, %s584
      $region40: #{_apply.9} parent=35 // pred_fallthru
        _
    $region36: #{_apply.9} parent=5 // pred_fallthru
      _
  $region6: #{_apply.9} parent=0 // loop_footer
    %s12 = sadd.s32 1, %s8
  $region7: #{_apply.9} parent=0 // loop_footer_branch
    %7 = sbr.rel target = $region3
  $region8: #{_apply.9} parent=0 // loop_exit
    _

</llo_original>
